<compile_context>
chip_gen: v7x
topology: tpu7x:2x2x1
jax: 0.10.0
libtpu: 0.0.40
codegen_flags: <defaults>
</compile_context>

<pallas_src>
import functools
import math

import jax
import jax.numpy as jnp
import numpy as np
from jax.experimental import pallas as pl
from jax.experimental.pallas import tpu as pltpu

_SQRT_2_OVER_PI = 0.7978845608028654


def _gelu(x):
    # tanh-approximate GELU (tensorrt_llm 'gelu' activation); always evaluated in f32.
    return 0.5 * x * (1.0 + jnp.tanh(_SQRT_2_OVER_PI * (x + 0.044715 * x * x * x)))


def _round_up(x, m):
    return ((x + m - 1) // m) * m


def _pick_tile(dim, target, granule):
    """Largest tile <= target that is a multiple of `granule` and divides `dim`.
    Falls back to the full dim (a block equal to the full extent is always layout-legal);
    note the fallback can blow up VMEM for pathological dims -- fine for Whisper shapes."""
    if dim <= target:
        return dim
    t = (target // granule) * granule
    while t >= granule:
        if dim % t == 0:
            return t
        t -= granule
    return dim


# ------------------------------ Pallas kernels ------------------------------


def linear_pallas(x, w, b, *, gamma=None, beta=None, gelu=False, residual=None,
                  eps=1e-5, out_dtype=None,
                  tm_target=768, tn_target=512, tk_target=512):
    """o = [gelu]( [LayerNorm](x) @ w + b ) [+ residual]  -- one fused, tiled Pallas kernel.

    Tiled over a (M/tm, N/tn[, K/tk]) grid.  When the K grid has > 1 step an f32 VMEM
    accumulator is zeroed at k==0 and the bias / gelu / residual epilogue + cast runs at
    k==last (pl.when).  When K fits in a single step (all LN-fused matmuls) the accumulator
    scratch is skipped entirely and the epilogue writes o_ref directly (saves a tm*tn f32
    zero-store + store + load per tile; matters most on v5e's single vector-store slot).
    tm_target=768 keeps weight HBM re-streaming (M/tm reads of W) low while fitting v5e's
    16 MiB default scoped VMEM; raise towards 1536 on v6e/v7x if M allows.
    """
    M, K = x.shape
    Kw, N = w.shape
    assert K == Kw
    ln = gamma is not None
    out_dtype = out_dtype or x.dtype

    tm = _pick_tile(M, tm_target, 8)
    tn = _pick_tile(N, tn_target, 128)
    tk = K if ln else _pick_tile(K, tk_target, 128)     # LN needs the whole row in-tile
    nk = K // tk
    single_k = nk == 1

    if single_k:
        grid = (M // tm, N // tn)
        x_map = lambda i, j: (i, 0)
        w_map = lambda i, j: (0, j)
        n_map = lambda i, j: (0, j)
        c_map = lambda i, j: (0, 0)
        o_map = lambda i, j: (i, j)
        semantics = ("parallel", "parallel")
    else:
        grid = (M // tm, N // tn, nk)
        x_map = lambda i, j, k: (i, k)
        w_map = lambda i, j, k: (k, j)
        n_map = lambda i, j, k: (0, j)
        c_map = lambda i, j, k: (0, 0)
        o_map = lambda i, j, k: (i, j)
        semantics = ("parallel", "parallel", "arbitrary")

    inputs = [x, w, b.reshape(1, N).astype(jnp.float32)]
    in_specs = [
        pl.BlockSpec((tm, tk), x_map),
        pl.BlockSpec((tk, tn), w_map),
        pl.BlockSpec((1, tn), n_map),
    ]
    if ln:
        inputs += [gamma.reshape(1, K).astype(jnp.float32),
                   beta.reshape(1, K).astype(jnp.float32)]
        in_specs += [pl.BlockSpec((1, K), c_map), pl.BlockSpec((1, K), c_map)]
    if residual is not None:
        inputs.append(residual)
        in_specs.append(pl.BlockSpec((tm, tn), o_map))
    n_in = len(inputs)

    def kernel(*refs):
        in_refs = refs[:n_in]
        o_ref = refs[n_in]
        acc_ref = None if single_k else refs[n_in + 1]
        x_ref, w_ref, b_ref = in_refs[0], in_refs[1], in_refs[2]
        pos = 3
        if ln:
            g_ref, be_ref = in_refs[pos], in_refs[pos + 1]
            pos += 2
        if residual is not None:
            r_ref = in_refs[pos]

        def load_x():
            xv = x_ref[...]
            if ln:
                # Full-K block: per-row LayerNorm is local to this tile (stats in f32).
                xf = xv.astype(jnp.float32)
                mean = jnp.mean(xf, axis=-1, keepdims=True)
                cent = xf - mean
                var = jnp.mean(cent * cent, axis=-1, keepdims=True)
                xf = cent * jax.lax.rsqrt(var + eps) * g_ref[...] + be_ref[...]
                xv = xf.astype(w_ref.dtype)
            return xv

        def epilogue(y):
            y = y + b_ref[...]
            if gelu:
                y = _gelu(y)
            if residual is not None:
                y = y + r_ref[...].astype(jnp.float32)
            o_ref[...] = y.astype(o_ref.dtype)

        if single_k:
            # No accumulator scratch round-trip for single-K-step matmuls.
            epilogue(jnp.dot(load_x(), w_ref[...], preferred_element_type=jnp.float32))
        else:
            kk = pl.program_id(2)

            @pl.when(kk == 0)
            def _init():
                acc_ref[...] = jnp.zeros_like(acc_ref)

            acc_ref[...] += jnp.dot(load_x(), w_ref[...],
                                    preferred_element_type=jnp.float32)

            @pl.when(kk == pl.num_programs(2) - 1)
            def _finalize():
                epilogue(acc_ref[...])

    isz = jnp.dtype(x.dtype).itemsize
    cost = pl.CostEstimate(
        flops=2 * M * N * K,
        transcendentals=M * N if gelu else 0,
        # account for per-tile re-reads (x re-read per N tile, w re-read per M tile)
        bytes_accessed=(M * K * (N // tn) + K * N * (M // tm)) * isz
        + M * N * jnp.dtype(out_dtype).itemsize)

    scratch = [] if single_k else [pltpu.VMEM((tm, tn), jnp.float32)]

    return pl.pallas_call(
        kernel,
        out_shape=jax.ShapeDtypeStruct((M, N), out_dtype),
        grid=grid,
        in_specs=in_specs,
        out_specs=pl.BlockSpec((tm, tn), o_map),
        scratch_shapes=scratch,
        compiler_params=pltpu.CompilerParams(dimension_semantics=semantics),
        cost_estimate=cost,
    )(*inputs)


def attention_pallas(qkv, *, batch, seq, heads, d_model, t_valid,
                     tq_target=256, exp_in_bf16=False):
    """Bidirectional multi-head softmax(q k^T) v reading q/k/v directly out of the fused
    [B*Tp, 3D] projection slab (1/sqrt(hd) is pre-folded into wq/bq).

    Grid = (batch, head-group, q-tile).  Each step handles a head group whose lane width is a
    multiple of 128 (>= 256 preferred for the v6e/v7x 256-wide MXU) and writes a lane-dense
    (tq, gw) block straight into the [B*Tp, D] output slab -- no HBM transposes/reshapes.
    Padded key positions (>= t_valid) get a single additive bias computed once per grid step.
    `exp_in_bf16=True` halves EUP exp cost on v6e/v7x (keep False on v5e / for f32 parity).
    """
    B, Tp, H, D = batch, seq, heads, d_model
    M, W3 = qkv.shape
    assert M == B * Tp and W3 == 3 * D and D % H == 0
    hd = D // H

    divisors = [c for c in range(1, H + 1) if H % c == 0 and (c * hd) % 128 == 0]
    big = [c for c in divisors if c * hd >= 256]
    g = min(big) if big else (max(divisors) if divisors else H)
    gw = g * hd                                  # lane width handled per grid step
    kcol = D // gw                               # column-block offset of K inside the qkv slab
    vcol = 2 * (D // gw)

    tq = _pick_tile(Tp, tq_target, 8)
    n_qt = Tp // tq
    grid = (B, D // gw, n_qt)

    def kernel(q_ref, k_ref, v_ref, o_ref):
        qv = q_ref[...]                          # already scaled by 1/sqrt(hd)
        kv = k_ref[...]
        vv = v_ref[...]
        if Tp != t_valid:                        # additive key-padding bias, built ONCE
            kidx = jax.lax.broadcasted_iota(jnp.int32, (1, Tp), 1)
            kbias = jnp.where(kidx < t_valid, 0.0, -1e30).astype(jnp.float32)
        outs = []
        for h in range(g):                       # static unroll over heads in the group
            sl = slice(h * hd, (h + 1) * hd)
            # TODO(synk): verify via pl.lower_as_mlir that this contracting-last-dims
            # dot_general lowers to an MXU transposed-RHS matmul (no XLU vxpose of K).
            s = jax.lax.dot_general(qv[:, sl], kv[:, sl],
                                    (((1,), (1,)), ((), ())),
                                    preferred_element_type=jnp.float32)
            if Tp != t_valid:
                s = s + kbias
            m = jnp.max(s, axis=-1, keepdims=True)
            z = s - m                            # keep mask + max-subtraction in f32
            if exp_in_bf16:
                p = jnp.exp(z.astype(jnp.bfloat16))
                l = jnp.sum(p.astype(jnp.float32), axis=-1, keepdims=True)
            else:
                p = jnp.exp(z)
                l = jnp.sum(p, axis=-1, keepdims=True)
            o = jnp.dot(p.astype(vv.dtype), vv[:, sl],
                        preferred_element_type=jnp.float32)
            outs.append(o * pl.reciprocal(l, approx=True))   # EUP recip on [tq,hd]
        y = outs[0] if g == 1 else jnp.concatenate(outs, axis=-1)
        o_ref[...] = y.astype(o_ref.dtype)

    q_spec = pl.BlockSpec((tq, gw), lambda b, gi, qi: (b * n_qt + qi, gi))
    k_spec = pl.BlockSpec((Tp, gw), lambda b, gi, qi: (b, kcol + gi))
    v_spec = pl.BlockSpec((Tp, gw), lambda b, gi, qi: (b, vcol + gi))
    o_spec = pl.BlockSpec((tq, gw), lambda b, gi, qi: (b * n_qt + qi, gi))

    cost = pl.CostEstimate(
        flops=4 * B * H * Tp * Tp * hd,
        transcendentals=B * H * Tp * Tp,
        bytes_accessed=(M * D + 2 * M * D * n_qt + M * D) * jnp.dtype(qkv.dtype).itemsize)

    return pl.pallas_call(
        kernel,
        out_shape=jax.ShapeDtypeStruct((M, D), qkv.dtype),
        grid=grid,
        in_specs=[q_spec, k_spec, v_spec],
        out_specs=o_spec,
        compiler_params=pltpu.CompilerParams(
            dimension_semantics=("parallel", "parallel", "parallel")),
        cost_estimate=cost,
    )(qkv, qkv, qkv)


def layernorm_pallas(x, gamma, beta, *, eps=1e-5, out_dtype=jnp.float32, tm_target=256):
    """Standalone LayerNorm (used only for the final encoder LayerNorm)."""
    M, D = x.shape
    tm = _pick_tile(M, tm_target, 8)

    def kernel(x_ref, g_ref, b_ref, o_ref):
        xf = x_ref[...].astype(jnp.float32)
        mean = jnp.mean(xf, axis=-1, keepdims=True)
        cent = xf - mean
        var = jnp.mean(cent * cent, axis=-1, keepdims=True)
        o_ref[...] = (cent * jax.lax.rsqrt(var + eps) * g_ref[...]
                      + b_ref[...]).astype(o_ref.dtype)

    return pl.pallas_call(
        kernel,
        out_shape=jax.ShapeDtypeStruct((M, D), out_dtype),
        grid=(M // tm,),
        in_specs=[pl.BlockSpec((tm, D), lambda i: (i, 0)),
                  pl.BlockSpec((1, D), lambda i: (0, 0)),
                  pl.BlockSpec((1, D), lambda i: (0, 0))],
        out_specs=pl.BlockSpec((tm, D), lambda i: (i, 0)),
        compiler_params=pltpu.CompilerParams(dimension_semantics=("parallel",)),
    )(x, gamma.reshape(1, D).astype(jnp.float32), beta.reshape(1, D).astype(jnp.float32))


def conv3_pallas(x, w, b, *, stride, tt_target=256, tn_target=256):
    """Temporal conv (kernel=3, padding=1, stride 1 or 2) + bias + gelu.

    The 3 taps are materialized as shifted/strided copies of the padded input at the XLA level
    (a few MB -- negligible next to the matmul traffic) so that the Pallas kernel is just 3
    time-tiled MXU matmuls with contiguous (1, tt, Cin) blocks: no whole-T VMEM blocks, no
    shifted value slices that cross (8,128) tiles, and enough grid steps to pipeline / shard.
    Grid = (batch, time tile, Cout tile).
    """
    B, T, Cin = x.shape
    k3, Cin2, Cout = w.shape
    assert k3 == 3 and Cin2 == Cin and stride in (1, 2)
    T_out = T if stride == 1 else (T - 1) // 2 + 1

    xp = jnp.pad(x, ((0, 0), (1, 1), (0, 0)))
    taps = [xp[:, k::stride, :][:, :T_out, :] for k in range(3)]    # out[t] = sum_k tap_k[t]@w[k]

    # time tiling; pad T_out so a clean multiple-of-8 time tile always exists
    if T_out <= tt_target:
        tt, T_pad = T_out, T_out
    else:
        tt = max(8, (tt_target // 8) * 8)
        T_pad = _round_up(T_out, tt)
    if T_pad != T_out:
        taps = [jnp.pad(tp, ((0, 0), (0, T_pad - T_out), (0, 0))) for tp in taps]

    tn = _pick_tile(Cout, tn_target, 128)
    grid = (B, T_pad // tt, Cout // tn)
    b2 = b.reshape(1, Cout).astype(jnp.float32)

    def kernel(x0_ref, x1_ref, x2_ref, w_ref, b_ref, o_ref):
        acc = jnp.dot(x0_ref[0], w_ref[0], preferred_element_type=jnp.float32)
        acc += jnp.dot(x1_ref[0], w_ref[1], preferred_element_type=jnp.float32)
        acc += jnp.dot(x2_ref[0], w_ref[2], preferred_element_type=jnp.float32)
        o_ref[0] = _gelu(acc + b_ref[...]).astype(o_ref.dtype)

    tap_spec = pl.BlockSpec((1, tt, Cin), lambda bi, ti, ci: (bi, ti, 0))
    in_specs = [tap_spec, tap_spec, tap_spec,
                pl.BlockSpec((3, Cin, tn), lambda bi, ti, ci: (0, 0, ci)),
                pl.BlockSpec((1, tn), lambda bi, ti, ci: (0, ci))]

    cost = pl.CostEstimate(
        flops=2 * 3 * B * T_pad * Cin * Cout,
        transcendentals=B * T_pad * Cout,
        bytes_accessed=(3 * B * T_pad * Cin * (Cout // tn) + 3 * Cin * Cout * (T_pad // tt)
                        + B * T_pad * Cout) * jnp.dtype(x.dtype).itemsize)

    out = pl.pallas_call(
        kernel,
        out_shape=jax.ShapeDtypeStruct((B, T_pad, Cout), x.dtype),
        grid=grid,
        in_specs=in_specs,
        out_specs=pl.BlockSpec((1, tt, tn), lambda bi, ti, ci: (bi, ti, ci)),
        compiler_params=pltpu.CompilerParams(
            dimension_semantics=("parallel", "parallel", "parallel")),
        cost_estimate=cost,
    )(*taps, w, b2)
    return out if T_pad == T_out else out[:, :T_out, :]


# ------------------------------ param prep & encoder forward ------------------------------


def prepare_params(params, cfg):
    """One-time parameter prep for the Pallas forward:
      * q/k/v projection weights/biases concatenated into a single [D, 3D] / [3D] projection
        (one fused LN+matmul per layer instead of three),
      * 1/sqrt(head_dim) folded into the q weights/bias (softmax is shift/scale invariant)."""
    D, H = cfg['d_model'], cfg['heads']
    scale = 1.0 / math.sqrt(D // H)
    out = {k: v for k, v in params.items() if k != 'layers'}
    out['layers'] = []
    for lp in params['layers']:
        wq = (lp['wq'].astype(jnp.float32) * scale).astype(lp['wq'].dtype)
        bq = lp['bq'].astype(jnp.float32) * scale
        out['layers'].append(dict(
            ln1_g=lp['ln1_g'], ln1_b=lp['ln1_b'],
            wqkv=jnp.concatenate([wq, lp['wk'], lp['wv']], axis=1),
            bqkv=jnp.concatenate([bq, lp['bk'].astype(jnp.float32),
                                  lp['bv'].astype(jnp.float32)]),
            wo=lp['wo'], bo=lp['bo'],
            ln2_g=lp['ln2_g'], ln2_b=lp['ln2_b'],
            w1=lp['w1'], b1=lp['b1'], w2=lp['w2'], b2=lp['b2']))
    return out


def whisper_encoder_forward(input_features, params, cfg, *, tiles=None):
    """input_features: [B, num_mel_bins, T]; `params` must come from prepare_params()."""
    t = dict(tm=768, tn=512, tk=512, tq=256, tt=256)
    if tiles:
        t.update(tiles)
    tile_kw = dict(tm_target=t['tm'], tn_target=t['tn'], tk_target=t['tk'])

    B, _, T = input_features.shape
    D, H = cfg['d_model'], cfg['heads']

    # NCW -> [B, T, C]; activations in bf16 (MXU-native), accumulation in f32.
    x = jnp.transpose(input_features, (0, 2, 1)).astype(jnp.bfloat16)

    # conv1 (k=3, s=1, p=1) + gelu; conv2 (k=3, s=2, p=1) + gelu
    h = conv3_pallas(x, params['conv1_w'], params['conv1_b'], stride=1,
                     tt_target=t['tt'], tn_target=min(t['tn'], 256))
    h = conv3_pallas(h, params['conv2_w'], params['conv2_b'], stride=2,
                     tt_target=t['tt'], tn_target=min(t['tn'], 256))
    T2 = h.shape[1]

    # positional embedding (zeros in the reference module)
    h = h + params['embed_positions'][:, :T2, :].astype(h.dtype)

    # pad time to a TPU-friendly length; padded keys are masked in attention and the
    # padded rows are sliced off at the end.
    Tp = _round_up(T2, 128) if T2 >= 128 else _round_up(T2, 8)
    if Tp != T2:
        h = jnp.pad(h, ((0, 0), (0, Tp - T2), (0, 0)))

    x2 = h.reshape(B * Tp, D)
    for lp in params['layers']:
        # ---- self-attention block (LayerNorm fused into the single QKV projection) ----
        residual = x2
        qkv = linear_pallas(x2, lp['wqkv'], lp['bqkv'],
                            gamma=lp['ln1_g'], beta=lp['ln1_b'], **tile_kw)
        attn = attention_pallas(qkv, batch=B, seq=Tp, heads=H, d_model=D,
                                t_valid=T2, tq_target=t['tq'])
        x2 = linear_pallas(attn, lp['wo'], lp['bo'], residual=residual, **tile_kw)

        # ---- FFN block (LayerNorm fused into fc1, residual fused into fc2) ----
        residual = x2
        y = linear_pallas(x2, lp['w1'], lp['b1'],
                          gamma=lp['ln2_g'], beta=lp['ln2_b'], gelu=True, **tile_kw)
        x2 = linear_pallas(y, lp['w2'], lp['b2'], residual=residual, **tile_kw)

    out = layernorm_pallas(x2, params['lnf_g'], params['lnf_b'], tm_target=t['tm'])
    return out.reshape(B, Tp, D)[:, :T2, :]          # float32, matching mark_output


# ------------------------------ pure-JAX reference ------------------------------


def whisper_encoder_forward_ref(input_features, params, cfg):
    f32 = jnp.float32
    B, _, _ = input_features.shape
    D, H = cfg['d_model'], cfg['heads']
    hd = D // H
    scale = 1.0 / math.sqrt(hd)

    def conv3(x, w, b, stride):
        xp = jnp.pad(x, ((0, 0), (1, 1), (0, 0)))
        T_out = (x.shape[1] - 1) // stride + 1
        y = sum(jnp.einsum('btc,cd->btd',
                           xp[:, kk: kk + stride * (T_out - 1) + 1: stride, :],
                           w[kk].astype(f32)) for kk in range(3))
        return _gelu(y + b.astype(f32))

    def ln(x, g, bb, eps=1e-5):
        m = jnp.mean(x, -1, keepdims=True)
        v2 = jnp.mean((x - m) ** 2, -1, keepdims=True)
        return (x - m) * jax.lax.rsqrt(v2 + eps) * g.astype(f32) + bb.astype(f32)

    x = jnp.transpose(input_features, (0, 2, 1)).astype(f32)
    h = conv3(x, params['conv1_w'], params['conv1_b'], 1)
    h = conv3(h, params['conv2_w'], params['conv2_b'], 2)
    T2 = h.shape[1]
    h = h + params['embed_positions'][:, :T2, :].astype(f32)

    x2 = h.reshape(B * T2, D)
    for lp in params['layers']:
        W = lambda n: lp[n].astype(f32)
        residual = x2
        y = ln(x2, lp['ln1_g'], lp['ln1_b'])
        q = y @ W('wq') + lp['bq']
        k = y @ W('wk') + lp['bk']
        v = y @ W('wv') + lp['bv']
        qh = q.reshape(B, T2, H, hd)
        kh = k.reshape(B, T2, H, hd)
        vh = v.reshape(B, T2, H, hd)
        s = jnp.einsum('bthd,bshd->bhts', qh, kh) * scale
        p = jax.nn.softmax(s, axis=-1)
        attn = jnp.einsum('bhts,bshd->bthd', p, vh).reshape(B * T2, D)
        x2 = attn @ W('wo') + lp['bo'] + residual

        residual = x2
        y = ln(x2, lp['ln2_g'], lp['ln2_b'])
        y = _gelu(y @ W('w1') + lp['b1'])
        x2 = y @ W('w2') + lp['b2'] + residual

    out = ln(x2, params['lnf_g'], params['lnf_b'])
    return out.reshape(B, T2, D)


# ------------------------------ params ------------------------------


def init_params(key, cfg, dtype=jnp.bfloat16):
    D, mel = cfg['d_model'], cfg['num_mel_bins']
    ffn, L, msp = cfg['ffn'], cfg['layers'], cfg['max_source_positions']
    keys = jax.random.split(key, 4 + L)

    def w(k, shape):
        return (0.02 * jax.random.normal(k, shape, jnp.float32)).astype(dtype)

    def bvec(k, shape):
        return 0.02 * jax.random.normal(k, shape, jnp.float32)     # biases kept in f32

    params = dict(
        conv1_w=w(keys[0], (3, mel, D)), conv1_b=bvec(keys[1], (D,)),
        conv2_w=w(keys[2], (3, D, D)), conv2_b=bvec(keys[3], (D,)),
        embed_positions=jnp.zeros((1, msp, D), jnp.float32),
        lnf_g=jnp.ones((D,), jnp.float32), lnf_b=jnp.zeros((D,), jnp.float32),
        layers=[],
    )
    for li in range(L):
        lk = jax.random.split(keys[4 + li], 12)
        params['layers'].append(dict(
            ln1_g=jnp.ones((D,), jnp.float32), ln1_b=jnp.zeros((D,), jnp.float32),
            wq=w(lk[0], (D, D)), bq=bvec(lk[1], (D,)),
            wk=w(lk[2], (D, D)), bk=bvec(lk[3], (D,)),
            wv=w(lk[4], (D, D)), bv=bvec(lk[5], (D,)),
            wo=w(lk[6], (D, D)), bo=bvec(lk[7], (D,)),
            ln2_g=jnp.ones((D,), jnp.float32), ln2_b=jnp.zeros((D,), jnp.float32),
            w1=w(lk[8], (D, ffn)), b1=bvec(lk[9], (ffn,)),
            w2=w(lk[10], (ffn, D)), b2=bvec(lk[11], (D,)),
        ))
    return params


if __name__ == "__main__":
    # Small, shape-consistent config (real Whisper: d_model=512, mel=80, heads=8, ffn=2048,
    # T=3000 -> T_out=1500).  Dims chosen so the single-K and multi-K matmul paths, q tiling,
    # the 256-lane head grouping, conv time tiling and the time padding + key-mask path run.
    cfg = dict(d_model=256, num_mel_bins=16, heads=4, ffn=512, layers=2,
               max_source_positions=14)     # T_out = (T_in - 1)//2 + 1 = 14
    B, T_in = 2, 28

    key = jax.random.PRNGKey(0)
    k_in, k_p = jax.random.split(key)
    input_features = jax.random.normal(k_in, (B, cfg['num_mel_bins'], T_in), jnp.float32)
    input_features = input_features.astype(jnp.bfloat16).astype(jnp.float32)
    params = init_params(k_p, cfg)
    prepped = prepare_params(params, cfg)

    # Small tile targets so every tiled code path is exercised at toy sizes
    # (production defaults are tm=768, tn=tk=512, tq=256, tt=256).
    tiles = dict(tm=16, tn=128, tk=128, tq=8, tt=8)

    fwd = jax.jit(functools.partial(whisper_encoder_forward, cfg=cfg, tiles=tiles))
    out = jax.block_until_ready(fwd(input_features, prepped))

    ref = jax.block_until_ready(whisper_encoder_forward_ref(input_features, params, cfg))

    np.testing.assert_allclose(np.asarray(out, np.float32), np.asarray(ref),
                               rtol=5e-2, atol=5e-2)
    assert out.shape == (B, 14, cfg['d_model'])
    assert out.dtype == jnp.float32
    print("KERNEL_OK")
</pallas_src>

<mosaic_0001>
module attributes {stable_mosaic.version = 11 : i64} {
  func.func @kernel(%arg0: i32, %arg1: i32, %arg2: i32, %arg3: memref<1x8x16xbf16, #tpu.memory_space<vmem>>, %arg4: memref<1x8x16xbf16, #tpu.memory_space<vmem>>, %arg5: memref<1x8x16xbf16, #tpu.memory_space<vmem>>, %arg6: memref<3x16x128xbf16, #tpu.memory_space<vmem>>, %arg7: memref<1x128xf32, #tpu.memory_space<vmem>>, %arg8: memref<1x8x128xbf16, #tpu.memory_space<vmem>>) attributes {dimension_semantics = [#tpu.dimension_semantics<parallel>, #tpu.dimension_semantics<parallel>, #tpu.dimension_semantics<parallel>], iteration_bounds = array<i64: 2, 4, 2>, scalar_prefetch = 0 : i64, scratch_operands = 0 : i64, tpu.core_type = #tpu.core_type<tc>, window_params = [{transform_indices = @transform_0, window_bounds = array<i64: 1, 8, 16>}, {transform_indices = @transform_1, window_bounds = array<i64: 1, 8, 16>}, {transform_indices = @transform_2, window_bounds = array<i64: 1, 8, 16>}, {transform_indices = @transform_3, window_bounds = array<i64: 3, 16, 128>}, {transform_indices = @transform_4, window_bounds = array<i64: 1, 128>}, {transform_indices = @transform_5, window_bounds = array<i64: 1, 8, 128>}]} {
    %c0 = arith.constant 0 : index
    %c0_0 = arith.constant 0 : index
    %c0_1 = arith.constant 0 : index
    %0 = vector.load %arg3[%c0, %c0_0, %c0_1] : memref<1x8x16xbf16, #tpu.memory_space<vmem>>, vector<1x8x16xbf16>
    %1 = vector.shape_cast %0 : vector<1x8x16xbf16> to vector<8x16xbf16>
    %c0_2 = arith.constant 0 : index
    %c0_3 = arith.constant 0 : index
    %c0_4 = arith.constant 0 : index
    %2 = vector.load %arg6[%c0_2, %c0_3, %c0_4] : memref<3x16x128xbf16, #tpu.memory_space<vmem>>, vector<1x16x128xbf16>
    %3 = vector.shape_cast %2 : vector<1x16x128xbf16> to vector<16x128xbf16>
    %cst = arith.constant dense<0.000000e+00> : vector<8x128xf32>
    %4 = tpu.matmul %1, %3, %cst {dimension_numbers = #tpu.dot_dimension_numbers<[1], [0], [0], [1], [0, 0, 1, 1], [], []>} : vector<8x16xbf16>, vector<16x128xbf16>, vector<8x128xf32> -> vector<8x128xf32>
    %c0_5 = arith.constant 0 : index
    %c0_6 = arith.constant 0 : index
    %c0_7 = arith.constant 0 : index
    %5 = vector.load %arg4[%c0_5, %c0_6, %c0_7] : memref<1x8x16xbf16, #tpu.memory_space<vmem>>, vector<1x8x16xbf16>
    %6 = vector.shape_cast %5 : vector<1x8x16xbf16> to vector<8x16xbf16>
    %c1 = arith.constant 1 : index
    %c0_8 = arith.constant 0 : index
    %c0_9 = arith.constant 0 : index
    %7 = vector.load %arg6[%c1, %c0_8, %c0_9] : memref<3x16x128xbf16, #tpu.memory_space<vmem>>, vector<1x16x128xbf16>
    %8 = vector.shape_cast %7 : vector<1x16x128xbf16> to vector<16x128xbf16>
    %cst_10 = arith.constant dense<0.000000e+00> : vector<8x128xf32>
    %9 = tpu.matmul %6, %8, %cst_10 {dimension_numbers = #tpu.dot_dimension_numbers<[1], [0], [0], [1], [0, 0, 1, 1], [], []>} : vector<8x16xbf16>, vector<16x128xbf16>, vector<8x128xf32> -> vector<8x128xf32>
    %10 = arith.addf %4, %9 : vector<8x128xf32>
    %c0_11 = arith.constant 0 : index
    %c0_12 = arith.constant 0 : index
    %c0_13 = arith.constant 0 : index
    %11 = vector.load %arg5[%c0_11, %c0_12, %c0_13] : memref<1x8x16xbf16, #tpu.memory_space<vmem>>, vector<1x8x16xbf16>
    %12 = vector.shape_cast %11 : vector<1x8x16xbf16> to vector<8x16xbf16>
    %c2 = arith.constant 2 : index
    %c0_14 = arith.constant 0 : index
    %c0_15 = arith.constant 0 : index
    %13 = vector.load %arg6[%c2, %c0_14, %c0_15] : memref<3x16x128xbf16, #tpu.memory_space<vmem>>, vector<1x16x128xbf16>
    %14 = vector.shape_cast %13 : vector<1x16x128xbf16> to vector<16x128xbf16>
    %cst_16 = arith.constant dense<0.000000e+00> : vector<8x128xf32>
    %15 = tpu.matmul %12, %14, %cst_16 {dimension_numbers = #tpu.dot_dimension_numbers<[1], [0], [0], [1], [0, 0, 1, 1], [], []>} : vector<8x16xbf16>, vector<16x128xbf16>, vector<8x128xf32> -> vector<8x128xf32>
    %16 = arith.addf %10, %15 : vector<8x128xf32>
    %c0_17 = arith.constant 0 : index
    %c0_18 = arith.constant 0 : index
    %17 = vector.load %arg7[%c0_17, %c0_18] : memref<1x128xf32, #tpu.memory_space<vmem>>, vector<1x128xf32>
    %18 = vector.broadcast %17 : vector<1x128xf32> to vector<8x128xf32>
    %19 = arith.addf %16, %18 : vector<8x128xf32>
    %cst_19 = arith.constant 5.000000e-01 : f32
    %20 = vector.broadcast %cst_19 : f32 to vector<8x128xf32>
    %21 = arith.mulf %20, %19 : vector<8x128xf32>
    %cst_20 = arith.constant 4.471500e-02 : f32
    %22 = vector.broadcast %cst_20 : f32 to vector<8x128xf32>
    %23 = arith.mulf %22, %19 : vector<8x128xf32>
    %24 = arith.mulf %23, %19 : vector<8x128xf32>
    %25 = arith.mulf %24, %19 : vector<8x128xf32>
    %26 = arith.addf %19, %25 : vector<8x128xf32>
    %cst_21 = arith.constant 0.797884583 : f32
    %27 = vector.broadcast %cst_21 : f32 to vector<8x128xf32>
    %28 = arith.mulf %27, %26 : vector<8x128xf32>
    %29 = math.tanh %28 : vector<8x128xf32>
    %cst_22 = arith.constant 1.000000e+00 : f32
    %30 = vector.broadcast %cst_22 : f32 to vector<8x128xf32>
    %31 = arith.addf %30, %29 : vector<8x128xf32>
    %32 = arith.mulf %21, %31 : vector<8x128xf32>
    %33 = arith.truncf %32 : vector<8x128xf32> to vector<8x128xbf16>
    %c0_23 = arith.constant 0 : index
    %c0_24 = arith.constant 0 : index
    %c0_25 = arith.constant 0 : index
    %34 = vector.load %arg8[%c0_23, %c0_24, %c0_25] : memref<1x8x128xbf16, #tpu.memory_space<vmem>>, vector<1x8x128xbf16>
    %35 = vector.shape_cast %34 : vector<1x8x128xbf16> to vector<8x128xbf16>
    %36 = vector.shape_cast %33 : vector<8x128xbf16> to vector<1x8x128xbf16>
    tpu.vector_store %arg8[%c0_23, %c0_24, %c0_25], %36 {strides = array<i32>} : memref<1x8x128xbf16, #tpu.memory_space<vmem>>, vector<1x8x128xbf16>,
    return
  }
  func.func @transform_0(%arg0: i32, %arg1: i32, %arg2: i32) -> (i32, i32, i32) {
    %c0_i32 = arith.constant 0 : i32
    %c0_i32_0 = arith.constant 0 : i32
    return %arg0, %arg1, %c0_i32 : i32, i32, i32
  }
  func.func @transform_1(%arg0: i32, %arg1: i32, %arg2: i32) -> (i32, i32, i32) {
    %c0_i32 = arith.constant 0 : i32
    %c0_i32_0 = arith.constant 0 : i32
    return %arg0, %arg1, %c0_i32 : i32, i32, i32
  }
  func.func @transform_2(%arg0: i32, %arg1: i32, %arg2: i32) -> (i32, i32, i32) {
    %c0_i32 = arith.constant 0 : i32
    %c0_i32_0 = arith.constant 0 : i32
    return %arg0, %arg1, %c0_i32 : i32, i32, i32
  }
  func.func @transform_3(%arg0: i32, %arg1: i32, %arg2: i32) -> (i32, i32, i32) {
    %c0_i32 = arith.constant 0 : i32
    %c0_i32_0 = arith.constant 0 : i32
    %c0_i32_1 = arith.constant 0 : i32
    return %c0_i32, %c0_i32_0, %arg2 : i32, i32, i32
  }
  func.func @transform_4(%arg0: i32, %arg1: i32, %arg2: i32) -> (i32, i32) {
    %c0_i32 = arith.constant 0 : i32
    %c0_i32_0 = arith.constant 0 : i32
    return %c0_i32, %arg2 : i32, i32
  }
  func.func @transform_5(%arg0: i32, %arg1: i32, %arg2: i32) -> (i32, i32, i32) {
    %c0_i32 = arith.constant 0 : i32
    return %arg0, %arg1, %arg2 : i32, i32, i32
  }
}

module attributes {stable_mosaic.version = 11 : i64} {
  func.func @kernel(%arg0: i32, %arg1: i32, %arg2: i32, %arg3: memref<1x8x256xbf16, #tpu.memory_space<vmem>>, %arg4: memref<1x8x256xbf16, #tpu.memory_space<vmem>>, %arg5: memref<1x8x256xbf16, #tpu.memory_space<vmem>>, %arg6: memref<3x256x128xbf16, #tpu.memory_space<vmem>>, %arg7: memref<1x128xf32, #tpu.memory_space<vmem>>, %arg8: memref<1x8x128xbf16, #tpu.memory_space<vmem>>) attributes {dimension_semantics = [#tpu.dimension_semantics<parallel>, #tpu.dimension_semantics<parallel>, #tpu.dimension_semantics<parallel>], iteration_bounds = array<i64: 2, 2, 2>, scalar_prefetch = 0 : i64, scratch_operands = 0 : i64, tpu.core_type = #tpu.core_type<tc>, window_params = [{transform_indices = @transform_0, window_bounds = array<i64: 1, 8, 256>}, {transform_indices = @transform_1, window_bounds = array<i64: 1, 8, 256>}, {transform_indices = @transform_2, window_bounds = array<i64: 1, 8, 256>}, {transform_indices = @transform_3, window_bounds = array<i64: 3, 256, 128>}, {transform_indices = @transform_4, window_bounds = array<i64: 1, 128>}, {transform_indices = @transform_5, window_bounds = array<i64: 1, 8, 128>}]} {
    %c0 = arith.constant 0 : index
    %c0_0 = arith.constant 0 : index
    %c0_1 = arith.constant 0 : index
    %0 = vector.load %arg3[%c0, %c0_0, %c0_1] : memref<1x8x256xbf16, #tpu.memory_space<vmem>>, vector<1x8x256xbf16>
    %1 = vector.shape_cast %0 : vector<1x8x256xbf16> to vector<8x256xbf16>
    %c0_2 = arith.constant 0 : index
    %c0_3 = arith.constant 0 : index
    %c0_4 = arith.constant 0 : index
    %2 = vector.load %arg6[%c0_2, %c0_3, %c0_4] : memref<3x256x128xbf16, #tpu.memory_space<vmem>>, vector<1x256x128xbf16>
    %3 = vector.shape_cast %2 : vector<1x256x128xbf16> to vector<256x128xbf16>
    %cst = arith.constant dense<0.000000e+00> : vector<8x128xf32>
    %4 = tpu.matmul %1, %3, %cst {dimension_numbers = #tpu.dot_dimension_numbers<[1], [0], [0], [1], [0, 0, 1, 1], [], []>} : vector<8x256xbf16>, vector<256x128xbf16>, vector<8x128xf32> -> vector<8x128xf32>
    %c0_5 = arith.constant 0 : index
    %c0_6 = arith.constant 0 : index
    %c0_7 = arith.constant 0 : index
    %5 = vector.load %arg4[%c0_5, %c0_6, %c0_7] : memref<1x8x256xbf16, #tpu.memory_space<vmem>>, vector<1x8x256xbf16>
    %6 = vector.shape_cast %5 : vector<1x8x256xbf16> to vector<8x256xbf16>
    %c1 = arith.constant 1 : index
    %c0_8 = arith.constant 0 : index
    %c0_9 = arith.constant 0 : index
    %7 = vector.load %arg6[%c1, %c0_8, %c0_9] : memref<3x256x128xbf16, #tpu.memory_space<vmem>>, vector<1x256x128xbf16>
    %8 = vector.shape_cast %7 : vector<1x256x128xbf16> to vector<256x128xbf16>
    %cst_10 = arith.constant dense<0.000000e+00> : vector<8x128xf32>
    %9 = tpu.matmul %6, %8, %cst_10 {dimension_numbers = #tpu.dot_dimension_numbers<[1], [0], [0], [1], [0, 0, 1, 1], [], []>} : vector<8x256xbf16>, vector<256x128xbf16>, vector<8x128xf32> -> vector<8x128xf32>
    %10 = arith.addf %4, %9 : vector<8x128xf32>
    %c0_11 = arith.constant 0 : index
    %c0_12 = arith.constant 0 : index
    %c0_13 = arith.constant 0 : index
    %11 = vector.load %arg5[%c0_11, %c0_12, %c0_13] : memref<1x8x256xbf16, #tpu.memory_space<vmem>>, vector<1x8x256xbf16>
    %12 = vector.shape_cast %11 : vector<1x8x256xbf16> to vector<8x256xbf16>
    %c2 = arith.constant 2 : index
    %c0_14 = arith.constant 0 : index
    %c0_15 = arith.constant 0 : index
    %13 = vector.load %arg6[%c2, %c0_14, %c0_15] : memref<3x256x128xbf16, #tpu.memory_space<vmem>>, vector<1x256x128xbf16>
    %14 = vector.shape_cast %13 : vector<1x256x128xbf16> to vector<256x128xbf16>
    %cst_16 = arith.constant dense<0.000000e+00> : vector<8x128xf32>
    %15 = tpu.matmul %12, %14, %cst_16 {dimension_numbers = #tpu.dot_dimension_numbers<[1], [0], [0], [1], [0, 0, 1, 1], [], []>} : vector<8x256xbf16>, vector<256x128xbf16>, vector<8x128xf32> -> vector<8x128xf32>
    %16 = arith.addf %10, %15 : vector<8x128xf32>
    %c0_17 = arith.constant 0 : index
    %c0_18 = arith.constant 0 : index
    %17 = vector.load %arg7[%c0_17, %c0_18] : memref<1x128xf32, #tpu.memory_space<vmem>>, vector<1x128xf32>
    %18 = vector.broadcast %17 : vector<1x128xf32> to vector<8x128xf32>
    %19 = arith.addf %16, %18 : vector<8x128xf32>
    %cst_19 = arith.constant 5.000000e-01 : f32
    %20 = vector.broadcast %cst_19 : f32 to vector<8x128xf32>
    %21 = arith.mulf %20, %19 : vector<8x128xf32>
    %cst_20 = arith.constant 4.471500e-02 : f32
    %22 = vector.broadcast %cst_20 : f32 to vector<8x128xf32>
    %23 = arith.mulf %22, %19 : vector<8x128xf32>
    %24 = arith.mulf %23, %19 : vector<8x128xf32>
    %25 = arith.mulf %24, %19 : vector<8x128xf32>
    %26 = arith.addf %19, %25 : vector<8x128xf32>
    %cst_21 = arith.constant 0.797884583 : f32
    %27 = vector.broadcast %cst_21 : f32 to vector<8x128xf32>
    %28 = arith.mulf %27, %26 : vector<8x128xf32>
    %29 = math.tanh %28 : vector<8x128xf32>
    %cst_22 = arith.constant 1.000000e+00 : f32
    %30 = vector.broadcast %cst_22 : f32 to vector<8x128xf32>
    %31 = arith.addf %30, %29 : vector<8x128xf32>
    %32 = arith.mulf %21, %31 : vector<8x128xf32>
    %33 = arith.truncf %32 : vector<8x128xf32> to vector<8x128xbf16>
    %c0_23 = arith.constant 0 : index
    %c0_24 = arith.constant 0 : index
    %c0_25 = arith.constant 0 : index
    %34 = vector.load %arg8[%c0_23, %c0_24, %c0_25] : memref<1x8x128xbf16, #tpu.memory_space<vmem>>, vector<1x8x128xbf16>
    %35 = vector.shape_cast %34 : vector<1x8x128xbf16> to vector<8x128xbf16>
    %36 = vector.shape_cast %33 : vector<8x128xbf16> to vector<1x8x128xbf16>
    tpu.vector_store %arg8[%c0_23, %c0_24, %c0_25], %36 {strides = array<i32>} : memref<1x8x128xbf16, #tpu.memory_space<vmem>>, vector<1x8x128xbf16>,
    return
  }
  func.func @transform_0(%arg0: i32, %arg1: i32, %arg2: i32) -> (i32, i32, i32) {
    %c0_i32 = arith.constant 0 : i32
    %c0_i32_0 = arith.constant 0 : i32
    return %arg0, %arg1, %c0_i32 : i32, i32, i32
  }
  func.func @transform_1(%arg0: i32, %arg1: i32, %arg2: i32) -> (i32, i32, i32) {
    %c0_i32 = arith.constant 0 : i32
    %c0_i32_0 = arith.constant 0 : i32
    return %arg0, %arg1, %c0_i32 : i32, i32, i32
  }
  func.func @transform_2(%arg0: i32, %arg1: i32, %arg2: i32) -> (i32, i32, i32) {
    %c0_i32 = arith.constant 0 : i32
    %c0_i32_0 = arith.constant 0 : i32
    return %arg0, %arg1, %c0_i32 : i32, i32, i32
  }
  func.func @transform_3(%arg0: i32, %arg1: i32, %arg2: i32) -> (i32, i32, i32) {
    %c0_i32 = arith.constant 0 : i32
    %c0_i32_0 = arith.constant 0 : i32
    %c0_i32_1 = arith.constant 0 : i32
    return %c0_i32, %c0_i32_0, %arg2 : i32, i32, i32
  }
  func.func @transform_4(%arg0: i32, %arg1: i32, %arg2: i32) -> (i32, i32) {
    %c0_i32 = arith.constant 0 : i32
    %c0_i32_0 = arith.constant 0 : i32
    return %c0_i32, %arg2 : i32, i32
  }
  func.func @transform_5(%arg0: i32, %arg1: i32, %arg2: i32) -> (i32, i32, i32) {
    %c0_i32 = arith.constant 0 : i32
    return %arg0, %arg1, %arg2 : i32, i32, i32
  }
}

module attributes {stable_mosaic.version = 11 : i64} {
  func.func @kernel(%arg0: i32, %arg1: i32, %arg2: i32, %arg3: memref<8x256xbf16, #tpu.memory_space<vmem>>, %arg4: memref<16x256xbf16, #tpu.memory_space<vmem>>, %arg5: memref<16x256xbf16, #tpu.memory_space<vmem>>, %arg6: memref<8x256xbf16, #tpu.memory_space<vmem>>) attributes {dimension_semantics = [#tpu.dimension_semantics<parallel>, #tpu.dimension_semantics<parallel>, #tpu.dimension_semantics<parallel>], iteration_bounds = array<i64: 2, 1, 2>, scalar_prefetch = 0 : i64, scratch_operands = 0 : i64, tpu.core_type = #tpu.core_type<tc>, window_params = [{transform_indices = @transform_0, window_bounds = array<i64: 8, 256>}, {transform_indices = @transform_1, window_bounds = array<i64: 16, 256>}, {transform_indices = @transform_2, window_bounds = array<i64: 16, 256>}, {transform_indices = @transform_3, window_bounds = array<i64: 8, 256>}]} {
    %c0 = arith.constant 0 : index
    %c0_0 = arith.constant 0 : index
    %0 = vector.load %arg3[%c0, %c0_0] : memref<8x256xbf16, #tpu.memory_space<vmem>>, vector<8x256xbf16>
    %c0_1 = arith.constant 0 : index
    %c0_2 = arith.constant 0 : index
    %1 = vector.load %arg4[%c0_1, %c0_2] : memref<16x256xbf16, #tpu.memory_space<vmem>>, vector<16x256xbf16>
    %c0_3 = arith.constant 0 : index
    %c0_4 = arith.constant 0 : index
    %2 = vector.load %arg5[%c0_3, %c0_4] : memref<16x256xbf16, #tpu.memory_space<vmem>>, vector<16x256xbf16>
    %3 = tpu.iota {dimensions = array<i32: 1>} : vector<1x16xi32>
    %c14_i32 = arith.constant 14 : i32
    %4 = vector.broadcast %c14_i32 : i32 to vector<1x16xi32>
    %5 = arith.cmpi slt, %3, %4 : vector<1x16xi32>
    %cst = arith.constant 0.000000e+00 : f32
    %cst_5 = arith.constant -1.000000e+30 : f32
    %6 = vector.broadcast %cst : f32 to vector<1x16xf32>
    %7 = vector.broadcast %cst_5 : f32 to vector<1x16xf32>
    %8 = arith.select %5, %6, %7 : vector<1x16xi1>, vector<1x16xf32>
    %9 = vector.extract_strided_slice %0 {offsets = [0, 0], sizes = [8, 64], strides = [1, 1]} : vector<8x256xbf16> to vector<8x64xbf16>
    %10 = vector.extract_strided_slice %1 {offsets = [0, 0], sizes = [16, 64], strides = [1, 1]} : vector<16x256xbf16> to vector<16x64xbf16>
    %cst_6 = arith.constant dense<0.000000e+00> : vector<8x16xf32>
    %11 = tpu.matmul %9, %10, %cst_6 {dimension_numbers = #tpu.dot_dimension_numbers<[1], [1], [0], [0], [0, 0, 1, 0], [], []>} : vector<8x64xbf16>, vector<16x64xbf16>, vector<8x16xf32> -> vector<8x16xf32>
    %12 = vector.broadcast %8 : vector<1x16xf32> to vector<8x16xf32>
    %13 = arith.addf %11, %12 : vector<8x16xf32>
    %cst_7 = arith.constant dense<0xFF800000> : vector<8xf32>
    %14 = vector.multi_reduction <maximumf>, %13, %cst_7 [1] : vector<8x16xf32> to vector<8xf32>
    %15 = vector.shape_cast %14 : vector<8xf32> to vector<8x1xf32>
    %16 = vector.broadcast %15 : vector<8x1xf32> to vector<8x16xf32>
    %17 = arith.subf %13, %16 : vector<8x16xf32>
    %18 = math.exp %17 : vector<8x16xf32>
    %cst_8 = arith.constant dense<0.000000e+00> : vector<8xf32>
    %19 = vector.multi_reduction <add>, %18, %cst_8 [1] : vector<8x16xf32> to vector<8xf32>
    %20 = vector.shape_cast %19 : vector<8xf32> to vector<8x1xf32>
    %21 = arith.truncf %18 : vector<8x16xf32> to vector<8x16xbf16>
    %22 = vector.extract_strided_slice %2 {offsets = [0, 0], sizes = [16, 64], strides = [1, 1]} : vector<16x256xbf16> to vector<16x64xbf16>
    %cst_9 = arith.constant dense<0.000000e+00> : vector<8x64xf32>
    %23 = tpu.matmul %21, %22, %cst_9 {dimension_numbers = #tpu.dot_dimension_numbers<[1], [0], [0], [1], [0, 0, 1, 1], [], []>} : vector<8x16xbf16>, vector<16x64xbf16>, vector<8x64xf32> -> vector<8x64xf32>
    %24 = tpu.reciprocal %20 {approx = true} : vector<8x1xf32> -> vector<8x1xf32>
    %25 = vector.broadcast %24 : vector<8x1xf32> to vector<8x64xf32>
    %26 = arith.mulf %23, %25 : vector<8x64xf32>
    %27 = vector.extract_strided_slice %0 {offsets = [0, 64], sizes = [8, 64], strides = [1, 1]} : vector<8x256xbf16> to vector<8x64xbf16>
    %28 = vector.extract_strided_slice %1 {offsets = [0, 64], sizes = [16, 64], strides = [1, 1]} : vector<16x256xbf16> to vector<16x64xbf16>
    %cst_10 = arith.constant dense<0.000000e+00> : vector<8x16xf32>
    %29 = tpu.matmul %27, %28, %cst_10 {dimension_numbers = #tpu.dot_dimension_numbers<[1], [1], [0], [0], [0, 0, 1, 0], [], []>} : vector<8x64xbf16>, vector<16x64xbf16>, vector<8x16xf32> -> vector<8x16xf32>
    %30 = vector.broadcast %8 : vector<1x16xf32> to vector<8x16xf32>
    %31 = arith.addf %29, %30 : vector<8x16xf32>
    %cst_11 = arith.constant dense<0xFF800000> : vector<8xf32>
    %32 = vector.multi_reduction <maximumf>, %31, %cst_11 [1] : vector<8x16xf32> to vector<8xf32>
    %33 = vector.shape_cast %32 : vector<8xf32> to vector<8x1xf32>
    %34 = vector.broadcast %33 : vector<8x1xf32> to vector<8x16xf32>
    %35 = arith.subf %31, %34 : vector<8x16xf32>
    %36 = math.exp %35 : vector<8x16xf32>
    %cst_12 = arith.constant dense<0.000000e+00> : vector<8xf32>
    %37 = vector.multi_reduction <add>, %36, %cst_12 [1] : vector<8x16xf32> to vector<8xf32>
    %38 = vector.shape_cast %37 : vector<8xf32> to vector<8x1xf32>
    %39 = arith.truncf %36 : vector<8x16xf32> to vector<8x16xbf16>
    %40 = vector.extract_strided_slice %2 {offsets = [0, 64], sizes = [16, 64], strides = [1, 1]} : vector<16x256xbf16> to vector<16x64xbf16>
    %cst_13 = arith.constant dense<0.000000e+00> : vector<8x64xf32>
    %41 = tpu.matmul %39, %40, %cst_13 {dimension_numbers = #tpu.dot_dimension_numbers<[1], [0], [0], [1], [0, 0, 1, 1], [], []>} : vector<8x16xbf16>, vector<16x64xbf16>, vector<8x64xf32> -> vector<8x64xf32>
    %42 = tpu.reciprocal %38 {approx = true} : vector<8x1xf32> -> vector<8x1xf32>
    %43 = vector.broadcast %42 : vector<8x1xf32> to vector<8x64xf32>
    %44 = arith.mulf %41, %43 : vector<8x64xf32>
    %45 = vector.extract_strided_slice %0 {offsets = [0, 128], sizes = [8, 64], strides = [1, 1]} : vector<8x256xbf16> to vector<8x64xbf16>
    %46 = vector.extract_strided_slice %1 {offsets = [0, 128], sizes = [16, 64], strides = [1, 1]} : vector<16x256xbf16> to vector<16x64xbf16>
    %cst_14 = arith.constant dense<0.000000e+00> : vector<8x16xf32>
    %47 = tpu.matmul %45, %46, %cst_14 {dimension_numbers = #tpu.dot_dimension_numbers<[1], [1], [0], [0], [0, 0, 1, 0], [], []>} : vector<8x64xbf16>, vector<16x64xbf16>, vector<8x16xf32> -> vector<8x16xf32>
    %48 = vector.broadcast %8 : vector<1x16xf32> to vector<8x16xf32>
    %49 = arith.addf %47, %48 : vector<8x16xf32>
    %cst_15 = arith.constant dense<0xFF800000> : vector<8xf32>
    %50 = vector.multi_reduction <maximumf>, %49, %cst_15 [1] : vector<8x16xf32> to vector<8xf32>
    %51 = vector.shape_cast %50 : vector<8xf32> to vector<8x1xf32>
    %52 = vector.broadcast %51 : vector<8x1xf32> to vector<8x16xf32>
    %53 = arith.subf %49, %52 : vector<8x16xf32>
    %54 = math.exp %53 : vector<8x16xf32>
    %cst_16 = arith.constant dense<0.000000e+00> : vector<8xf32>
    %55 = vector.multi_reduction <add>, %54, %cst_16 [1] : vector<8x16xf32> to vector<8xf32>
    %56 = vector.shape_cast %55 : vector<8xf32> to vector<8x1xf32>
    %57 = arith.truncf %54 : vector<8x16xf32> to vector<8x16xbf16>
    %58 = vector.extract_strided_slice %2 {offsets = [0, 128], sizes = [16, 64], strides = [1, 1]} : vector<16x256xbf16> to vector<16x64xbf16>
    %cst_17 = arith.constant dense<0.000000e+00> : vector<8x64xf32>
    %59 = tpu.matmul %57, %58, %cst_17 {dimension_numbers = #tpu.dot_dimension_numbers<[1], [0], [0], [1], [0, 0, 1, 1], [], []>} : vector<8x16xbf16>, vector<16x64xbf16>, vector<8x64xf32> -> vector<8x64xf32>
    %60 = tpu.reciprocal %56 {approx = true} : vector<8x1xf32> -> vector<8x1xf32>
    %61 = vector.broadcast %60 : vector<8x1xf32> to vector<8x64xf32>
    %62 = arith.mulf %59, %61 : vector<8x64xf32>
    %63 = vector.extract_strided_slice %0 {offsets = [0, 192], sizes = [8, 64], strides = [1, 1]} : vector<8x256xbf16> to vector<8x64xbf16>
    %64 = vector.extract_strided_slice %1 {offsets = [0, 192], sizes = [16, 64], strides = [1, 1]} : vector<16x256xbf16> to vector<16x64xbf16>
    %cst_18 = arith.constant dense<0.000000e+00> : vector<8x16xf32>
    %65 = tpu.matmul %63, %64, %cst_18 {dimension_numbers = #tpu.dot_dimension_numbers<[1], [1], [0], [0], [0, 0, 1, 0], [], []>} : vector<8x64xbf16>, vector<16x64xbf16>, vector<8x16xf32> -> vector<8x16xf32>
    %66 = vector.broadcast %8 : vector<1x16xf32> to vector<8x16xf32>
    %67 = arith.addf %65, %66 : vector<8x16xf32>
    %cst_19 = arith.constant dense<0xFF800000> : vector<8xf32>
    %68 = vector.multi_reduction <maximumf>, %67, %cst_19 [1] : vector<8x16xf32> to vector<8xf32>
    %69 = vector.shape_cast %68 : vector<8xf32> to vector<8x1xf32>
    %70 = vector.broadcast %69 : vector<8x1xf32> to vector<8x16xf32>
    %71 = arith.subf %67, %70 : vector<8x16xf32>
    %72 = math.exp %71 : vector<8x16xf32>
    %cst_20 = arith.constant dense<0.000000e+00> : vector<8xf32>
    %73 = vector.multi_reduction <add>, %72, %cst_20 [1] : vector<8x16xf32> to vector<8xf32>
    %74 = vector.shape_cast %73 : vector<8xf32> to vector<8x1xf32>
    %75 = arith.truncf %72 : vector<8x16xf32> to vector<8x16xbf16>
    %76 = vector.extract_strided_slice %2 {offsets = [0, 192], sizes = [16, 64], strides = [1, 1]} : vector<16x256xbf16> to vector<16x64xbf16>
    %cst_21 = arith.constant dense<0.000000e+00> : vector<8x64xf32>
    %77 = tpu.matmul %75, %76, %cst_21 {dimension_numbers = #tpu.dot_dimension_numbers<[1], [0], [0], [1], [0, 0, 1, 1], [], []>} : vector<8x16xbf16>, vector<16x64xbf16>, vector<8x64xf32> -> vector<8x64xf32>
    %78 = tpu.reciprocal %74 {approx = true} : vector<8x1xf32> -> vector<8x1xf32>
    %79 = vector.broadcast %78 : vector<8x1xf32> to vector<8x64xf32>
    %80 = arith.mulf %77, %79 : vector<8x64xf32>
    %81 = tpu.concatenate %26, %44, %62, %80 in 1 : vector<8x64xf32>, vector<8x64xf32>, vector<8x64xf32>, vector<8x64xf32> -> vector<8x256xf32>
    %82 = arith.truncf %81 : vector<8x256xf32> to vector<8x256xbf16>
    %c0_22 = arith.constant 0 : index
    %c0_23 = arith.constant 0 : index
    %83 = vector.load %arg6[%c0_22, %c0_23] : memref<8x256xbf16, #tpu.memory_space<vmem>>, vector<8x256xbf16>
    tpu.vector_store %arg6[%c0_22, %c0_23], %82 {strides = array<i32>} : memref<8x256xbf16, #tpu.memory_space<vmem>>, vector<8x256xbf16>,
    return
  }
  func.func @transform_0(%arg0: i32, %arg1: i32, %arg2: i32) -> (i32, i32) {
    %c2_i32 = arith.constant 2 : i32
    %0 = arith.muli %arg0, %c2_i32 : i32
    %1 = arith.addi %0, %arg2 : i32
    %c0_i32 = arith.constant 0 : i32
    return %1, %arg1 : i32, i32
  }
  func.func @transform_1(%arg0: i32, %arg1: i32, %arg2: i32) -> (i32, i32) {
    %c1_i32 = arith.constant 1 : i32
    %0 = arith.addi %c1_i32, %arg1 : i32
    %c0_i32 = arith.constant 0 : i32
    return %arg0, %0 : i32, i32
  }
  func.func @transform_2(%arg0: i32, %arg1: i32, %arg2: i32) -> (i32, i32) {
    %c2_i32 = arith.constant 2 : i32
    %0 = arith.addi %c2_i32, %arg1 : i32
    %c0_i32 = arith.constant 0 : i32
    return %arg0, %0 : i32, i32
  }
  func.func @transform_3(%arg0: i32, %arg1: i32, %arg2: i32) -> (i32, i32) {
    %c2_i32 = arith.constant 2 : i32
    %0 = arith.muli %arg0, %c2_i32 : i32
    %1 = arith.addi %0, %arg2 : i32
    %c0_i32 = arith.constant 0 : i32
    return %1, %arg1 : i32, i32
  }
}

module attributes {stable_mosaic.version = 11 : i64} {
  func.func @kernel(%arg0: i32, %arg1: i32, %arg2: memref<16x256xbf16, #tpu.memory_space<vmem>>, %arg3: memref<256x128xbf16, #tpu.memory_space<vmem>>, %arg4: memref<1x128xf32, #tpu.memory_space<vmem>>, %arg5: memref<1x256xf32, #tpu.memory_space<vmem>>, %arg6: memref<1x256xf32, #tpu.memory_space<vmem>>, %arg7: memref<16x128xbf16, #tpu.memory_space<vmem>>) attributes {dimension_semantics = [#tpu.dimension_semantics<parallel>, #tpu.dimension_semantics<parallel>], iteration_bounds = array<i64: 2, 6>, scalar_prefetch = 0 : i64, scratch_operands = 0 : i64, tpu.core_type = #tpu.core_type<tc>, window_params = [{transform_indices = @transform_0, window_bounds = array<i64: 16, 256>}, {transform_indices = @transform_1, window_bounds = array<i64: 256, 128>}, {transform_indices = @transform_2, window_bounds = array<i64: 1, 128>}, {pipeline_mode = #tpu.pipeline_mode<synchronous>, transform_indices = @transform_3, window_bounds = array<i64: 1, 256>}, {pipeline_mode = #tpu.pipeline_mode<synchronous>, transform_indices = @transform_4, window_bounds = array<i64: 1, 256>}, {transform_indices = @transform_5, window_bounds = array<i64: 16, 128>}]} {
    %c0 = arith.constant 0 : index
    %c0_0 = arith.constant 0 : index
    %0 = vector.load %arg2[%c0, %c0_0] : memref<16x256xbf16, #tpu.memory_space<vmem>>, vector<16x256xbf16>
    %1 = arith.extf %0 : vector<16x256xbf16> to vector<16x256xf32>
    %cst = arith.constant dense<0.000000e+00> : vector<16xf32>
    %2 = vector.multi_reduction <add>, %1, %cst [1] : vector<16x256xf32> to vector<16xf32>
    %3 = vector.shape_cast %2 : vector<16xf32> to vector<16x1xf32>
    %cst_1 = arith.constant 2.560000e+02 : f32
    %4 = vector.broadcast %cst_1 : f32 to vector<16x1xf32>
    %5 = arith.divf %3, %4 : vector<16x1xf32>
    %6 = vector.broadcast %5 : vector<16x1xf32> to vector<16x256xf32>
    %7 = arith.subf %1, %6 : vector<16x256xf32>
    %8 = arith.mulf %7, %7 : vector<16x256xf32>
    %cst_2 = arith.constant dense<0.000000e+00> : vector<16xf32>
    %9 = vector.multi_reduction <add>, %8, %cst_2 [1] : vector<16x256xf32> to vector<16xf32>
    %10 = vector.shape_cast %9 : vector<16xf32> to vector<16x1xf32>
    %cst_3 = arith.constant 2.560000e+02 : f32
    %11 = vector.broadcast %cst_3 : f32 to vector<16x1xf32>
    %12 = arith.divf %10, %11 : vector<16x1xf32>
    %cst_4 = arith.constant 9.99999974E-6 : f32
    %13 = vector.broadcast %cst_4 : f32 to vector<16x1xf32>
    %14 = arith.addf %12, %13 : vector<16x1xf32>
    %15 = math.rsqrt %14 : vector<16x1xf32>
    %16 = vector.broadcast %15 : vector<16x1xf32> to vector<16x256xf32>
    %17 = arith.mulf %7, %16 : vector<16x256xf32>
    %c0_5 = arith.constant 0 : index
    %c0_6 = arith.constant 0 : index
    %18 = vector.load %arg5[%c0_5, %c0_6] : memref<1x256xf32, #tpu.memory_space<vmem>>, vector<1x256xf32>
    %19 = vector.broadcast %18 : vector<1x256xf32> to vector<16x256xf32>
    %20 = arith.mulf %17, %19 : vector<16x256xf32>
    %c0_7 = arith.constant 0 : index
    %c0_8 = arith.constant 0 : index
    %21 = vector.load %arg6[%c0_7, %c0_8] : memref<1x256xf32, #tpu.memory_space<vmem>>, vector<1x256xf32>
    %22 = vector.broadcast %21 : vector<1x256xf32> to vector<16x256xf32>
    %23 = arith.addf %20, %22 : vector<16x256xf32>
    %24 = arith.truncf %23 : vector<16x256xf32> to vector<16x256xbf16>
    %c0_9 = arith.constant 0 : index
    %c0_10 = arith.constant 0 : index
    %25 = vector.load %arg3[%c0_9, %c0_10] : memref<256x128xbf16, #tpu.memory_space<vmem>>, vector<256x128xbf16>
    %cst_11 = arith.constant dense<0.000000e+00> : vector<16x128xf32>
    %26 = tpu.matmul %24, %25, %cst_11 {dimension_numbers = #tpu.dot_dimension_numbers<[1], [0], [0], [1], [0, 0, 1, 1], [], []>} : vector<16x256xbf16>, vector<256x128xbf16>, vector<16x128xf32> -> vector<16x128xf32>
    %c0_12 = arith.constant 0 : index
    %c0_13 = arith.constant 0 : index
    %27 = vector.load %arg4[%c0_12, %c0_13] : memref<1x128xf32, #tpu.memory_space<vmem>>, vector<1x128xf32>
    %28 = vector.broadcast %27 : vector<1x128xf32> to vector<16x128xf32>
    %29 = arith.addf %26, %28 : vector<16x128xf32>
    %30 = arith.truncf %29 : vector<16x128xf32> to vector<16x128xbf16>
    %c0_14 = arith.constant 0 : index
    %c0_15 = arith.constant 0 : index
    %31 = vector.load %arg7[%c0_14, %c0_15] : memref<16x128xbf16, #tpu.memory_space<vmem>>, vector<16x128xbf16>
    tpu.vector_store %arg7[%c0_14, %c0_15], %30 {strides = array<i32>} : memref<16x128xbf16, #tpu.memory_space<vmem>>, vector<16x128xbf16>,
    return
  }
  func.func @transform_0(%arg0: i32, %arg1: i32) -> (i32, i32) {
    %c0_i32 = arith.constant 0 : i32
    %c0_i32_0 = arith.constant 0 : i32
    return %arg0, %c0_i32 : i32, i32
  }
  func.func @transform_1(%arg0: i32, %arg1: i32) -> (i32, i32) {
    %c0_i32 = arith.constant 0 : i32
    %c0_i32_0 = arith.constant 0 : i32
    return %c0_i32, %arg1 : i32, i32
  }
  func.func @transform_2(%arg0: i32, %arg1: i32) -> (i32, i32) {
    %c0_i32 = arith.constant 0 : i32
    %c0_i32_0 = arith.constant 0 : i32
    return %c0_i32, %arg1 : i32, i32
  }
  func.func @transform_3(%arg0: i32, %arg1: i32) -> (i32, i32) {
    %c0_i32 = arith.constant 0 : i32
    %c0_i32_0 = arith.constant 0 : i32
    %c0_i32_1 = arith.constant 0 : i32
    return %c0_i32, %c0_i32_0 : i32, i32
  }
  func.func @transform_4(%arg0: i32, %arg1: i32) -> (i32, i32) {
    %c0_i32 = arith.constant 0 : i32
    %c0_i32_0 = arith.constant 0 : i32
    %c0_i32_1 = arith.constant 0 : i32
    return %c0_i32, %c0_i32_0 : i32, i32
  }
  func.func @transform_5(%arg0: i32, %arg1: i32) -> (i32, i32) {
    %c0_i32 = arith.constant 0 : i32
    return %arg0, %arg1 : i32, i32
  }
}

module attributes {stable_mosaic.version = 11 : i64} {
  func.func @kernel(%arg0: i32, %arg1: i32, %arg2: i32, %arg3: memref<16x128xbf16, #tpu.memory_space<vmem>>, %arg4: memref<128x128xbf16, #tpu.memory_space<vmem>>, %arg5: memref<1x128xf32, #tpu.memory_space<vmem>>, %arg6: memref<16x128xbf16, #tpu.memory_space<vmem>>, %arg7: memref<16x128xbf16, #tpu.memory_space<vmem>>, %arg8: memref<16x128xf32, #tpu.memory_space<vmem>>) attributes {dimension_semantics = [#tpu.dimension_semantics<parallel>, #tpu.dimension_semantics<parallel>, #tpu.dimension_semantics<arbitrary>], iteration_bounds = array<i64: 2, 2, 2>, scalar_prefetch = 0 : i64, scratch_operands = 1 : i64, tpu.core_type = #tpu.core_type<tc>, window_params = [{transform_indices = @transform_0, window_bounds = array<i64: 16, 128>}, {transform_indices = @transform_1, window_bounds = array<i64: 128, 128>}, {transform_indices = @transform_2, window_bounds = array<i64: 1, 128>}, {transform_indices = @transform_3, window_bounds = array<i64: 16, 128>}, {transform_indices = @transform_4, window_bounds = array<i64: 16, 128>}]} {
    %c0_i32 = arith.constant 0 : i32
    %0 = arith.cmpi eq, %arg2, %c0_i32 : i32
    %1 = arith.extui %0 : i1 to i32
    %c0_i32_0 = arith.constant 0 : i32
    %2 = arith.cmpi ne, %1, %c0_i32_0 : i32
    scf.if %2 {
      %cst_9 = arith.constant 0.000000e+00 : f32
      %12 = vector.broadcast %cst_9 : f32 to vector<16x128xf32>
      %c0_10 = arith.constant 0 : index
      %c0_11 = arith.constant 0 : index
      %13 = vector.load %arg8[%c0_10, %c0_11] : memref<16x128xf32, #tpu.memory_space<vmem>>, vector<16x128xf32>
      tpu.vector_store %arg8[%c0_10, %c0_11], %12 {strides = array<i32>} : memref<16x128xf32, #tpu.memory_space<vmem>>, vector<16x128xf32>,
    } else {
    }
    %c0 = arith.constant 0 : index
    %c0_1 = arith.constant 0 : index
    %3 = vector.load %arg8[%c0, %c0_1] : memref<16x128xf32, #tpu.memory_space<vmem>>, vector<16x128xf32>
    %c0_2 = arith.constant 0 : index
    %c0_3 = arith.constant 0 : index
    %4 = vector.load %arg3[%c0_2, %c0_3] : memref<16x128xbf16, #tpu.memory_space<vmem>>, vector<16x128xbf16>
    %c0_4 = arith.constant 0 : index
    %c0_5 = arith.constant 0 : index
    %5 = vector.load %arg4[%c0_4, %c0_5] : memref<128x128xbf16, #tpu.memory_space<vmem>>, vector<128x128xbf16>
    %cst = arith.constant dense<0.000000e+00> : vector<16x128xf32>
    %6 = tpu.matmul %4, %5, %cst {dimension_numbers = #tpu.dot_dimension_numbers<[1], [0], [0], [1], [0, 0, 1, 1], [], []>} : vector<16x128xbf16>, vector<128x128xbf16>, vector<16x128xf32> -> vector<16x128xf32>
    %7 = arith.addf %3, %6 : vector<16x128xf32>
    %c0_6 = arith.constant 0 : index
    %c0_7 = arith.constant 0 : index
    %8 = vector.load %arg8[%c0_6, %c0_7] : memref<16x128xf32, #tpu.memory_space<vmem>>, vector<16x128xf32>
    tpu.vector_store %arg8[%c0_6, %c0_7], %7 {strides = array<i32>} : memref<16x128xf32, #tpu.memory_space<vmem>>, vector<16x128xf32>,
    %c1_i32 = arith.constant 1 : i32
    %9 = arith.cmpi eq, %arg2, %c1_i32 : i32
    %10 = arith.extui %9 : i1 to i32
    %c0_i32_8 = arith.constant 0 : i32
    %11 = arith.cmpi ne, %10, %c0_i32_8 : i32
    scf.if %11 {
      %c0_9 = arith.constant 0 : index
      %c0_10 = arith.constant 0 : index
      %12 = vector.load %arg8[%c0_9, %c0_10] : memref<16x128xf32, #tpu.memory_space<vmem>>, vector<16x128xf32>
      %c0_11 = arith.constant 0 : index
      %c0_12 = arith.constant 0 : index
      %13 = vector.load %arg5[%c0_11, %c0_12] : memref<1x128xf32, #tpu.memory_space<vmem>>, vector<1x128xf32>
      %14 = vector.broadcast %13 : vector<1x128xf32> to vector<16x128xf32>
      %15 = arith.addf %12, %14 : vector<16x128xf32>
      %c0_13 = arith.constant 0 : index
      %c0_14 = arith.constant 0 : index
      %16 = vector.load %arg6[%c0_13, %c0_14] : memref<16x128xbf16, #tpu.memory_space<vmem>>, vector<16x128xbf16>
      %17 = arith.extf %16 : vector<16x128xbf16> to vector<16x128xf32>
      %18 = arith.addf %15, %17 : vector<16x128xf32>
      %19 = arith.truncf %18 : vector<16x128xf32> to vector<16x128xbf16>
      %c0_15 = arith.constant 0 : index
      %c0_16 = arith.constant 0 : index
      %20 = vector.load %arg7[%c0_15, %c0_16] : memref<16x128xbf16, #tpu.memory_space<vmem>>, vector<16x128xbf16>
      tpu.vector_store %arg7[%c0_15, %c0_16], %19 {strides = array<i32>} : memref<16x128xbf16, #tpu.memory_space<vmem>>, vector<16x128xbf16>,
    } else {
    }
    return
  }
  func.func @transform_0(%arg0: i32, %arg1: i32, %arg2: i32) -> (i32, i32) {
    %c0_i32 = arith.constant 0 : i32
    return %arg0, %arg2 : i32, i32
  }
  func.func @transform_1(%arg0: i32, %arg1: i32, %arg2: i32) -> (i32, i32) {
    %c0_i32 = arith.constant 0 : i32
    return %arg2, %arg1 : i32, i32
  }
  func.func @transform_2(%arg0: i32, %arg1: i32, %arg2: i32) -> (i32, i32) {
    %c0_i32 = arith.constant 0 : i32
    %c0_i32_0 = arith.constant 0 : i32
    return %c0_i32, %arg1 : i32, i32
  }
  func.func @transform_3(%arg0: i32, %arg1: i32, %arg2: i32) -> (i32, i32) {
    %c0_i32 = arith.constant 0 : i32
    return %arg0, %arg1 : i32, i32
  }
  func.func @transform_4(%arg0: i32, %arg1: i32, %arg2: i32) -> (i32, i32) {
    %c0_i32 = arith.constant 0 : i32
    return %arg0, %arg1 : i32, i32
  }
}

module attributes {stable_mosaic.version = 11 : i64} {
  func.func @kernel(%arg0: i32, %arg1: i32, %arg2: memref<16x256xbf16, #tpu.memory_space<vmem>>, %arg3: memref<256x128xbf16, #tpu.memory_space<vmem>>, %arg4: memref<1x128xf32, #tpu.memory_space<vmem>>, %arg5: memref<1x256xf32, #tpu.memory_space<vmem>>, %arg6: memref<1x256xf32, #tpu.memory_space<vmem>>, %arg7: memref<16x128xbf16, #tpu.memory_space<vmem>>) attributes {dimension_semantics = [#tpu.dimension_semantics<parallel>, #tpu.dimension_semantics<parallel>], iteration_bounds = array<i64: 2, 4>, scalar_prefetch = 0 : i64, scratch_operands = 0 : i64, tpu.core_type = #tpu.core_type<tc>, window_params = [{transform_indices = @transform_0, window_bounds = array<i64: 16, 256>}, {transform_indices = @transform_1, window_bounds = array<i64: 256, 128>}, {transform_indices = @transform_2, window_bounds = array<i64: 1, 128>}, {pipeline_mode = #tpu.pipeline_mode<synchronous>, transform_indices = @transform_3, window_bounds = array<i64: 1, 256>}, {pipeline_mode = #tpu.pipeline_mode<synchronous>, transform_indices = @transform_4, window_bounds = array<i64: 1, 256>}, {transform_indices = @transform_5, window_bounds = array<i64: 16, 128>}]} {
    %c0 = arith.constant 0 : index
    %c0_0 = arith.constant 0 : index
    %0 = vector.load %arg2[%c0, %c0_0] : memref<16x256xbf16, #tpu.memory_space<vmem>>, vector<16x256xbf16>
    %1 = arith.extf %0 : vector<16x256xbf16> to vector<16x256xf32>
    %cst = arith.constant dense<0.000000e+00> : vector<16xf32>
    %2 = vector.multi_reduction <add>, %1, %cst [1] : vector<16x256xf32> to vector<16xf32>
    %3 = vector.shape_cast %2 : vector<16xf32> to vector<16x1xf32>
    %cst_1 = arith.constant 2.560000e+02 : f32
    %4 = vector.broadcast %cst_1 : f32 to vector<16x1xf32>
    %5 = arith.divf %3, %4 : vector<16x1xf32>
    %6 = vector.broadcast %5 : vector<16x1xf32> to vector<16x256xf32>
    %7 = arith.subf %1, %6 : vector<16x256xf32>
    %8 = arith.mulf %7, %7 : vector<16x256xf32>
    %cst_2 = arith.constant dense<0.000000e+00> : vector<16xf32>
    %9 = vector.multi_reduction <add>, %8, %cst_2 [1] : vector<16x256xf32> to vector<16xf32>
    %10 = vector.shape_cast %9 : vector<16xf32> to vector<16x1xf32>
    %cst_3 = arith.constant 2.560000e+02 : f32
    %11 = vector.broadcast %cst_3 : f32 to vector<16x1xf32>
    %12 = arith.divf %10, %11 : vector<16x1xf32>
    %cst_4 = arith.constant 9.99999974E-6 : f32
    %13 = vector.broadcast %cst_4 : f32 to vector<16x1xf32>
    %14 = arith.addf %12, %13 : vector<16x1xf32>
    %15 = math.rsqrt %14 : vector<16x1xf32>
    %16 = vector.broadcast %15 : vector<16x1xf32> to vector<16x256xf32>
    %17 = arith.mulf %7, %16 : vector<16x256xf32>
    %c0_5 = arith.constant 0 : index
    %c0_6 = arith.constant 0 : index
    %18 = vector.load %arg5[%c0_5, %c0_6] : memref<1x256xf32, #tpu.memory_space<vmem>>, vector<1x256xf32>
    %19 = vector.broadcast %18 : vector<1x256xf32> to vector<16x256xf32>
    %20 = arith.mulf %17, %19 : vector<16x256xf32>
    %c0_7 = arith.constant 0 : index
    %c0_8 = arith.constant 0 : index
    %21 = vector.load %arg6[%c0_7, %c0_8] : memref<1x256xf32, #tpu.memory_space<vmem>>, vector<1x256xf32>
    %22 = vector.broadcast %21 : vector<1x256xf32> to vector<16x256xf32>
    %23 = arith.addf %20, %22 : vector<16x256xf32>
    %24 = arith.truncf %23 : vector<16x256xf32> to vector<16x256xbf16>
    %c0_9 = arith.constant 0 : index
    %c0_10 = arith.constant 0 : index
    %25 = vector.load %arg3[%c0_9, %c0_10] : memref<256x128xbf16, #tpu.memory_space<vmem>>, vector<256x128xbf16>
    %cst_11 = arith.constant dense<0.000000e+00> : vector<16x128xf32>
    %26 = tpu.matmul %24, %25, %cst_11 {dimension_numbers = #tpu.dot_dimension_numbers<[1], [0], [0], [1], [0, 0, 1, 1], [], []>} : vector<16x256xbf16>, vector<256x128xbf16>, vector<16x128xf32> -> vector<16x128xf32>
    %c0_12 = arith.constant 0 : index
    %c0_13 = arith.constant 0 : index
    %27 = vector.load %arg4[%c0_12, %c0_13] : memref<1x128xf32, #tpu.memory_space<vmem>>, vector<1x128xf32>
    %28 = vector.broadcast %27 : vector<1x128xf32> to vector<16x128xf32>
    %29 = arith.addf %26, %28 : vector<16x128xf32>
    %cst_14 = arith.constant 5.000000e-01 : f32
    %30 = vector.broadcast %cst_14 : f32 to vector<16x128xf32>
    %31 = arith.mulf %30, %29 : vector<16x128xf32>
    %cst_15 = arith.constant 4.471500e-02 : f32
    %32 = vector.broadcast %cst_15 : f32 to vector<16x128xf32>
    %33 = arith.mulf %32, %29 : vector<16x128xf32>
    %34 = arith.mulf %33, %29 : vector<16x128xf32>
    %35 = arith.mulf %34, %29 : vector<16x128xf32>
    %36 = arith.addf %29, %35 : vector<16x128xf32>
    %cst_16 = arith.constant 0.797884583 : f32
    %37 = vector.broadcast %cst_16 : f32 to vector<16x128xf32>
    %38 = arith.mulf %37, %36 : vector<16x128xf32>
    %39 = math.tanh %38 : vector<16x128xf32>
    %cst_17 = arith.constant 1.000000e+00 : f32
    %40 = vector.broadcast %cst_17 : f32 to vector<16x128xf32>
    %41 = arith.addf %40, %39 : vector<16x128xf32>
    %42 = arith.mulf %31, %41 : vector<16x128xf32>
    %43 = arith.truncf %42 : vector<16x128xf32> to vector<16x128xbf16>
    %c0_18 = arith.constant 0 : index
    %c0_19 = arith.constant 0 : index
    %44 = vector.load %arg7[%c0_18, %c0_19] : memref<16x128xbf16, #tpu.memory_space<vmem>>, vector<16x128xbf16>
    tpu.vector_store %arg7[%c0_18, %c0_19], %43 {strides = array<i32>} : memref<16x128xbf16, #tpu.memory_space<vmem>>, vector<16x128xbf16>,
    return
  }
  func.func @transform_0(%arg0: i32, %arg1: i32) -> (i32, i32) {
    %c0_i32 = arith.constant 0 : i32
    %c0_i32_0 = arith.constant 0 : i32
    return %arg0, %c0_i32 : i32, i32
  }
  func.func @transform_1(%arg0: i32, %arg1: i32) -> (i32, i32) {
    %c0_i32 = arith.constant 0 : i32
    %c0_i32_0 = arith.constant 0 : i32
    return %c0_i32, %arg1 : i32, i32
  }
  func.func @transform_2(%arg0: i32, %arg1: i32) -> (i32, i32) {
    %c0_i32 = arith.constant 0 : i32
    %c0_i32_0 = arith.constant 0 : i32
    return %c0_i32, %arg1 : i32, i32
  }
  func.func @transform_3(%arg0: i32, %arg1: i32) -> (i32, i32) {
    %c0_i32 = arith.constant 0 : i32
    %c0_i32_0 = arith.constant 0 : i32
    %c0_i32_1 = arith.constant 0 : i32
    return %c0_i32, %c0_i32_0 : i32, i32
  }
  func.func @transform_4(%arg0: i32, %arg1: i32) -> (i32, i32) {
    %c0_i32 = arith.constant 0 : i32
    %c0_i32_0 = arith.constant 0 : i32
    %c0_i32_1 = arith.constant 0 : i32
    return %c0_i32, %c0_i32_0 : i32, i32
  }
  func.func @transform_5(%arg0: i32, %arg1: i32) -> (i32, i32) {
    %c0_i32 = arith.constant 0 : i32
    return %arg0, %arg1 : i32, i32
  }
}

module attributes {stable_mosaic.version = 11 : i64} {
  func.func @kernel(%arg0: i32, %arg1: i32, %arg2: i32, %arg3: memref<16x128xbf16, #tpu.memory_space<vmem>>, %arg4: memref<128x128xbf16, #tpu.memory_space<vmem>>, %arg5: memref<1x128xf32, #tpu.memory_space<vmem>>, %arg6: memref<16x128xbf16, #tpu.memory_space<vmem>>, %arg7: memref<16x128xbf16, #tpu.memory_space<vmem>>, %arg8: memref<16x128xf32, #tpu.memory_space<vmem>>) attributes {dimension_semantics = [#tpu.dimension_semantics<parallel>, #tpu.dimension_semantics<parallel>, #tpu.dimension_semantics<arbitrary>], iteration_bounds = array<i64: 2, 2, 4>, scalar_prefetch = 0 : i64, scratch_operands = 1 : i64, tpu.core_type = #tpu.core_type<tc>, window_params = [{transform_indices = @transform_0, window_bounds = array<i64: 16, 128>}, {transform_indices = @transform_1, window_bounds = array<i64: 128, 128>}, {transform_indices = @transform_2, window_bounds = array<i64: 1, 128>}, {transform_indices = @transform_3, window_bounds = array<i64: 16, 128>}, {transform_indices = @transform_4, window_bounds = array<i64: 16, 128>}]} {
    %c0_i32 = arith.constant 0 : i32
    %0 = arith.cmpi eq, %arg2, %c0_i32 : i32
    %1 = arith.extui %0 : i1 to i32
    %c0_i32_0 = arith.constant 0 : i32
    %2 = arith.cmpi ne, %1, %c0_i32_0 : i32
    scf.if %2 {
      %cst_9 = arith.constant 0.000000e+00 : f32
      %12 = vector.broadcast %cst_9 : f32 to vector<16x128xf32>
      %c0_10 = arith.constant 0 : index
      %c0_11 = arith.constant 0 : index
      %13 = vector.load %arg8[%c0_10, %c0_11] : memref<16x128xf32, #tpu.memory_space<vmem>>, vector<16x128xf32>
      tpu.vector_store %arg8[%c0_10, %c0_11], %12 {strides = array<i32>} : memref<16x128xf32, #tpu.memory_space<vmem>>, vector<16x128xf32>,
    } else {
    }
    %c0 = arith.constant 0 : index
    %c0_1 = arith.constant 0 : index
    %3 = vector.load %arg8[%c0, %c0_1] : memref<16x128xf32, #tpu.memory_space<vmem>>, vector<16x128xf32>
    %c0_2 = arith.constant 0 : index
    %c0_3 = arith.constant 0 : index
    %4 = vector.load %arg3[%c0_2, %c0_3] : memref<16x128xbf16, #tpu.memory_space<vmem>>, vector<16x128xbf16>
    %c0_4 = arith.constant 0 : index
    %c0_5 = arith.constant 0 : index
    %5 = vector.load %arg4[%c0_4, %c0_5] : memref<128x128xbf16, #tpu.memory_space<vmem>>, vector<128x128xbf16>
    %cst = arith.constant dense<0.000000e+00> : vector<16x128xf32>
    %6 = tpu.matmul %4, %5, %cst {dimension_numbers = #tpu.dot_dimension_numbers<[1], [0], [0], [1], [0, 0, 1, 1], [], []>} : vector<16x128xbf16>, vector<128x128xbf16>, vector<16x128xf32> -> vector<16x128xf32>
    %7 = arith.addf %3, %6 : vector<16x128xf32>
    %c0_6 = arith.constant 0 : index
    %c0_7 = arith.constant 0 : index
    %8 = vector.load %arg8[%c0_6, %c0_7] : memref<16x128xf32, #tpu.memory_space<vmem>>, vector<16x128xf32>
    tpu.vector_store %arg8[%c0_6, %c0_7], %7 {strides = array<i32>} : memref<16x128xf32, #tpu.memory_space<vmem>>, vector<16x128xf32>,
    %c3_i32 = arith.constant 3 : i32
    %9 = arith.cmpi eq, %arg2, %c3_i32 : i32
    %10 = arith.extui %9 : i1 to i32
    %c0_i32_8 = arith.constant 0 : i32
    %11 = arith.cmpi ne, %10, %c0_i32_8 : i32
    scf.if %11 {
      %c0_9 = arith.constant 0 : index
      %c0_10 = arith.constant 0 : index
      %12 = vector.load %arg8[%c0_9, %c0_10] : memref<16x128xf32, #tpu.memory_space<vmem>>, vector<16x128xf32>
      %c0_11 = arith.constant 0 : index
      %c0_12 = arith.constant 0 : index
      %13 = vector.load %arg5[%c0_11, %c0_12] : memref<1x128xf32, #tpu.memory_space<vmem>>, vector<1x128xf32>
      %14 = vector.broadcast %13 : vector<1x128xf32> to vector<16x128xf32>
      %15 = arith.addf %12, %14 : vector<16x128xf32>
      %c0_13 = arith.constant 0 : index
      %c0_14 = arith.constant 0 : index
      %16 = vector.load %arg6[%c0_13, %c0_14] : memref<16x128xbf16, #tpu.memory_space<vmem>>, vector<16x128xbf16>
      %17 = arith.extf %16 : vector<16x128xbf16> to vector<16x128xf32>
      %18 = arith.addf %15, %17 : vector<16x128xf32>
      %19 = arith.truncf %18 : vector<16x128xf32> to vector<16x128xbf16>
      %c0_15 = arith.constant 0 : index
      %c0_16 = arith.constant 0 : index
      %20 = vector.load %arg7[%c0_15, %c0_16] : memref<16x128xbf16, #tpu.memory_space<vmem>>, vector<16x128xbf16>
      tpu.vector_store %arg7[%c0_15, %c0_16], %19 {strides = array<i32>} : memref<16x128xbf16, #tpu.memory_space<vmem>>, vector<16x128xbf16>,
    } else {
    }
    return
  }
  func.func @transform_0(%arg0: i32, %arg1: i32, %arg2: i32) -> (i32, i32) {
    %c0_i32 = arith.constant 0 : i32
    return %arg0, %arg2 : i32, i32
  }
  func.func @transform_1(%arg0: i32, %arg1: i32, %arg2: i32) -> (i32, i32) {
    %c0_i32 = arith.constant 0 : i32
    return %arg2, %arg1 : i32, i32
  }
  func.func @transform_2(%arg0: i32, %arg1: i32, %arg2: i32) -> (i32, i32) {
    %c0_i32 = arith.constant 0 : i32
    %c0_i32_0 = arith.constant 0 : i32
    return %c0_i32, %arg1 : i32, i32
  }
  func.func @transform_3(%arg0: i32, %arg1: i32, %arg2: i32) -> (i32, i32) {
    %c0_i32 = arith.constant 0 : i32
    return %arg0, %arg1 : i32, i32
  }
  func.func @transform_4(%arg0: i32, %arg1: i32, %arg2: i32) -> (i32, i32) {
    %c0_i32 = arith.constant 0 : i32
    return %arg0, %arg1 : i32, i32
  }
}

module attributes {stable_mosaic.version = 11 : i64} {
  func.func @kernel(%arg0: i32, %arg1: memref<16x256xbf16, #tpu.memory_space<vmem>>, %arg2: memref<1x256xf32, #tpu.memory_space<vmem>>, %arg3: memref<1x256xf32, #tpu.memory_space<vmem>>, %arg4: memref<16x256xf32, #tpu.memory_space<vmem>>) attributes {dimension_semantics = [#tpu.dimension_semantics<parallel>], iteration_bounds = array<i64: 2>, scalar_prefetch = 0 : i64, scratch_operands = 0 : i64, tpu.core_type = #tpu.core_type<tc>, window_params = [{transform_indices = @transform_0, window_bounds = array<i64: 16, 256>}, {pipeline_mode = #tpu.pipeline_mode<synchronous>, transform_indices = @transform_1, window_bounds = array<i64: 1, 256>}, {pipeline_mode = #tpu.pipeline_mode<synchronous>, transform_indices = @transform_2, window_bounds = array<i64: 1, 256>}, {transform_indices = @transform_3, window_bounds = array<i64: 16, 256>}]} {
    %c0 = arith.constant 0 : index
    %c0_0 = arith.constant 0 : index
    %0 = vector.load %arg1[%c0, %c0_0] : memref<16x256xbf16, #tpu.memory_space<vmem>>, vector<16x256xbf16>
    %1 = arith.extf %0 : vector<16x256xbf16> to vector<16x256xf32>
    %cst = arith.constant dense<0.000000e+00> : vector<16xf32>
    %2 = vector.multi_reduction <add>, %1, %cst [1] : vector<16x256xf32> to vector<16xf32>
    %3 = vector.shape_cast %2 : vector<16xf32> to vector<16x1xf32>
    %cst_1 = arith.constant 2.560000e+02 : f32
    %4 = vector.broadcast %cst_1 : f32 to vector<16x1xf32>
    %5 = arith.divf %3, %4 : vector<16x1xf32>
    %6 = vector.broadcast %5 : vector<16x1xf32> to vector<16x256xf32>
    %7 = arith.subf %1, %6 : vector<16x256xf32>
    %8 = arith.mulf %7, %7 : vector<16x256xf32>
    %cst_2 = arith.constant dense<0.000000e+00> : vector<16xf32>
    %9 = vector.multi_reduction <add>, %8, %cst_2 [1] : vector<16x256xf32> to vector<16xf32>
    %10 = vector.shape_cast %9 : vector<16xf32> to vector<16x1xf32>
    %cst_3 = arith.constant 2.560000e+02 : f32
    %11 = vector.broadcast %cst_3 : f32 to vector<16x1xf32>
    %12 = arith.divf %10, %11 : vector<16x1xf32>
    %cst_4 = arith.constant 9.99999974E-6 : f32
    %13 = vector.broadcast %cst_4 : f32 to vector<16x1xf32>
    %14 = arith.addf %12, %13 : vector<16x1xf32>
    %15 = math.rsqrt %14 : vector<16x1xf32>
    %16 = vector.broadcast %15 : vector<16x1xf32> to vector<16x256xf32>
    %17 = arith.mulf %7, %16 : vector<16x256xf32>
    %c0_5 = arith.constant 0 : index
    %c0_6 = arith.constant 0 : index
    %18 = vector.load %arg2[%c0_5, %c0_6] : memref<1x256xf32, #tpu.memory_space<vmem>>, vector<1x256xf32>
    %19 = vector.broadcast %18 : vector<1x256xf32> to vector<16x256xf32>
    %20 = arith.mulf %17, %19 : vector<16x256xf32>
    %c0_7 = arith.constant 0 : index
    %c0_8 = arith.constant 0 : index
    %21 = vector.load %arg3[%c0_7, %c0_8] : memref<1x256xf32, #tpu.memory_space<vmem>>, vector<1x256xf32>
    %22 = vector.broadcast %21 : vector<1x256xf32> to vector<16x256xf32>
    %23 = arith.addf %20, %22 : vector<16x256xf32>
    %c0_9 = arith.constant 0 : index
    %c0_10 = arith.constant 0 : index
    %24 = vector.load %arg4[%c0_9, %c0_10] : memref<16x256xf32, #tpu.memory_space<vmem>>, vector<16x256xf32>
    tpu.vector_store %arg4[%c0_9, %c0_10], %23 {strides = array<i32>} : memref<16x256xf32, #tpu.memory_space<vmem>>, vector<16x256xf32>,
    return
  }
  func.func @transform_0(%arg0: i32) -> (i32, i32) {
    %c0_i32 = arith.constant 0 : i32
    %c0_i32_0 = arith.constant 0 : i32
    return %arg0, %c0_i32 : i32, i32
  }
  func.func @transform_1(%arg0: i32) -> (i32, i32) {
    %c0_i32 = arith.constant 0 : i32
    %c0_i32_0 = arith.constant 0 : i32
    %c0_i32_1 = arith.constant 0 : i32
    return %c0_i32, %c0_i32_0 : i32, i32
  }
  func.func @transform_2(%arg0: i32) -> (i32, i32) {
    %c0_i32 = arith.constant 0 : i32
    %c0_i32_0 = arith.constant 0 : i32
    %c0_i32_1 = arith.constant 0 : i32
    return %c0_i32, %c0_i32_0 : i32, i32
  }
  func.func @transform_3(%arg0: i32) -> (i32, i32) {
    %c0_i32 = arith.constant 0 : i32
    %c0_i32_0 = arith.constant 0 : i32
    return %arg0, %c0_i32 : i32, i32
  }
}

</mosaic_0001>

<llo_original>
// kernel: whisper_encoder_forward.13
$region0: #{whisper_encoder_forward.13}
  #allocation0 [shape = 'u32[]', space=smem, size = 0x4, offset = 0x4, fixed_abs, tag = 'smem constant byte address 0x4 - core index']
  #allocation1 [shape = 'u32[144,128]{1,0:T(1,128)}', space=vmem, size = 0x12000, scoped, tag = 'internal scratch']
  %s0 = inlined_call_operand.vmem [shape: bf16[2,32,16], index: 0, kind: input, shape index: {}]
  %s1 = inlined_call_operand.vmem [shape: bf16[2,32,16], index: 1, kind: input, shape index: {}]
  %s2 = inlined_call_operand.vmem [shape: bf16[2,32,16], index: 2, kind: input, shape index: {}]
  %s3 = inlined_call_operand.vmem [shape: bf16[3,16,256], index: 3, kind: input, shape index: {}]
  %s4 = inlined_call_operand.vmem [shape: f32[1,256], index: 4, kind: input, shape index: {}]
  %s5 = inlined_call_operand.vmem [shape: bf16[2,32,256], index: 5, kind: output, shape index: {}]
  %s6 = sld [smem:[#allocation0]]
  $region94: #{whisper_encoder_forward.13} parent=0
    _
  %s8 = ssub.s32 1, %s6
  %s9 = scalar_select 0, %s8, %s6
  $region1: #{whisper_encoder_forward.13} parent=0
    #allocation2 [shape = 'u8[24576]{0}', space=vmem, size = 0x6000, scoped, tag = 'input window, operand 3']
    loop: start=0, step=1, limit=18
    $region2: #{whisper_encoder_forward.13} parent=1 // loop_pre_header
      _
    $region3: #{whisper_encoder_forward.13} parent=1 // loop_header
      %s11 = sphi 0, %s15
      %p12 = scmp.ge.s32.totalorder %s11, 18
      %s18 = sphi 0, %s37
      %s19 = sphi 0, %s33
      %s20 = sphi 0, %s29
      %s21 = sphi 0, %s18
      %s22 = sphi 0, %s19
      %s23 = sphi 0, %s20
      %s24 = sphi 0, %s21
      %s25 = sphi 0, %s22
      %s26 = sphi 0, %s23
      %s42 = sphi 0, %s44
      %s45 = sphi 0, %s42
      %s46 = sphi 0, %s45
      %s62 = sphi 0, %s46
      %s70 = sphi 0, %s72
      %s73 = sphi 0, %s70
      %s74 = sphi 0, %s73
      %s90 = sphi 0, %s74
      %s98 = sphi 0, %s100
      %s101 = sphi 0, %s98
      %s102 = sphi 0, %s101
      %s118 = sphi 0, %s102
      %s124 = sphi 0, %s126
      %s127 = sphi 0, %s124
      %s128 = sphi 0, %s127
      %s144 = sphi 0, %s128
      %s150 = sphi 0, %s152
      %s153 = sphi 0, %s150
      %s154 = sphi 0, %s153
      %s170 = sphi 0, %s154
      %s180 = sphi 0, %s182
      %s183 = sphi 0, %s180
      %s184 = sphi 0, %s183
      %s200 = sphi 0, %s184
    $region4: #{whisper_encoder_forward.13} parent=1 // loop_header_branch
      %14 = sbr.rel (%p12) target = $region8
    $region5: #{whisper_encoder_forward.13} parent=1 // loop_body
      %s16 = ssub.s32 %s11, 1
      %s17 = ssub.s32 %s11, 2
      %s27 = sadd.s32 1, %s20
      %p28 = scmp.ge.s32.totalorder %s27, 2
      %s29 = scalar_select %p28, 0, %s27
      %s30 = sadd.s32 1, %s19
      %s31 = scalar_select %p28, %s30, %s19
      %p32 = scmp.ge.s32.totalorder %s31, 4
      %s33 = scalar_select %p32, 0, %s31
      %s34 = sadd.s32 1, %s18
      %s35 = scalar_select %p32, %s34, %s18
      %p36 = scmp.ge.s32.totalorder %s35, 2
      %s37 = scalar_select %p36, 0, %s35
      %s38 = ssub.s32 %s18, %s37
      %s39 = ssub.s32 %s19, %s33
      %s40 = sor.u32 %s38, %s39
      %p41 = scmp.eq.s32.totalorder %s40, 0
      %s43 = sadd.s32 %s42, 1
      %s44 = scalar_select %p41, %s42, %s43
      %p47 = pneg %p41
      %p48 = scmp.eq.s32.totalorder %s11, 15
      %p49 = por %p47, %p48
      %p50 = scmp.ne.s32.totalorder %s42, %s45
      %p51 = scmp.eq.s32.totalorder %s11, 0
      %p52 = por %p50, %p51
      %p53 = scmp.ne.s32.totalorder %s42, %s45
      %p54 = scmp.eq.s32.totalorder %s16, 15
      %p55 = por %p53, %p54
      %p56 = scmp.ne.s32.totalorder %s45, %s46
      %p57 = scmp.eq.s32.totalorder %s16, 0
      %p58 = por %p56, %p57
      %p59 = scmp.ne.s32.totalorder %s45, %s46
      %p60 = scmp.eq.s32.totalorder %s17, 15
      %p61 = por %p59, %p60
      %p63 = scmp.ne.s32.totalorder %s46, %s62
      %p64 = scmp.eq.s32.totalorder %s17, 0
      %p65 = por %p63, %p64
      %s66 = ssub.s32 %s18, %s37
      %s67 = ssub.s32 %s19, %s33
      %s68 = sor.u32 %s66, %s67
      %p69 = scmp.eq.s32.totalorder %s68, 0
      %s71 = sadd.s32 %s70, 1
      %s72 = scalar_select %p69, %s70, %s71
      %p75 = pneg %p69
      %p76 = scmp.eq.s32.totalorder %s11, 15
      %p77 = por %p75, %p76
      %p78 = scmp.ne.s32.totalorder %s70, %s73
      %p79 = scmp.eq.s32.totalorder %s11, 0
      %p80 = por %p78, %p79
      %p81 = scmp.ne.s32.totalorder %s70, %s73
      %p82 = scmp.eq.s32.totalorder %s16, 15
      %p83 = por %p81, %p82
      %p84 = scmp.ne.s32.totalorder %s73, %s74
      %p85 = scmp.eq.s32.totalorder %s16, 0
      %p86 = por %p84, %p85
      %p87 = scmp.ne.s32.totalorder %s73, %s74
      %p88 = scmp.eq.s32.totalorder %s17, 15
      %p89 = por %p87, %p88
      %p91 = scmp.ne.s32.totalorder %s74, %s90
      %p92 = scmp.eq.s32.totalorder %s17, 0
      %p93 = por %p91, %p92
      %s94 = ssub.s32 %s18, %s37
      %s95 = ssub.s32 %s19, %s33
      %s96 = sor.u32 %s94, %s95
      %p97 = scmp.eq.s32.totalorder %s96, 0
      %s99 = sadd.s32 %s98, 1
      %s100 = scalar_select %p97, %s98, %s99
      %p103 = pneg %p97
      %p104 = scmp.eq.s32.totalorder %s11, 15
      %p105 = por %p103, %p104
      %p106 = scmp.ne.s32.totalorder %s98, %s101
      %p107 = scmp.eq.s32.totalorder %s11, 0
      %p108 = por %p106, %p107
      %p109 = scmp.ne.s32.totalorder %s98, %s101
      %p110 = scmp.eq.s32.totalorder %s16, 15
      %p111 = por %p109, %p110
      %p112 = scmp.ne.s32.totalorder %s101, %s102
      %p113 = scmp.eq.s32.totalorder %s16, 0
      %p114 = por %p112, %p113
      %p115 = scmp.ne.s32.totalorder %s101, %s102
      %p116 = scmp.eq.s32.totalorder %s17, 15
      %p117 = por %p115, %p116
      %p119 = scmp.ne.s32.totalorder %s102, %s118
      %p120 = scmp.eq.s32.totalorder %s17, 0
      %p121 = por %p119, %p120
      %s122 = ssub.s32 %s20, %s29
      %p123 = scmp.eq.s32.totalorder %s122, 0
      %s125 = sadd.s32 %s124, 1
      %s126 = scalar_select %p123, %s124, %s125
      %p129 = pneg %p123
      %p130 = scmp.eq.s32.totalorder %s11, 15
      %p131 = por %p129, %p130
      %p132 = scmp.ne.s32.totalorder %s124, %s127
      %p133 = scmp.eq.s32.totalorder %s11, 0
      %p134 = por %p132, %p133
      %p135 = scmp.ne.s32.totalorder %s124, %s127
      %p136 = scmp.eq.s32.totalorder %s16, 15
      %p137 = por %p135, %p136
      %p138 = scmp.ne.s32.totalorder %s127, %s128
      %p139 = scmp.eq.s32.totalorder %s16, 0
      %p140 = por %p138, %p139
      %p141 = scmp.ne.s32.totalorder %s127, %s128
      %p142 = scmp.eq.s32.totalorder %s17, 15
      %p143 = por %p141, %p142
      %p145 = scmp.ne.s32.totalorder %s128, %s144
      %p146 = scmp.eq.s32.totalorder %s17, 0
      %p147 = por %p145, %p146
      %s148 = ssub.s32 %s20, %s29
      %p149 = scmp.eq.s32.totalorder %s148, 0
      %s151 = sadd.s32 %s150, 1
      %s152 = scalar_select %p149, %s150, %s151
      %p155 = pneg %p149
      %p156 = scmp.eq.s32.totalorder %s11, 15
      %p157 = por %p155, %p156
      %p158 = scmp.ne.s32.totalorder %s150, %s153
      %p159 = scmp.eq.s32.totalorder %s11, 0
      %p160 = por %p158, %p159
      %p161 = scmp.ne.s32.totalorder %s150, %s153
      %p162 = scmp.eq.s32.totalorder %s16, 15
      %p163 = por %p161, %p162
      %p164 = scmp.ne.s32.totalorder %s153, %s154
      %p165 = scmp.eq.s32.totalorder %s16, 0
      %p166 = por %p164, %p165
      %p167 = scmp.ne.s32.totalorder %s153, %s154
      %p168 = scmp.eq.s32.totalorder %s17, 15
      %p169 = por %p167, %p168
      %p171 = scmp.ne.s32.totalorder %s154, %s170
      %p172 = scmp.eq.s32.totalorder %s17, 0
      %p173 = por %p171, %p172
      %s174 = ssub.s32 %s18, %s37
      %s175 = ssub.s32 %s19, %s33
      %s176 = sor.u32 %s174, %s175
      %s177 = ssub.s32 %s20, %s29
      %s178 = sor.u32 %s176, %s177
      %p179 = scmp.eq.s32.totalorder %s178, 0
      %s181 = sadd.s32 %s180, 1
      %s182 = scalar_select %p179, %s180, %s181
      %p185 = pneg %p179
      %p186 = scmp.eq.s32.totalorder %s11, 15
      %p187 = por %p185, %p186
      %p188 = scmp.ne.s32.totalorder %s180, %s183
      %p189 = scmp.eq.s32.totalorder %s11, 0
      %p190 = por %p188, %p189
      %p191 = scmp.ne.s32.totalorder %s180, %s183
      %p192 = scmp.eq.s32.totalorder %s16, 15
      %p193 = por %p191, %p192
      %p194 = scmp.ne.s32.totalorder %s183, %s184
      %p195 = scmp.eq.s32.totalorder %s16, 0
      %p196 = por %p194, %p195
      %p197 = scmp.ne.s32.totalorder %s183, %s184
      %p198 = scmp.eq.s32.totalorder %s17, 15
      %p199 = por %p197, %p198
      %p201 = scmp.ne.s32.totalorder %s184, %s200
      %p202 = scmp.eq.s32.totalorder %s17, 0
      %p203 = por %p201, %p202
      %p204 = scmp.le.s32.totalorder 1, %s11
      %p205 = scmp.lt.s32.totalorder %s11, 17
      %p206 = pnand %p204, %p205
      %p207 = pneg %p206
      // Predicated region
      $region9: #{whisper_encoder_forward.13} parent=5 // pred_check
        _
      $region10: #{whisper_encoder_forward.13} parent=5 // pred_check_branch
        %209 = sbr.rel (%p206) target = $region12
      $region11: #{whisper_encoder_forward.13} parent=5 // pred_region
        %s210 = ssub.s32 %s11, 1
      $region12: #{whisper_encoder_forward.13} parent=5 // pred_fallthru
        _
      %p211 = scmp.lt.s32.totalorder %s11, 16
      // Predicated region
      $region13: #{whisper_encoder_forward.13} parent=5 // pred_check
        %p212 = pneg %p211
      $region14: #{whisper_encoder_forward.13} parent=5 // pred_check_branch
        %214 = sbr.rel (%p212) target = $region16
      $region15: #{whisper_encoder_forward.13} parent=5 // pred_region
        // Predicated region
        $region17: #{whisper_encoder_forward.13} parent=15 // pred_check
          %p215 = pneg %p52
        $region18: #{whisper_encoder_forward.13} parent=15 // pred_check_branch
          %217 = sbr.rel (%p215) target = $region20
        $region19: #{whisper_encoder_forward.13} parent=15 // pred_region
          %p218 = scmp.lt.s32.totalorder %s18, 1
          %s219 = scalar_select %p218, %s18, 1
          %p220 = scmp.lt.s32.totalorder %s19, 3
          %s221 = scalar_select %p220, %s19, 3
          %s222 = smul.addr %s219, 4
          %s223 = sadd.s32 %s221, %s222
          %s224 = smul.addr %s223, 4
          %s225 = scalar_lea.vmem %s0, %s224
        $region20: #{whisper_encoder_forward.13} parent=15 // pred_fallthru
          _
        // Predicated region
        $region21: #{whisper_encoder_forward.13} parent=15 // pred_check
          %p226 = pneg %p80
        $region22: #{whisper_encoder_forward.13} parent=15 // pred_check_branch
          %228 = sbr.rel (%p226) target = $region24
        $region23: #{whisper_encoder_forward.13} parent=15 // pred_region
          %p229 = scmp.lt.s32.totalorder %s18, 1
          %s230 = scalar_select %p229, %s18, 1
          %p231 = scmp.lt.s32.totalorder %s19, 3
          %s232 = scalar_select %p231, %s19, 3
          %s233 = smul.addr %s230, 4
          %s234 = sadd.s32 %s232, %s233
          %s235 = smul.addr %s234, 4
          %s236 = scalar_lea.vmem %s1, %s235
        $region24: #{whisper_encoder_forward.13} parent=15 // pred_fallthru
          _
        // Predicated region
        $region25: #{whisper_encoder_forward.13} parent=15 // pred_check
          %p237 = pneg %p108
        $region26: #{whisper_encoder_forward.13} parent=15 // pred_check_branch
          %239 = sbr.rel (%p237) target = $region28
        $region27: #{whisper_encoder_forward.13} parent=15 // pred_region
          %p240 = scmp.lt.s32.totalorder %s18, 1
          %s241 = scalar_select %p240, %s18, 1
          %p242 = scmp.lt.s32.totalorder %s19, 3
          %s243 = scalar_select %p242, %s19, 3
          %s244 = smul.addr %s241, 4
          %s245 = sadd.s32 %s243, %s244
          %s246 = smul.addr %s245, 4
          %s247 = scalar_lea.vmem %s2, %s246
        $region28: #{whisper_encoder_forward.13} parent=15 // pred_fallthru
          _
        // Predicated region
        $region29: #{whisper_encoder_forward.13} parent=15 // pred_check
          %p248 = pneg %p134
        $region30: #{whisper_encoder_forward.13} parent=15 // pred_check_branch
          %250 = sbr.rel (%p248) target = $region32
        $region31: #{whisper_encoder_forward.13} parent=15 // pred_region
          %s251 = sand.u32 %s124, 1
          %s252 = sand.u32 %s124, 1
          %s253 = smul.addr %s252, 24
          %s254 = scalar_lea.vmem [#allocation2], %s253
          %s255 = smul.addr %s20, 4
          %s256 = scalar_lea.vmem %s3, %s255
          // Predicated region
          $region33: #{whisper_encoder_forward.13} parent=31 // pred_check
            _
          $region34: #{whisper_encoder_forward.13} parent=31 // pred_check_branch
            %258 = sbr.rel (0) target = $region36
          $region35: #{whisper_encoder_forward.13} parent=31 // pred_region
            // Predicated region
            $region37: #{whisper_encoder_forward.13} parent=35 // pred_check
              _
            $region38: #{whisper_encoder_forward.13} parent=35 // pred_check_branch
              %260 = sbr.rel target = $region40
            $region39: #{whisper_encoder_forward.13} parent=35 // pred_region
              // Predicated region
              $region52: #{whisper_encoder_forward.13} parent=39 // pred_check
                _
              $region53: #{whisper_encoder_forward.13} parent=39 // pred_check_branch
                %285 = sbr.rel (0) target = $region55
              $region54: #{whisper_encoder_forward.13} parent=39 // pred_region
                loop: start=0, step=1, limit=1
                $region56: #{whisper_encoder_forward.13} parent=54 // loop_pre_header
                  _
                $region57: #{whisper_encoder_forward.13} parent=54 // loop_header
                  %s287 = sphi 0, %s291
                  %p288 = scmp.ge.s32.totalorder %s287, 1
                  %s292 = sphi %s256, %s256
                  %s293 = sphi %s254, %s254
                $region58: #{whisper_encoder_forward.13} parent=54 // loop_header_branch
                  %290 = sbr.rel (%p288) target = $region62
                $region59: #{whisper_encoder_forward.13} parent=54 // loop_body
                  _
                $region60: #{whisper_encoder_forward.13} parent=54 // loop_footer
                  %s291 = sadd.s32 1, %s287
                $region61: #{whisper_encoder_forward.13} parent=54 // loop_footer_branch
                  %286 = sbr.rel target = $region57
                $region62: #{whisper_encoder_forward.13} parent=54 // loop_exit
                  _
                loop: start=0, step=1, limit=1
                $region63: #{whisper_encoder_forward.13} parent=54 // loop_pre_header
                  _
                $region64: #{whisper_encoder_forward.13} parent=54 // loop_header
                  %s296 = sphi 0, %s300
                  %p297 = scmp.ge.s32.totalorder %s296, 1
                  %s301 = sphi %s256, %s256
                  %s302 = sphi %s254, %s254
                $region65: #{whisper_encoder_forward.13} parent=54 // loop_header_branch
                  %299 = sbr.rel (%p297) target = $region69
                $region66: #{whisper_encoder_forward.13} parent=54 // loop_body
                  %v303 = vld [vmem:[%s301] sm:$0xf]
                  %304 = vst [vmem:[%s302] sm:$0xf] %v303
                  %v305 = vld [vmem:[%s301 + $0x8] sm:$0xf]
                  %306 = vst [vmem:[%s302 + $0x4] sm:$0xf] %v305
                  %v307 = vld [vmem:[%s301 + $0x10] sm:$0xf]
                  %308 = vst [vmem:[%s302 + $0x8] sm:$0xf] %v307
                  %v309 = vld [vmem:[%s301 + $0x18] sm:$0xf]
                  %310 = vst [vmem:[%s302 + $0xc] sm:$0xf] %v309
                  %v311 = vld [vmem:[%s301 + $0x20] sm:$0xf]
                  %312 = vst [vmem:[%s302 + $0x10] sm:$0xf] %v311
                  %v313 = vld [vmem:[%s301 + $0x28] sm:$0xf]
                  %314 = vst [vmem:[%s302 + $0x14] sm:$0xf] %v313
                $region67: #{whisper_encoder_forward.13} parent=54 // loop_footer
                  %s300 = sadd.s32 1, %s296
                $region68: #{whisper_encoder_forward.13} parent=54 // loop_footer_branch
                  %295 = sbr.rel target = $region64
                $region69: #{whisper_encoder_forward.13} parent=54 // loop_exit
                  _
              $region55: #{whisper_encoder_forward.13} parent=39 // pred_fallthru
                _
            $region40: #{whisper_encoder_forward.13} parent=35 // pred_fallthru
              _
            // Predicated region
            $region41: #{whisper_encoder_forward.13} parent=35 // pred_check
              _
            $region42: #{whisper_encoder_forward.13} parent=35 // pred_check_branch
              %262 = sbr.rel (0) target = $region44
            $region43: #{whisper_encoder_forward.13} parent=35 // pred_region
              loop: start=0, step=1, limit=1
              $region45: #{whisper_encoder_forward.13} parent=43 // loop_pre_header
                _
              $region46: #{whisper_encoder_forward.13} parent=43 // loop_header
                %s265 = sphi 0, %s269
                %p266 = scmp.ge.s32.totalorder %s265, 1
                %s270 = sphi %s256, %s256
                %s271 = sphi %s254, %s254
              $region47: #{whisper_encoder_forward.13} parent=43 // loop_header_branch
                %268 = sbr.rel (%p266) target = $region51
              $region48: #{whisper_encoder_forward.13} parent=43 // loop_body
                %v272 = vld [vmem:[%s270] sm:$0xf]
                %273 = vst [vmem:[%s271] sm:$0xf] %v272
                %v274 = vld [vmem:[%s270 + $0x8] sm:$0xf]
                %275 = vst [vmem:[%s271 + $0x4] sm:$0xf] %v274
                %v276 = vld [vmem:[%s270 + $0x10] sm:$0xf]
                %277 = vst [vmem:[%s271 + $0x8] sm:$0xf] %v276
                %v278 = vld [vmem:[%s270 + $0x18] sm:$0xf]
                %279 = vst [vmem:[%s271 + $0xc] sm:$0xf] %v278
                %v280 = vld [vmem:[%s270 + $0x20] sm:$0xf]
                %281 = vst [vmem:[%s271 + $0x10] sm:$0xf] %v280
                %v282 = vld [vmem:[%s270 + $0x28] sm:$0xf]
                %283 = vst [vmem:[%s271 + $0x14] sm:$0xf] %v282
              $region49: #{whisper_encoder_forward.13} parent=43 // loop_footer
                %s269 = sadd.s32 1, %s265
              $region50: #{whisper_encoder_forward.13} parent=43 // loop_footer_branch
                %264 = sbr.rel target = $region46
              $region51: #{whisper_encoder_forward.13} parent=43 // loop_exit
                _
            $region44: #{whisper_encoder_forward.13} parent=35 // pred_fallthru
              _
          $region36: #{whisper_encoder_forward.13} parent=31 // pred_fallthru
            _
          %315 = vnop
        $region32: #{whisper_encoder_forward.13} parent=15 // pred_fallthru
          _
        // Predicated region
        $region70: #{whisper_encoder_forward.13} parent=15 // pred_check
          %p316 = pneg %p160
        $region71: #{whisper_encoder_forward.13} parent=15 // pred_check_branch
          %318 = sbr.rel (%p316) target = $region73
        $region72: #{whisper_encoder_forward.13} parent=15 // pred_region
          %p319 = scmp.lt.s32.totalorder %s20, 1
          %s320 = scalar_select %p319, %s20, 1
          %s321 = scalar_lea.vmem %s4, %s320
        $region73: #{whisper_encoder_forward.13} parent=15 // pred_fallthru
          _
      $region16: #{whisper_encoder_forward.13} parent=5 // pred_fallthru
        _
      %p322 = scmp.le.s32.totalorder 1, %s11
      %p323 = scmp.lt.s32.totalorder %s11, 17
      %p324 = pnand %p322, %p323
      %p325 = pneg %p324
      // Predicated region
      $region74: #{whisper_encoder_forward.13} parent=5 // pred_check
        _
      $region75: #{whisper_encoder_forward.13} parent=5 // pred_check_branch
        %327 = sbr.rel (%p324) target = $region77
      $region76: #{whisper_encoder_forward.13} parent=5 // pred_region
        %s328 = ssub.s32 %s11, 1
        %s329 = sand.u32 %s127, 1
        %s330 = sand.u32 %s127, 1
        %s331 = smul.addr %s330, 24
        %s332 = scalar_lea.vmem [#allocation2], %s331
        // Predicated region
        $region78: #{whisper_encoder_forward.13} parent=76 // pred_check
          %p333 = pneg %p140
        $region79: #{whisper_encoder_forward.13} parent=76 // pred_check_branch
          %335 = sbr.rel (%p333) target = $region81
        $region80: #{whisper_encoder_forward.13} parent=76 // pred_region
          _
        $region81: #{whisper_encoder_forward.13} parent=76 // pred_fallthru
          _
        %p336 = scmp.lt.s32.totalorder %s21, 1
        %s337 = scalar_select %p336, %s21, 1
        %p338 = scmp.lt.s32.totalorder %s22, 3
        %s339 = scalar_select %p338, %s22, 3
        %s340 = smul.addr %s337, 4
        %s341 = sadd.s32 %s339, %s340
        %s342 = smul.addr %s341, 4
        %s343 = scalar_lea.vmem %s0, %s342
        %p344 = pneg %p58
        %p345 = pneg %p55
        %p346 = scmp.lt.s32.totalorder %s21, 1
        %s347 = scalar_select %p346, %s21, 1
        %p348 = scmp.lt.s32.totalorder %s22, 3
        %s349 = scalar_select %p348, %s22, 3
        %s350 = smul.addr %s347, 4
        %s351 = sadd.s32 %s349, %s350
        %s352 = smul.addr %s351, 4
        %s353 = scalar_lea.vmem %s1, %s352
        %p354 = pneg %p86
        %p355 = pneg %p83
        %p356 = scmp.lt.s32.totalorder %s21, 1
        %s357 = scalar_select %p356, %s21, 1
        %p358 = scmp.lt.s32.totalorder %s22, 3
        %s359 = scalar_select %p358, %s22, 3
        %s360 = smul.addr %s357, 4
        %s361 = sadd.s32 %s359, %s360
        %s362 = smul.addr %s361, 4
        %s363 = scalar_lea.vmem %s2, %s362
        %p364 = pneg %p114
        %p365 = pneg %p111
        %s366 = sand.u32 %s127, 1
        %s367 = sand.u32 %s127, 1
        %s368 = smul.addr %s367, 24
        %s369 = scalar_lea.vmem [#allocation2], %s368
        %p370 = pneg %p140
        %p371 = pneg %p137
        %p372 = scmp.lt.s32.totalorder %s23, 1
        %s373 = scalar_select %p372, %s23, 1
        %s374 = scalar_lea.vmem %s4, %s373
        %p375 = pneg %p166
        %p376 = pneg %p163
        %p377 = pneg %p196
        %p378 = pneg %p193
        %p379 = scmp.lt.s32.totalorder %s21, 1
        %s380 = scalar_select %p379, %s21, 1
        %p381 = scmp.lt.s32.totalorder %s22, 3
        %s382 = scalar_select %p381, %s22, 3
        %p383 = scmp.lt.s32.totalorder %s23, 1
        %s384 = scalar_select %p383, %s23, 1
        %s385 = smul.addr %s382, 2
        %s386 = sadd.s32 %s384, %s385
        %s387 = smul.addr %s380, 8
        %s388 = sadd.s32 %s386, %s387
        %s389 = smul.addr %s388, 4
        %s390 = scalar_lea.vmem %s5, %s389
        %p391 = scmp.lt.s32.totalorder %s21, 1
        %s392 = scalar_select %p391, %s21, 1
        %p393 = scmp.lt.s32.totalorder %s22, 3
        %s394 = scalar_select %p393, %s22, 3
        %s395 = smul.addr %s392, 4
        %s396 = sadd.s32 %s394, %s395
        %s397 = smul.addr %s396, 4
        %s398 = scalar_lea.vmem %s0, %s397
        %p399 = scmp.lt.s32.totalorder %s21, 1
        %s400 = scalar_select %p399, %s21, 1
        %p401 = scmp.lt.s32.totalorder %s22, 3
        %s402 = scalar_select %p401, %s22, 3
        %s403 = smul.addr %s400, 4
        %s404 = sadd.s32 %s402, %s403
        %s405 = smul.addr %s404, 4
        %s406 = scalar_lea.vmem %s1, %s405
        %p407 = scmp.lt.s32.totalorder %s21, 1
        %s408 = scalar_select %p407, %s21, 1
        %p409 = scmp.lt.s32.totalorder %s22, 3
        %s410 = scalar_select %p409, %s22, 3
        %s411 = smul.addr %s408, 4
        %s412 = sadd.s32 %s410, %s411
        %s413 = smul.addr %s412, 4
        %s414 = scalar_lea.vmem %s2, %s413
        %p415 = scmp.lt.s32.totalorder %s23, 1
        %s416 = scalar_select %p415, %s23, 1
        %s417 = scalar_lea.vmem %s4, %s416
        %p418 = scmp.lt.s32.totalorder %s21, 1
        %s419 = scalar_select %p418, %s21, 1
        %p420 = scmp.lt.s32.totalorder %s22, 3
        %s421 = scalar_select %p420, %s22, 3
        %p422 = scmp.lt.s32.totalorder %s23, 1
        %s423 = scalar_select %p422, %s23, 1
        %s424 = smul.addr %s421, 2
        %s425 = sadd.s32 %s423, %s424
        %s426 = smul.addr %s419, 8
        %s427 = sadd.s32 %s425, %s426
        %s428 = smul.addr %s427, 4
        %s429 = scalar_lea.vmem %s5, %s428
        %v431 = vld [vmem:[%s398] sm:$0xf]
        %v432 = vld [vmem:[%s332] sm:$0xf]
        %v433 = vld [vmem:[%s332 + $0x4] sm:$0xf]
        %v434 = vld [vmem:[%s406] sm:$0xf]
        %s435 = scalar_lea.vmem %s332, 8 [#allocation2]
        %v436 = vld [vmem:[%s435] sm:$0xf]
        %v437 = vld [vmem:[%s435 + $0x4] sm:$0xf]
        %v440 = vunpack.c.l.b16 %v436
        %v441 = vunpack.c.l.b16 %v437
        %v442 = vpack.c.b16 %v441, %v440
        %vm444 = vcmask 130048
        %v446 = vsel %vm444, %v434, 0
        %448 = vmatprep.subr.bf16.mxu0 0
        %449 = vmatpush1.bf16.msra.mxu0 %v442
        %450 = vmatprep.subr.bf16.mxu0 0
        %451 = vmatpush1.bf16.msra.mxu0 0
        %452 = vmatprep.subr.bf16.mxu0 0
        %453 = vmatpush1.bf16.msra.mxu0 0
        %454 = vmatprep.subr.bf16.mxu0 0
        %455 = vmatpush1.bf16.msra.mxu0 0
        %456 = vmatprep.subr.bf16.mxu0 0
        %457 = vmatpush1.bf16.msra.mxu0 0
        %458 = vmatprep.subr.bf16.mxu0 0
        %459 = vmatpush1.bf16.msra.mxu0 0
        %460 = vmatprep.subr.bf16.mxu0 0
        %461 = vmatpush1.bf16.msra.mxu0 0
        %462 = vmatprep.subr.bf16.mxu0 0
        %463 = vmatpush1.bf16.msra.mxu0 0
        %464 = vmatprep.subr.bf16.mxu0 0
        %465 = vmatpush1.bf16.msra.mxu0 0
        %466 = vmatprep.subr.bf16.mxu0 0
        %467 = vmatpush1.bf16.msra.mxu0 0
        %468 = vmatprep.subr.bf16.mxu0 0
        %469 = vmatpush1.bf16.msra.mxu0 0
        %470 = vmatprep.subr.bf16.mxu0 0
        %471 = vmatpush1.bf16.msra.mxu0 0
        %472 = vmatprep.subr.bf16.mxu0 0
        %473 = vmatpush1.bf16.msra.mxu0 0
        %474 = vmatprep.subr.bf16.mxu0 0
        %475 = vmatpush1.bf16.msra.mxu0 0
        %476 = vmatprep.subr.bf16.mxu0 0
        %477 = vmatpush1.bf16.msra.mxu0 0
        %478 = vmatprep.subr.bf16.mxu0 0
        %479 = vmatpush1.bf16.msra.mxu0 0
        %480 = vmatprep.mubr.bf16.mxu0 0
        %481 = vmatmul.mubr.bf16.gmra.mrb[0].mxu0 %v446
        %v482 = vpop.f32.mrb[0].mxu0
        %v483 = vadd.f32 0.0, %v482
        %v484 = vpop.f32.mrb[0].mxu0
        %v485 = vpop.f32.mrb[0].mxu0
        %v486 = vpop.f32.mrb[0].mxu0
        %487 = vdwg.mxu0
        %v490 = vunpack.c.l.b16 %v432
        %v491 = vunpack.c.l.b16 %v433
        %v492 = vpack.c.b16 %v491, %v490
        %v495 = vsel %vm444, %v431, 0
        %497 = vmatprep.subr.bf16.mxu0 0
        %498 = vmatpush1.bf16.msra.mxu0 %v492
        %499 = vmatprep.subr.bf16.mxu0 0
        %500 = vmatpush1.bf16.msra.mxu0 0
        %501 = vmatprep.subr.bf16.mxu0 0
        %502 = vmatpush1.bf16.msra.mxu0 0
        %503 = vmatprep.subr.bf16.mxu0 0
        %504 = vmatpush1.bf16.msra.mxu0 0
        %505 = vmatprep.subr.bf16.mxu0 0
        %506 = vmatpush1.bf16.msra.mxu0 0
        %507 = vmatprep.subr.bf16.mxu0 0
        %508 = vmatpush1.bf16.msra.mxu0 0
        %509 = vmatprep.subr.bf16.mxu0 0
        %510 = vmatpush1.bf16.msra.mxu0 0
        %511 = vmatprep.subr.bf16.mxu0 0
        %512 = vmatpush1.bf16.msra.mxu0 0
        %513 = vmatprep.subr.bf16.mxu0 0
        %514 = vmatpush1.bf16.msra.mxu0 0
        %515 = vmatprep.subr.bf16.mxu0 0
        %516 = vmatpush1.bf16.msra.mxu0 0
        %517 = vmatprep.subr.bf16.mxu0 0
        %518 = vmatpush1.bf16.msra.mxu0 0
        %519 = vmatprep.subr.bf16.mxu0 0
        %520 = vmatpush1.bf16.msra.mxu0 0
        %521 = vmatprep.subr.bf16.mxu0 0
        %522 = vmatpush1.bf16.msra.mxu0 0
        %523 = vmatprep.subr.bf16.mxu0 0
        %524 = vmatpush1.bf16.msra.mxu0 0
        %525 = vmatprep.subr.bf16.mxu0 0
        %526 = vmatpush1.bf16.msra.mxu0 0
        %527 = vmatprep.subr.bf16.mxu0 0
        %528 = vmatpush1.bf16.msra.mxu0 0
        %529 = vmatprep.mubr.bf16.mxu0 0
        %530 = vmatmul.mubr.bf16.gmra.mrb[0].mxu0 %v495
        %v531 = vpop.f32.mrb[0].mxu0
        %v532 = vadd.f32 %v483, %v531
        %v533 = vpop.f32.mrb[0].mxu0
        %v534 = vpop.f32.mrb[0].mxu0
        %v535 = vpop.f32.mrb[0].mxu0
        %536 = vdwg.mxu0
        %v537 = vld [vmem:[%s414] sm:$0xf]
        %s538 = scalar_lea.vmem %s332, 16 [#allocation2]
        %v539 = vld [vmem:[%s538] sm:$0xf]
        %v540 = vld [vmem:[%s538 + $0x4] sm:$0xf]
        %v543 = vunpack.c.l.b16 %v539
        %v544 = vunpack.c.l.b16 %v540
        %v545 = vpack.c.b16 %v544, %v543
        %v548 = vsel %vm444, %v537, 0
        %550 = vmatprep.subr.bf16.mxu0 0
        %551 = vmatpush1.bf16.msra.mxu0 %v545
        %552 = vmatprep.subr.bf16.mxu0 0
        %553 = vmatpush1.bf16.msra.mxu0 0
        %554 = vmatprep.subr.bf16.mxu0 0
        %555 = vmatpush1.bf16.msra.mxu0 0
        %556 = vmatprep.subr.bf16.mxu0 0
        %557 = vmatpush1.bf16.msra.mxu0 0
        %558 = vmatprep.subr.bf16.mxu0 0
        %559 = vmatpush1.bf16.msra.mxu0 0
        %560 = vmatprep.subr.bf16.mxu0 0
        %561 = vmatpush1.bf16.msra.mxu0 0
        %562 = vmatprep.subr.bf16.mxu0 0
        %563 = vmatpush1.bf16.msra.mxu0 0
        %564 = vmatprep.subr.bf16.mxu0 0
        %565 = vmatpush1.bf16.msra.mxu0 0
        %566 = vmatprep.subr.bf16.mxu0 0
        %567 = vmatpush1.bf16.msra.mxu0 0
        %568 = vmatprep.subr.bf16.mxu0 0
        %569 = vmatpush1.bf16.msra.mxu0 0
        %570 = vmatprep.subr.bf16.mxu0 0
        %571 = vmatpush1.bf16.msra.mxu0 0
        %572 = vmatprep.subr.bf16.mxu0 0
        %573 = vmatpush1.bf16.msra.mxu0 0
        %574 = vmatprep.subr.bf16.mxu0 0
        %575 = vmatpush1.bf16.msra.mxu0 0
        %576 = vmatprep.subr.bf16.mxu0 0
        %577 = vmatpush1.bf16.msra.mxu0 0
        %578 = vmatprep.subr.bf16.mxu0 0
        %579 = vmatpush1.bf16.msra.mxu0 0
        %580 = vmatprep.subr.bf16.mxu0 0
        %581 = vmatpush1.bf16.msra.mxu0 0
        %582 = vmatprep.mubr.bf16.mxu0 0
        %583 = vmatmul.mubr.bf16.gmra.mrb[0].mxu0 %v548
        %v584 = vpop.f32.mrb[0].mxu0
        %v585 = vadd.f32 0.0, %v584
        %v586 = vpop.f32.mrb[0].mxu0
        %v587 = vpop.f32.mrb[0].mxu0
        %v588 = vpop.f32.mrb[0].mxu0
        %589 = vdwg.mxu0
        %v590 = vadd.f32 %v532, %v585
        %v591 = vld [vmem:[%s417] sm:$0x1]
        %v593 = vlaneseq
        %v594 = vshrl.u32 %v593, 7
        %v595 = vsub.s32 0, %v594
        %v596 = vrot.slane %v591, %v595
        %v598 = vadd.f32 %v590, %v596
        %v599 = vmul.f32 %v598, 0.5
        %v600 = vmul.f32 %v598, 0.044715
        %v601 = vmul.f32 %v600, %v598
        %v602 = vmul.f32 %v601, %v598
        %v603 = vadd.f32 %v598, %v602
        %v604 = vmul.f32 %v603, 0.7978846
        %v605 = vtanh.pop %v604
        %v606 = vadd.f32 %v605, 1.0
        %v607 = vmul.f32 %v599, %v606
        %v608 = vpack.c.bf16 %v607, %v607
        %609 = vst [vmem:[%s429] sm:$0xf] %v608
        %p610 = scmp.lt.s32.totalorder %s21, 1
        %s611 = scalar_select %p610, %s21, 1
        %p612 = scmp.lt.s32.totalorder %s22, 3
        %s613 = scalar_select %p612, %s22, 3
        %p614 = scmp.lt.s32.totalorder %s23, 1
        %s615 = scalar_select %p614, %s23, 1
        %s616 = smul.addr %s613, 2
        %s617 = sadd.s32 %s615, %s616
        %s618 = smul.addr %s611, 8
        %s619 = sadd.s32 %s617, %s618
        %s620 = smul.addr %s619, 4
        %s621 = scalar_lea.vmem %s5, %s620
        // Predicated region
        $region82: #{whisper_encoder_forward.13} parent=76 // pred_check
          %p622 = pneg %p193
        $region83: #{whisper_encoder_forward.13} parent=76 // pred_check_branch
          %624 = sbr.rel (%p622) target = $region85
        $region84: #{whisper_encoder_forward.13} parent=76 // pred_region
          _
        $region85: #{whisper_encoder_forward.13} parent=76 // pred_fallthru
          _
      $region77: #{whisper_encoder_forward.13} parent=5 // pred_fallthru
        _
      %p625 = scmp.le.s32.totalorder 2, %s11
      // Predicated region
      $region86: #{whisper_encoder_forward.13} parent=5 // pred_check
        %p626 = pneg %p625
      $region87: #{whisper_encoder_forward.13} parent=5 // pred_check_branch
        %628 = sbr.rel (%p626) target = $region89
      $region88: #{whisper_encoder_forward.13} parent=5 // pred_region
        %s629 = ssub.s32 %s11, 2
        // Predicated region
        $region90: #{whisper_encoder_forward.13} parent=88 // pred_check
          %p630 = pneg %p199
        $region91: #{whisper_encoder_forward.13} parent=88 // pred_check_branch
          %632 = sbr.rel (%p630) target = $region93
        $region92: #{whisper_encoder_forward.13} parent=88 // pred_region
          %p633 = scmp.lt.s32.totalorder %s24, 1
          %s634 = scalar_select %p633, %s24, 1
          %p635 = scmp.lt.s32.totalorder %s25, 3
          %s636 = scalar_select %p635, %s25, 3
          %p637 = scmp.lt.s32.totalorder %s26, 1
          %s638 = scalar_select %p637, %s26, 1
          %s639 = smul.addr %s636, 2
          %s640 = sadd.s32 %s638, %s639
          %s641 = smul.addr %s634, 8
          %s642 = sadd.s32 %s640, %s641
          %s643 = smul.addr %s642, 4
          %s644 = scalar_lea.vmem %s5, %s643
        $region93: #{whisper_encoder_forward.13} parent=88 // pred_fallthru
          _
      $region89: #{whisper_encoder_forward.13} parent=5 // pred_fallthru
        _
    $region6: #{whisper_encoder_forward.13} parent=1 // loop_footer
      %s15 = sadd.s32 1, %s11
    $region7: #{whisper_encoder_forward.13} parent=1 // loop_footer_branch
      %10 = sbr.rel target = $region3
    $region8: #{whisper_encoder_forward.13} parent=1 // loop_exit
      _

// kernel: whisper_encoder_forward.14
$region0: #{whisper_encoder_forward.14}
  #allocation0 [shape = 'u32[]', space=smem, size = 0x4, offset = 0x4, fixed_abs, tag = 'smem constant byte address 0x4 - core index']
  #allocation1 [shape = 'u32[144,128]{1,0:T(1,128)}', space=vmem, size = 0x12000, scoped, tag = 'internal scratch']
  %s0 = inlined_call_operand.vmem [shape: bf16[2,16,256], index: 0, kind: input, shape index: {}]
  %s1 = inlined_call_operand.vmem [shape: bf16[2,16,256], index: 1, kind: input, shape index: {}]
  %s2 = inlined_call_operand.vmem [shape: bf16[2,16,256], index: 2, kind: input, shape index: {}]
  %s3 = inlined_call_operand.vmem [shape: bf16[3,256,256], index: 3, kind: input, shape index: {}]
  %s4 = inlined_call_operand.vmem [shape: f32[1,256], index: 4, kind: input, shape index: {}]
  %s5 = inlined_call_operand.vmem [shape: bf16[2,16,256], index: 5, kind: output, shape index: {}]
  %s6 = sld [smem:[#allocation0]]
  $region94: #{whisper_encoder_forward.14} parent=0
    _
  %s8 = ssub.s32 1, %s6
  %s9 = scalar_select 0, %s8, %s6
  $region1: #{whisper_encoder_forward.14} parent=0
    #allocation2 [shape = 'u8[393216]{0}', space=vmem, size = 0x60000, scoped, tag = 'input window, operand 3']
    loop: start=0, step=1, limit=10
    $region2: #{whisper_encoder_forward.14} parent=1 // loop_pre_header
      _
    $region3: #{whisper_encoder_forward.14} parent=1 // loop_header
      %s11 = sphi 0, %s15
      %p12 = scmp.ge.s32.totalorder %s11, 10
      %s18 = sphi 0, %s37
      %s19 = sphi 0, %s33
      %s20 = sphi 0, %s29
      %s21 = sphi 0, %s18
      %s22 = sphi 0, %s19
      %s23 = sphi 0, %s20
      %s24 = sphi 0, %s21
      %s25 = sphi 0, %s22
      %s26 = sphi 0, %s23
      %s42 = sphi 0, %s44
      %s45 = sphi 0, %s42
      %s46 = sphi 0, %s45
      %s62 = sphi 0, %s46
      %s70 = sphi 0, %s72
      %s73 = sphi 0, %s70
      %s74 = sphi 0, %s73
      %s90 = sphi 0, %s74
      %s98 = sphi 0, %s100
      %s101 = sphi 0, %s98
      %s102 = sphi 0, %s101
      %s118 = sphi 0, %s102
      %s124 = sphi 0, %s126
      %s127 = sphi 0, %s124
      %s128 = sphi 0, %s127
      %s144 = sphi 0, %s128
      %s150 = sphi 0, %s152
      %s153 = sphi 0, %s150
      %s154 = sphi 0, %s153
      %s170 = sphi 0, %s154
      %s180 = sphi 0, %s182
      %s183 = sphi 0, %s180
      %s184 = sphi 0, %s183
      %s200 = sphi 0, %s184
    $region4: #{whisper_encoder_forward.14} parent=1 // loop_header_branch
      %14 = sbr.rel (%p12) target = $region8
    $region5: #{whisper_encoder_forward.14} parent=1 // loop_body
      %s16 = ssub.s32 %s11, 1
      %s17 = ssub.s32 %s11, 2
      %s27 = sadd.s32 1, %s20
      %p28 = scmp.ge.s32.totalorder %s27, 2
      %s29 = scalar_select %p28, 0, %s27
      %s30 = sadd.s32 1, %s19
      %s31 = scalar_select %p28, %s30, %s19
      %p32 = scmp.ge.s32.totalorder %s31, 2
      %s33 = scalar_select %p32, 0, %s31
      %s34 = sadd.s32 1, %s18
      %s35 = scalar_select %p32, %s34, %s18
      %p36 = scmp.ge.s32.totalorder %s35, 2
      %s37 = scalar_select %p36, 0, %s35
      %s38 = ssub.s32 %s18, %s37
      %s39 = ssub.s32 %s19, %s33
      %s40 = sor.u32 %s38, %s39
      %p41 = scmp.eq.s32.totalorder %s40, 0
      %s43 = sadd.s32 %s42, 1
      %s44 = scalar_select %p41, %s42, %s43
      %p47 = pneg %p41
      %p48 = scmp.eq.s32.totalorder %s11, 7
      %p49 = por %p47, %p48
      %p50 = scmp.ne.s32.totalorder %s42, %s45
      %p51 = scmp.eq.s32.totalorder %s11, 0
      %p52 = por %p50, %p51
      %p53 = scmp.ne.s32.totalorder %s42, %s45
      %p54 = scmp.eq.s32.totalorder %s16, 7
      %p55 = por %p53, %p54
      %p56 = scmp.ne.s32.totalorder %s45, %s46
      %p57 = scmp.eq.s32.totalorder %s16, 0
      %p58 = por %p56, %p57
      %p59 = scmp.ne.s32.totalorder %s45, %s46
      %p60 = scmp.eq.s32.totalorder %s17, 7
      %p61 = por %p59, %p60
      %p63 = scmp.ne.s32.totalorder %s46, %s62
      %p64 = scmp.eq.s32.totalorder %s17, 0
      %p65 = por %p63, %p64
      %s66 = ssub.s32 %s18, %s37
      %s67 = ssub.s32 %s19, %s33
      %s68 = sor.u32 %s66, %s67
      %p69 = scmp.eq.s32.totalorder %s68, 0
      %s71 = sadd.s32 %s70, 1
      %s72 = scalar_select %p69, %s70, %s71
      %p75 = pneg %p69
      %p76 = scmp.eq.s32.totalorder %s11, 7
      %p77 = por %p75, %p76
      %p78 = scmp.ne.s32.totalorder %s70, %s73
      %p79 = scmp.eq.s32.totalorder %s11, 0
      %p80 = por %p78, %p79
      %p81 = scmp.ne.s32.totalorder %s70, %s73
      %p82 = scmp.eq.s32.totalorder %s16, 7
      %p83 = por %p81, %p82
      %p84 = scmp.ne.s32.totalorder %s73, %s74
      %p85 = scmp.eq.s32.totalorder %s16, 0
      %p86 = por %p84, %p85
      %p87 = scmp.ne.s32.totalorder %s73, %s74
      %p88 = scmp.eq.s32.totalorder %s17, 7
      %p89 = por %p87, %p88
      %p91 = scmp.ne.s32.totalorder %s74, %s90
      %p92 = scmp.eq.s32.totalorder %s17, 0
      %p93 = por %p91, %p92
      %s94 = ssub.s32 %s18, %s37
      %s95 = ssub.s32 %s19, %s33
      %s96 = sor.u32 %s94, %s95
      %p97 = scmp.eq.s32.totalorder %s96, 0
      %s99 = sadd.s32 %s98, 1
      %s100 = scalar_select %p97, %s98, %s99
      %p103 = pneg %p97
      %p104 = scmp.eq.s32.totalorder %s11, 7
      %p105 = por %p103, %p104
      %p106 = scmp.ne.s32.totalorder %s98, %s101
      %p107 = scmp.eq.s32.totalorder %s11, 0
      %p108 = por %p106, %p107
      %p109 = scmp.ne.s32.totalorder %s98, %s101
      %p110 = scmp.eq.s32.totalorder %s16, 7
      %p111 = por %p109, %p110
      %p112 = scmp.ne.s32.totalorder %s101, %s102
      %p113 = scmp.eq.s32.totalorder %s16, 0
      %p114 = por %p112, %p113
      %p115 = scmp.ne.s32.totalorder %s101, %s102
      %p116 = scmp.eq.s32.totalorder %s17, 7
      %p117 = por %p115, %p116
      %p119 = scmp.ne.s32.totalorder %s102, %s118
      %p120 = scmp.eq.s32.totalorder %s17, 0
      %p121 = por %p119, %p120
      %s122 = ssub.s32 %s20, %s29
      %p123 = scmp.eq.s32.totalorder %s122, 0
      %s125 = sadd.s32 %s124, 1
      %s126 = scalar_select %p123, %s124, %s125
      %p129 = pneg %p123
      %p130 = scmp.eq.s32.totalorder %s11, 7
      %p131 = por %p129, %p130
      %p132 = scmp.ne.s32.totalorder %s124, %s127
      %p133 = scmp.eq.s32.totalorder %s11, 0
      %p134 = por %p132, %p133
      %p135 = scmp.ne.s32.totalorder %s124, %s127
      %p136 = scmp.eq.s32.totalorder %s16, 7
      %p137 = por %p135, %p136
      %p138 = scmp.ne.s32.totalorder %s127, %s128
      %p139 = scmp.eq.s32.totalorder %s16, 0
      %p140 = por %p138, %p139
      %p141 = scmp.ne.s32.totalorder %s127, %s128
      %p142 = scmp.eq.s32.totalorder %s17, 7
      %p143 = por %p141, %p142
      %p145 = scmp.ne.s32.totalorder %s128, %s144
      %p146 = scmp.eq.s32.totalorder %s17, 0
      %p147 = por %p145, %p146
      %s148 = ssub.s32 %s20, %s29
      %p149 = scmp.eq.s32.totalorder %s148, 0
      %s151 = sadd.s32 %s150, 1
      %s152 = scalar_select %p149, %s150, %s151
      %p155 = pneg %p149
      %p156 = scmp.eq.s32.totalorder %s11, 7
      %p157 = por %p155, %p156
      %p158 = scmp.ne.s32.totalorder %s150, %s153
      %p159 = scmp.eq.s32.totalorder %s11, 0
      %p160 = por %p158, %p159
      %p161 = scmp.ne.s32.totalorder %s150, %s153
      %p162 = scmp.eq.s32.totalorder %s16, 7
      %p163 = por %p161, %p162
      %p164 = scmp.ne.s32.totalorder %s153, %s154
      %p165 = scmp.eq.s32.totalorder %s16, 0
      %p166 = por %p164, %p165
      %p167 = scmp.ne.s32.totalorder %s153, %s154
      %p168 = scmp.eq.s32.totalorder %s17, 7
      %p169 = por %p167, %p168
      %p171 = scmp.ne.s32.totalorder %s154, %s170
      %p172 = scmp.eq.s32.totalorder %s17, 0
      %p173 = por %p171, %p172
      %s174 = ssub.s32 %s18, %s37
      %s175 = ssub.s32 %s19, %s33
      %s176 = sor.u32 %s174, %s175
      %s177 = ssub.s32 %s20, %s29
      %s178 = sor.u32 %s176, %s177
      %p179 = scmp.eq.s32.totalorder %s178, 0
      %s181 = sadd.s32 %s180, 1
      %s182 = scalar_select %p179, %s180, %s181
      %p185 = pneg %p179
      %p186 = scmp.eq.s32.totalorder %s11, 7
      %p187 = por %p185, %p186
      %p188 = scmp.ne.s32.totalorder %s180, %s183
      %p189 = scmp.eq.s32.totalorder %s11, 0
      %p190 = por %p188, %p189
      %p191 = scmp.ne.s32.totalorder %s180, %s183
      %p192 = scmp.eq.s32.totalorder %s16, 7
      %p193 = por %p191, %p192
      %p194 = scmp.ne.s32.totalorder %s183, %s184
      %p195 = scmp.eq.s32.totalorder %s16, 0
      %p196 = por %p194, %p195
      %p197 = scmp.ne.s32.totalorder %s183, %s184
      %p198 = scmp.eq.s32.totalorder %s17, 7
      %p199 = por %p197, %p198
      %p201 = scmp.ne.s32.totalorder %s184, %s200
      %p202 = scmp.eq.s32.totalorder %s17, 0
      %p203 = por %p201, %p202
      %p204 = scmp.le.s32.totalorder 1, %s11
      %p205 = scmp.lt.s32.totalorder %s11, 9
      %p206 = pnand %p204, %p205
      %p207 = pneg %p206
      // Predicated region
      $region9: #{whisper_encoder_forward.14} parent=5 // pred_check
        _
      $region10: #{whisper_encoder_forward.14} parent=5 // pred_check_branch
        %209 = sbr.rel (%p206) target = $region12
      $region11: #{whisper_encoder_forward.14} parent=5 // pred_region
        %s210 = ssub.s32 %s11, 1
      $region12: #{whisper_encoder_forward.14} parent=5 // pred_fallthru
        _
      %p211 = scmp.lt.s32.totalorder %s11, 8
      // Predicated region
      $region13: #{whisper_encoder_forward.14} parent=5 // pred_check
        %p212 = pneg %p211
      $region14: #{whisper_encoder_forward.14} parent=5 // pred_check_branch
        %214 = sbr.rel (%p212) target = $region16
      $region15: #{whisper_encoder_forward.14} parent=5 // pred_region
        // Predicated region
        $region17: #{whisper_encoder_forward.14} parent=15 // pred_check
          %p215 = pneg %p52
        $region18: #{whisper_encoder_forward.14} parent=15 // pred_check_branch
          %217 = sbr.rel (%p215) target = $region20
        $region19: #{whisper_encoder_forward.14} parent=15 // pred_region
          %p218 = scmp.lt.s32.totalorder %s18, 1
          %s219 = scalar_select %p218, %s18, 1
          %p220 = scmp.lt.s32.totalorder %s19, 1
          %s221 = scalar_select %p220, %s19, 1
          %s222 = smul.addr %s221, 2
          %s223 = smul.addr %s219, 4
          %s224 = sadd.s32 %s222, %s223
          %s225 = smul.addr %s224, 4
          %s226 = scalar_lea.vmem %s0, %s225
        $region20: #{whisper_encoder_forward.14} parent=15 // pred_fallthru
          _
        // Predicated region
        $region21: #{whisper_encoder_forward.14} parent=15 // pred_check
          %p227 = pneg %p80
        $region22: #{whisper_encoder_forward.14} parent=15 // pred_check_branch
          %229 = sbr.rel (%p227) target = $region24
        $region23: #{whisper_encoder_forward.14} parent=15 // pred_region
          %p230 = scmp.lt.s32.totalorder %s18, 1
          %s231 = scalar_select %p230, %s18, 1
          %p232 = scmp.lt.s32.totalorder %s19, 1
          %s233 = scalar_select %p232, %s19, 1
          %s234 = smul.addr %s233, 2
          %s235 = smul.addr %s231, 4
          %s236 = sadd.s32 %s234, %s235
          %s237 = smul.addr %s236, 4
          %s238 = scalar_lea.vmem %s1, %s237
        $region24: #{whisper_encoder_forward.14} parent=15 // pred_fallthru
          _
        // Predicated region
        $region25: #{whisper_encoder_forward.14} parent=15 // pred_check
          %p239 = pneg %p108
        $region26: #{whisper_encoder_forward.14} parent=15 // pred_check_branch
          %241 = sbr.rel (%p239) target = $region28
        $region27: #{whisper_encoder_forward.14} parent=15 // pred_region
          %p242 = scmp.lt.s32.totalorder %s18, 1
          %s243 = scalar_select %p242, %s18, 1
          %p244 = scmp.lt.s32.totalorder %s19, 1
          %s245 = scalar_select %p244, %s19, 1
          %s246 = smul.addr %s245, 2
          %s247 = smul.addr %s243, 4
          %s248 = sadd.s32 %s246, %s247
          %s249 = smul.addr %s248, 4
          %s250 = scalar_lea.vmem %s2, %s249
        $region28: #{whisper_encoder_forward.14} parent=15 // pred_fallthru
          _
        // Predicated region
        $region29: #{whisper_encoder_forward.14} parent=15 // pred_check
          %p251 = pneg %p134
        $region30: #{whisper_encoder_forward.14} parent=15 // pred_check_branch
          %253 = sbr.rel (%p251) target = $region32
        $region31: #{whisper_encoder_forward.14} parent=15 // pred_region
          %s254 = sand.u32 %s124, 1
          %s255 = sand.u32 %s124, 1
          %s256 = smul.addr %s255, 384
          %s257 = scalar_lea.vmem [#allocation2], %s256
          %s258 = smul.addr %s20, 4
          %s259 = scalar_lea.vmem %s3, %s258
          // Predicated region
          $region33: #{whisper_encoder_forward.14} parent=31 // pred_check
            _
          $region34: #{whisper_encoder_forward.14} parent=31 // pred_check_branch
            %261 = sbr.rel (0) target = $region36
          $region35: #{whisper_encoder_forward.14} parent=31 // pred_region
            // Predicated region
            $region37: #{whisper_encoder_forward.14} parent=35 // pred_check
              _
            $region38: #{whisper_encoder_forward.14} parent=35 // pred_check_branch
              %263 = sbr.rel target = $region40
            $region39: #{whisper_encoder_forward.14} parent=35 // pred_region
              // Predicated region
              $region52: #{whisper_encoder_forward.14} parent=39 // pred_check
                _
              $region53: #{whisper_encoder_forward.14} parent=39 // pred_check_branch
                %468 = sbr.rel (0) target = $region55
              $region54: #{whisper_encoder_forward.14} parent=39 // pred_region
                loop: start=0, step=1, limit=1
                $region56: #{whisper_encoder_forward.14} parent=54 // loop_pre_header
                  _
                $region57: #{whisper_encoder_forward.14} parent=54 // loop_header
                  %s470 = sphi 0, %s474
                  %p471 = scmp.ge.s32.totalorder %s470, 1
                  %s475 = sphi %s259, %s259
                  %s476 = sphi %s257, %s257
                $region58: #{whisper_encoder_forward.14} parent=54 // loop_header_branch
                  %473 = sbr.rel (%p471) target = $region62
                $region59: #{whisper_encoder_forward.14} parent=54 // loop_body
                  _
                $region60: #{whisper_encoder_forward.14} parent=54 // loop_footer
                  %s474 = sadd.s32 1, %s470
                $region61: #{whisper_encoder_forward.14} parent=54 // loop_footer_branch
                  %469 = sbr.rel target = $region57
                $region62: #{whisper_encoder_forward.14} parent=54 // loop_exit
                  _
                loop: start=0, step=1, limit=1
                $region63: #{whisper_encoder_forward.14} parent=54 // loop_pre_header
                  _
                $region64: #{whisper_encoder_forward.14} parent=54 // loop_header
                  %s479 = sphi 0, %s483
                  %p480 = scmp.ge.s32.totalorder %s479, 1
                  %s484 = sphi %s259, %s259
                  %s485 = sphi %s257, %s257
                $region65: #{whisper_encoder_forward.14} parent=54 // loop_header_branch
                  %482 = sbr.rel (%p480) target = $region69
                $region66: #{whisper_encoder_forward.14} parent=54 // loop_body
                  %v486 = vld [vmem:[%s484] sm:$0xf]
                  %487 = vst [vmem:[%s485] sm:$0xf] %v486
                  %v488 = vld [vmem:[%s484 + $0x8] sm:$0xf]
                  %489 = vst [vmem:[%s485 + $0x4] sm:$0xf] %v488
                  %v490 = vld [vmem:[%s484 + $0x10] sm:$0xf]
                  %491 = vst [vmem:[%s485 + $0x8] sm:$0xf] %v490
                  %v492 = vld [vmem:[%s484 + $0x18] sm:$0xf]
                  %493 = vst [vmem:[%s485 + $0xc] sm:$0xf] %v492
                  %v494 = vld [vmem:[%s484 + $0x20] sm:$0xf]
                  %495 = vst [vmem:[%s485 + $0x10] sm:$0xf] %v494
                  %v496 = vld [vmem:[%s484 + $0x28] sm:$0xf]
                  %497 = vst [vmem:[%s485 + $0x14] sm:$0xf] %v496
                  %v498 = vld [vmem:[%s484 + $0x30] sm:$0xf]
                  %499 = vst [vmem:[%s485 + $0x18] sm:$0xf] %v498
                  %v500 = vld [vmem:[%s484 + $0x38] sm:$0xf]
                  %501 = vst [vmem:[%s485 + $0x1c] sm:$0xf] %v500
                  %v502 = vld [vmem:[%s484 + $0x40] sm:$0xf]
                  %503 = vst [vmem:[%s485 + $0x20] sm:$0xf] %v502
                  %v504 = vld [vmem:[%s484 + $0x48] sm:$0xf]
                  %505 = vst [vmem:[%s485 + $0x24] sm:$0xf] %v504
                  %v506 = vld [vmem:[%s484 + $0x50] sm:$0xf]
                  %507 = vst [vmem:[%s485 + $0x28] sm:$0xf] %v506
                  %v508 = vld [vmem:[%s484 + $0x58] sm:$0xf]
                  %509 = vst [vmem:[%s485 + $0x2c] sm:$0xf] %v508
                  %v510 = vld [vmem:[%s484 + $0x60] sm:$0xf]
                  %511 = vst [vmem:[%s485 + $0x30] sm:$0xf] %v510
                  %v512 = vld [vmem:[%s484 + $0x68] sm:$0xf]
                  %513 = vst [vmem:[%s485 + $0x34] sm:$0xf] %v512
                  %v514 = vld [vmem:[%s484 + $0x70] sm:$0xf]
                  %515 = vst [vmem:[%s485 + $0x38] sm:$0xf] %v514
                  %v516 = vld [vmem:[%s484 + $0x78] sm:$0xf]
                  %517 = vst [vmem:[%s485 + $0x3c] sm:$0xf] %v516
                  %v518 = vld [vmem:[%s484 + $0x80] sm:$0xf]
                  %519 = vst [vmem:[%s485 + $0x40] sm:$0xf] %v518
                  %v520 = vld [vmem:[%s484 + $0x88] sm:$0xf]
                  %521 = vst [vmem:[%s485 + $0x44] sm:$0xf] %v520
                  %v522 = vld [vmem:[%s484 + $0x90] sm:$0xf]
                  %523 = vst [vmem:[%s485 + $0x48] sm:$0xf] %v522
                  %v524 = vld [vmem:[%s484 + $0x98] sm:$0xf]
                  %525 = vst [vmem:[%s485 + $0x4c] sm:$0xf] %v524
                  %v526 = vld [vmem:[%s484 + $0xa0] sm:$0xf]
                  %527 = vst [vmem:[%s485 + $0x50] sm:$0xf] %v526
                  %v528 = vld [vmem:[%s484 + $0xa8] sm:$0xf]
                  %529 = vst [vmem:[%s485 + $0x54] sm:$0xf] %v528
                  %v530 = vld [vmem:[%s484 + $0xb0] sm:$0xf]
                  %531 = vst [vmem:[%s485 + $0x58] sm:$0xf] %v530
                  %v532 = vld [vmem:[%s484 + $0xb8] sm:$0xf]
                  %533 = vst [vmem:[%s485 + $0x5c] sm:$0xf] %v532
                  %v534 = vld [vmem:[%s484 + $0xc0] sm:$0xf]
                  %535 = vst [vmem:[%s485 + $0x60] sm:$0xf] %v534
                  %v536 = vld [vmem:[%s484 + $0xc8] sm:$0xf]
                  %537 = vst [vmem:[%s485 + $0x64] sm:$0xf] %v536
                  %v538 = vld [vmem:[%s484 + $0xd0] sm:$0xf]
                  %539 = vst [vmem:[%s485 + $0x68] sm:$0xf] %v538
                  %v540 = vld [vmem:[%s484 + $0xd8] sm:$0xf]
                  %541 = vst [vmem:[%s485 + $0x6c] sm:$0xf] %v540
                  %v542 = vld [vmem:[%s484 + $0xe0] sm:$0xf]
                  %543 = vst [vmem:[%s485 + $0x70] sm:$0xf] %v542
                  %v544 = vld [vmem:[%s484 + $0xe8] sm:$0xf]
                  %545 = vst [vmem:[%s485 + $0x74] sm:$0xf] %v544
                  %v546 = vld [vmem:[%s484 + $0xf0] sm:$0xf]
                  %547 = vst [vmem:[%s485 + $0x78] sm:$0xf] %v546
                  %v548 = vld [vmem:[%s484 + $0xf8] sm:$0xf]
                  %549 = vst [vmem:[%s485 + $0x7c] sm:$0xf] %v548
                  %v550 = vld [vmem:[%s484 + $0x100] sm:$0xf]
                  %551 = vst [vmem:[%s485 + $0x80] sm:$0xf] %v550
                  %v552 = vld [vmem:[%s484 + $0x108] sm:$0xf]
                  %553 = vst [vmem:[%s485 + $0x84] sm:$0xf] %v552
                  %v554 = vld [vmem:[%s484 + $0x110] sm:$0xf]
                  %555 = vst [vmem:[%s485 + $0x88] sm:$0xf] %v554
                  %v556 = vld [vmem:[%s484 + $0x118] sm:$0xf]
                  %557 = vst [vmem:[%s485 + $0x8c] sm:$0xf] %v556
                  %v558 = vld [vmem:[%s484 + $0x120] sm:$0xf]
                  %559 = vst [vmem:[%s485 + $0x90] sm:$0xf] %v558
                  %v560 = vld [vmem:[%s484 + $0x128] sm:$0xf]
                  %561 = vst [vmem:[%s485 + $0x94] sm:$0xf] %v560
                  %v562 = vld [vmem:[%s484 + $0x130] sm:$0xf]
                  %563 = vst [vmem:[%s485 + $0x98] sm:$0xf] %v562
                  %v564 = vld [vmem:[%s484 + $0x138] sm:$0xf]
                  %565 = vst [vmem:[%s485 + $0x9c] sm:$0xf] %v564
                  %v566 = vld [vmem:[%s484 + $0x140] sm:$0xf]
                  %567 = vst [vmem:[%s485 + $0xa0] sm:$0xf] %v566
                  %v568 = vld [vmem:[%s484 + $0x148] sm:$0xf]
                  %569 = vst [vmem:[%s485 + $0xa4] sm:$0xf] %v568
                  %v570 = vld [vmem:[%s484 + $0x150] sm:$0xf]
                  %571 = vst [vmem:[%s485 + $0xa8] sm:$0xf] %v570
                  %v572 = vld [vmem:[%s484 + $0x158] sm:$0xf]
                  %573 = vst [vmem:[%s485 + $0xac] sm:$0xf] %v572
                  %v574 = vld [vmem:[%s484 + $0x160] sm:$0xf]
                  %575 = vst [vmem:[%s485 + $0xb0] sm:$0xf] %v574
                  %v576 = vld [vmem:[%s484 + $0x168] sm:$0xf]
                  %577 = vst [vmem:[%s485 + $0xb4] sm:$0xf] %v576
                  %v578 = vld [vmem:[%s484 + $0x170] sm:$0xf]
                  %579 = vst [vmem:[%s485 + $0xb8] sm:$0xf] %v578
                  %v580 = vld [vmem:[%s484 + $0x178] sm:$0xf]
                  %581 = vst [vmem:[%s485 + $0xbc] sm:$0xf] %v580
                  %v582 = vld [vmem:[%s484 + $0x180] sm:$0xf]
                  %583 = vst [vmem:[%s485 + $0xc0] sm:$0xf] %v582
                  %v584 = vld [vmem:[%s484 + $0x188] sm:$0xf]
                  %585 = vst [vmem:[%s485 + $0xc4] sm:$0xf] %v584
                  %v586 = vld [vmem:[%s484 + $0x190] sm:$0xf]
                  %587 = vst [vmem:[%s485 + $0xc8] sm:$0xf] %v586
                  %v588 = vld [vmem:[%s484 + $0x198] sm:$0xf]
                  %589 = vst [vmem:[%s485 + $0xcc] sm:$0xf] %v588
                  %v590 = vld [vmem:[%s484 + $0x1a0] sm:$0xf]
                  %591 = vst [vmem:[%s485 + $0xd0] sm:$0xf] %v590
                  %v592 = vld [vmem:[%s484 + $0x1a8] sm:$0xf]
                  %593 = vst [vmem:[%s485 + $0xd4] sm:$0xf] %v592
                  %v594 = vld [vmem:[%s484 + $0x1b0] sm:$0xf]
                  %595 = vst [vmem:[%s485 + $0xd8] sm:$0xf] %v594
                  %v596 = vld [vmem:[%s484 + $0x1b8] sm:$0xf]
                  %597 = vst [vmem:[%s485 + $0xdc] sm:$0xf] %v596
                  %v598 = vld [vmem:[%s484 + $0x1c0] sm:$0xf]
                  %599 = vst [vmem:[%s485 + $0xe0] sm:$0xf] %v598
                  %v600 = vld [vmem:[%s484 + $0x1c8] sm:$0xf]
                  %601 = vst [vmem:[%s485 + $0xe4] sm:$0xf] %v600
                  %v602 = vld [vmem:[%s484 + $0x1d0] sm:$0xf]
                  %603 = vst [vmem:[%s485 + $0xe8] sm:$0xf] %v602
                  %v604 = vld [vmem:[%s484 + $0x1d8] sm:$0xf]
                  %605 = vst [vmem:[%s485 + $0xec] sm:$0xf] %v604
                  %v606 = vld [vmem:[%s484 + $0x1e0] sm:$0xf]
                  %607 = vst [vmem:[%s485 + $0xf0] sm:$0xf] %v606
                  %v608 = vld [vmem:[%s484 + $0x1e8] sm:$0xf]
                  %609 = vst [vmem:[%s485 + $0xf4] sm:$0xf] %v608
                  %v610 = vld [vmem:[%s484 + $0x1f0] sm:$0xf]
                  %611 = vst [vmem:[%s485 + $0xf8] sm:$0xf] %v610
                  %v612 = vld [vmem:[%s484 + $0x1f8] sm:$0xf]
                  %613 = vst [vmem:[%s485 + $0xfc] sm:$0xf] %v612
                  %v614 = vld [vmem:[%s484 + $0x200] sm:$0xf]
                  %615 = vst [vmem:[%s485 + $0x100] sm:$0xf] %v614
                  %v616 = vld [vmem:[%s484 + $0x208] sm:$0xf]
                  %617 = vst [vmem:[%s485 + $0x104] sm:$0xf] %v616
                  %v618 = vld [vmem:[%s484 + $0x210] sm:$0xf]
                  %619 = vst [vmem:[%s485 + $0x108] sm:$0xf] %v618
                  %v620 = vld [vmem:[%s484 + $0x218] sm:$0xf]
                  %621 = vst [vmem:[%s485 + $0x10c] sm:$0xf] %v620
                  %v622 = vld [vmem:[%s484 + $0x220] sm:$0xf]
                  %623 = vst [vmem:[%s485 + $0x110] sm:$0xf] %v622
                  %v624 = vld [vmem:[%s484 + $0x228] sm:$0xf]
                  %625 = vst [vmem:[%s485 + $0x114] sm:$0xf] %v624
                  %v626 = vld [vmem:[%s484 + $0x230] sm:$0xf]
                  %627 = vst [vmem:[%s485 + $0x118] sm:$0xf] %v626
                  %v628 = vld [vmem:[%s484 + $0x238] sm:$0xf]
                  %629 = vst [vmem:[%s485 + $0x11c] sm:$0xf] %v628
                  %v630 = vld [vmem:[%s484 + $0x240] sm:$0xf]
                  %631 = vst [vmem:[%s485 + $0x120] sm:$0xf] %v630
                  %v632 = vld [vmem:[%s484 + $0x248] sm:$0xf]
                  %633 = vst [vmem:[%s485 + $0x124] sm:$0xf] %v632
                  %v634 = vld [vmem:[%s484 + $0x250] sm:$0xf]
                  %635 = vst [vmem:[%s485 + $0x128] sm:$0xf] %v634
                  %v636 = vld [vmem:[%s484 + $0x258] sm:$0xf]
                  %637 = vst [vmem:[%s485 + $0x12c] sm:$0xf] %v636
                  %v638 = vld [vmem:[%s484 + $0x260] sm:$0xf]
                  %639 = vst [vmem:[%s485 + $0x130] sm:$0xf] %v638
                  %v640 = vld [vmem:[%s484 + $0x268] sm:$0xf]
                  %641 = vst [vmem:[%s485 + $0x134] sm:$0xf] %v640
                  %v642 = vld [vmem:[%s484 + $0x270] sm:$0xf]
                  %643 = vst [vmem:[%s485 + $0x138] sm:$0xf] %v642
                  %v644 = vld [vmem:[%s484 + $0x278] sm:$0xf]
                  %645 = vst [vmem:[%s485 + $0x13c] sm:$0xf] %v644
                  %v646 = vld [vmem:[%s484 + $0x280] sm:$0xf]
                  %647 = vst [vmem:[%s485 + $0x140] sm:$0xf] %v646
                  %v648 = vld [vmem:[%s484 + $0x288] sm:$0xf]
                  %649 = vst [vmem:[%s485 + $0x144] sm:$0xf] %v648
                  %v650 = vld [vmem:[%s484 + $0x290] sm:$0xf]
                  %651 = vst [vmem:[%s485 + $0x148] sm:$0xf] %v650
                  %v652 = vld [vmem:[%s484 + $0x298] sm:$0xf]
                  %653 = vst [vmem:[%s485 + $0x14c] sm:$0xf] %v652
                  %v654 = vld [vmem:[%s484 + $0x2a0] sm:$0xf]
                  %655 = vst [vmem:[%s485 + $0x150] sm:$0xf] %v654
                  %v656 = vld [vmem:[%s484 + $0x2a8] sm:$0xf]
                  %657 = vst [vmem:[%s485 + $0x154] sm:$0xf] %v656
                  %v658 = vld [vmem:[%s484 + $0x2b0] sm:$0xf]
                  %659 = vst [vmem:[%s485 + $0x158] sm:$0xf] %v658
                  %v660 = vld [vmem:[%s484 + $0x2b8] sm:$0xf]
                  %661 = vst [vmem:[%s485 + $0x15c] sm:$0xf] %v660
                  %v662 = vld [vmem:[%s484 + $0x2c0] sm:$0xf]
                  %663 = vst [vmem:[%s485 + $0x160] sm:$0xf] %v662
                  %v664 = vld [vmem:[%s484 + $0x2c8] sm:$0xf]
                  %665 = vst [vmem:[%s485 + $0x164] sm:$0xf] %v664
                  %v666 = vld [vmem:[%s484 + $0x2d0] sm:$0xf]
                  %667 = vst [vmem:[%s485 + $0x168] sm:$0xf] %v666
                  %v668 = vld [vmem:[%s484 + $0x2d8] sm:$0xf]
                  %669 = vst [vmem:[%s485 + $0x16c] sm:$0xf] %v668
                  %v670 = vld [vmem:[%s484 + $0x2e0] sm:$0xf]
                  %671 = vst [vmem:[%s485 + $0x170] sm:$0xf] %v670
                  %v672 = vld [vmem:[%s484 + $0x2e8] sm:$0xf]
                  %673 = vst [vmem:[%s485 + $0x174] sm:$0xf] %v672
                  %v674 = vld [vmem:[%s484 + $0x2f0] sm:$0xf]
                  %675 = vst [vmem:[%s485 + $0x178] sm:$0xf] %v674
                  %v676 = vld [vmem:[%s484 + $0x2f8] sm:$0xf]
                  %677 = vst [vmem:[%s485 + $0x17c] sm:$0xf] %v676
                $region67: #{whisper_encoder_forward.14} parent=54 // loop_footer
                  %s483 = sadd.s32 1, %s479
                $region68: #{whisper_encoder_forward.14} parent=54 // loop_footer_branch
                  %478 = sbr.rel target = $region64
                $region69: #{whisper_encoder_forward.14} parent=54 // loop_exit
                  _
              $region55: #{whisper_encoder_forward.14} parent=39 // pred_fallthru
                _
            $region40: #{whisper_encoder_forward.14} parent=35 // pred_fallthru
              _
            // Predicated region
            $region41: #{whisper_encoder_forward.14} parent=35 // pred_check
              _
            $region42: #{whisper_encoder_forward.14} parent=35 // pred_check_branch
              %265 = sbr.rel (0) target = $region44
            $region43: #{whisper_encoder_forward.14} parent=35 // pred_region
              loop: start=0, step=1, limit=1
              $region45: #{whisper_encoder_forward.14} parent=43 // loop_pre_header
                _
              $region46: #{whisper_encoder_forward.14} parent=43 // loop_header
                %s268 = sphi 0, %s272
                %p269 = scmp.ge.s32.totalorder %s268, 1
                %s273 = sphi %s259, %s259
                %s274 = sphi %s257, %s257
              $region47: #{whisper_encoder_forward.14} parent=43 // loop_header_branch
                %271 = sbr.rel (%p269) target = $region51
              $region48: #{whisper_encoder_forward.14} parent=43 // loop_body
                %v275 = vld [vmem:[%s273] sm:$0xf]
                %276 = vst [vmem:[%s274] sm:$0xf] %v275
                %v277 = vld [vmem:[%s273 + $0x8] sm:$0xf]
                %278 = vst [vmem:[%s274 + $0x4] sm:$0xf] %v277
                %v279 = vld [vmem:[%s273 + $0x10] sm:$0xf]
                %280 = vst [vmem:[%s274 + $0x8] sm:$0xf] %v279
                %v281 = vld [vmem:[%s273 + $0x18] sm:$0xf]
                %282 = vst [vmem:[%s274 + $0xc] sm:$0xf] %v281
                %v283 = vld [vmem:[%s273 + $0x20] sm:$0xf]
                %284 = vst [vmem:[%s274 + $0x10] sm:$0xf] %v283
                %v285 = vld [vmem:[%s273 + $0x28] sm:$0xf]
                %286 = vst [vmem:[%s274 + $0x14] sm:$0xf] %v285
                %v287 = vld [vmem:[%s273 + $0x30] sm:$0xf]
                %288 = vst [vmem:[%s274 + $0x18] sm:$0xf] %v287
                %v289 = vld [vmem:[%s273 + $0x38] sm:$0xf]
                %290 = vst [vmem:[%s274 + $0x1c] sm:$0xf] %v289
                %v291 = vld [vmem:[%s273 + $0x40] sm:$0xf]
                %292 = vst [vmem:[%s274 + $0x20] sm:$0xf] %v291
                %v293 = vld [vmem:[%s273 + $0x48] sm:$0xf]
                %294 = vst [vmem:[%s274 + $0x24] sm:$0xf] %v293
                %v295 = vld [vmem:[%s273 + $0x50] sm:$0xf]
                %296 = vst [vmem:[%s274 + $0x28] sm:$0xf] %v295
                %v297 = vld [vmem:[%s273 + $0x58] sm:$0xf]
                %298 = vst [vmem:[%s274 + $0x2c] sm:$0xf] %v297
                %v299 = vld [vmem:[%s273 + $0x60] sm:$0xf]
                %300 = vst [vmem:[%s274 + $0x30] sm:$0xf] %v299
                %v301 = vld [vmem:[%s273 + $0x68] sm:$0xf]
                %302 = vst [vmem:[%s274 + $0x34] sm:$0xf] %v301
                %v303 = vld [vmem:[%s273 + $0x70] sm:$0xf]
                %304 = vst [vmem:[%s274 + $0x38] sm:$0xf] %v303
                %v305 = vld [vmem:[%s273 + $0x78] sm:$0xf]
                %306 = vst [vmem:[%s274 + $0x3c] sm:$0xf] %v305
                %v307 = vld [vmem:[%s273 + $0x80] sm:$0xf]
                %308 = vst [vmem:[%s274 + $0x40] sm:$0xf] %v307
                %v309 = vld [vmem:[%s273 + $0x88] sm:$0xf]
                %310 = vst [vmem:[%s274 + $0x44] sm:$0xf] %v309
                %v311 = vld [vmem:[%s273 + $0x90] sm:$0xf]
                %312 = vst [vmem:[%s274 + $0x48] sm:$0xf] %v311
                %v313 = vld [vmem:[%s273 + $0x98] sm:$0xf]
                %314 = vst [vmem:[%s274 + $0x4c] sm:$0xf] %v313
                %v315 = vld [vmem:[%s273 + $0xa0] sm:$0xf]
                %316 = vst [vmem:[%s274 + $0x50] sm:$0xf] %v315
                %v317 = vld [vmem:[%s273 + $0xa8] sm:$0xf]
                %318 = vst [vmem:[%s274 + $0x54] sm:$0xf] %v317
                %v319 = vld [vmem:[%s273 + $0xb0] sm:$0xf]
                %320 = vst [vmem:[%s274 + $0x58] sm:$0xf] %v319
                %v321 = vld [vmem:[%s273 + $0xb8] sm:$0xf]
                %322 = vst [vmem:[%s274 + $0x5c] sm:$0xf] %v321
                %v323 = vld [vmem:[%s273 + $0xc0] sm:$0xf]
                %324 = vst [vmem:[%s274 + $0x60] sm:$0xf] %v323
                %v325 = vld [vmem:[%s273 + $0xc8] sm:$0xf]
                %326 = vst [vmem:[%s274 + $0x64] sm:$0xf] %v325
                %v327 = vld [vmem:[%s273 + $0xd0] sm:$0xf]
                %328 = vst [vmem:[%s274 + $0x68] sm:$0xf] %v327
                %v329 = vld [vmem:[%s273 + $0xd8] sm:$0xf]
                %330 = vst [vmem:[%s274 + $0x6c] sm:$0xf] %v329
                %v331 = vld [vmem:[%s273 + $0xe0] sm:$0xf]
                %332 = vst [vmem:[%s274 + $0x70] sm:$0xf] %v331
                %v333 = vld [vmem:[%s273 + $0xe8] sm:$0xf]
                %334 = vst [vmem:[%s274 + $0x74] sm:$0xf] %v333
                %v335 = vld [vmem:[%s273 + $0xf0] sm:$0xf]
                %336 = vst [vmem:[%s274 + $0x78] sm:$0xf] %v335
                %v337 = vld [vmem:[%s273 + $0xf8] sm:$0xf]
                %338 = vst [vmem:[%s274 + $0x7c] sm:$0xf] %v337
                %v339 = vld [vmem:[%s273 + $0x100] sm:$0xf]
                %340 = vst [vmem:[%s274 + $0x80] sm:$0xf] %v339
                %v341 = vld [vmem:[%s273 + $0x108] sm:$0xf]
                %342 = vst [vmem:[%s274 + $0x84] sm:$0xf] %v341
                %v343 = vld [vmem:[%s273 + $0x110] sm:$0xf]
                %344 = vst [vmem:[%s274 + $0x88] sm:$0xf] %v343
                %v345 = vld [vmem:[%s273 + $0x118] sm:$0xf]
                %346 = vst [vmem:[%s274 + $0x8c] sm:$0xf] %v345
                %v347 = vld [vmem:[%s273 + $0x120] sm:$0xf]
                %348 = vst [vmem:[%s274 + $0x90] sm:$0xf] %v347
                %v349 = vld [vmem:[%s273 + $0x128] sm:$0xf]
                %350 = vst [vmem:[%s274 + $0x94] sm:$0xf] %v349
                %v351 = vld [vmem:[%s273 + $0x130] sm:$0xf]
                %352 = vst [vmem:[%s274 + $0x98] sm:$0xf] %v351
                %v353 = vld [vmem:[%s273 + $0x138] sm:$0xf]
                %354 = vst [vmem:[%s274 + $0x9c] sm:$0xf] %v353
                %v355 = vld [vmem:[%s273 + $0x140] sm:$0xf]
                %356 = vst [vmem:[%s274 + $0xa0] sm:$0xf] %v355
                %v357 = vld [vmem:[%s273 + $0x148] sm:$0xf]
                %358 = vst [vmem:[%s274 + $0xa4] sm:$0xf] %v357
                %v359 = vld [vmem:[%s273 + $0x150] sm:$0xf]
                %360 = vst [vmem:[%s274 + $0xa8] sm:$0xf] %v359
                %v361 = vld [vmem:[%s273 + $0x158] sm:$0xf]
                %362 = vst [vmem:[%s274 + $0xac] sm:$0xf] %v361
                %v363 = vld [vmem:[%s273 + $0x160] sm:$0xf]
                %364 = vst [vmem:[%s274 + $0xb0] sm:$0xf] %v363
                %v365 = vld [vmem:[%s273 + $0x168] sm:$0xf]
                %366 = vst [vmem:[%s274 + $0xb4] sm:$0xf] %v365
                %v367 = vld [vmem:[%s273 + $0x170] sm:$0xf]
                %368 = vst [vmem:[%s274 + $0xb8] sm:$0xf] %v367
                %v369 = vld [vmem:[%s273 + $0x178] sm:$0xf]
                %370 = vst [vmem:[%s274 + $0xbc] sm:$0xf] %v369
                %v371 = vld [vmem:[%s273 + $0x180] sm:$0xf]
                %372 = vst [vmem:[%s274 + $0xc0] sm:$0xf] %v371
                %v373 = vld [vmem:[%s273 + $0x188] sm:$0xf]
                %374 = vst [vmem:[%s274 + $0xc4] sm:$0xf] %v373
                %v375 = vld [vmem:[%s273 + $0x190] sm:$0xf]
                %376 = vst [vmem:[%s274 + $0xc8] sm:$0xf] %v375
                %v377 = vld [vmem:[%s273 + $0x198] sm:$0xf]
                %378 = vst [vmem:[%s274 + $0xcc] sm:$0xf] %v377
                %v379 = vld [vmem:[%s273 + $0x1a0] sm:$0xf]
                %380 = vst [vmem:[%s274 + $0xd0] sm:$0xf] %v379
                %v381 = vld [vmem:[%s273 + $0x1a8] sm:$0xf]
                %382 = vst [vmem:[%s274 + $0xd4] sm:$0xf] %v381
                %v383 = vld [vmem:[%s273 + $0x1b0] sm:$0xf]
                %384 = vst [vmem:[%s274 + $0xd8] sm:$0xf] %v383
                %v385 = vld [vmem:[%s273 + $0x1b8] sm:$0xf]
                %386 = vst [vmem:[%s274 + $0xdc] sm:$0xf] %v385
                %v387 = vld [vmem:[%s273 + $0x1c0] sm:$0xf]
                %388 = vst [vmem:[%s274 + $0xe0] sm:$0xf] %v387
                %v389 = vld [vmem:[%s273 + $0x1c8] sm:$0xf]
                %390 = vst [vmem:[%s274 + $0xe4] sm:$0xf] %v389
                %v391 = vld [vmem:[%s273 + $0x1d0] sm:$0xf]
                %392 = vst [vmem:[%s274 + $0xe8] sm:$0xf] %v391
                %v393 = vld [vmem:[%s273 + $0x1d8] sm:$0xf]
                %394 = vst [vmem:[%s274 + $0xec] sm:$0xf] %v393
                %v395 = vld [vmem:[%s273 + $0x1e0] sm:$0xf]
                %396 = vst [vmem:[%s274 + $0xf0] sm:$0xf] %v395
                %v397 = vld [vmem:[%s273 + $0x1e8] sm:$0xf]
                %398 = vst [vmem:[%s274 + $0xf4] sm:$0xf] %v397
                %v399 = vld [vmem:[%s273 + $0x1f0] sm:$0xf]
                %400 = vst [vmem:[%s274 + $0xf8] sm:$0xf] %v399
                %v401 = vld [vmem:[%s273 + $0x1f8] sm:$0xf]
                %402 = vst [vmem:[%s274 + $0xfc] sm:$0xf] %v401
                %v403 = vld [vmem:[%s273 + $0x200] sm:$0xf]
                %404 = vst [vmem:[%s274 + $0x100] sm:$0xf] %v403
                %v405 = vld [vmem:[%s273 + $0x208] sm:$0xf]
                %406 = vst [vmem:[%s274 + $0x104] sm:$0xf] %v405
                %v407 = vld [vmem:[%s273 + $0x210] sm:$0xf]
                %408 = vst [vmem:[%s274 + $0x108] sm:$0xf] %v407
                %v409 = vld [vmem:[%s273 + $0x218] sm:$0xf]
                %410 = vst [vmem:[%s274 + $0x10c] sm:$0xf] %v409
                %v411 = vld [vmem:[%s273 + $0x220] sm:$0xf]
                %412 = vst [vmem:[%s274 + $0x110] sm:$0xf] %v411
                %v413 = vld [vmem:[%s273 + $0x228] sm:$0xf]
                %414 = vst [vmem:[%s274 + $0x114] sm:$0xf] %v413
                %v415 = vld [vmem:[%s273 + $0x230] sm:$0xf]
                %416 = vst [vmem:[%s274 + $0x118] sm:$0xf] %v415
                %v417 = vld [vmem:[%s273 + $0x238] sm:$0xf]
                %418 = vst [vmem:[%s274 + $0x11c] sm:$0xf] %v417
                %v419 = vld [vmem:[%s273 + $0x240] sm:$0xf]
                %420 = vst [vmem:[%s274 + $0x120] sm:$0xf] %v419
                %v421 = vld [vmem:[%s273 + $0x248] sm:$0xf]
                %422 = vst [vmem:[%s274 + $0x124] sm:$0xf] %v421
                %v423 = vld [vmem:[%s273 + $0x250] sm:$0xf]
                %424 = vst [vmem:[%s274 + $0x128] sm:$0xf] %v423
                %v425 = vld [vmem:[%s273 + $0x258] sm:$0xf]
                %426 = vst [vmem:[%s274 + $0x12c] sm:$0xf] %v425
                %v427 = vld [vmem:[%s273 + $0x260] sm:$0xf]
                %428 = vst [vmem:[%s274 + $0x130] sm:$0xf] %v427
                %v429 = vld [vmem:[%s273 + $0x268] sm:$0xf]
                %430 = vst [vmem:[%s274 + $0x134] sm:$0xf] %v429
                %v431 = vld [vmem:[%s273 + $0x270] sm:$0xf]
                %432 = vst [vmem:[%s274 + $0x138] sm:$0xf] %v431
                %v433 = vld [vmem:[%s273 + $0x278] sm:$0xf]
                %434 = vst [vmem:[%s274 + $0x13c] sm:$0xf] %v433
                %v435 = vld [vmem:[%s273 + $0x280] sm:$0xf]
                %436 = vst [vmem:[%s274 + $0x140] sm:$0xf] %v435
                %v437 = vld [vmem:[%s273 + $0x288] sm:$0xf]
                %438 = vst [vmem:[%s274 + $0x144] sm:$0xf] %v437
                %v439 = vld [vmem:[%s273 + $0x290] sm:$0xf]
                %440 = vst [vmem:[%s274 + $0x148] sm:$0xf] %v439
                %v441 = vld [vmem:[%s273 + $0x298] sm:$0xf]
                %442 = vst [vmem:[%s274 + $0x14c] sm:$0xf] %v441
                %v443 = vld [vmem:[%s273 + $0x2a0] sm:$0xf]
                %444 = vst [vmem:[%s274 + $0x150] sm:$0xf] %v443
                %v445 = vld [vmem:[%s273 + $0x2a8] sm:$0xf]
                %446 = vst [vmem:[%s274 + $0x154] sm:$0xf] %v445
                %v447 = vld [vmem:[%s273 + $0x2b0] sm:$0xf]
                %448 = vst [vmem:[%s274 + $0x158] sm:$0xf] %v447
                %v449 = vld [vmem:[%s273 + $0x2b8] sm:$0xf]
                %450 = vst [vmem:[%s274 + $0x15c] sm:$0xf] %v449
                %v451 = vld [vmem:[%s273 + $0x2c0] sm:$0xf]
                %452 = vst [vmem:[%s274 + $0x160] sm:$0xf] %v451
                %v453 = vld [vmem:[%s273 + $0x2c8] sm:$0xf]
                %454 = vst [vmem:[%s274 + $0x164] sm:$0xf] %v453
                %v455 = vld [vmem:[%s273 + $0x2d0] sm:$0xf]
                %456 = vst [vmem:[%s274 + $0x168] sm:$0xf] %v455
                %v457 = vld [vmem:[%s273 + $0x2d8] sm:$0xf]
                %458 = vst [vmem:[%s274 + $0x16c] sm:$0xf] %v457
                %v459 = vld [vmem:[%s273 + $0x2e0] sm:$0xf]
                %460 = vst [vmem:[%s274 + $0x170] sm:$0xf] %v459
                %v461 = vld [vmem:[%s273 + $0x2e8] sm:$0xf]
                %462 = vst [vmem:[%s274 + $0x174] sm:$0xf] %v461
                %v463 = vld [vmem:[%s273 + $0x2f0] sm:$0xf]
                %464 = vst [vmem:[%s274 + $0x178] sm:$0xf] %v463
                %v465 = vld [vmem:[%s273 + $0x2f8] sm:$0xf]
                %466 = vst [vmem:[%s274 + $0x17c] sm:$0xf] %v465
              $region49: #{whisper_encoder_forward.14} parent=43 // loop_footer
                %s272 = sadd.s32 1, %s268
              $region50: #{whisper_encoder_forward.14} parent=43 // loop_footer_branch
                %267 = sbr.rel target = $region46
              $region51: #{whisper_encoder_forward.14} parent=43 // loop_exit
                _
            $region44: #{whisper_encoder_forward.14} parent=35 // pred_fallthru
              _
          $region36: #{whisper_encoder_forward.14} parent=31 // pred_fallthru
            _
          %678 = vnop
        $region32: #{whisper_encoder_forward.14} parent=15 // pred_fallthru
          _
        // Predicated region
        $region70: #{whisper_encoder_forward.14} parent=15 // pred_check
          %p679 = pneg %p160
        $region71: #{whisper_encoder_forward.14} parent=15 // pred_check_branch
          %681 = sbr.rel (%p679) target = $region73
        $region72: #{whisper_encoder_forward.14} parent=15 // pred_region
          %p682 = scmp.lt.s32.totalorder %s20, 1
          %s683 = scalar_select %p682, %s20, 1
          %s684 = scalar_lea.vmem %s4, %s683
        $region73: #{whisper_encoder_forward.14} parent=15 // pred_fallthru
          _
      $region16: #{whisper_encoder_forward.14} parent=5 // pred_fallthru
        _
      %p685 = scmp.le.s32.totalorder 1, %s11
      %p686 = scmp.lt.s32.totalorder %s11, 9
      %p687 = pnand %p685, %p686
      %p688 = pneg %p687
      // Predicated region
      $region74: #{whisper_encoder_forward.14} parent=5 // pred_check
        _
      $region75: #{whisper_encoder_forward.14} parent=5 // pred_check_branch
        %690 = sbr.rel (%p687) target = $region77
      $region76: #{whisper_encoder_forward.14} parent=5 // pred_region
        %s691 = ssub.s32 %s11, 1
        %s692 = sand.u32 %s127, 1
        %s693 = sand.u32 %s127, 1
        %s694 = smul.addr %s693, 384
        %s695 = scalar_lea.vmem [#allocation2], %s694
        // Predicated region
        $region78: #{whisper_encoder_forward.14} parent=76 // pred_check
          %p696 = pneg %p140
        $region79: #{whisper_encoder_forward.14} parent=76 // pred_check_branch
          %698 = sbr.rel (%p696) target = $region81
        $region80: #{whisper_encoder_forward.14} parent=76 // pred_region
          _
        $region81: #{whisper_encoder_forward.14} parent=76 // pred_fallthru
          _
        %p699 = scmp.lt.s32.totalorder %s21, 1
        %s700 = scalar_select %p699, %s21, 1
        %p701 = scmp.lt.s32.totalorder %s22, 1
        %s702 = scalar_select %p701, %s22, 1
        %s703 = smul.addr %s702, 2
        %s704 = smul.addr %s700, 4
        %s705 = sadd.s32 %s703, %s704
        %s706 = smul.addr %s705, 4
        %s707 = scalar_lea.vmem %s0, %s706
        %p708 = pneg %p58
        %p709 = pneg %p55
        %p710 = scmp.lt.s32.totalorder %s21, 1
        %s711 = scalar_select %p710, %s21, 1
        %p712 = scmp.lt.s32.totalorder %s22, 1
        %s713 = scalar_select %p712, %s22, 1
        %s714 = smul.addr %s713, 2
        %s715 = smul.addr %s711, 4
        %s716 = sadd.s32 %s714, %s715
        %s717 = smul.addr %s716, 4
        %s718 = scalar_lea.vmem %s1, %s717
        %p719 = pneg %p86
        %p720 = pneg %p83
        %p721 = scmp.lt.s32.totalorder %s21, 1
        %s722 = scalar_select %p721, %s21, 1
        %p723 = scmp.lt.s32.totalorder %s22, 1
        %s724 = scalar_select %p723, %s22, 1
        %s725 = smul.addr %s724, 2
        %s726 = smul.addr %s722, 4
        %s727 = sadd.s32 %s725, %s726
        %s728 = smul.addr %s727, 4
        %s729 = scalar_lea.vmem %s2, %s728
        %p730 = pneg %p114
        %p731 = pneg %p111
        %s732 = sand.u32 %s127, 1
        %s733 = sand.u32 %s127, 1
        %s734 = smul.addr %s733, 384
        %s735 = scalar_lea.vmem [#allocation2], %s734
        %p736 = pneg %p140
        %p737 = pneg %p137
        %p738 = scmp.lt.s32.totalorder %s23, 1
        %s739 = scalar_select %p738, %s23, 1
        %s740 = scalar_lea.vmem %s4, %s739
        %p741 = pneg %p166
        %p742 = pneg %p163
        %p743 = pneg %p196
        %p744 = pneg %p193
        %p745 = scmp.lt.s32.totalorder %s21, 1
        %s746 = scalar_select %p745, %s21, 1
        %p747 = scmp.lt.s32.totalorder %s22, 1
        %s748 = scalar_select %p747, %s22, 1
        %p749 = scmp.lt.s32.totalorder %s23, 1
        %s750 = scalar_select %p749, %s23, 1
        %s751 = smul.addr %s748, 2
        %s752 = sadd.s32 %s750, %s751
        %s753 = smul.addr %s746, 4
        %s754 = sadd.s32 %s752, %s753
        %s755 = smul.addr %s754, 4
        %s756 = scalar_lea.vmem %s5, %s755
        %p757 = scmp.lt.s32.totalorder %s21, 1
        %s758 = scalar_select %p757, %s21, 1
        %p759 = scmp.lt.s32.totalorder %s22, 1
        %s760 = scalar_select %p759, %s22, 1
        %s761 = smul.addr %s760, 2
        %s762 = smul.addr %s758, 4
        %s763 = sadd.s32 %s761, %s762
        %s764 = smul.addr %s763, 4
        %s765 = scalar_lea.vmem %s0, %s764
        %p766 = scmp.lt.s32.totalorder %s21, 1
        %s767 = scalar_select %p766, %s21, 1
        %p768 = scmp.lt.s32.totalorder %s22, 1
        %s769 = scalar_select %p768, %s22, 1
        %s770 = smul.addr %s769, 2
        %s771 = smul.addr %s767, 4
        %s772 = sadd.s32 %s770, %s771
        %s773 = smul.addr %s772, 4
        %s774 = scalar_lea.vmem %s1, %s773
        %p775 = scmp.lt.s32.totalorder %s21, 1
        %s776 = scalar_select %p775, %s21, 1
        %p777 = scmp.lt.s32.totalorder %s22, 1
        %s778 = scalar_select %p777, %s22, 1
        %s779 = smul.addr %s778, 2
        %s780 = smul.addr %s776, 4
        %s781 = sadd.s32 %s779, %s780
        %s782 = smul.addr %s781, 4
        %s783 = scalar_lea.vmem %s2, %s782
        %p784 = scmp.lt.s32.totalorder %s23, 1
        %s785 = scalar_select %p784, %s23, 1
        %s786 = scalar_lea.vmem %s4, %s785
        %p787 = scmp.lt.s32.totalorder %s21, 1
        %s788 = scalar_select %p787, %s21, 1
        %p789 = scmp.lt.s32.totalorder %s22, 1
        %s790 = scalar_select %p789, %s22, 1
        %p791 = scmp.lt.s32.totalorder %s23, 1
        %s792 = scalar_select %p791, %s23, 1
        %s793 = smul.addr %s790, 2
        %s794 = sadd.s32 %s792, %s793
        %s795 = smul.addr %s788, 4
        %s796 = sadd.s32 %s794, %s795
        %s797 = smul.addr %s796, 4
        %s798 = scalar_lea.vmem %s5, %s797
        %v800 = vld [vmem:[%s765] sm:$0xff]
        %v801 = vld [vmem:[%s695] sm:$0xf]
        %v802 = vld [vmem:[%s695 + $0x4] sm:$0xf]
        %v803 = vld [vmem:[%s695 + $0x8] sm:$0xf]
        %v804 = vld [vmem:[%s695 + $0xc] sm:$0xf]
        %v805 = vld [vmem:[%s695 + $0x10] sm:$0xf]
        %v806 = vld [vmem:[%s695 + $0x14] sm:$0xf]
        %v807 = vld [vmem:[%s695 + $0x18] sm:$0xf]
        %v808 = vld [vmem:[%s695 + $0x1c] sm:$0xf]
        %v809 = vld [vmem:[%s695 + $0x20] sm:$0xf]
        %v810 = vld [vmem:[%s695 + $0x24] sm:$0xf]
        %v811 = vld [vmem:[%s695 + $0x28] sm:$0xf]
        %v812 = vld [vmem:[%s695 + $0x2c] sm:$0xf]
        %v813 = vld [vmem:[%s695 + $0x30] sm:$0xf]
        %v814 = vld [vmem:[%s695 + $0x34] sm:$0xf]
        %v815 = vld [vmem:[%s695 + $0x38] sm:$0xf]
        %v816 = vld [vmem:[%s695 + $0x3c] sm:$0xf]
        %v817 = vld [vmem:[%s695 + $0x40] sm:$0xf]
        %v818 = vld [vmem:[%s695 + $0x44] sm:$0xf]
        %v819 = vld [vmem:[%s695 + $0x48] sm:$0xf]
        %v820 = vld [vmem:[%s695 + $0x4c] sm:$0xf]
        %v821 = vld [vmem:[%s695 + $0x50] sm:$0xf]
        %v822 = vld [vmem:[%s695 + $0x54] sm:$0xf]
        %v823 = vld [vmem:[%s695 + $0x58] sm:$0xf]
        %v824 = vld [vmem:[%s695 + $0x5c] sm:$0xf]
        %v825 = vld [vmem:[%s695 + $0x60] sm:$0xf]
        %v826 = vld [vmem:[%s695 + $0x64] sm:$0xf]
        %v827 = vld [vmem:[%s695 + $0x68] sm:$0xf]
        %v828 = vld [vmem:[%s695 + $0x6c] sm:$0xf]
        %v829 = vld [vmem:[%s695 + $0x70] sm:$0xf]
        %v830 = vld [vmem:[%s695 + $0x74] sm:$0xf]
        %v831 = vld [vmem:[%s695 + $0x78] sm:$0xf]
        %v832 = vld [vmem:[%s695 + $0x7c] sm:$0xf]
        %v833 = vld [vmem:[%s774] sm:$0xff]
        %s834 = scalar_lea.vmem %s695, 128 [#allocation2]
        %v835 = vld [vmem:[%s834] sm:$0xf]
        %v836 = vld [vmem:[%s834 + $0x4] sm:$0xf]
        %v837 = vld [vmem:[%s834 + $0x8] sm:$0xf]
        %v838 = vld [vmem:[%s834 + $0xc] sm:$0xf]
        %v839 = vld [vmem:[%s834 + $0x10] sm:$0xf]
        %v840 = vld [vmem:[%s834 + $0x14] sm:$0xf]
        %v841 = vld [vmem:[%s834 + $0x18] sm:$0xf]
        %v842 = vld [vmem:[%s834 + $0x1c] sm:$0xf]
        %v843 = vld [vmem:[%s834 + $0x20] sm:$0xf]
        %v844 = vld [vmem:[%s834 + $0x24] sm:$0xf]
        %v845 = vld [vmem:[%s834 + $0x28] sm:$0xf]
        %v846 = vld [vmem:[%s834 + $0x2c] sm:$0xf]
        %v847 = vld [vmem:[%s834 + $0x30] sm:$0xf]
        %v848 = vld [vmem:[%s834 + $0x34] sm:$0xf]
        %v849 = vld [vmem:[%s834 + $0x38] sm:$0xf]
        %v850 = vld [vmem:[%s834 + $0x3c] sm:$0xf]
        %v851 = vld [vmem:[%s834 + $0x40] sm:$0xf]
        %v852 = vld [vmem:[%s834 + $0x44] sm:$0xf]
        %v853 = vld [vmem:[%s834 + $0x48] sm:$0xf]
        %v854 = vld [vmem:[%s834 + $0x4c] sm:$0xf]
        %v855 = vld [vmem:[%s834 + $0x50] sm:$0xf]
        %v856 = vld [vmem:[%s834 + $0x54] sm:$0xf]
        %v857 = vld [vmem:[%s834 + $0x58] sm:$0xf]
        %v858 = vld [vmem:[%s834 + $0x5c] sm:$0xf]
        %v859 = vld [vmem:[%s834 + $0x60] sm:$0xf]
        %v860 = vld [vmem:[%s834 + $0x64] sm:$0xf]
        %v861 = vld [vmem:[%s834 + $0x68] sm:$0xf]
        %v862 = vld [vmem:[%s834 + $0x6c] sm:$0xf]
        %v863 = vld [vmem:[%s834 + $0x70] sm:$0xf]
        %v864 = vld [vmem:[%s834 + $0x74] sm:$0xf]
        %v865 = vld [vmem:[%s834 + $0x78] sm:$0xf]
        %v866 = vld [vmem:[%s834 + $0x7c] sm:$0xf]
        %v868 = vunpack.c.l.b16 %v833
        %v869 = vunpack.c.h.b16 %v833
        %v870 = vpack.c.b16 %v868, %v868
        %v871 = vpack.c.b16 %v869, %v869
        %v906 = vunpack.c.l.b16 %v835
        %v907 = vunpack.c.l.b16 %v836
        %v908 = vunpack.c.l.b16 %v837
        %v909 = vunpack.c.l.b16 %v838
        %v910 = vunpack.c.l.b16 %v839
        %v911 = vunpack.c.l.b16 %v840
        %v912 = vunpack.c.l.b16 %v841
        %v913 = vunpack.c.l.b16 %v842
        %v914 = vunpack.c.l.b16 %v843
        %v915 = vunpack.c.l.b16 %v844
        %v916 = vunpack.c.l.b16 %v845
        %v917 = vunpack.c.l.b16 %v846
        %v918 = vunpack.c.l.b16 %v847
        %v919 = vunpack.c.l.b16 %v848
        %v920 = vunpack.c.l.b16 %v849
        %v921 = vunpack.c.l.b16 %v850
        %v922 = vunpack.c.l.b16 %v851
        %v923 = vunpack.c.l.b16 %v852
        %v924 = vunpack.c.l.b16 %v853
        %v925 = vunpack.c.l.b16 %v854
        %v926 = vunpack.c.l.b16 %v855
        %v927 = vunpack.c.l.b16 %v856
        %v928 = vunpack.c.l.b16 %v857
        %v929 = vunpack.c.l.b16 %v858
        %v930 = vunpack.c.l.b16 %v859
        %v931 = vunpack.c.l.b16 %v860
        %v932 = vunpack.c.l.b16 %v861
        %v933 = vunpack.c.l.b16 %v862
        %v934 = vunpack.c.l.b16 %v863
        %v935 = vunpack.c.l.b16 %v864
        %v936 = vunpack.c.l.b16 %v865
        %v937 = vunpack.c.l.b16 %v866
        %v938 = vpack.c.b16 %v907, %v906
        %v939 = vpack.c.b16 %v909, %v908
        %v940 = vpack.c.b16 %v911, %v910
        %v941 = vpack.c.b16 %v913, %v912
        %v942 = vpack.c.b16 %v915, %v914
        %v943 = vpack.c.b16 %v917, %v916
        %v944 = vpack.c.b16 %v919, %v918
        %v945 = vpack.c.b16 %v921, %v920
        %v946 = vpack.c.b16 %v923, %v922
        %v947 = vpack.c.b16 %v925, %v924
        %v948 = vpack.c.b16 %v927, %v926
        %v949 = vpack.c.b16 %v929, %v928
        %v950 = vpack.c.b16 %v931, %v930
        %v951 = vpack.c.b16 %v933, %v932
        %v952 = vpack.c.b16 %v935, %v934
        %v953 = vpack.c.b16 %v937, %v936
        %970 = vmatprep.subr.bf16.mxu0 0
        %971 = vmatpush1.bf16.msra.mxu0 %v938
        %972 = vmatprep.subr.bf16.mxu0 0
        %973 = vmatpush1.bf16.msra.mxu0 %v939
        %974 = vmatprep.subr.bf16.mxu0 0
        %975 = vmatpush1.bf16.msra.mxu0 %v940
        %976 = vmatprep.subr.bf16.mxu0 0
        %977 = vmatpush1.bf16.msra.mxu0 %v941
        %978 = vmatprep.subr.bf16.mxu0 0
        %979 = vmatpush1.bf16.msra.mxu0 %v942
        %980 = vmatprep.subr.bf16.mxu0 0
        %981 = vmatpush1.bf16.msra.mxu0 %v943
        %982 = vmatprep.subr.bf16.mxu0 0
        %983 = vmatpush1.bf16.msra.mxu0 %v944
        %984 = vmatprep.subr.bf16.mxu0 0
        %985 = vmatpush1.bf16.msra.mxu0 %v945
        %986 = vmatprep.subr.bf16.mxu0 0
        %987 = vmatpush1.bf16.msra.mxu0 %v946
        %988 = vmatprep.subr.bf16.mxu0 0
        %989 = vmatpush1.bf16.msra.mxu0 %v947
        %990 = vmatprep.subr.bf16.mxu0 0
        %991 = vmatpush1.bf16.msra.mxu0 %v948
        %992 = vmatprep.subr.bf16.mxu0 0
        %993 = vmatpush1.bf16.msra.mxu0 %v949
        %994 = vmatprep.subr.bf16.mxu0 0
        %995 = vmatpush1.bf16.msra.mxu0 %v950
        %996 = vmatprep.subr.bf16.mxu0 0
        %997 = vmatpush1.bf16.msra.mxu0 %v951
        %998 = vmatprep.subr.bf16.mxu0 0
        %999 = vmatpush1.bf16.msra.mxu0 %v952
        %1000 = vmatprep.subr.bf16.mxu0 0
        %1001 = vmatpush1.bf16.msra.mxu0 %v953
        %1002 = vmatprep.mubr.bf16.mxu0 %v871
        %1003 = vmatmul.mubr.bf16.gmra.mrb[0].mxu0 %v870
        %v1004 = vpop.f32.mrb[0].mxu0
        %v1005 = vadd.f32 0.0, %v1004
        %v1006 = vpop.f32.mrb[0].mxu0
        %v1007 = vpop.f32.mrb[0].mxu0
        %v1008 = vpop.f32.mrb[0].mxu0
        %1009 = vdwg.mxu0
        %v1011 = vunpack.c.l.b16 %v800
        %v1012 = vunpack.c.h.b16 %v800
        %v1013 = vpack.c.b16 %v1011, %v1011
        %v1014 = vpack.c.b16 %v1012, %v1012
        %v1049 = vunpack.c.l.b16 %v801
        %v1050 = vunpack.c.l.b16 %v802
        %v1051 = vunpack.c.l.b16 %v803
        %v1052 = vunpack.c.l.b16 %v804
        %v1053 = vunpack.c.l.b16 %v805
        %v1054 = vunpack.c.l.b16 %v806
        %v1055 = vunpack.c.l.b16 %v807
        %v1056 = vunpack.c.l.b16 %v808
        %v1057 = vunpack.c.l.b16 %v809
        %v1058 = vunpack.c.l.b16 %v810
        %v1059 = vunpack.c.l.b16 %v811
        %v1060 = vunpack.c.l.b16 %v812
        %v1061 = vunpack.c.l.b16 %v813
        %v1062 = vunpack.c.l.b16 %v814
        %v1063 = vunpack.c.l.b16 %v815
        %v1064 = vunpack.c.l.b16 %v816
        %v1065 = vunpack.c.l.b16 %v817
        %v1066 = vunpack.c.l.b16 %v818
        %v1067 = vunpack.c.l.b16 %v819
        %v1068 = vunpack.c.l.b16 %v820
        %v1069 = vunpack.c.l.b16 %v821
        %v1070 = vunpack.c.l.b16 %v822
        %v1071 = vunpack.c.l.b16 %v823
        %v1072 = vunpack.c.l.b16 %v824
        %v1073 = vunpack.c.l.b16 %v825
        %v1074 = vunpack.c.l.b16 %v826
        %v1075 = vunpack.c.l.b16 %v827
        %v1076 = vunpack.c.l.b16 %v828
        %v1077 = vunpack.c.l.b16 %v829
        %v1078 = vunpack.c.l.b16 %v830
        %v1079 = vunpack.c.l.b16 %v831
        %v1080 = vunpack.c.l.b16 %v832
        %v1081 = vpack.c.b16 %v1050, %v1049
        %v1082 = vpack.c.b16 %v1052, %v1051
        %v1083 = vpack.c.b16 %v1054, %v1053
        %v1084 = vpack.c.b16 %v1056, %v1055
        %v1085 = vpack.c.b16 %v1058, %v1057
        %v1086 = vpack.c.b16 %v1060, %v1059
        %v1087 = vpack.c.b16 %v1062, %v1061
        %v1088 = vpack.c.b16 %v1064, %v1063
        %v1089 = vpack.c.b16 %v1066, %v1065
        %v1090 = vpack.c.b16 %v1068, %v1067
        %v1091 = vpack.c.b16 %v1070, %v1069
        %v1092 = vpack.c.b16 %v1072, %v1071
        %v1093 = vpack.c.b16 %v1074, %v1073
        %v1094 = vpack.c.b16 %v1076, %v1075
        %v1095 = vpack.c.b16 %v1078, %v1077
        %v1096 = vpack.c.b16 %v1080, %v1079
        %1113 = vmatprep.subr.bf16.mxu0 0
        %1114 = vmatpush1.bf16.msra.mxu0 %v1081
        %1115 = vmatprep.subr.bf16.mxu0 0
        %1116 = vmatpush1.bf16.msra.mxu0 %v1082
        %1117 = vmatprep.subr.bf16.mxu0 0
        %1118 = vmatpush1.bf16.msra.mxu0 %v1083
        %1119 = vmatprep.subr.bf16.mxu0 0
        %1120 = vmatpush1.bf16.msra.mxu0 %v1084
        %1121 = vmatprep.subr.bf16.mxu0 0
        %1122 = vmatpush1.bf16.msra.mxu0 %v1085
        %1123 = vmatprep.subr.bf16.mxu0 0
        %1124 = vmatpush1.bf16.msra.mxu0 %v1086
        %1125 = vmatprep.subr.bf16.mxu0 0
        %1126 = vmatpush1.bf16.msra.mxu0 %v1087
        %1127 = vmatprep.subr.bf16.mxu0 0
        %1128 = vmatpush1.bf16.msra.mxu0 %v1088
        %1129 = vmatprep.subr.bf16.mxu0 0
        %1130 = vmatpush1.bf16.msra.mxu0 %v1089
        %1131 = vmatprep.subr.bf16.mxu0 0
        %1132 = vmatpush1.bf16.msra.mxu0 %v1090
        %1133 = vmatprep.subr.bf16.mxu0 0
        %1134 = vmatpush1.bf16.msra.mxu0 %v1091
        %1135 = vmatprep.subr.bf16.mxu0 0
        %1136 = vmatpush1.bf16.msra.mxu0 %v1092
        %1137 = vmatprep.subr.bf16.mxu0 0
        %1138 = vmatpush1.bf16.msra.mxu0 %v1093
        %1139 = vmatprep.subr.bf16.mxu0 0
        %1140 = vmatpush1.bf16.msra.mxu0 %v1094
        %1141 = vmatprep.subr.bf16.mxu0 0
        %1142 = vmatpush1.bf16.msra.mxu0 %v1095
        %1143 = vmatprep.subr.bf16.mxu0 0
        %1144 = vmatpush1.bf16.msra.mxu0 %v1096
        %1145 = vmatprep.mubr.bf16.mxu0 %v1014
        %1146 = vmatmul.mubr.bf16.gmra.mrb[0].mxu0 %v1013
        %v1147 = vpop.f32.mrb[0].mxu0
        %v1148 = vadd.f32 %v1005, %v1147
        %v1149 = vpop.f32.mrb[0].mxu0
        %v1150 = vpop.f32.mrb[0].mxu0
        %v1151 = vpop.f32.mrb[0].mxu0
        %1152 = vdwg.mxu0
        %v1153 = vld [vmem:[%s783] sm:$0xff]
        %s1154 = scalar_lea.vmem %s695, 256 [#allocation2]
        %v1155 = vld [vmem:[%s1154] sm:$0xf]
        %v1156 = vld [vmem:[%s1154 + $0x4] sm:$0xf]
        %v1157 = vld [vmem:[%s1154 + $0x8] sm:$0xf]
        %v1158 = vld [vmem:[%s1154 + $0xc] sm:$0xf]
        %v1159 = vld [vmem:[%s1154 + $0x10] sm:$0xf]
        %v1160 = vld [vmem:[%s1154 + $0x14] sm:$0xf]
        %v1161 = vld [vmem:[%s1154 + $0x18] sm:$0xf]
        %v1162 = vld [vmem:[%s1154 + $0x1c] sm:$0xf]
        %v1163 = vld [vmem:[%s1154 + $0x20] sm:$0xf]
        %v1164 = vld [vmem:[%s1154 + $0x24] sm:$0xf]
        %v1165 = vld [vmem:[%s1154 + $0x28] sm:$0xf]
        %v1166 = vld [vmem:[%s1154 + $0x2c] sm:$0xf]
        %v1167 = vld [vmem:[%s1154 + $0x30] sm:$0xf]
        %v1168 = vld [vmem:[%s1154 + $0x34] sm:$0xf]
        %v1169 = vld [vmem:[%s1154 + $0x38] sm:$0xf]
        %v1170 = vld [vmem:[%s1154 + $0x3c] sm:$0xf]
        %v1171 = vld [vmem:[%s1154 + $0x40] sm:$0xf]
        %v1172 = vld [vmem:[%s1154 + $0x44] sm:$0xf]
        %v1173 = vld [vmem:[%s1154 + $0x48] sm:$0xf]
        %v1174 = vld [vmem:[%s1154 + $0x4c] sm:$0xf]
        %v1175 = vld [vmem:[%s1154 + $0x50] sm:$0xf]
        %v1176 = vld [vmem:[%s1154 + $0x54] sm:$0xf]
        %v1177 = vld [vmem:[%s1154 + $0x58] sm:$0xf]
        %v1178 = vld [vmem:[%s1154 + $0x5c] sm:$0xf]
        %v1179 = vld [vmem:[%s1154 + $0x60] sm:$0xf]
        %v1180 = vld [vmem:[%s1154 + $0x64] sm:$0xf]
        %v1181 = vld [vmem:[%s1154 + $0x68] sm:$0xf]
        %v1182 = vld [vmem:[%s1154 + $0x6c] sm:$0xf]
        %v1183 = vld [vmem:[%s1154 + $0x70] sm:$0xf]
        %v1184 = vld [vmem:[%s1154 + $0x74] sm:$0xf]
        %v1185 = vld [vmem:[%s1154 + $0x78] sm:$0xf]
        %v1186 = vld [vmem:[%s1154 + $0x7c] sm:$0xf]
        %v1188 = vunpack.c.l.b16 %v1153
        %v1189 = vunpack.c.h.b16 %v1153
        %v1190 = vpack.c.b16 %v1188, %v1188
        %v1191 = vpack.c.b16 %v1189, %v1189
        %v1226 = vunpack.c.l.b16 %v1155
        %v1227 = vunpack.c.l.b16 %v1156
        %v1228 = vunpack.c.l.b16 %v1157
        %v1229 = vunpack.c.l.b16 %v1158
        %v1230 = vunpack.c.l.b16 %v1159
        %v1231 = vunpack.c.l.b16 %v1160
        %v1232 = vunpack.c.l.b16 %v1161
        %v1233 = vunpack.c.l.b16 %v1162
        %v1234 = vunpack.c.l.b16 %v1163
        %v1235 = vunpack.c.l.b16 %v1164
        %v1236 = vunpack.c.l.b16 %v1165
        %v1237 = vunpack.c.l.b16 %v1166
        %v1238 = vunpack.c.l.b16 %v1167
        %v1239 = vunpack.c.l.b16 %v1168
        %v1240 = vunpack.c.l.b16 %v1169
        %v1241 = vunpack.c.l.b16 %v1170
        %v1242 = vunpack.c.l.b16 %v1171
        %v1243 = vunpack.c.l.b16 %v1172
        %v1244 = vunpack.c.l.b16 %v1173
        %v1245 = vunpack.c.l.b16 %v1174
        %v1246 = vunpack.c.l.b16 %v1175
        %v1247 = vunpack.c.l.b16 %v1176
        %v1248 = vunpack.c.l.b16 %v1177
        %v1249 = vunpack.c.l.b16 %v1178
        %v1250 = vunpack.c.l.b16 %v1179
        %v1251 = vunpack.c.l.b16 %v1180
        %v1252 = vunpack.c.l.b16 %v1181
        %v1253 = vunpack.c.l.b16 %v1182
        %v1254 = vunpack.c.l.b16 %v1183
        %v1255 = vunpack.c.l.b16 %v1184
        %v1256 = vunpack.c.l.b16 %v1185
        %v1257 = vunpack.c.l.b16 %v1186
        %v1258 = vpack.c.b16 %v1227, %v1226
        %v1259 = vpack.c.b16 %v1229, %v1228
        %v1260 = vpack.c.b16 %v1231, %v1230
        %v1261 = vpack.c.b16 %v1233, %v1232
        %v1262 = vpack.c.b16 %v1235, %v1234
        %v1263 = vpack.c.b16 %v1237, %v1236
        %v1264 = vpack.c.b16 %v1239, %v1238
        %v1265 = vpack.c.b16 %v1241, %v1240
        %v1266 = vpack.c.b16 %v1243, %v1242
        %v1267 = vpack.c.b16 %v1245, %v1244
        %v1268 = vpack.c.b16 %v1247, %v1246
        %v1269 = vpack.c.b16 %v1249, %v1248
        %v1270 = vpack.c.b16 %v1251, %v1250
        %v1271 = vpack.c.b16 %v1253, %v1252
        %v1272 = vpack.c.b16 %v1255, %v1254
        %v1273 = vpack.c.b16 %v1257, %v1256
        %1290 = vmatprep.subr.bf16.mxu0 0
        %1291 = vmatpush1.bf16.msra.mxu0 %v1258
        %1292 = vmatprep.subr.bf16.mxu0 0
        %1293 = vmatpush1.bf16.msra.mxu0 %v1259
        %1294 = vmatprep.subr.bf16.mxu0 0
        %1295 = vmatpush1.bf16.msra.mxu0 %v1260
        %1296 = vmatprep.subr.bf16.mxu0 0
        %1297 = vmatpush1.bf16.msra.mxu0 %v1261
        %1298 = vmatprep.subr.bf16.mxu0 0
        %1299 = vmatpush1.bf16.msra.mxu0 %v1262
        %1300 = vmatprep.subr.bf16.mxu0 0
        %1301 = vmatpush1.bf16.msra.mxu0 %v1263
        %1302 = vmatprep.subr.bf16.mxu0 0
        %1303 = vmatpush1.bf16.msra.mxu0 %v1264
        %1304 = vmatprep.subr.bf16.mxu0 0
        %1305 = vmatpush1.bf16.msra.mxu0 %v1265
        %1306 = vmatprep.subr.bf16.mxu0 0
        %1307 = vmatpush1.bf16.msra.mxu0 %v1266
        %1308 = vmatprep.subr.bf16.mxu0 0
        %1309 = vmatpush1.bf16.msra.mxu0 %v1267
        %1310 = vmatprep.subr.bf16.mxu0 0
        %1311 = vmatpush1.bf16.msra.mxu0 %v1268
        %1312 = vmatprep.subr.bf16.mxu0 0
        %1313 = vmatpush1.bf16.msra.mxu0 %v1269
        %1314 = vmatprep.subr.bf16.mxu0 0
        %1315 = vmatpush1.bf16.msra.mxu0 %v1270
        %1316 = vmatprep.subr.bf16.mxu0 0
        %1317 = vmatpush1.bf16.msra.mxu0 %v1271
        %1318 = vmatprep.subr.bf16.mxu0 0
        %1319 = vmatpush1.bf16.msra.mxu0 %v1272
        %1320 = vmatprep.subr.bf16.mxu0 0
        %1321 = vmatpush1.bf16.msra.mxu0 %v1273
        %1322 = vmatprep.mubr.bf16.mxu0 %v1191
        %1323 = vmatmul.mubr.bf16.gmra.mrb[0].mxu0 %v1190
        %v1324 = vpop.f32.mrb[0].mxu0
        %v1325 = vadd.f32 0.0, %v1324
        %v1326 = vpop.f32.mrb[0].mxu0
        %v1327 = vpop.f32.mrb[0].mxu0
        %v1328 = vpop.f32.mrb[0].mxu0
        %1329 = vdwg.mxu0
        %v1330 = vadd.f32 %v1148, %v1325
        %v1331 = vld [vmem:[%s786] sm:$0x1]
        %v1333 = vlaneseq
        %v1334 = vshrl.u32 %v1333, 7
        %v1335 = vsub.s32 0, %v1334
        %v1336 = vrot.slane %v1331, %v1335
        %v1338 = vadd.f32 %v1330, %v1336
        %v1339 = vmul.f32 %v1338, 0.5
        %v1340 = vmul.f32 %v1338, 0.044715
        %v1341 = vmul.f32 %v1340, %v1338
        %v1342 = vmul.f32 %v1341, %v1338
        %v1343 = vadd.f32 %v1338, %v1342
        %v1344 = vmul.f32 %v1343, 0.7978846
        %v1345 = vtanh.pop %v1344
        %v1346 = vadd.f32 %v1345, 1.0
        %v1347 = vmul.f32 %v1339, %v1346
        %v1348 = vpack.c.bf16 %v1347, %v1347
        %1349 = vst [vmem:[%s798] sm:$0xf] %v1348
        %p1350 = scmp.lt.s32.totalorder %s21, 1
        %s1351 = scalar_select %p1350, %s21, 1
        %p1352 = scmp.lt.s32.totalorder %s22, 1
        %s1353 = scalar_select %p1352, %s22, 1
        %p1354 = scmp.lt.s32.totalorder %s23, 1
        %s1355 = scalar_select %p1354, %s23, 1
        %s1356 = smul.addr %s1353, 2
        %s1357 = sadd.s32 %s1355, %s1356
        %s1358 = smul.addr %s1351, 4
        %s1359 = sadd.s32 %s1357, %s1358
        %s1360 = smul.addr %s1359, 4
        %s1361 = scalar_lea.vmem %s5, %s1360
        // Predicated region
        $region82: #{whisper_encoder_forward.14} parent=76 // pred_check
          %p1362 = pneg %p193
        $region83: #{whisper_encoder_forward.14} parent=76 // pred_check_branch
          %1364 = sbr.rel (%p1362) target = $region85
        $region84: #{whisper_encoder_forward.14} parent=76 // pred_region
          _
        $region85: #{whisper_encoder_forward.14} parent=76 // pred_fallthru
          _
      $region77: #{whisper_encoder_forward.14} parent=5 // pred_fallthru
        _
      %p1365 = scmp.le.s32.totalorder 2, %s11
      // Predicated region
      $region86: #{whisper_encoder_forward.14} parent=5 // pred_check
        %p1366 = pneg %p1365
      $region87: #{whisper_encoder_forward.14} parent=5 // pred_check_branch
        %1368 = sbr.rel (%p1366) target = $region89
      $region88: #{whisper_encoder_forward.14} parent=5 // pred_region
        %s1369 = ssub.s32 %s11, 2
        // Predicated region
        $region90: #{whisper_encoder_forward.14} parent=88 // pred_check
          %p1370 = pneg %p199
        $region91: #{whisper_encoder_forward.14} parent=88 // pred_check_branch
          %1372 = sbr.rel (%p1370) target = $region93
        $region92: #{whisper_encoder_forward.14} parent=88 // pred_region
          %p1373 = scmp.lt.s32.totalorder %s24, 1
          %s1374 = scalar_select %p1373, %s24, 1
          %p1375 = scmp.lt.s32.totalorder %s25, 1
          %s1376 = scalar_select %p1375, %s25, 1
          %p1377 = scmp.lt.s32.totalorder %s26, 1
          %s1378 = scalar_select %p1377, %s26, 1
          %s1379 = smul.addr %s1376, 2
          %s1380 = sadd.s32 %s1378, %s1379
          %s1381 = smul.addr %s1374, 4
          %s1382 = sadd.s32 %s1380, %s1381
          %s1383 = smul.addr %s1382, 4
          %s1384 = scalar_lea.vmem %s5, %s1383
        $region93: #{whisper_encoder_forward.14} parent=88 // pred_fallthru
          _
      $region89: #{whisper_encoder_forward.14} parent=5 // pred_fallthru
        _
    $region6: #{whisper_encoder_forward.14} parent=1 // loop_footer
      %s15 = sadd.s32 1, %s11
    $region7: #{whisper_encoder_forward.14} parent=1 // loop_footer_branch
      %10 = sbr.rel target = $region3
    $region8: #{whisper_encoder_forward.14} parent=1 // loop_exit
      _

// kernel: whisper_encoder_forward.15
$region0: #{whisper_encoder_forward.15}
  #allocation0 [shape = 'u32[]', space=smem, size = 0x4, offset = 0x4, fixed_abs, tag = 'smem constant byte address 0x4 - core index']
  #allocation1 [shape = 'u32[144,128]{1,0:T(1,128)}', space=vmem, size = 0x12000, scoped, tag = 'internal scratch']
  %s0 = inlined_call_operand.vmem [shape: bf16[32,256], index: 0, kind: input, shape index: {}]
  %s1 = inlined_call_operand.vmem [shape: bf16[256,768], index: 1, kind: input, shape index: {}]
  %s2 = inlined_call_operand.vmem [shape: f32[1,768], index: 2, kind: input, shape index: {}]
  %s3 = inlined_call_operand.vmem [shape: f32[1,256], index: 3, kind: input, shape index: {}]
  %s4 = inlined_call_operand.vmem [shape: f32[1,256], index: 4, kind: input, shape index: {}]
  %s5 = inlined_call_operand.vmem [shape: bf16[32,768], index: 5, kind: output, shape index: {}]
  %s6 = sld [smem:[#allocation0]]
  $region131: #{whisper_encoder_forward.15} parent=0
    _
  %s8 = ssub.s32 1, %s6
  %s9 = scalar_select 0, %s8, %s6
  $region1: #{whisper_encoder_forward.15} parent=0
    #allocation2 [shape = 'u8[131072]{0}', space=vmem, size = 0x20000, scoped, tag = 'input window, operand 1']
    #allocation3 [shape = 'u8[8192]{0}', space=vmem, size = 0x2000, scoped, tag = 'output window, operand 0']
    loop: start=0, step=1, limit=14
    $region2: #{whisper_encoder_forward.15} parent=1 // loop_pre_header
      _
    $region3: #{whisper_encoder_forward.15} parent=1 // loop_header
      %s11 = sphi 0, %s15
      %p12 = scmp.ge.s32.totalorder %s11, 14
      %s18 = sphi 0, %s30
      %s19 = sphi 0, %s26
      %s20 = sphi 0, %s18
      %s21 = sphi 0, %s19
      %s22 = sphi 0, %s20
      %s23 = sphi 0, %s21
      %s33 = sphi 0, %s35
      %s36 = sphi 0, %s33
      %s37 = sphi 0, %s36
      %s53 = sphi 0, %s37
      %s59 = sphi 0, %s61
      %s62 = sphi 0, %s59
      %s63 = sphi 0, %s62
      %s79 = sphi 0, %s63
      %s85 = sphi 0, %s87
      %s88 = sphi 0, %s85
      %s89 = sphi 0, %s88
      %s105 = sphi 0, %s89
      %s109 = sphi 0, %s109
      %s111 = sphi 0, %s109
      %s112 = sphi 0, %s111
      %s126 = sphi 0, %s112
      %s130 = sphi 0, %s130
      %s132 = sphi 0, %s130
      %s133 = sphi 0, %s132
      %s147 = sphi 0, %s133
      %s155 = sphi 0, %s157
      %s158 = sphi 0, %s155
      %s159 = sphi 0, %s158
      %s175 = sphi 0, %s159
    $region4: #{whisper_encoder_forward.15} parent=1 // loop_header_branch
      %14 = sbr.rel (%p12) target = $region8
    $region5: #{whisper_encoder_forward.15} parent=1 // loop_body
      %s16 = ssub.s32 %s11, 1
      %s17 = ssub.s32 %s11, 2
      %s24 = sadd.s32 1, %s19
      %p25 = scmp.ge.s32.totalorder %s24, 6
      %s26 = scalar_select %p25, 0, %s24
      %s27 = sadd.s32 1, %s18
      %s28 = scalar_select %p25, %s27, %s18
      %p29 = scmp.ge.s32.totalorder %s28, 2
      %s30 = scalar_select %p29, 0, %s28
      %s31 = ssub.s32 %s18, %s30
      %p32 = scmp.eq.s32.totalorder %s31, 0
      %s34 = sadd.s32 %s33, 1
      %s35 = scalar_select %p32, %s33, %s34
      %p38 = pneg %p32
      %p39 = scmp.eq.s32.totalorder %s11, 11
      %p40 = por %p38, %p39
      %p41 = scmp.ne.s32.totalorder %s33, %s36
      %p42 = scmp.eq.s32.totalorder %s11, 0
      %p43 = por %p41, %p42
      %p44 = scmp.ne.s32.totalorder %s33, %s36
      %p45 = scmp.eq.s32.totalorder %s16, 11
      %p46 = por %p44, %p45
      %p47 = scmp.ne.s32.totalorder %s36, %s37
      %p48 = scmp.eq.s32.totalorder %s16, 0
      %p49 = por %p47, %p48
      %p50 = scmp.ne.s32.totalorder %s36, %s37
      %p51 = scmp.eq.s32.totalorder %s17, 11
      %p52 = por %p50, %p51
      %p54 = scmp.ne.s32.totalorder %s37, %s53
      %p55 = scmp.eq.s32.totalorder %s17, 0
      %p56 = por %p54, %p55
      %s57 = ssub.s32 %s19, %s26
      %p58 = scmp.eq.s32.totalorder %s57, 0
      %s60 = sadd.s32 %s59, 1
      %s61 = scalar_select %p58, %s59, %s60
      %p64 = pneg %p58
      %p65 = scmp.eq.s32.totalorder %s11, 11
      %p66 = por %p64, %p65
      %p67 = scmp.ne.s32.totalorder %s59, %s62
      %p68 = scmp.eq.s32.totalorder %s11, 0
      %p69 = por %p67, %p68
      %p70 = scmp.ne.s32.totalorder %s59, %s62
      %p71 = scmp.eq.s32.totalorder %s16, 11
      %p72 = por %p70, %p71
      %p73 = scmp.ne.s32.totalorder %s62, %s63
      %p74 = scmp.eq.s32.totalorder %s16, 0
      %p75 = por %p73, %p74
      %p76 = scmp.ne.s32.totalorder %s62, %s63
      %p77 = scmp.eq.s32.totalorder %s17, 11
      %p78 = por %p76, %p77
      %p80 = scmp.ne.s32.totalorder %s63, %s79
      %p81 = scmp.eq.s32.totalorder %s17, 0
      %p82 = por %p80, %p81
      %s83 = ssub.s32 %s19, %s26
      %p84 = scmp.eq.s32.totalorder %s83, 0
      %s86 = sadd.s32 %s85, 1
      %s87 = scalar_select %p84, %s85, %s86
      %p90 = pneg %p84
      %p91 = scmp.eq.s32.totalorder %s11, 11
      %p92 = por %p90, %p91
      %p93 = scmp.ne.s32.totalorder %s85, %s88
      %p94 = scmp.eq.s32.totalorder %s11, 0
      %p95 = por %p93, %p94
      %p96 = scmp.ne.s32.totalorder %s85, %s88
      %p97 = scmp.eq.s32.totalorder %s16, 11
      %p98 = por %p96, %p97
      %p99 = scmp.ne.s32.totalorder %s88, %s89
      %p100 = scmp.eq.s32.totalorder %s16, 0
      %p101 = por %p99, %p100
      %p102 = scmp.ne.s32.totalorder %s88, %s89
      %p103 = scmp.eq.s32.totalorder %s17, 11
      %p104 = por %p102, %p103
      %p106 = scmp.ne.s32.totalorder %s89, %s105
      %p107 = scmp.eq.s32.totalorder %s17, 0
      %p108 = por %p106, %p107
      %s110 = sadd.s32 %s109, 1
      %p113 = scmp.eq.s32.totalorder %s11, 11
      %p114 = scmp.ne.s32.totalorder %s109, %s111
      %p115 = scmp.eq.s32.totalorder %s11, 0
      %p116 = por %p114, %p115
      %p117 = scmp.ne.s32.totalorder %s109, %s111
      %p118 = scmp.eq.s32.totalorder %s16, 11
      %p119 = por %p117, %p118
      %p120 = scmp.ne.s32.totalorder %s111, %s112
      %p121 = scmp.eq.s32.totalorder %s16, 0
      %p122 = por %p120, %p121
      %p123 = scmp.ne.s32.totalorder %s111, %s112
      %p124 = scmp.eq.s32.totalorder %s17, 11
      %p125 = por %p123, %p124
      %p127 = scmp.ne.s32.totalorder %s112, %s126
      %p128 = scmp.eq.s32.totalorder %s17, 0
      %p129 = por %p127, %p128
      %s131 = sadd.s32 %s130, 1
      %p134 = scmp.eq.s32.totalorder %s11, 11
      %p135 = scmp.ne.s32.totalorder %s130, %s132
      %p136 = scmp.eq.s32.totalorder %s11, 0
      %p137 = por %p135, %p136
      %p138 = scmp.ne.s32.totalorder %s130, %s132
      %p139 = scmp.eq.s32.totalorder %s16, 11
      %p140 = por %p138, %p139
      %p141 = scmp.ne.s32.totalorder %s132, %s133
      %p142 = scmp.eq.s32.totalorder %s16, 0
      %p143 = por %p141, %p142
      %p144 = scmp.ne.s32.totalorder %s132, %s133
      %p145 = scmp.eq.s32.totalorder %s17, 11
      %p146 = por %p144, %p145
      %p148 = scmp.ne.s32.totalorder %s133, %s147
      %p149 = scmp.eq.s32.totalorder %s17, 0
      %p150 = por %p148, %p149
      %s151 = ssub.s32 %s18, %s30
      %s152 = ssub.s32 %s19, %s26
      %s153 = sor.u32 %s151, %s152
      %p154 = scmp.eq.s32.totalorder %s153, 0
      %s156 = sadd.s32 %s155, 1
      %s157 = scalar_select %p154, %s155, %s156
      %p160 = pneg %p154
      %p161 = scmp.eq.s32.totalorder %s11, 11
      %p162 = por %p160, %p161
      %p163 = scmp.ne.s32.totalorder %s155, %s158
      %p164 = scmp.eq.s32.totalorder %s11, 0
      %p165 = por %p163, %p164
      %p166 = scmp.ne.s32.totalorder %s155, %s158
      %p167 = scmp.eq.s32.totalorder %s16, 11
      %p168 = por %p166, %p167
      %p169 = scmp.ne.s32.totalorder %s158, %s159
      %p170 = scmp.eq.s32.totalorder %s16, 0
      %p171 = por %p169, %p170
      %p172 = scmp.ne.s32.totalorder %s158, %s159
      %p173 = scmp.eq.s32.totalorder %s17, 11
      %p174 = por %p172, %p173
      %p176 = scmp.ne.s32.totalorder %s159, %s175
      %p177 = scmp.eq.s32.totalorder %s17, 0
      %p178 = por %p176, %p177
      %p179 = scmp.le.s32.totalorder 1, %s11
      %p180 = scmp.lt.s32.totalorder %s11, 13
      %p181 = pnand %p179, %p180
      %p182 = pneg %p181
      // Predicated region
      $region9: #{whisper_encoder_forward.15} parent=5 // pred_check
        _
      $region10: #{whisper_encoder_forward.15} parent=5 // pred_check_branch
        %184 = sbr.rel (%p181) target = $region12
      $region11: #{whisper_encoder_forward.15} parent=5 // pred_region
        %s185 = ssub.s32 %s11, 1
        // Predicated region
        $region13: #{whisper_encoder_forward.15} parent=11 // pred_check
          %p186 = pneg %p122
        $region14: #{whisper_encoder_forward.15} parent=11 // pred_check_branch
          %188 = sbr.rel (%p186) target = $region16
        $region15: #{whisper_encoder_forward.15} parent=11 // pred_region
          _
        $region16: #{whisper_encoder_forward.15} parent=11 // pred_fallthru
          _
        // Predicated region
        $region17: #{whisper_encoder_forward.15} parent=11 // pred_check
          %p189 = pneg %p143
        $region18: #{whisper_encoder_forward.15} parent=11 // pred_check_branch
          %191 = sbr.rel (%p189) target = $region20
        $region19: #{whisper_encoder_forward.15} parent=11 // pred_region
          _
        $region20: #{whisper_encoder_forward.15} parent=11 // pred_fallthru
          _
      $region12: #{whisper_encoder_forward.15} parent=5 // pred_fallthru
        _
      %p192 = scmp.lt.s32.totalorder %s11, 12
      // Predicated region
      $region21: #{whisper_encoder_forward.15} parent=5 // pred_check
        %p193 = pneg %p192
      $region22: #{whisper_encoder_forward.15} parent=5 // pred_check_branch
        %195 = sbr.rel (%p193) target = $region24
      $region23: #{whisper_encoder_forward.15} parent=5 // pred_region
        // Predicated region
        $region25: #{whisper_encoder_forward.15} parent=23 // pred_check
          %p196 = pneg %p43
        $region26: #{whisper_encoder_forward.15} parent=23 // pred_check_branch
          %198 = sbr.rel (%p196) target = $region28
        $region27: #{whisper_encoder_forward.15} parent=23 // pred_region
          %s199 = smul.u32 2, %s18
          %p200 = scmp.lt.s32.totalorder %s199, 3
          %s201 = scalar_select %p200, %s199, 3
          %s202 = smul.addr %s201, 2
          %s203 = smul.addr %s202, 4
          %s204 = scalar_lea.vmem %s0, %s203
          %s205 = smul.u32 2, %s18
        $region28: #{whisper_encoder_forward.15} parent=23 // pred_fallthru
          _
        // Predicated region
        $region29: #{whisper_encoder_forward.15} parent=23 // pred_check
          %p206 = pneg %p69
        $region30: #{whisper_encoder_forward.15} parent=23 // pred_check_branch
          %208 = sbr.rel (%p206) target = $region32
        $region31: #{whisper_encoder_forward.15} parent=23 // pred_region
          %s209 = sand.u32 %s59, 1
          %s210 = sand.u32 %s59, 1
          %s211 = smul.addr %s210, 128
          %s212 = scalar_lea.vmem [#allocation2], %s211
          %s213 = smul.addr %s19, 4
          %s214 = scalar_lea.vmem %s1, %s213
          // Predicated region
          $region33: #{whisper_encoder_forward.15} parent=31 // pred_check
            _
          $region34: #{whisper_encoder_forward.15} parent=31 // pred_check_branch
            %216 = sbr.rel (0) target = $region36
          $region35: #{whisper_encoder_forward.15} parent=31 // pred_region
            // Predicated region
            $region37: #{whisper_encoder_forward.15} parent=35 // pred_check
              _
            $region38: #{whisper_encoder_forward.15} parent=35 // pred_check_branch
              %218 = sbr.rel target = $region40
            $region39: #{whisper_encoder_forward.15} parent=35 // pred_region
              // Predicated region
              $region52: #{whisper_encoder_forward.15} parent=39 // pred_check
                _
              $region53: #{whisper_encoder_forward.15} parent=39 // pred_check_branch
                %295 = sbr.rel (0) target = $region55
              $region54: #{whisper_encoder_forward.15} parent=39 // pred_region
                loop: start=0, step=1, limit=1
                $region56: #{whisper_encoder_forward.15} parent=54 // loop_pre_header
                  _
                $region57: #{whisper_encoder_forward.15} parent=54 // loop_header
                  %s297 = sphi 0, %s301
                  %p298 = scmp.ge.s32.totalorder %s297, 1
                  %s302 = sphi %s214, %s214
                  %s303 = sphi %s212, %s212
                $region58: #{whisper_encoder_forward.15} parent=54 // loop_header_branch
                  %300 = sbr.rel (%p298) target = $region62
                $region59: #{whisper_encoder_forward.15} parent=54 // loop_body
                  _
                $region60: #{whisper_encoder_forward.15} parent=54 // loop_footer
                  %s301 = sadd.s32 1, %s297
                $region61: #{whisper_encoder_forward.15} parent=54 // loop_footer_branch
                  %296 = sbr.rel target = $region57
                $region62: #{whisper_encoder_forward.15} parent=54 // loop_exit
                  _
                loop: start=0, step=1, limit=1
                $region63: #{whisper_encoder_forward.15} parent=54 // loop_pre_header
                  _
                $region64: #{whisper_encoder_forward.15} parent=54 // loop_header
                  %s306 = sphi 0, %s310
                  %p307 = scmp.ge.s32.totalorder %s306, 1
                  %s311 = sphi %s214, %s214
                  %s312 = sphi %s212, %s212
                $region65: #{whisper_encoder_forward.15} parent=54 // loop_header_branch
                  %309 = sbr.rel (%p307) target = $region69
                $region66: #{whisper_encoder_forward.15} parent=54 // loop_body
                  %v313 = vld [vmem:[%s311] sm:$0xf]
                  %314 = vst [vmem:[%s312] sm:$0xf] %v313
                  %v315 = vld [vmem:[%s311 + $0x18] sm:$0xf]
                  %316 = vst [vmem:[%s312 + $0x4] sm:$0xf] %v315
                  %v317 = vld [vmem:[%s311 + $0x30] sm:$0xf]
                  %318 = vst [vmem:[%s312 + $0x8] sm:$0xf] %v317
                  %v319 = vld [vmem:[%s311 + $0x48] sm:$0xf]
                  %320 = vst [vmem:[%s312 + $0xc] sm:$0xf] %v319
                  %v321 = vld [vmem:[%s311 + $0x60] sm:$0xf]
                  %322 = vst [vmem:[%s312 + $0x10] sm:$0xf] %v321
                  %v323 = vld [vmem:[%s311 + $0x78] sm:$0xf]
                  %324 = vst [vmem:[%s312 + $0x14] sm:$0xf] %v323
                  %v325 = vld [vmem:[%s311 + $0x90] sm:$0xf]
                  %326 = vst [vmem:[%s312 + $0x18] sm:$0xf] %v325
                  %v327 = vld [vmem:[%s311 + $0xa8] sm:$0xf]
                  %328 = vst [vmem:[%s312 + $0x1c] sm:$0xf] %v327
                  %v329 = vld [vmem:[%s311 + $0xc0] sm:$0xf]
                  %330 = vst [vmem:[%s312 + $0x20] sm:$0xf] %v329
                  %v331 = vld [vmem:[%s311 + $0xd8] sm:$0xf]
                  %332 = vst [vmem:[%s312 + $0x24] sm:$0xf] %v331
                  %v333 = vld [vmem:[%s311 + $0xf0] sm:$0xf]
                  %334 = vst [vmem:[%s312 + $0x28] sm:$0xf] %v333
                  %v335 = vld [vmem:[%s311 + $0x108] sm:$0xf]
                  %336 = vst [vmem:[%s312 + $0x2c] sm:$0xf] %v335
                  %v337 = vld [vmem:[%s311 + $0x120] sm:$0xf]
                  %338 = vst [vmem:[%s312 + $0x30] sm:$0xf] %v337
                  %v339 = vld [vmem:[%s311 + $0x138] sm:$0xf]
                  %340 = vst [vmem:[%s312 + $0x34] sm:$0xf] %v339
                  %v341 = vld [vmem:[%s311 + $0x150] sm:$0xf]
                  %342 = vst [vmem:[%s312 + $0x38] sm:$0xf] %v341
                  %v343 = vld [vmem:[%s311 + $0x168] sm:$0xf]
                  %344 = vst [vmem:[%s312 + $0x3c] sm:$0xf] %v343
                  %v345 = vld [vmem:[%s311 + $0x180] sm:$0xf]
                  %346 = vst [vmem:[%s312 + $0x40] sm:$0xf] %v345
                  %v347 = vld [vmem:[%s311 + $0x198] sm:$0xf]
                  %348 = vst [vmem:[%s312 + $0x44] sm:$0xf] %v347
                  %v349 = vld [vmem:[%s311 + $0x1b0] sm:$0xf]
                  %350 = vst [vmem:[%s312 + $0x48] sm:$0xf] %v349
                  %v351 = vld [vmem:[%s311 + $0x1c8] sm:$0xf]
                  %352 = vst [vmem:[%s312 + $0x4c] sm:$0xf] %v351
                  %v353 = vld [vmem:[%s311 + $0x1e0] sm:$0xf]
                  %354 = vst [vmem:[%s312 + $0x50] sm:$0xf] %v353
                  %v355 = vld [vmem:[%s311 + $0x1f8] sm:$0xf]
                  %356 = vst [vmem:[%s312 + $0x54] sm:$0xf] %v355
                  %v357 = vld [vmem:[%s311 + $0x210] sm:$0xf]
                  %358 = vst [vmem:[%s312 + $0x58] sm:$0xf] %v357
                  %v359 = vld [vmem:[%s311 + $0x228] sm:$0xf]
                  %360 = vst [vmem:[%s312 + $0x5c] sm:$0xf] %v359
                  %v361 = vld [vmem:[%s311 + $0x240] sm:$0xf]
                  %362 = vst [vmem:[%s312 + $0x60] sm:$0xf] %v361
                  %v363 = vld [vmem:[%s311 + $0x258] sm:$0xf]
                  %364 = vst [vmem:[%s312 + $0x64] sm:$0xf] %v363
                  %v365 = vld [vmem:[%s311 + $0x270] sm:$0xf]
                  %366 = vst [vmem:[%s312 + $0x68] sm:$0xf] %v365
                  %v367 = vld [vmem:[%s311 + $0x288] sm:$0xf]
                  %368 = vst [vmem:[%s312 + $0x6c] sm:$0xf] %v367
                  %v369 = vld [vmem:[%s311 + $0x2a0] sm:$0xf]
                  %370 = vst [vmem:[%s312 + $0x70] sm:$0xf] %v369
                  %v371 = vld [vmem:[%s311 + $0x2b8] sm:$0xf]
                  %372 = vst [vmem:[%s312 + $0x74] sm:$0xf] %v371
                  %v373 = vld [vmem:[%s311 + $0x2d0] sm:$0xf]
                  %374 = vst [vmem:[%s312 + $0x78] sm:$0xf] %v373
                  %v375 = vld [vmem:[%s311 + $0x2e8] sm:$0xf]
                  %376 = vst [vmem:[%s312 + $0x7c] sm:$0xf] %v375
                $region67: #{whisper_encoder_forward.15} parent=54 // loop_footer
                  %s310 = sadd.s32 1, %s306
                $region68: #{whisper_encoder_forward.15} parent=54 // loop_footer_branch
                  %305 = sbr.rel target = $region64
                $region69: #{whisper_encoder_forward.15} parent=54 // loop_exit
                  _
              $region55: #{whisper_encoder_forward.15} parent=39 // pred_fallthru
                _
            $region40: #{whisper_encoder_forward.15} parent=35 // pred_fallthru
              _
            // Predicated region
            $region41: #{whisper_encoder_forward.15} parent=35 // pred_check
              _
            $region42: #{whisper_encoder_forward.15} parent=35 // pred_check_branch
              %220 = sbr.rel (0) target = $region44
            $region43: #{whisper_encoder_forward.15} parent=35 // pred_region
              loop: start=0, step=1, limit=1
              $region45: #{whisper_encoder_forward.15} parent=43 // loop_pre_header
                _
              $region46: #{whisper_encoder_forward.15} parent=43 // loop_header
                %s223 = sphi 0, %s227
                %p224 = scmp.ge.s32.totalorder %s223, 1
                %s228 = sphi %s214, %s214
                %s229 = sphi %s212, %s212
              $region47: #{whisper_encoder_forward.15} parent=43 // loop_header_branch
                %226 = sbr.rel (%p224) target = $region51
              $region48: #{whisper_encoder_forward.15} parent=43 // loop_body
                %v230 = vld [vmem:[%s228] sm:$0xf]
                %231 = vst [vmem:[%s229] sm:$0xf] %v230
                %v232 = vld [vmem:[%s228 + $0x18] sm:$0xf]
                %233 = vst [vmem:[%s229 + $0x4] sm:$0xf] %v232
                %v234 = vld [vmem:[%s228 + $0x30] sm:$0xf]
                %235 = vst [vmem:[%s229 + $0x8] sm:$0xf] %v234
                %v236 = vld [vmem:[%s228 + $0x48] sm:$0xf]
                %237 = vst [vmem:[%s229 + $0xc] sm:$0xf] %v236
                %v238 = vld [vmem:[%s228 + $0x60] sm:$0xf]
                %239 = vst [vmem:[%s229 + $0x10] sm:$0xf] %v238
                %v240 = vld [vmem:[%s228 + $0x78] sm:$0xf]
                %241 = vst [vmem:[%s229 + $0x14] sm:$0xf] %v240
                %v242 = vld [vmem:[%s228 + $0x90] sm:$0xf]
                %243 = vst [vmem:[%s229 + $0x18] sm:$0xf] %v242
                %v244 = vld [vmem:[%s228 + $0xa8] sm:$0xf]
                %245 = vst [vmem:[%s229 + $0x1c] sm:$0xf] %v244
                %v246 = vld [vmem:[%s228 + $0xc0] sm:$0xf]
                %247 = vst [vmem:[%s229 + $0x20] sm:$0xf] %v246
                %v248 = vld [vmem:[%s228 + $0xd8] sm:$0xf]
                %249 = vst [vmem:[%s229 + $0x24] sm:$0xf] %v248
                %v250 = vld [vmem:[%s228 + $0xf0] sm:$0xf]
                %251 = vst [vmem:[%s229 + $0x28] sm:$0xf] %v250
                %v252 = vld [vmem:[%s228 + $0x108] sm:$0xf]
                %253 = vst [vmem:[%s229 + $0x2c] sm:$0xf] %v252
                %v254 = vld [vmem:[%s228 + $0x120] sm:$0xf]
                %255 = vst [vmem:[%s229 + $0x30] sm:$0xf] %v254
                %v256 = vld [vmem:[%s228 + $0x138] sm:$0xf]
                %257 = vst [vmem:[%s229 + $0x34] sm:$0xf] %v256
                %v258 = vld [vmem:[%s228 + $0x150] sm:$0xf]
                %259 = vst [vmem:[%s229 + $0x38] sm:$0xf] %v258
                %v260 = vld [vmem:[%s228 + $0x168] sm:$0xf]
                %261 = vst [vmem:[%s229 + $0x3c] sm:$0xf] %v260
                %v262 = vld [vmem:[%s228 + $0x180] sm:$0xf]
                %263 = vst [vmem:[%s229 + $0x40] sm:$0xf] %v262
                %v264 = vld [vmem:[%s228 + $0x198] sm:$0xf]
                %265 = vst [vmem:[%s229 + $0x44] sm:$0xf] %v264
                %v266 = vld [vmem:[%s228 + $0x1b0] sm:$0xf]
                %267 = vst [vmem:[%s229 + $0x48] sm:$0xf] %v266
                %v268 = vld [vmem:[%s228 + $0x1c8] sm:$0xf]
                %269 = vst [vmem:[%s229 + $0x4c] sm:$0xf] %v268
                %v270 = vld [vmem:[%s228 + $0x1e0] sm:$0xf]
                %271 = vst [vmem:[%s229 + $0x50] sm:$0xf] %v270
                %v272 = vld [vmem:[%s228 + $0x1f8] sm:$0xf]
                %273 = vst [vmem:[%s229 + $0x54] sm:$0xf] %v272
                %v274 = vld [vmem:[%s228 + $0x210] sm:$0xf]
                %275 = vst [vmem:[%s229 + $0x58] sm:$0xf] %v274
                %v276 = vld [vmem:[%s228 + $0x228] sm:$0xf]
                %277 = vst [vmem:[%s229 + $0x5c] sm:$0xf] %v276
                %v278 = vld [vmem:[%s228 + $0x240] sm:$0xf]
                %279 = vst [vmem:[%s229 + $0x60] sm:$0xf] %v278
                %v280 = vld [vmem:[%s228 + $0x258] sm:$0xf]
                %281 = vst [vmem:[%s229 + $0x64] sm:$0xf] %v280
                %v282 = vld [vmem:[%s228 + $0x270] sm:$0xf]
                %283 = vst [vmem:[%s229 + $0x68] sm:$0xf] %v282
                %v284 = vld [vmem:[%s228 + $0x288] sm:$0xf]
                %285 = vst [vmem:[%s229 + $0x6c] sm:$0xf] %v284
                %v286 = vld [vmem:[%s228 + $0x2a0] sm:$0xf]
                %287 = vst [vmem:[%s229 + $0x70] sm:$0xf] %v286
                %v288 = vld [vmem:[%s228 + $0x2b8] sm:$0xf]
                %289 = vst [vmem:[%s229 + $0x74] sm:$0xf] %v288
                %v290 = vld [vmem:[%s228 + $0x2d0] sm:$0xf]
                %291 = vst [vmem:[%s229 + $0x78] sm:$0xf] %v290
                %v292 = vld [vmem:[%s228 + $0x2e8] sm:$0xf]
                %293 = vst [vmem:[%s229 + $0x7c] sm:$0xf] %v292
              $region49: #{whisper_encoder_forward.15} parent=43 // loop_footer
                %s227 = sadd.s32 1, %s223
              $region50: #{whisper_encoder_forward.15} parent=43 // loop_footer_branch
                %222 = sbr.rel target = $region46
              $region51: #{whisper_encoder_forward.15} parent=43 // loop_exit
                _
            $region44: #{whisper_encoder_forward.15} parent=35 // pred_fallthru
              _
          $region36: #{whisper_encoder_forward.15} parent=31 // pred_fallthru
            _
          %377 = vnop
        $region32: #{whisper_encoder_forward.15} parent=23 // pred_fallthru
          _
        // Predicated region
        $region70: #{whisper_encoder_forward.15} parent=23 // pred_check
          %p378 = pneg %p95
        $region71: #{whisper_encoder_forward.15} parent=23 // pred_check_branch
          %380 = sbr.rel (%p378) target = $region73
        $region72: #{whisper_encoder_forward.15} parent=23 // pred_region
          %p381 = scmp.lt.s32.totalorder %s19, 5
          %s382 = scalar_select %p381, %s19, 5
          %s383 = scalar_lea.vmem %s2, %s382
        $region73: #{whisper_encoder_forward.15} parent=23 // pred_fallthru
          _
      $region24: #{whisper_encoder_forward.15} parent=5 // pred_fallthru
        _
      %p384 = scmp.le.s32.totalorder 1, %s11
      %p385 = scmp.lt.s32.totalorder %s11, 13
      %p386 = pnand %p384, %p385
      %p387 = pneg %p386
      // Predicated region
      $region74: #{whisper_encoder_forward.15} parent=5 // pred_check
        _
      $region75: #{whisper_encoder_forward.15} parent=5 // pred_check_branch
        %389 = sbr.rel (%p386) target = $region77
      $region76: #{whisper_encoder_forward.15} parent=5 // pred_region
        %s390 = ssub.s32 %s11, 1
        %s391 = sand.u32 %s62, 1
        %s392 = sand.u32 %s62, 1
        %s393 = smul.addr %s392, 128
        %s394 = scalar_lea.vmem [#allocation2], %s393
        // Predicated region
        $region78: #{whisper_encoder_forward.15} parent=76 // pred_check
          %p395 = pneg %p75
        $region79: #{whisper_encoder_forward.15} parent=76 // pred_check_branch
          %397 = sbr.rel (%p395) target = $region81
        $region80: #{whisper_encoder_forward.15} parent=76 // pred_region
          _
        $region81: #{whisper_encoder_forward.15} parent=76 // pred_fallthru
          _
        %s398 = smul.u32 2, %s20
        %p399 = scmp.lt.s32.totalorder %s398, 3
        %s400 = scalar_select %p399, %s398, 3
        %s401 = smul.addr %s400, 2
        %s402 = smul.addr %s401, 4
        %s403 = scalar_lea.vmem %s0, %s402
        %p404 = pneg %p49
        %p405 = pneg %p46
        %s406 = sand.u32 %s62, 1
        %s407 = sand.u32 %s62, 1
        %s408 = smul.addr %s407, 128
        %s409 = scalar_lea.vmem [#allocation2], %s408
        %p410 = pneg %p75
        %p411 = pneg %p72
        %p412 = scmp.lt.s32.totalorder %s21, 5
        %s413 = scalar_select %p412, %s21, 5
        %s414 = scalar_lea.vmem %s2, %s413
        %p415 = pneg %p101
        %p416 = pneg %p98
        %p417 = pneg %p122
        %p418 = pneg %p119
        %p419 = pneg %p143
        %p420 = pneg %p140
        %p421 = pneg %p171
        %p422 = pneg %p168
        %s423 = sand.u32 %s158, 1
        %s424 = sand.u32 %s158, 1
        %s425 = smul.addr %s424, 8
        %s426 = scalar_lea.vmem [#allocation3], %s425
        %s427 = smul.u32 2, %s20
        %p428 = scmp.lt.s32.totalorder %s427, 3
        %s429 = scalar_select %p428, %s427, 3
        %s430 = smul.addr %s429, 2
        %s431 = smul.addr %s430, 4
        %s432 = scalar_lea.vmem %s0, %s431
        %s433 = smul.u32 2, %s20
        %p434 = scmp.lt.s32.totalorder %s21, 5
        %s435 = scalar_select %p434, %s21, 5
        %s436 = scalar_lea.vmem %s2, %s435
        %s437 = smul.u32 2, %s20
        %v439 = vld [vmem:[%s432] sm:$0xff]
        %v440 = vld [vmem:[%s432 + $0x8] sm:$0xff]
        %v441 = vunpack.c.l.bf16 %v439
        %v442 = vunpack.c.h.bf16 %v439
        %v443 = vunpack.c.l.bf16 %v440
        %v444 = vunpack.c.h.bf16 %v440
        %v445 = vadd.f32 %v441, %v442
        %446 = vadd.xlane.f32.xlu0 %v445
        %v447 = vpop.xlane.xlu0 %446
        %v448 = vadd.f32 %v443, %v444
        %449 = vadd.xlane.f32.xlu0 %v448
        %v450 = vpop.xlane.xlu0 %449
        %v451 = vrcp.pop 256.0
        %v452 = vmul.f32 %v447, %v451
        %v453 = vmul.f32 %v450, %v451
        %v454 = vsub.f32 %v441, %v452
        %v455 = vsub.f32 %v442, %v452
        %v456 = vsub.f32 %v443, %v453
        %v457 = vsub.f32 %v444, %v453
        %v458 = vmul.f32 %v454, %v454
        %v459 = vmul.f32 %v455, %v455
        %v460 = vmul.f32 %v456, %v456
        %v461 = vmul.f32 %v457, %v457
        %v462 = vadd.f32 %v458, %v459
        %463 = vadd.xlane.f32.xlu0 %v462
        %v464 = vpop.xlane.xlu0 %463
        %v465 = vadd.f32 %v460, %v461
        %466 = vadd.xlane.f32.xlu0 %v465
        %v467 = vpop.xlane.xlu0 %466
        %v468 = vmul.f32 %v464, %v451
        %v469 = vmul.f32 %v467, %v451
        %v470 = vadd.f32 %v468, 1e-05
        %v471 = vadd.f32 %v469, 1e-05
        %v472 = vrsqrt.pop %v470
        %v473 = vrsqrt.pop %v471
        %v474 = vmul.f32 %v454, %v472
        %v475 = vmul.f32 %v455, %v472
        %v476 = vmul.f32 %v456, %v473
        %v477 = vmul.f32 %v457, %v473
        %v478 = vld [vmem:[%s3] sm:$0x3]
        %v480 = vlaneseq
        %v481 = vshrl.u32 %v480, 7
        %v482 = vsub.s32 0, %v481
        %v483 = vrot.slane %v478, %v482
        %v484 = vlaneseq
        %v485 = vshrl.u32 %v484, 7
        %v486 = vsub.s32 1, %v485
        %v487 = vrot.slane %v478, %v486
        %v490 = vmul.f32 %v474, %v483
        %v491 = vmul.f32 %v475, %v487
        %v492 = vmul.f32 %v476, %v483
        %v493 = vmul.f32 %v477, %v487
        %v494 = vld [vmem:[%s4] sm:$0x3]
        %v496 = vlaneseq
        %v497 = vshrl.u32 %v496, 7
        %v498 = vsub.s32 0, %v497
        %v499 = vrot.slane %v494, %v498
        %v500 = vlaneseq
        %v501 = vshrl.u32 %v500, 7
        %v502 = vsub.s32 1, %v501
        %v503 = vrot.slane %v494, %v502
        %v506 = vadd.f32 %v490, %v499
        %v507 = vadd.f32 %v491, %v503
        %v508 = vadd.f32 %v492, %v499
        %v509 = vadd.f32 %v493, %v503
        %v510 = vpack.c.bf16 %v508, %v506
        %v511 = vpack.c.bf16 %v509, %v507
        %v512 = vld [vmem:[%s394] sm:$0xf]
        %v513 = vld [vmem:[%s394 + $0x4] sm:$0xf]
        %v514 = vld [vmem:[%s394 + $0x8] sm:$0xf]
        %v515 = vld [vmem:[%s394 + $0xc] sm:$0xf]
        %v516 = vld [vmem:[%s394 + $0x10] sm:$0xf]
        %v517 = vld [vmem:[%s394 + $0x14] sm:$0xf]
        %v518 = vld [vmem:[%s394 + $0x18] sm:$0xf]
        %v519 = vld [vmem:[%s394 + $0x1c] sm:$0xf]
        %v520 = vld [vmem:[%s394 + $0x20] sm:$0xf]
        %v521 = vld [vmem:[%s394 + $0x24] sm:$0xf]
        %v522 = vld [vmem:[%s394 + $0x28] sm:$0xf]
        %v523 = vld [vmem:[%s394 + $0x2c] sm:$0xf]
        %v524 = vld [vmem:[%s394 + $0x30] sm:$0xf]
        %v525 = vld [vmem:[%s394 + $0x34] sm:$0xf]
        %v526 = vld [vmem:[%s394 + $0x38] sm:$0xf]
        %v527 = vld [vmem:[%s394 + $0x3c] sm:$0xf]
        %v528 = vld [vmem:[%s394 + $0x40] sm:$0xf]
        %v529 = vld [vmem:[%s394 + $0x44] sm:$0xf]
        %v530 = vld [vmem:[%s394 + $0x48] sm:$0xf]
        %v531 = vld [vmem:[%s394 + $0x4c] sm:$0xf]
        %v532 = vld [vmem:[%s394 + $0x50] sm:$0xf]
        %v533 = vld [vmem:[%s394 + $0x54] sm:$0xf]
        %v534 = vld [vmem:[%s394 + $0x58] sm:$0xf]
        %v535 = vld [vmem:[%s394 + $0x5c] sm:$0xf]
        %v536 = vld [vmem:[%s394 + $0x60] sm:$0xf]
        %v537 = vld [vmem:[%s394 + $0x64] sm:$0xf]
        %v538 = vld [vmem:[%s394 + $0x68] sm:$0xf]
        %v539 = vld [vmem:[%s394 + $0x6c] sm:$0xf]
        %v540 = vld [vmem:[%s394 + $0x70] sm:$0xf]
        %v541 = vld [vmem:[%s394 + $0x74] sm:$0xf]
        %v542 = vld [vmem:[%s394 + $0x78] sm:$0xf]
        %v543 = vld [vmem:[%s394 + $0x7c] sm:$0xf]
        %v544 = vld [vmem:[%s436] sm:$0x1]
        %v546 = vlaneseq
        %v547 = vshrl.u32 %v546, 7
        %v548 = vsub.s32 0, %v547
        %v549 = vrot.slane %v544, %v548
        %v583 = vunpack.c.l.b16 %v512
        %v584 = vunpack.c.l.b16 %v513
        %v585 = vunpack.c.l.b16 %v514
        %v586 = vunpack.c.l.b16 %v515
        %v587 = vunpack.c.l.b16 %v516
        %v588 = vunpack.c.l.b16 %v517
        %v589 = vunpack.c.l.b16 %v518
        %v590 = vunpack.c.l.b16 %v519
        %v591 = vunpack.c.l.b16 %v520
        %v592 = vunpack.c.l.b16 %v521
        %v593 = vunpack.c.l.b16 %v522
        %v594 = vunpack.c.l.b16 %v523
        %v595 = vunpack.c.l.b16 %v524
        %v596 = vunpack.c.l.b16 %v525
        %v597 = vunpack.c.l.b16 %v526
        %v598 = vunpack.c.l.b16 %v527
        %v599 = vunpack.c.l.b16 %v528
        %v600 = vunpack.c.l.b16 %v529
        %v601 = vunpack.c.l.b16 %v530
        %v602 = vunpack.c.l.b16 %v531
        %v603 = vunpack.c.l.b16 %v532
        %v604 = vunpack.c.l.b16 %v533
        %v605 = vunpack.c.l.b16 %v534
        %v606 = vunpack.c.l.b16 %v535
        %v607 = vunpack.c.l.b16 %v536
        %v608 = vunpack.c.l.b16 %v537
        %v609 = vunpack.c.l.b16 %v538
        %v610 = vunpack.c.l.b16 %v539
        %v611 = vunpack.c.l.b16 %v540
        %v612 = vunpack.c.l.b16 %v541
        %v613 = vunpack.c.l.b16 %v542
        %v614 = vunpack.c.l.b16 %v543
        %v615 = vpack.c.b16 %v584, %v583
        %v616 = vpack.c.b16 %v586, %v585
        %v617 = vpack.c.b16 %v588, %v587
        %v618 = vpack.c.b16 %v590, %v589
        %v619 = vpack.c.b16 %v592, %v591
        %v620 = vpack.c.b16 %v594, %v593
        %v621 = vpack.c.b16 %v596, %v595
        %v622 = vpack.c.b16 %v598, %v597
        %v623 = vpack.c.b16 %v600, %v599
        %v624 = vpack.c.b16 %v602, %v601
        %v625 = vpack.c.b16 %v604, %v603
        %v626 = vpack.c.b16 %v606, %v605
        %v627 = vpack.c.b16 %v608, %v607
        %v628 = vpack.c.b16 %v610, %v609
        %v629 = vpack.c.b16 %v612, %v611
        %v630 = vpack.c.b16 %v614, %v613
        %647 = vmatprep.subr.bf16.mxu0 0
        %648 = vmatpush1.bf16.msra.mxu0 %v615
        %649 = vmatprep.subr.bf16.mxu0 0
        %650 = vmatpush1.bf16.msra.mxu0 %v616
        %651 = vmatprep.subr.bf16.mxu0 0
        %652 = vmatpush1.bf16.msra.mxu0 %v617
        %653 = vmatprep.subr.bf16.mxu0 0
        %654 = vmatpush1.bf16.msra.mxu0 %v618
        %655 = vmatprep.subr.bf16.mxu0 0
        %656 = vmatpush1.bf16.msra.mxu0 %v619
        %657 = vmatprep.subr.bf16.mxu0 0
        %658 = vmatpush1.bf16.msra.mxu0 %v620
        %659 = vmatprep.subr.bf16.mxu0 0
        %660 = vmatpush1.bf16.msra.mxu0 %v621
        %661 = vmatprep.subr.bf16.mxu0 0
        %662 = vmatpush1.bf16.msra.mxu0 %v622
        %663 = vmatprep.subr.bf16.mxu0 0
        %664 = vmatpush1.bf16.msra.mxu0 %v623
        %665 = vmatprep.subr.bf16.mxu0 0
        %666 = vmatpush1.bf16.msra.mxu0 %v624
        %667 = vmatprep.subr.bf16.mxu0 0
        %668 = vmatpush1.bf16.msra.mxu0 %v625
        %669 = vmatprep.subr.bf16.mxu0 0
        %670 = vmatpush1.bf16.msra.mxu0 %v626
        %671 = vmatprep.subr.bf16.mxu0 0
        %672 = vmatpush1.bf16.msra.mxu0 %v627
        %673 = vmatprep.subr.bf16.mxu0 0
        %674 = vmatpush1.bf16.msra.mxu0 %v628
        %675 = vmatprep.subr.bf16.mxu0 0
        %676 = vmatpush1.bf16.msra.mxu0 %v629
        %677 = vmatprep.subr.bf16.mxu0 0
        %678 = vmatpush1.bf16.msra.mxu0 %v630
        %679 = vmatprep.mubr.bf16.mxu0 %v511
        %680 = vmatmul.mubr.bf16.gmra.mrb[0].mxu0 %v510
        %v681 = vpop.f32.mrb[0].mxu0
        %v682 = vadd.f32 %v549, %v681
        %v683 = vpop.f32.mrb[0].mxu0
        %v684 = vpop.f32.mrb[0].mxu0
        %v685 = vadd.f32 %v549, %v684
        %v686 = vpop.f32.mrb[0].mxu0
        %687 = vdwg.mxu0
        %v688 = vpack.c.bf16 %v685, %v682
        %v690 = vunpack.c.l.b16 %v688
        %v691 = vunpack.c.h.b16 %v688
        %v692 = vpack.c.b16 %v690, %v690
        %v693 = vpack.c.b16 %v691, %v691
        %696 = vst [vmem:[%s426] sm:$0xf] %v692
        %697 = vst [vmem:[%s426 + $0x4] sm:$0xf] %v693
        %s698 = sand.u32 %s158, 1
        %s699 = sand.u32 %s158, 1
        %s700 = smul.addr %s699, 8
        %s701 = scalar_lea.vmem [#allocation3], %s700
        // Predicated region
        $region82: #{whisper_encoder_forward.15} parent=76 // pred_check
          %p702 = pneg %p168
        $region83: #{whisper_encoder_forward.15} parent=76 // pred_check_branch
          %704 = sbr.rel (%p702) target = $region85
        $region84: #{whisper_encoder_forward.15} parent=76 // pred_region
          %s705 = smul.u32 2, %s20
          %s706 = smul.addr %s705, 6
          %s707 = sadd.s32 %s21, %s706
          %s708 = smul.addr %s707, 4
          %s709 = scalar_lea.vmem %s5, %s708
          // Predicated region
          $region86: #{whisper_encoder_forward.15} parent=84 // pred_check
            _
          $region87: #{whisper_encoder_forward.15} parent=84 // pred_check_branch
            %711 = sbr.rel (0) target = $region89
          $region88: #{whisper_encoder_forward.15} parent=84 // pred_region
            // Predicated region
            $region90: #{whisper_encoder_forward.15} parent=88 // pred_check
              _
            $region91: #{whisper_encoder_forward.15} parent=88 // pred_check_branch
              %713 = sbr.rel target = $region93
            $region92: #{whisper_encoder_forward.15} parent=88 // pred_region
              // Predicated region
              $region105: #{whisper_encoder_forward.15} parent=92 // pred_check
                _
              $region106: #{whisper_encoder_forward.15} parent=92 // pred_check_branch
                %730 = sbr.rel (0) target = $region108
              $region107: #{whisper_encoder_forward.15} parent=92 // pred_region
                loop: start=0, step=1, limit=1
                $region109: #{whisper_encoder_forward.15} parent=107 // loop_pre_header
                  _
                $region110: #{whisper_encoder_forward.15} parent=107 // loop_header
                  %s732 = sphi 0, %s736
                  %p733 = scmp.ge.s32.totalorder %s732, 1
                  %s737 = sphi %s701, %s701
                  %s738 = sphi %s709, %s709
                $region111: #{whisper_encoder_forward.15} parent=107 // loop_header_branch
                  %735 = sbr.rel (%p733) target = $region115
                $region112: #{whisper_encoder_forward.15} parent=107 // loop_body
                  _
                $region113: #{whisper_encoder_forward.15} parent=107 // loop_footer
                  %s736 = sadd.s32 1, %s732
                $region114: #{whisper_encoder_forward.15} parent=107 // loop_footer_branch
                  %731 = sbr.rel target = $region110
                $region115: #{whisper_encoder_forward.15} parent=107 // loop_exit
                  _
                loop: start=0, step=1, limit=1
                $region116: #{whisper_encoder_forward.15} parent=107 // loop_pre_header
                  _
                $region117: #{whisper_encoder_forward.15} parent=107 // loop_header
                  %s741 = sphi 0, %s745
                  %p742 = scmp.ge.s32.totalorder %s741, 1
                  %s746 = sphi %s701, %s701
                  %s747 = sphi %s709, %s709
                $region118: #{whisper_encoder_forward.15} parent=107 // loop_header_branch
                  %744 = sbr.rel (%p742) target = $region122
                $region119: #{whisper_encoder_forward.15} parent=107 // loop_body
                  %v748 = vld [vmem:[%s746] sm:$0xf]
                  %749 = vst [vmem:[%s747] sm:$0xf] %v748
                  %v750 = vld [vmem:[%s746 + $0x4] sm:$0xf]
                  %751 = vst [vmem:[%s747 + $0x18] sm:$0xf] %v750
                $region120: #{whisper_encoder_forward.15} parent=107 // loop_footer
                  %s745 = sadd.s32 1, %s741
                $region121: #{whisper_encoder_forward.15} parent=107 // loop_footer_branch
                  %740 = sbr.rel target = $region117
                $region122: #{whisper_encoder_forward.15} parent=107 // loop_exit
                  _
              $region108: #{whisper_encoder_forward.15} parent=92 // pred_fallthru
                _
            $region93: #{whisper_encoder_forward.15} parent=88 // pred_fallthru
              _
            // Predicated region
            $region94: #{whisper_encoder_forward.15} parent=88 // pred_check
              _
            $region95: #{whisper_encoder_forward.15} parent=88 // pred_check_branch
              %715 = sbr.rel (0) target = $region97
            $region96: #{whisper_encoder_forward.15} parent=88 // pred_region
              loop: start=0, step=1, limit=1
              $region98: #{whisper_encoder_forward.15} parent=96 // loop_pre_header
                _
              $region99: #{whisper_encoder_forward.15} parent=96 // loop_header
                %s718 = sphi 0, %s722
                %p719 = scmp.ge.s32.totalorder %s718, 1
                %s723 = sphi %s701, %s701
                %s724 = sphi %s709, %s709
              $region100: #{whisper_encoder_forward.15} parent=96 // loop_header_branch
                %721 = sbr.rel (%p719) target = $region104
              $region101: #{whisper_encoder_forward.15} parent=96 // loop_body
                %v725 = vld [vmem:[%s723] sm:$0xf]
                %726 = vst [vmem:[%s724] sm:$0xf] %v725
                %v727 = vld [vmem:[%s723 + $0x4] sm:$0xf]
                %728 = vst [vmem:[%s724 + $0x18] sm:$0xf] %v727
              $region102: #{whisper_encoder_forward.15} parent=96 // loop_footer
                %s722 = sadd.s32 1, %s718
              $region103: #{whisper_encoder_forward.15} parent=96 // loop_footer_branch
                %717 = sbr.rel target = $region99
              $region104: #{whisper_encoder_forward.15} parent=96 // loop_exit
                _
            $region97: #{whisper_encoder_forward.15} parent=88 // pred_fallthru
              _
          $region89: #{whisper_encoder_forward.15} parent=84 // pred_fallthru
            _
          %752 = vnop
        $region85: #{whisper_encoder_forward.15} parent=76 // pred_fallthru
          _
      $region77: #{whisper_encoder_forward.15} parent=5 // pred_fallthru
        _
      %p753 = scmp.le.s32.totalorder 2, %s11
      // Predicated region
      $region123: #{whisper_encoder_forward.15} parent=5 // pred_check
        %p754 = pneg %p753
      $region124: #{whisper_encoder_forward.15} parent=5 // pred_check_branch
        %756 = sbr.rel (%p754) target = $region126
      $region125: #{whisper_encoder_forward.15} parent=5 // pred_region
        %s757 = ssub.s32 %s11, 2
        // Predicated region
        $region127: #{whisper_encoder_forward.15} parent=125 // pred_check
          %p758 = pneg %p174
        $region128: #{whisper_encoder_forward.15} parent=125 // pred_check_branch
          %760 = sbr.rel (%p758) target = $region130
        $region129: #{whisper_encoder_forward.15} parent=125 // pred_region
          %s761 = sand.u32 %s159, 1
          %s762 = sand.u32 %s159, 1
          %s763 = smul.addr %s762, 8
          %s764 = scalar_lea.vmem [#allocation3], %s763
        $region130: #{whisper_encoder_forward.15} parent=125 // pred_fallthru
          _
      $region126: #{whisper_encoder_forward.15} parent=5 // pred_fallthru
        _
    $region6: #{whisper_encoder_forward.15} parent=1 // loop_footer
      %s15 = sadd.s32 1, %s11
    $region7: #{whisper_encoder_forward.15} parent=1 // loop_footer_branch
      %10 = sbr.rel target = $region3
    $region8: #{whisper_encoder_forward.15} parent=1 // loop_exit
      _

// kernel: whisper_encoder_forward.16
$region0: #{whisper_encoder_forward.16}
  #allocation0 [shape = 'u32[]', space=smem, size = 0x4, offset = 0x4, fixed_abs, tag = 'smem constant byte address 0x4 - core index']
  #allocation1 [shape = 'u32[144,128]{1,0:T(1,128)}', space=vmem, size = 0x12000, scoped, tag = 'internal scratch']
  %s0 = inlined_call_operand.vmem [shape: bf16[32,768], index: 0, kind: input, shape index: {}, may-alias: {0,1,2}]
  %s1 = inlined_call_operand.vmem [shape: bf16[32,768], index: 1, kind: input, shape index: {}, may-alias: {0,1,2}]
  %s2 = inlined_call_operand.vmem [shape: bf16[32,768], index: 2, kind: input, shape index: {}, may-alias: {0,1,2}]
  %s3 = inlined_call_operand.vmem [shape: bf16[32,256], index: 3, kind: output, shape index: {}]
  %s4 = sld [smem:[#allocation0]]
  $region121: #{whisper_encoder_forward.16} parent=0
    _
  %s6 = ssub.s32 1, %s4
  %s7 = scalar_select 0, %s6, %s4
  $region1: #{whisper_encoder_forward.16} parent=0
    #allocation2 [shape = 'u8[16384]{0}', space=vmem, size = 0x4000, scoped, tag = 'input window, operand 1']
    #allocation3 [shape = 'u8[16384]{0}', space=vmem, size = 0x4000, scoped, tag = 'input window, operand 2']
    loop: start=0, step=1, limit=6
    $region2: #{whisper_encoder_forward.16} parent=1 // loop_pre_header
      _
    $region3: #{whisper_encoder_forward.16} parent=1 // loop_header
      %s9 = sphi 0, %s13
      %p10 = scmp.ge.s32.totalorder %s9, 6
      %s16 = sphi 0, %s35
      %s17 = sphi 0, %s31
      %s18 = sphi 0, %s27
      %s19 = sphi 0, %s16
      %s20 = sphi 0, %s17
      %s21 = sphi 0, %s18
      %s22 = sphi 0, %s19
      %s23 = sphi 0, %s20
      %s24 = sphi 0, %s21
      %s44 = sphi 0, %s46
      %s47 = sphi 0, %s44
      %s48 = sphi 0, %s47
      %s64 = sphi 0, %s48
      %s74 = sphi 0, %s76
      %s77 = sphi 0, %s74
      %s78 = sphi 0, %s77
      %s94 = sphi 0, %s78
      %s104 = sphi 0, %s106
      %s107 = sphi 0, %s104
      %s108 = sphi 0, %s107
      %s124 = sphi 0, %s108
      %s136 = sphi 0, %s138
      %s139 = sphi 0, %s136
      %s140 = sphi 0, %s139
      %s156 = sphi 0, %s140
    $region4: #{whisper_encoder_forward.16} parent=1 // loop_header_branch
      %12 = sbr.rel (%p10) target = $region8
    $region5: #{whisper_encoder_forward.16} parent=1 // loop_body
      %s14 = ssub.s32 %s9, 1
      %s15 = ssub.s32 %s9, 2
      %s25 = sadd.s32 1, %s18
      %p26 = scmp.ge.s32.totalorder %s25, 2
      %s27 = scalar_select %p26, 0, %s25
      %s28 = sadd.s32 1, %s17
      %s29 = scalar_select %p26, %s28, %s17
      %p30 = scmp.ge.s32.totalorder %s29, 1
      %s31 = scalar_select %p30, 0, %s29
      %s32 = sadd.s32 1, %s16
      %s33 = scalar_select %p30, %s32, %s16
      %p34 = scmp.ge.s32.totalorder %s33, 2
      %s35 = scalar_select %p34, 0, %s33
      %s36 = smul.u32 %s16, 2
      %s37 = sadd.s32 %s36, %s18
      %s38 = smul.u32 %s35, 2
      %s39 = sadd.s32 %s38, %s27
      %s40 = ssub.s32 %s37, %s39
      %s41 = ssub.s32 %s17, %s31
      %s42 = sor.u32 %s40, %s41
      %p43 = scmp.eq.s32.totalorder %s42, 0
      %s45 = sadd.s32 %s44, 1
      %s46 = scalar_select %p43, %s44, %s45
      %p49 = pneg %p43
      %p50 = scmp.eq.s32.totalorder %s9, 3
      %p51 = por %p49, %p50
      %p52 = scmp.ne.s32.totalorder %s44, %s47
      %p53 = scmp.eq.s32.totalorder %s9, 0
      %p54 = por %p52, %p53
      %p55 = scmp.ne.s32.totalorder %s44, %s47
      %p56 = scmp.eq.s32.totalorder %s14, 3
      %p57 = por %p55, %p56
      %p58 = scmp.ne.s32.totalorder %s47, %s48
      %p59 = scmp.eq.s32.totalorder %s14, 0
      %p60 = por %p58, %p59
      %p61 = scmp.ne.s32.totalorder %s47, %s48
      %p62 = scmp.eq.s32.totalorder %s15, 3
      %p63 = por %p61, %p62
      %p65 = scmp.ne.s32.totalorder %s48, %s64
      %p66 = scmp.eq.s32.totalorder %s15, 0
      %p67 = por %p65, %p66
      %s68 = sadd.s32 %s17, 1
      %s69 = sadd.s32 %s31, 1
      %s70 = ssub.s32 %s16, %s35
      %s71 = ssub.s32 %s68, %s69
      %s72 = sor.u32 %s70, %s71
      %p73 = scmp.eq.s32.totalorder %s72, 0
      %s75 = sadd.s32 %s74, 1
      %s76 = scalar_select %p73, %s74, %s75
      %p79 = pneg %p73
      %p80 = scmp.eq.s32.totalorder %s9, 3
      %p81 = por %p79, %p80
      %p82 = scmp.ne.s32.totalorder %s74, %s77
      %p83 = scmp.eq.s32.totalorder %s9, 0
      %p84 = por %p82, %p83
      %p85 = scmp.ne.s32.totalorder %s74, %s77
      %p86 = scmp.eq.s32.totalorder %s14, 3
      %p87 = por %p85, %p86
      %p88 = scmp.ne.s32.totalorder %s77, %s78
      %p89 = scmp.eq.s32.totalorder %s14, 0
      %p90 = por %p88, %p89
      %p91 = scmp.ne.s32.totalorder %s77, %s78
      %p92 = scmp.eq.s32.totalorder %s15, 3
      %p93 = por %p91, %p92
      %p95 = scmp.ne.s32.totalorder %s78, %s94
      %p96 = scmp.eq.s32.totalorder %s15, 0
      %p97 = por %p95, %p96
      %s98 = sadd.s32 %s17, 2
      %s99 = sadd.s32 %s31, 2
      %s100 = ssub.s32 %s16, %s35
      %s101 = ssub.s32 %s98, %s99
      %s102 = sor.u32 %s100, %s101
      %p103 = scmp.eq.s32.totalorder %s102, 0
      %s105 = sadd.s32 %s104, 1
      %s106 = scalar_select %p103, %s104, %s105
      %p109 = pneg %p103
      %p110 = scmp.eq.s32.totalorder %s9, 3
      %p111 = por %p109, %p110
      %p112 = scmp.ne.s32.totalorder %s104, %s107
      %p113 = scmp.eq.s32.totalorder %s9, 0
      %p114 = por %p112, %p113
      %p115 = scmp.ne.s32.totalorder %s104, %s107
      %p116 = scmp.eq.s32.totalorder %s14, 3
      %p117 = por %p115, %p116
      %p118 = scmp.ne.s32.totalorder %s107, %s108
      %p119 = scmp.eq.s32.totalorder %s14, 0
      %p120 = por %p118, %p119
      %p121 = scmp.ne.s32.totalorder %s107, %s108
      %p122 = scmp.eq.s32.totalorder %s15, 3
      %p123 = por %p121, %p122
      %p125 = scmp.ne.s32.totalorder %s108, %s124
      %p126 = scmp.eq.s32.totalorder %s15, 0
      %p127 = por %p125, %p126
      %s128 = smul.u32 %s16, 2
      %s129 = sadd.s32 %s128, %s18
      %s130 = smul.u32 %s35, 2
      %s131 = sadd.s32 %s130, %s27
      %s132 = ssub.s32 %s129, %s131
      %s133 = ssub.s32 %s17, %s31
      %s134 = sor.u32 %s132, %s133
      %p135 = scmp.eq.s32.totalorder %s134, 0
      %s137 = sadd.s32 %s136, 1
      %s138 = scalar_select %p135, %s136, %s137
      %p141 = pneg %p135
      %p142 = scmp.eq.s32.totalorder %s9, 3
      %p143 = por %p141, %p142
      %p144 = scmp.ne.s32.totalorder %s136, %s139
      %p145 = scmp.eq.s32.totalorder %s9, 0
      %p146 = por %p144, %p145
      %p147 = scmp.ne.s32.totalorder %s136, %s139
      %p148 = scmp.eq.s32.totalorder %s14, 3
      %p149 = por %p147, %p148
      %p150 = scmp.ne.s32.totalorder %s139, %s140
      %p151 = scmp.eq.s32.totalorder %s14, 0
      %p152 = por %p150, %p151
      %p153 = scmp.ne.s32.totalorder %s139, %s140
      %p154 = scmp.eq.s32.totalorder %s15, 3
      %p155 = por %p153, %p154
      %p157 = scmp.ne.s32.totalorder %s140, %s156
      %p158 = scmp.eq.s32.totalorder %s15, 0
      %p159 = por %p157, %p158
      %p160 = scmp.le.s32.totalorder 1, %s9
      %p161 = scmp.lt.s32.totalorder %s9, 5
      %p162 = pnand %p160, %p161
      %p163 = pneg %p162
      // Predicated region
      $region9: #{whisper_encoder_forward.16} parent=5 // pred_check
        _
      $region10: #{whisper_encoder_forward.16} parent=5 // pred_check_branch
        %165 = sbr.rel (%p162) target = $region12
      $region11: #{whisper_encoder_forward.16} parent=5 // pred_region
        %s166 = ssub.s32 %s9, 1
      $region12: #{whisper_encoder_forward.16} parent=5 // pred_fallthru
        _
      %p167 = scmp.lt.s32.totalorder %s9, 4
      // Predicated region
      $region13: #{whisper_encoder_forward.16} parent=5 // pred_check
        %p168 = pneg %p167
      $region14: #{whisper_encoder_forward.16} parent=5 // pred_check_branch
        %170 = sbr.rel (%p168) target = $region16
      $region15: #{whisper_encoder_forward.16} parent=5 // pred_region
        // Predicated region
        $region17: #{whisper_encoder_forward.16} parent=15 // pred_check
          %p171 = pneg %p54
        $region18: #{whisper_encoder_forward.16} parent=15 // pred_check_branch
          %173 = sbr.rel (%p171) target = $region20
        $region19: #{whisper_encoder_forward.16} parent=15 // pred_region
          %s174 = smul.u32 %s16, 2
          %s175 = sadd.s32 %s174, %s18
          %s176 = smul.u32 2, %s17
          %p177 = scmp.lt.s32.totalorder %s175, 3
          %s178 = scalar_select %p177, %s175, 3
          %p179 = scmp.lt.s32.totalorder %s176, 5
          %s180 = scalar_select %p179, %s176, 5
          %s181 = smul.addr %s178, 6
          %s182 = sadd.s32 %s180, %s181
          %s183 = smul.addr %s182, 4
          %s184 = scalar_lea.vmem %s0, %s183
          %s185 = smul.u32 %s16, 2
          %s186 = sadd.s32 %s185, %s18
          %s187 = smul.u32 2, %s17
        $region20: #{whisper_encoder_forward.16} parent=15 // pred_fallthru
          _
        // Predicated region
        $region21: #{whisper_encoder_forward.16} parent=15 // pred_check
          %p188 = pneg %p84
        $region22: #{whisper_encoder_forward.16} parent=15 // pred_check_branch
          %190 = sbr.rel (%p188) target = $region24
        $region23: #{whisper_encoder_forward.16} parent=15 // pred_region
          %s191 = sand.u32 %s74, 1
          %s192 = sand.u32 %s74, 1
          %s193 = smul.addr %s192, 16
          %s194 = scalar_lea.vmem [#allocation2], %s193
          %s195 = sadd.s32 %s17, 1
          %s196 = smul.u32 2, %s16
          %s197 = smul.u32 2, %s195
          %s198 = smul.addr %s196, 6
          %s199 = sadd.s32 %s197, %s198
          %s200 = smul.addr %s199, 4
          %s201 = scalar_lea.vmem %s1, %s200
          // Predicated region
          $region25: #{whisper_encoder_forward.16} parent=23 // pred_check
            _
          $region26: #{whisper_encoder_forward.16} parent=23 // pred_check_branch
            %203 = sbr.rel (0) target = $region28
          $region27: #{whisper_encoder_forward.16} parent=23 // pred_region
            // Predicated region
            $region29: #{whisper_encoder_forward.16} parent=27 // pred_check
              _
            $region30: #{whisper_encoder_forward.16} parent=27 // pred_check_branch
              %205 = sbr.rel (0) target = $region32
            $region31: #{whisper_encoder_forward.16} parent=27 // pred_region
              // Predicated region
              $region44: #{whisper_encoder_forward.16} parent=31 // pred_check
                _
              $region45: #{whisper_encoder_forward.16} parent=31 // pred_check_branch
                %222 = sbr.rel (0) target = $region47
              $region46: #{whisper_encoder_forward.16} parent=31 // pred_region
                loop: start=0, step=1, limit=1
                $region48: #{whisper_encoder_forward.16} parent=46 // loop_pre_header
                  _
                $region49: #{whisper_encoder_forward.16} parent=46 // loop_header
                  %s224 = sphi 0, %s228
                  %p225 = scmp.ge.s32.totalorder %s224, 1
                  %s229 = sphi %s201, %s201
                  %s230 = sphi %s194, %s194
                $region50: #{whisper_encoder_forward.16} parent=46 // loop_header_branch
                  %227 = sbr.rel (%p225) target = $region54
                $region51: #{whisper_encoder_forward.16} parent=46 // loop_body
                  %v231 = vld [vmem:[%s229] sm:$0xff]
                  %232 = vst [vmem:[%s230] sm:$0xff] %v231
                  %v233 = vld [vmem:[%s229 + $0x18] sm:$0xff]
                  %234 = vst [vmem:[%s230 + $0x8] sm:$0xff] %v233
                $region52: #{whisper_encoder_forward.16} parent=46 // loop_footer
                  %s228 = sadd.s32 1, %s224
                $region53: #{whisper_encoder_forward.16} parent=46 // loop_footer_branch
                  %223 = sbr.rel target = $region49
                $region54: #{whisper_encoder_forward.16} parent=46 // loop_exit
                  _
              $region47: #{whisper_encoder_forward.16} parent=31 // pred_fallthru
                _
              // Predicated region
              $region55: #{whisper_encoder_forward.16} parent=31 // pred_check
                _
              $region56: #{whisper_encoder_forward.16} parent=31 // pred_check_branch
                %236 = sbr.rel target = $region58
              $region57: #{whisper_encoder_forward.16} parent=31 // pred_region
                _
              $region58: #{whisper_encoder_forward.16} parent=31 // pred_fallthru
                _
            $region32: #{whisper_encoder_forward.16} parent=27 // pred_fallthru
              _
            // Predicated region
            $region33: #{whisper_encoder_forward.16} parent=27 // pred_check
              _
            $region34: #{whisper_encoder_forward.16} parent=27 // pred_check_branch
              %207 = sbr.rel target = $region36
            $region35: #{whisper_encoder_forward.16} parent=27 // pred_region
              loop: start=0, step=1, limit=1
              $region37: #{whisper_encoder_forward.16} parent=35 // loop_pre_header
                _
              $region38: #{whisper_encoder_forward.16} parent=35 // loop_header
                %s210 = sphi 0, %s214
                %p211 = scmp.ge.s32.totalorder %s210, 1
                %s215 = sphi %s201, %s201
                %s216 = sphi %s194, %s194
              $region39: #{whisper_encoder_forward.16} parent=35 // loop_header_branch
                %213 = sbr.rel (%p211) target = $region43
              $region40: #{whisper_encoder_forward.16} parent=35 // loop_body
                %v217 = vld [vmem:[%s215] sm:$0xff]
                %218 = vst [vmem:[%s216] sm:$0xff] %v217
                %v219 = vld [vmem:[%s215 + $0x18] sm:$0xff]
                %220 = vst [vmem:[%s216 + $0x8] sm:$0xff] %v219
              $region41: #{whisper_encoder_forward.16} parent=35 // loop_footer
                %s214 = sadd.s32 1, %s210
              $region42: #{whisper_encoder_forward.16} parent=35 // loop_footer_branch
                %209 = sbr.rel target = $region38
              $region43: #{whisper_encoder_forward.16} parent=35 // loop_exit
                _
            $region36: #{whisper_encoder_forward.16} parent=27 // pred_fallthru
              _
          $region28: #{whisper_encoder_forward.16} parent=23 // pred_fallthru
            _
          %237 = vnop
        $region24: #{whisper_encoder_forward.16} parent=15 // pred_fallthru
          _
        // Predicated region
        $region59: #{whisper_encoder_forward.16} parent=15 // pred_check
          %p238 = pneg %p114
        $region60: #{whisper_encoder_forward.16} parent=15 // pred_check_branch
          %240 = sbr.rel (%p238) target = $region62
        $region61: #{whisper_encoder_forward.16} parent=15 // pred_region
          %s241 = sand.u32 %s104, 1
          %s242 = sand.u32 %s104, 1
          %s243 = smul.addr %s242, 16
          %s244 = scalar_lea.vmem [#allocation3], %s243
          %s245 = sadd.s32 %s17, 2
          %s246 = smul.u32 2, %s16
          %s247 = smul.u32 2, %s245
          %s248 = smul.addr %s246, 6
          %s249 = sadd.s32 %s247, %s248
          %s250 = smul.addr %s249, 4
          %s251 = scalar_lea.vmem %s2, %s250
          // Predicated region
          $region63: #{whisper_encoder_forward.16} parent=61 // pred_check
            _
          $region64: #{whisper_encoder_forward.16} parent=61 // pred_check_branch
            %253 = sbr.rel (0) target = $region66
          $region65: #{whisper_encoder_forward.16} parent=61 // pred_region
            // Predicated region
            $region67: #{whisper_encoder_forward.16} parent=65 // pred_check
              _
            $region68: #{whisper_encoder_forward.16} parent=65 // pred_check_branch
              %255 = sbr.rel (0) target = $region70
            $region69: #{whisper_encoder_forward.16} parent=65 // pred_region
              // Predicated region
              $region82: #{whisper_encoder_forward.16} parent=69 // pred_check
                _
              $region83: #{whisper_encoder_forward.16} parent=69 // pred_check_branch
                %272 = sbr.rel (0) target = $region85
              $region84: #{whisper_encoder_forward.16} parent=69 // pred_region
                loop: start=0, step=1, limit=1
                $region86: #{whisper_encoder_forward.16} parent=84 // loop_pre_header
                  _
                $region87: #{whisper_encoder_forward.16} parent=84 // loop_header
                  %s274 = sphi 0, %s278
                  %p275 = scmp.ge.s32.totalorder %s274, 1
                  %s279 = sphi %s251, %s251
                  %s280 = sphi %s244, %s244
                $region88: #{whisper_encoder_forward.16} parent=84 // loop_header_branch
                  %277 = sbr.rel (%p275) target = $region92
                $region89: #{whisper_encoder_forward.16} parent=84 // loop_body
                  %v281 = vld [vmem:[%s279] sm:$0xff]
                  %282 = vst [vmem:[%s280] sm:$0xff] %v281
                  %v283 = vld [vmem:[%s279 + $0x18] sm:$0xff]
                  %284 = vst [vmem:[%s280 + $0x8] sm:$0xff] %v283
                $region90: #{whisper_encoder_forward.16} parent=84 // loop_footer
                  %s278 = sadd.s32 1, %s274
                $region91: #{whisper_encoder_forward.16} parent=84 // loop_footer_branch
                  %273 = sbr.rel target = $region87
                $region92: #{whisper_encoder_forward.16} parent=84 // loop_exit
                  _
              $region85: #{whisper_encoder_forward.16} parent=69 // pred_fallthru
                _
              // Predicated region
              $region93: #{whisper_encoder_forward.16} parent=69 // pred_check
                _
              $region94: #{whisper_encoder_forward.16} parent=69 // pred_check_branch
                %286 = sbr.rel target = $region96
              $region95: #{whisper_encoder_forward.16} parent=69 // pred_region
                _
              $region96: #{whisper_encoder_forward.16} parent=69 // pred_fallthru
                _
            $region70: #{whisper_encoder_forward.16} parent=65 // pred_fallthru
              _
            // Predicated region
            $region71: #{whisper_encoder_forward.16} parent=65 // pred_check
              _
            $region72: #{whisper_encoder_forward.16} parent=65 // pred_check_branch
              %257 = sbr.rel target = $region74
            $region73: #{whisper_encoder_forward.16} parent=65 // pred_region
              loop: start=0, step=1, limit=1
              $region75: #{whisper_encoder_forward.16} parent=73 // loop_pre_header
                _
              $region76: #{whisper_encoder_forward.16} parent=73 // loop_header
                %s260 = sphi 0, %s264
                %p261 = scmp.ge.s32.totalorder %s260, 1
                %s265 = sphi %s251, %s251
                %s266 = sphi %s244, %s244
              $region77: #{whisper_encoder_forward.16} parent=73 // loop_header_branch
                %263 = sbr.rel (%p261) target = $region81
              $region78: #{whisper_encoder_forward.16} parent=73 // loop_body
                %v267 = vld [vmem:[%s265] sm:$0xff]
                %268 = vst [vmem:[%s266] sm:$0xff] %v267
                %v269 = vld [vmem:[%s265 + $0x18] sm:$0xff]
                %270 = vst [vmem:[%s266 + $0x8] sm:$0xff] %v269
              $region79: #{whisper_encoder_forward.16} parent=73 // loop_footer
                %s264 = sadd.s32 1, %s260
              $region80: #{whisper_encoder_forward.16} parent=73 // loop_footer_branch
                %259 = sbr.rel target = $region76
              $region81: #{whisper_encoder_forward.16} parent=73 // loop_exit
                _
            $region74: #{whisper_encoder_forward.16} parent=65 // pred_fallthru
              _
          $region66: #{whisper_encoder_forward.16} parent=61 // pred_fallthru
            _
          %287 = vnop
        $region62: #{whisper_encoder_forward.16} parent=15 // pred_fallthru
          _
      $region16: #{whisper_encoder_forward.16} parent=5 // pred_fallthru
        _
      %p288 = scmp.le.s32.totalorder 1, %s9
      %p289 = scmp.lt.s32.totalorder %s9, 5
      %p290 = pnand %p288, %p289
      %p291 = pneg %p290
      // Predicated region
      $region97: #{whisper_encoder_forward.16} parent=5 // pred_check
        _
      $region98: #{whisper_encoder_forward.16} parent=5 // pred_check_branch
        %293 = sbr.rel (%p290) target = $region100
      $region99: #{whisper_encoder_forward.16} parent=5 // pred_region
        %s294 = ssub.s32 %s9, 1
        %s295 = sand.u32 %s77, 1
        %s296 = sand.u32 %s77, 1
        %s297 = smul.addr %s296, 16
        %s298 = scalar_lea.vmem [#allocation2], %s297
        // Predicated region
        $region101: #{whisper_encoder_forward.16} parent=99 // pred_check
          %p299 = pneg %p90
        $region102: #{whisper_encoder_forward.16} parent=99 // pred_check_branch
          %301 = sbr.rel (%p299) target = $region104
        $region103: #{whisper_encoder_forward.16} parent=99 // pred_region
          _
        $region104: #{whisper_encoder_forward.16} parent=99 // pred_fallthru
          _
        %s302 = sand.u32 %s107, 1
        %s303 = sand.u32 %s107, 1
        %s304 = smul.addr %s303, 16
        %s305 = scalar_lea.vmem [#allocation3], %s304
        // Predicated region
        $region105: #{whisper_encoder_forward.16} parent=99 // pred_check
          %p306 = pneg %p120
        $region106: #{whisper_encoder_forward.16} parent=99 // pred_check_branch
          %308 = sbr.rel (%p306) target = $region108
        $region107: #{whisper_encoder_forward.16} parent=99 // pred_region
          _
        $region108: #{whisper_encoder_forward.16} parent=99 // pred_fallthru
          _
        %s309 = smul.u32 %s19, 2
        %s310 = sadd.s32 %s309, %s21
        %s311 = smul.u32 2, %s20
        %p312 = scmp.lt.s32.totalorder %s310, 3
        %s313 = scalar_select %p312, %s310, 3
        %p314 = scmp.lt.s32.totalorder %s311, 5
        %s315 = scalar_select %p314, %s311, 5
        %s316 = smul.addr %s313, 6
        %s317 = sadd.s32 %s315, %s316
        %s318 = smul.addr %s317, 4
        %s319 = scalar_lea.vmem %s0, %s318
        %p320 = pneg %p60
        %p321 = pneg %p57
        %s322 = sand.u32 %s77, 1
        %s323 = sand.u32 %s77, 1
        %s324 = smul.addr %s323, 16
        %s325 = scalar_lea.vmem [#allocation2], %s324
        %p326 = pneg %p90
        %p327 = pneg %p87
        %s328 = sand.u32 %s107, 1
        %s329 = sand.u32 %s107, 1
        %s330 = smul.addr %s329, 16
        %s331 = scalar_lea.vmem [#allocation3], %s330
        %p332 = pneg %p120
        %p333 = pneg %p117
        %p334 = pneg %p152
        %p335 = pneg %p149
        %s336 = smul.u32 %s19, 2
        %s337 = sadd.s32 %s336, %s21
        %s338 = smul.u32 2, %s20
        %p339 = scmp.lt.s32.totalorder %s337, 3
        %s340 = scalar_select %p339, %s337, 3
        %p341 = scmp.lt.s32.totalorder %s338, 1
        %s342 = scalar_select %p341, %s338, 1
        %s343 = smul.addr %s340, 2
        %s344 = sadd.s32 %s342, %s343
        %s345 = smul.addr %s344, 4
        %s346 = scalar_lea.vmem %s3, %s345
        %s347 = smul.u32 %s19, 2
        %s348 = sadd.s32 %s347, %s21
        %s349 = smul.u32 2, %s20
        %p350 = scmp.lt.s32.totalorder %s348, 3
        %s351 = scalar_select %p350, %s348, 3
        %p352 = scmp.lt.s32.totalorder %s349, 5
        %s353 = scalar_select %p352, %s349, 5
        %s354 = smul.addr %s351, 6
        %s355 = sadd.s32 %s353, %s354
        %s356 = smul.addr %s355, 4
        %s357 = scalar_lea.vmem %s0, %s356
        %s358 = smul.u32 %s19, 2
        %s359 = sadd.s32 %s358, %s21
        %s360 = smul.u32 2, %s20
        %s361 = sadd.s32 %s20, 1
        %s362 = smul.u32 2, %s19
        %s363 = smul.u32 2, %s361
        %s364 = sadd.s32 %s20, 2
        %s365 = smul.u32 2, %s19
        %s366 = smul.u32 2, %s364
        %s367 = smul.u32 %s19, 2
        %s368 = sadd.s32 %s367, %s21
        %s369 = smul.u32 2, %s20
        %p370 = scmp.lt.s32.totalorder %s368, 3
        %s371 = scalar_select %p370, %s368, 3
        %p372 = scmp.lt.s32.totalorder %s369, 1
        %s373 = scalar_select %p372, %s369, 1
        %s374 = smul.addr %s371, 2
        %s375 = sadd.s32 %s373, %s374
        %s376 = smul.addr %s375, 4
        %s377 = scalar_lea.vmem %s3, %s376
        %s378 = smul.u32 %s19, 2
        %s379 = sadd.s32 %s378, %s21
        %s380 = smul.u32 2, %s20
        %v382 = vld [vmem:[%s357] sm:$0xff]
        %v383 = vld [vmem:[%s298] sm:$0xff]
        %v384 = vld [vmem:[%s298 + $0x8] sm:$0xff]
        %v385 = vld [vmem:[%s305] sm:$0xff]
        %v386 = vld [vmem:[%s305 + $0x8] sm:$0xff]
        %v387 = vlaneseq
        %v388 = vand.u32 %v387, 127
        %vm389 = vcmp.lt.s32.totalorder %v388, 14
        %v390 = vsel %vm389, 0.0, -1e+30
        %v393 = vunpack.c.l.b16 %v383
        %v394 = vunpack.c.l.b16 %v384
        %v395 = vpack.c.b16 %v394, %v393
        %vm396 = vcmask 523264
        %v398 = vsel %vm396, %v382, 0
        %v401 = vsel %vm396, %v395, 0
        %403 = vmatprep.subr.bf16.mxu0 0
        %404 = vmatpush1.bf16.xpose.msra.mxu0 %v401
        %405 = vmatprep.subr.bf16.mxu0 0
        %406 = vmatpush1.bf16.xpose.msra.mxu0 0
        %407 = vmatprep.subr.bf16.mxu0 0
        %408 = vmatpush1.bf16.xpose.msra.mxu0 0
        %409 = vmatprep.subr.bf16.mxu0 0
        %410 = vmatpush1.bf16.xpose.msra.mxu0 0
        %411 = vmatprep.subr.bf16.mxu0 0
        %412 = vmatpush1.bf16.xpose.msra.mxu0 0
        %413 = vmatprep.subr.bf16.mxu0 0
        %414 = vmatpush1.bf16.xpose.msra.mxu0 0
        %415 = vmatprep.subr.bf16.mxu0 0
        %416 = vmatpush1.bf16.xpose.msra.mxu0 0
        %417 = vmatprep.subr.bf16.mxu0 0
        %418 = vmatpush1.bf16.xpose.msra.mxu0 0
        %419 = vmatprep.subr.bf16.mxu0 0
        %420 = vmatpush1.bf16.xpose.msra.mxu0 0
        %421 = vmatprep.subr.bf16.mxu0 0
        %422 = vmatpush1.bf16.xpose.msra.mxu0 0
        %423 = vmatprep.subr.bf16.mxu0 0
        %424 = vmatpush1.bf16.xpose.msra.mxu0 0
        %425 = vmatprep.subr.bf16.mxu0 0
        %426 = vmatpush1.bf16.xpose.msra.mxu0 0
        %427 = vmatprep.subr.bf16.mxu0 0
        %428 = vmatpush1.bf16.xpose.msra.mxu0 0
        %429 = vmatprep.subr.bf16.mxu0 0
        %430 = vmatpush1.bf16.xpose.msra.mxu0 0
        %431 = vmatprep.subr.bf16.mxu0 0
        %432 = vmatpush1.bf16.xpose.msra.mxu0 0
        %433 = vmatprep.subr.bf16.mxu0 0
        %434 = vmatpush1.bf16.xpose.msra.mxu0 0
        %435 = vmatprep.mubr.bf16.mxu0 0
        %436 = vmatmul.mubr.bf16.gmra.mrb[0].mxu0 %v398
        %v437 = vpop.f32.mrb[0].mxu0
        %v438 = vadd.f32 %v390, %v437
        %v439 = vpop.f32.mrb[0].mxu0
        %v440 = vpop.f32.mrb[0].mxu0
        %v441 = vpop.f32.mrb[0].mxu0
        %442 = vdwg.mxu0
        %vm443 = vcmask 130048
        %v444 = vsel %vm443, %v438, -inf
        %445 = vmax.xlane.f32.xlu0 %v444
        %v446 = vpop.xlane.xlu0 %445
        %v447 = vsub.f32 %v438, %v446
        %v448 = vmul.f32 %v447, 1.442695
        %v449 = vpow.pop %v448
        %v450 = vsel %vm443, %v449, 0.0
        %451 = vadd.xlane.f32.xlu0 %v450
        %v452 = vpop.xlane.xlu0 %451
        %v453 = vpack.c.bf16 %v449, %v449
        %v456 = vunpack.c.l.b16 %v385
        %v457 = vunpack.c.l.b16 %v386
        %v458 = vpack.c.b16 %v457, %v456
        %v461 = vsel %vm443, %v453, 0
        %463 = vmatprep.subr.bf16.mxu0 0
        %464 = vmatpush1.bf16.msra.mxu0 %v458
        %465 = vmatprep.subr.bf16.mxu0 0
        %466 = vmatpush1.bf16.msra.mxu0 0
        %467 = vmatprep.subr.bf16.mxu0 0
        %468 = vmatpush1.bf16.msra.mxu0 0
        %469 = vmatprep.subr.bf16.mxu0 0
        %470 = vmatpush1.bf16.msra.mxu0 0
        %471 = vmatprep.subr.bf16.mxu0 0
        %472 = vmatpush1.bf16.msra.mxu0 0
        %473 = vmatprep.subr.bf16.mxu0 0
        %474 = vmatpush1.bf16.msra.mxu0 0
        %475 = vmatprep.subr.bf16.mxu0 0
        %476 = vmatpush1.bf16.msra.mxu0 0
        %477 = vmatprep.subr.bf16.mxu0 0
        %478 = vmatpush1.bf16.msra.mxu0 0
        %479 = vmatprep.subr.bf16.mxu0 0
        %480 = vmatpush1.bf16.msra.mxu0 0
        %481 = vmatprep.subr.bf16.mxu0 0
        %482 = vmatpush1.bf16.msra.mxu0 0
        %483 = vmatprep.subr.bf16.mxu0 0
        %484 = vmatpush1.bf16.msra.mxu0 0
        %485 = vmatprep.subr.bf16.mxu0 0
        %486 = vmatpush1.bf16.msra.mxu0 0
        %487 = vmatprep.subr.bf16.mxu0 0
        %488 = vmatpush1.bf16.msra.mxu0 0
        %489 = vmatprep.subr.bf16.mxu0 0
        %490 = vmatpush1.bf16.msra.mxu0 0
        %491 = vmatprep.subr.bf16.mxu0 0
        %492 = vmatpush1.bf16.msra.mxu0 0
        %493 = vmatprep.subr.bf16.mxu0 0
        %494 = vmatpush1.bf16.msra.mxu0 0
        %495 = vmatprep.mubr.bf16.mxu0 0
        %496 = vmatmul.mubr.bf16.gmra.mrb[0].mxu0 %v461
        %v497 = vpop.f32.mrb[0].mxu0
        %v498 = vadd.f32 0.0, %v497
        %v499 = vpop.f32.mrb[0].mxu0
        %v500 = vpop.f32.mrb[0].mxu0
        %v501 = vpop.f32.mrb[0].mxu0
        %502 = vdwg.mxu0
        %v503 = vrcp.pop %v452
        %v504 = vmul.f32 %v498, %v503
        %v506 = vunpack.c.l.b16 %v382
        %v507 = vpack.c.b16 %v506, %v506
        %508 = vrot.lane.b32.xlu0 %v507, 64
        %v509 = vpop.permute.xlu0 %508
        %510 = vrot.lane.b32.xlu0 %v395, 64
        %v511 = vpop.permute.xlu0 %510
        %v513 = vsel %vm396, %v509, 0
        %v516 = vsel %vm396, %v511, 0
        %518 = vmatprep.subr.bf16.mxu0 0
        %519 = vmatpush1.bf16.xpose.msra.mxu0 %v516
        %520 = vmatprep.subr.bf16.mxu0 0
        %521 = vmatpush1.bf16.xpose.msra.mxu0 0
        %522 = vmatprep.subr.bf16.mxu0 0
        %523 = vmatpush1.bf16.xpose.msra.mxu0 0
        %524 = vmatprep.subr.bf16.mxu0 0
        %525 = vmatpush1.bf16.xpose.msra.mxu0 0
        %526 = vmatprep.subr.bf16.mxu0 0
        %527 = vmatpush1.bf16.xpose.msra.mxu0 0
        %528 = vmatprep.subr.bf16.mxu0 0
        %529 = vmatpush1.bf16.xpose.msra.mxu0 0
        %530 = vmatprep.subr.bf16.mxu0 0
        %531 = vmatpush1.bf16.xpose.msra.mxu0 0
        %532 = vmatprep.subr.bf16.mxu0 0
        %533 = vmatpush1.bf16.xpose.msra.mxu0 0
        %534 = vmatprep.subr.bf16.mxu0 0
        %535 = vmatpush1.bf16.xpose.msra.mxu0 0
        %536 = vmatprep.subr.bf16.mxu0 0
        %537 = vmatpush1.bf16.xpose.msra.mxu0 0
        %538 = vmatprep.subr.bf16.mxu0 0
        %539 = vmatpush1.bf16.xpose.msra.mxu0 0
        %540 = vmatprep.subr.bf16.mxu0 0
        %541 = vmatpush1.bf16.xpose.msra.mxu0 0
        %542 = vmatprep.subr.bf16.mxu0 0
        %543 = vmatpush1.bf16.xpose.msra.mxu0 0
        %544 = vmatprep.subr.bf16.mxu0 0
        %545 = vmatpush1.bf16.xpose.msra.mxu0 0
        %546 = vmatprep.subr.bf16.mxu0 0
        %547 = vmatpush1.bf16.xpose.msra.mxu0 0
        %548 = vmatprep.subr.bf16.mxu0 0
        %549 = vmatpush1.bf16.xpose.msra.mxu0 0
        %550 = vmatprep.mubr.bf16.mxu0 0
        %551 = vmatmul.mubr.bf16.gmra.mrb[0].mxu0 %v513
        %v552 = vpop.f32.mrb[0].mxu0
        %v553 = vadd.f32 %v390, %v552
        %v554 = vpop.f32.mrb[0].mxu0
        %v555 = vpop.f32.mrb[0].mxu0
        %v556 = vpop.f32.mrb[0].mxu0
        %557 = vdwg.mxu0
        %v558 = vsel %vm443, %v553, -inf
        %559 = vmax.xlane.f32.xlu0 %v558
        %v560 = vpop.xlane.xlu0 %559
        %v561 = vsub.f32 %v553, %v560
        %v562 = vmul.f32 %v561, 1.442695
        %v563 = vpow.pop %v562
        %v564 = vsel %vm443, %v563, 0.0
        %565 = vadd.xlane.f32.xlu0 %v564
        %v566 = vpop.xlane.xlu0 %565
        %v567 = vpack.c.bf16 %v563, %v563
        %568 = vrot.lane.b32.xlu0 %v458, 64
        %v569 = vpop.permute.xlu0 %568
        %v572 = vsel %vm443, %v567, 0
        %574 = vmatprep.subr.bf16.mxu0 0
        %575 = vmatpush1.bf16.msra.mxu0 %v569
        %576 = vmatprep.subr.bf16.mxu0 0
        %577 = vmatpush1.bf16.msra.mxu0 0
        %578 = vmatprep.subr.bf16.mxu0 0
        %579 = vmatpush1.bf16.msra.mxu0 0
        %580 = vmatprep.subr.bf16.mxu0 0
        %581 = vmatpush1.bf16.msra.mxu0 0
        %582 = vmatprep.subr.bf16.mxu0 0
        %583 = vmatpush1.bf16.msra.mxu0 0
        %584 = vmatprep.subr.bf16.mxu0 0
        %585 = vmatpush1.bf16.msra.mxu0 0
        %586 = vmatprep.subr.bf16.mxu0 0
        %587 = vmatpush1.bf16.msra.mxu0 0
        %588 = vmatprep.subr.bf16.mxu0 0
        %589 = vmatpush1.bf16.msra.mxu0 0
        %590 = vmatprep.subr.bf16.mxu0 0
        %591 = vmatpush1.bf16.msra.mxu0 0
        %592 = vmatprep.subr.bf16.mxu0 0
        %593 = vmatpush1.bf16.msra.mxu0 0
        %594 = vmatprep.subr.bf16.mxu0 0
        %595 = vmatpush1.bf16.msra.mxu0 0
        %596 = vmatprep.subr.bf16.mxu0 0
        %597 = vmatpush1.bf16.msra.mxu0 0
        %598 = vmatprep.subr.bf16.mxu0 0
        %599 = vmatpush1.bf16.msra.mxu0 0
        %600 = vmatprep.subr.bf16.mxu0 0
        %601 = vmatpush1.bf16.msra.mxu0 0
        %602 = vmatprep.subr.bf16.mxu0 0
        %603 = vmatpush1.bf16.msra.mxu0 0
        %604 = vmatprep.subr.bf16.mxu0 0
        %605 = vmatpush1.bf16.msra.mxu0 0
        %606 = vmatprep.mubr.bf16.mxu0 0
        %607 = vmatmul.mubr.bf16.gmra.mrb[0].mxu0 %v572
        %v608 = vpop.f32.mrb[0].mxu0
        %v609 = vadd.f32 0.0, %v608
        %v610 = vpop.f32.mrb[0].mxu0
        %v611 = vpop.f32.mrb[0].mxu0
        %v612 = vpop.f32.mrb[0].mxu0
        %613 = vdwg.mxu0
        %v614 = vrcp.pop %v566
        %v615 = vmul.f32 %v609, %v614
        %v616 = vunpack.c.h.b16 %v382
        %v617 = vpack.c.b16 %v616, %v616
        %v618 = vunpack.c.h.b16 %v383
        %v619 = vunpack.c.h.b16 %v384
        %v620 = vpack.c.b16 %v619, %v618
        %v622 = vsel %vm396, %v617, 0
        %v625 = vsel %vm396, %v620, 0
        %627 = vmatprep.subr.bf16.mxu0 0
        %628 = vmatpush1.bf16.xpose.msra.mxu0 %v625
        %629 = vmatprep.subr.bf16.mxu0 0
        %630 = vmatpush1.bf16.xpose.msra.mxu0 0
        %631 = vmatprep.subr.bf16.mxu0 0
        %632 = vmatpush1.bf16.xpose.msra.mxu0 0
        %633 = vmatprep.subr.bf16.mxu0 0
        %634 = vmatpush1.bf16.xpose.msra.mxu0 0
        %635 = vmatprep.subr.bf16.mxu0 0
        %636 = vmatpush1.bf16.xpose.msra.mxu0 0
        %637 = vmatprep.subr.bf16.mxu0 0
        %638 = vmatpush1.bf16.xpose.msra.mxu0 0
        %639 = vmatprep.subr.bf16.mxu0 0
        %640 = vmatpush1.bf16.xpose.msra.mxu0 0
        %641 = vmatprep.subr.bf16.mxu0 0
        %642 = vmatpush1.bf16.xpose.msra.mxu0 0
        %643 = vmatprep.subr.bf16.mxu0 0
        %644 = vmatpush1.bf16.xpose.msra.mxu0 0
        %645 = vmatprep.subr.bf16.mxu0 0
        %646 = vmatpush1.bf16.xpose.msra.mxu0 0
        %647 = vmatprep.subr.bf16.mxu0 0
        %648 = vmatpush1.bf16.xpose.msra.mxu0 0
        %649 = vmatprep.subr.bf16.mxu0 0
        %650 = vmatpush1.bf16.xpose.msra.mxu0 0
        %651 = vmatprep.subr.bf16.mxu0 0
        %652 = vmatpush1.bf16.xpose.msra.mxu0 0
        %653 = vmatprep.subr.bf16.mxu0 0
        %654 = vmatpush1.bf16.xpose.msra.mxu0 0
        %655 = vmatprep.subr.bf16.mxu0 0
        %656 = vmatpush1.bf16.xpose.msra.mxu0 0
        %657 = vmatprep.subr.bf16.mxu0 0
        %658 = vmatpush1.bf16.xpose.msra.mxu0 0
        %659 = vmatprep.mubr.bf16.mxu0 0
        %660 = vmatmul.mubr.bf16.gmra.mrb[0].mxu0 %v622
        %v661 = vpop.f32.mrb[0].mxu0
        %v662 = vadd.f32 %v390, %v661
        %v663 = vpop.f32.mrb[0].mxu0
        %v664 = vpop.f32.mrb[0].mxu0
        %v665 = vpop.f32.mrb[0].mxu0
        %666 = vdwg.mxu0
        %v667 = vsel %vm443, %v662, -inf
        %668 = vmax.xlane.f32.xlu0 %v667
        %v669 = vpop.xlane.xlu0 %668
        %v670 = vsub.f32 %v662, %v669
        %v671 = vmul.f32 %v670, 1.442695
        %v672 = vpow.pop %v671
        %v673 = vsel %vm443, %v672, 0.0
        %674 = vadd.xlane.f32.xlu0 %v673
        %v675 = vpop.xlane.xlu0 %674
        %v676 = vpack.c.bf16 %v672, %v672
        %v677 = vunpack.c.h.b16 %v385
        %v678 = vunpack.c.h.b16 %v386
        %v679 = vpack.c.b16 %v678, %v677
        %v682 = vsel %vm443, %v676, 0
        %684 = vmatprep.subr.bf16.mxu0 0
        %685 = vmatpush1.bf16.msra.mxu0 %v679
        %686 = vmatprep.subr.bf16.mxu0 0
        %687 = vmatpush1.bf16.msra.mxu0 0
        %688 = vmatprep.subr.bf16.mxu0 0
        %689 = vmatpush1.bf16.msra.mxu0 0
        %690 = vmatprep.subr.bf16.mxu0 0
        %691 = vmatpush1.bf16.msra.mxu0 0
        %692 = vmatprep.subr.bf16.mxu0 0
        %693 = vmatpush1.bf16.msra.mxu0 0
        %694 = vmatprep.subr.bf16.mxu0 0
        %695 = vmatpush1.bf16.msra.mxu0 0
        %696 = vmatprep.subr.bf16.mxu0 0
        %697 = vmatpush1.bf16.msra.mxu0 0
        %698 = vmatprep.subr.bf16.mxu0 0
        %699 = vmatpush1.bf16.msra.mxu0 0
        %700 = vmatprep.subr.bf16.mxu0 0
        %701 = vmatpush1.bf16.msra.mxu0 0
        %702 = vmatprep.subr.bf16.mxu0 0
        %703 = vmatpush1.bf16.msra.mxu0 0
        %704 = vmatprep.subr.bf16.mxu0 0
        %705 = vmatpush1.bf16.msra.mxu0 0
        %706 = vmatprep.subr.bf16.mxu0 0
        %707 = vmatpush1.bf16.msra.mxu0 0
        %708 = vmatprep.subr.bf16.mxu0 0
        %709 = vmatpush1.bf16.msra.mxu0 0
        %710 = vmatprep.subr.bf16.mxu0 0
        %711 = vmatpush1.bf16.msra.mxu0 0
        %712 = vmatprep.subr.bf16.mxu0 0
        %713 = vmatpush1.bf16.msra.mxu0 0
        %714 = vmatprep.subr.bf16.mxu0 0
        %715 = vmatpush1.bf16.msra.mxu0 0
        %716 = vmatprep.mubr.bf16.mxu0 0
        %717 = vmatmul.mubr.bf16.gmra.mrb[0].mxu0 %v682
        %v718 = vpop.f32.mrb[0].mxu0
        %v719 = vadd.f32 0.0, %v718
        %v720 = vpop.f32.mrb[0].mxu0
        %v721 = vpop.f32.mrb[0].mxu0
        %v722 = vpop.f32.mrb[0].mxu0
        %723 = vdwg.mxu0
        %v724 = vrcp.pop %v675
        %v725 = vmul.f32 %v719, %v724
        %726 = vrot.lane.b32.xlu0 %v617, 64
        %v727 = vpop.permute.xlu0 %726
        %728 = vrot.lane.b32.xlu0 %v620, 64
        %v729 = vpop.permute.xlu0 %728
        %v731 = vsel %vm396, %v727, 0
        %v734 = vsel %vm396, %v729, 0
        %736 = vmatprep.subr.bf16.mxu0 0
        %737 = vmatpush1.bf16.xpose.msra.mxu0 %v734
        %738 = vmatprep.subr.bf16.mxu0 0
        %739 = vmatpush1.bf16.xpose.msra.mxu0 0
        %740 = vmatprep.subr.bf16.mxu0 0
        %741 = vmatpush1.bf16.xpose.msra.mxu0 0
        %742 = vmatprep.subr.bf16.mxu0 0
        %743 = vmatpush1.bf16.xpose.msra.mxu0 0
        %744 = vmatprep.subr.bf16.mxu0 0
        %745 = vmatpush1.bf16.xpose.msra.mxu0 0
        %746 = vmatprep.subr.bf16.mxu0 0
        %747 = vmatpush1.bf16.xpose.msra.mxu0 0
        %748 = vmatprep.subr.bf16.mxu0 0
        %749 = vmatpush1.bf16.xpose.msra.mxu0 0
        %750 = vmatprep.subr.bf16.mxu0 0
        %751 = vmatpush1.bf16.xpose.msra.mxu0 0
        %752 = vmatprep.subr.bf16.mxu0 0
        %753 = vmatpush1.bf16.xpose.msra.mxu0 0
        %754 = vmatprep.subr.bf16.mxu0 0
        %755 = vmatpush1.bf16.xpose.msra.mxu0 0
        %756 = vmatprep.subr.bf16.mxu0 0
        %757 = vmatpush1.bf16.xpose.msra.mxu0 0
        %758 = vmatprep.subr.bf16.mxu0 0
        %759 = vmatpush1.bf16.xpose.msra.mxu0 0
        %760 = vmatprep.subr.bf16.mxu0 0
        %761 = vmatpush1.bf16.xpose.msra.mxu0 0
        %762 = vmatprep.subr.bf16.mxu0 0
        %763 = vmatpush1.bf16.xpose.msra.mxu0 0
        %764 = vmatprep.subr.bf16.mxu0 0
        %765 = vmatpush1.bf16.xpose.msra.mxu0 0
        %766 = vmatprep.subr.bf16.mxu0 0
        %767 = vmatpush1.bf16.xpose.msra.mxu0 0
        %768 = vmatprep.mubr.bf16.mxu0 0
        %769 = vmatmul.mubr.bf16.gmra.mrb[0].mxu0 %v731
        %v770 = vpop.f32.mrb[0].mxu0
        %v771 = vadd.f32 %v390, %v770
        %v772 = vpop.f32.mrb[0].mxu0
        %v773 = vpop.f32.mrb[0].mxu0
        %v774 = vpop.f32.mrb[0].mxu0
        %775 = vdwg.mxu0
        %v776 = vsel %vm443, %v771, -inf
        %777 = vmax.xlane.f32.xlu0 %v776
        %v778 = vpop.xlane.xlu0 %777
        %v779 = vsub.f32 %v771, %v778
        %v780 = vmul.f32 %v779, 1.442695
        %v781 = vpow.pop %v780
        %v782 = vsel %vm443, %v781, 0.0
        %783 = vadd.xlane.f32.xlu0 %v782
        %v784 = vpop.xlane.xlu0 %783
        %v785 = vpack.c.bf16 %v781, %v781
        %786 = vrot.lane.b32.xlu0 %v679, 64
        %v787 = vpop.permute.xlu0 %786
        %v790 = vsel %vm443, %v785, 0
        %792 = vmatprep.subr.bf16.mxu0 0
        %793 = vmatpush1.bf16.msra.mxu0 %v787
        %794 = vmatprep.subr.bf16.mxu0 0
        %795 = vmatpush1.bf16.msra.mxu0 0
        %796 = vmatprep.subr.bf16.mxu0 0
        %797 = vmatpush1.bf16.msra.mxu0 0
        %798 = vmatprep.subr.bf16.mxu0 0
        %799 = vmatpush1.bf16.msra.mxu0 0
        %800 = vmatprep.subr.bf16.mxu0 0
        %801 = vmatpush1.bf16.msra.mxu0 0
        %802 = vmatprep.subr.bf16.mxu0 0
        %803 = vmatpush1.bf16.msra.mxu0 0
        %804 = vmatprep.subr.bf16.mxu0 0
        %805 = vmatpush1.bf16.msra.mxu0 0
        %806 = vmatprep.subr.bf16.mxu0 0
        %807 = vmatpush1.bf16.msra.mxu0 0
        %808 = vmatprep.subr.bf16.mxu0 0
        %809 = vmatpush1.bf16.msra.mxu0 0
        %810 = vmatprep.subr.bf16.mxu0 0
        %811 = vmatpush1.bf16.msra.mxu0 0
        %812 = vmatprep.subr.bf16.mxu0 0
        %813 = vmatpush1.bf16.msra.mxu0 0
        %814 = vmatprep.subr.bf16.mxu0 0
        %815 = vmatpush1.bf16.msra.mxu0 0
        %816 = vmatprep.subr.bf16.mxu0 0
        %817 = vmatpush1.bf16.msra.mxu0 0
        %818 = vmatprep.subr.bf16.mxu0 0
        %819 = vmatpush1.bf16.msra.mxu0 0
        %820 = vmatprep.subr.bf16.mxu0 0
        %821 = vmatpush1.bf16.msra.mxu0 0
        %822 = vmatprep.subr.bf16.mxu0 0
        %823 = vmatpush1.bf16.msra.mxu0 0
        %824 = vmatprep.mubr.bf16.mxu0 0
        %825 = vmatmul.mubr.bf16.gmra.mrb[0].mxu0 %v790
        %v826 = vpop.f32.mrb[0].mxu0
        %v827 = vadd.f32 0.0, %v826
        %v828 = vpop.f32.mrb[0].mxu0
        %v829 = vpop.f32.mrb[0].mxu0
        %v830 = vpop.f32.mrb[0].mxu0
        %831 = vdwg.mxu0
        %v832 = vrcp.pop %v784
        %v833 = vmul.f32 %v827, %v832
        %835 = vrot.lane.b32.xlu0 %v615, 64
        %v836 = vpop.permute.xlu0 %835
        %839 = vrot.lane.b32.xlu0 %v833, 64
        %v840 = vpop.permute.xlu0 %839
        %v842 = vsel %vm396, %v504, %v836
        %v843 = vsel %vm396, %v725, %v840
        %v844 = vpack.c.bf16 %v842, %v842
        %v845 = vpack.c.bf16 %v843, %v843
        %v848 = vunpack.c.l.b16 %v844
        %v849 = vunpack.c.l.b16 %v845
        %v850 = vpack.c.b16 %v849, %v848
        %852 = vst [vmem:[%s377] sm:$0xff] %v850
        %s853 = smul.u32 %s19, 2
        %s854 = sadd.s32 %s853, %s21
        %s855 = smul.u32 2, %s20
        %p856 = scmp.lt.s32.totalorder %s854, 3
        %s857 = scalar_select %p856, %s854, 3
        %p858 = scmp.lt.s32.totalorder %s855, 1
        %s859 = scalar_select %p858, %s855, 1
        %s860 = smul.addr %s857, 2
        %s861 = sadd.s32 %s859, %s860
        %s862 = smul.addr %s861, 4
        %s863 = scalar_lea.vmem %s3, %s862
        // Predicated region
        $region109: #{whisper_encoder_forward.16} parent=99 // pred_check
          %p864 = pneg %p149
        $region110: #{whisper_encoder_forward.16} parent=99 // pred_check_branch
          %866 = sbr.rel (%p864) target = $region112
        $region111: #{whisper_encoder_forward.16} parent=99 // pred_region
          %s867 = smul.u32 %s19, 2
          %s868 = sadd.s32 %s867, %s21
          %s869 = smul.u32 2, %s20
        $region112: #{whisper_encoder_forward.16} parent=99 // pred_fallthru
          _
      $region100: #{whisper_encoder_forward.16} parent=5 // pred_fallthru
        _
      %p870 = scmp.le.s32.totalorder 2, %s9
      // Predicated region
      $region113: #{whisper_encoder_forward.16} parent=5 // pred_check
        %p871 = pneg %p870
      $region114: #{whisper_encoder_forward.16} parent=5 // pred_check_branch
        %873 = sbr.rel (%p871) target = $region116
      $region115: #{whisper_encoder_forward.16} parent=5 // pred_region
        %s874 = ssub.s32 %s9, 2
        // Predicated region
        $region117: #{whisper_encoder_forward.16} parent=115 // pred_check
          %p875 = pneg %p155
        $region118: #{whisper_encoder_forward.16} parent=115 // pred_check_branch
          %877 = sbr.rel (%p875) target = $region120
        $region119: #{whisper_encoder_forward.16} parent=115 // pred_region
          %s878 = smul.u32 %s22, 2
          %s879 = sadd.s32 %s878, %s24
          %s880 = smul.u32 2, %s23
          %p881 = scmp.lt.s32.totalorder %s879, 3
          %s882 = scalar_select %p881, %s879, 3
          %p883 = scmp.lt.s32.totalorder %s880, 1
          %s884 = scalar_select %p883, %s880, 1
          %s885 = smul.addr %s882, 2
          %s886 = sadd.s32 %s884, %s885
          %s887 = smul.addr %s886, 4
          %s888 = scalar_lea.vmem %s3, %s887
        $region120: #{whisper_encoder_forward.16} parent=115 // pred_fallthru
          _
      $region116: #{whisper_encoder_forward.16} parent=5 // pred_fallthru
        _
    $region6: #{whisper_encoder_forward.16} parent=1 // loop_footer
      %s13 = sadd.s32 1, %s9
    $region7: #{whisper_encoder_forward.16} parent=1 // loop_footer_branch
      %8 = sbr.rel target = $region3
    $region8: #{whisper_encoder_forward.16} parent=1 // loop_exit
      _

// kernel: whisper_encoder_forward.17
$region0: #{whisper_encoder_forward.17}
  #allocation0 [shape = 'u32[]', space=smem, size = 0x4, offset = 0x4, fixed_abs, tag = 'smem constant byte address 0x4 - core index']
  #allocation1 [shape = 'u32[144,128]{1,0:T(1,128)}', space=vmem, size = 0x12000, scoped, tag = 'internal scratch']
  #allocation2 [shape = 'f32[16,128]{1,0:T(8,128)}', space=vmem, size = 0x2000, scoped, tag = 'scratch operand']
  %s0 = inlined_call_operand.vmem [shape: bf16[32,256], index: 0, kind: input, shape index: {}]
  %s1 = inlined_call_operand.vmem [shape: bf16[256,256], index: 1, kind: input, shape index: {}]
  %s2 = inlined_call_operand.vmem [shape: f32[1,256], index: 2, kind: input, shape index: {}]
  %s3 = inlined_call_operand.vmem [shape: bf16[32,256], index: 3, kind: input, shape index: {}]
  %s4 = inlined_call_operand.vmem [shape: bf16[32,256], index: 4, kind: output, shape index: {}]
  %s5 = sld [smem:[#allocation0]]
  $region217: #{whisper_encoder_forward.17} parent=0
    _
  %s7 = ssub.s32 1, %s5
  %s8 = scalar_select 0, %s7, %s5
  $region1: #{whisper_encoder_forward.17} parent=0
    #allocation3 [shape = 'u8[8192]{0}', space=vmem, size = 0x2000, scoped, tag = 'input window, operand 0']
    #allocation4 [shape = 'u8[65536]{0}', space=vmem, size = 0x10000, scoped, tag = 'input window, operand 1']
    #allocation5 [shape = 'u8[8192]{0}', space=vmem, size = 0x2000, scoped, tag = 'input window, operand 3']
    #allocation6 [shape = 'u8[8192]{0}', space=vmem, size = 0x2000, scoped, tag = 'output window, operand 0']
    loop: start=0, step=1, limit=10
    $region2: #{whisper_encoder_forward.17} parent=1 // loop_pre_header
      _
    $region3: #{whisper_encoder_forward.17} parent=1 // loop_header
      %s10 = sphi 0, %s14
      %p11 = scmp.ge.s32.totalorder %s10, 10
      %s17 = sphi 0, %s36
      %s18 = sphi 0, %s32
      %s19 = sphi 0, %s28
      %s20 = sphi 0, %s17
      %s21 = sphi 0, %s18
      %s22 = sphi 0, %s19
      %s23 = sphi 0, %s20
      %s24 = sphi 0, %s21
      %s25 = sphi 0, %s22
      %s41 = sphi 0, %s43
      %s44 = sphi 0, %s41
      %s45 = sphi 0, %s44
      %s61 = sphi 0, %s45
      %s69 = sphi 0, %s71
      %s72 = sphi 0, %s69
      %s73 = sphi 0, %s72
      %s89 = sphi 0, %s73
      %s95 = sphi 0, %s97
      %s98 = sphi 0, %s95
      %s99 = sphi 0, %s98
      %s115 = sphi 0, %s99
      %s123 = sphi 0, %s125
      %s126 = sphi 0, %s123
      %s127 = sphi 0, %s126
      %s143 = sphi 0, %s127
      %s151 = sphi 0, %s153
      %s154 = sphi 0, %s151
      %s155 = sphi 0, %s154
      %s171 = sphi 0, %s155
    $region4: #{whisper_encoder_forward.17} parent=1 // loop_header_branch
      %13 = sbr.rel (%p11) target = $region8
    $region5: #{whisper_encoder_forward.17} parent=1 // loop_body
      %s15 = ssub.s32 %s10, 1
      %s16 = ssub.s32 %s10, 2
      %s26 = sadd.s32 1, %s19
      %p27 = scmp.ge.s32.totalorder %s26, 2
      %s28 = scalar_select %p27, 0, %s26
      %s29 = sadd.s32 1, %s18
      %s30 = scalar_select %p27, %s29, %s18
      %p31 = scmp.ge.s32.totalorder %s30, 2
      %s32 = scalar_select %p31, 0, %s30
      %s33 = sadd.s32 1, %s17
      %s34 = scalar_select %p31, %s33, %s17
      %p35 = scmp.ge.s32.totalorder %s34, 2
      %s36 = scalar_select %p35, 0, %s34
      %s37 = ssub.s32 %s17, %s36
      %s38 = ssub.s32 %s19, %s28
      %s39 = sor.u32 %s37, %s38
      %p40 = scmp.eq.s32.totalorder %s39, 0
      %s42 = sadd.s32 %s41, 1
      %s43 = scalar_select %p40, %s41, %s42
      %p46 = pneg %p40
      %p47 = scmp.eq.s32.totalorder %s10, 7
      %p48 = por %p46, %p47
      %p49 = scmp.ne.s32.totalorder %s41, %s44
      %p50 = scmp.eq.s32.totalorder %s10, 0
      %p51 = por %p49, %p50
      %p52 = scmp.ne.s32.totalorder %s41, %s44
      %p53 = scmp.eq.s32.totalorder %s15, 7
      %p54 = por %p52, %p53
      %p55 = scmp.ne.s32.totalorder %s44, %s45
      %p56 = scmp.eq.s32.totalorder %s15, 0
      %p57 = por %p55, %p56
      %p58 = scmp.ne.s32.totalorder %s44, %s45
      %p59 = scmp.eq.s32.totalorder %s16, 7
      %p60 = por %p58, %p59
      %p62 = scmp.ne.s32.totalorder %s45, %s61
      %p63 = scmp.eq.s32.totalorder %s16, 0
      %p64 = por %p62, %p63
      %s65 = ssub.s32 %s19, %s28
      %s66 = ssub.s32 %s18, %s32
      %s67 = sor.u32 %s65, %s66
      %p68 = scmp.eq.s32.totalorder %s67, 0
      %s70 = sadd.s32 %s69, 1
      %s71 = scalar_select %p68, %s69, %s70
      %p74 = pneg %p68
      %p75 = scmp.eq.s32.totalorder %s10, 7
      %p76 = por %p74, %p75
      %p77 = scmp.ne.s32.totalorder %s69, %s72
      %p78 = scmp.eq.s32.totalorder %s10, 0
      %p79 = por %p77, %p78
      %p80 = scmp.ne.s32.totalorder %s69, %s72
      %p81 = scmp.eq.s32.totalorder %s15, 7
      %p82 = por %p80, %p81
      %p83 = scmp.ne.s32.totalorder %s72, %s73
      %p84 = scmp.eq.s32.totalorder %s15, 0
      %p85 = por %p83, %p84
      %p86 = scmp.ne.s32.totalorder %s72, %s73
      %p87 = scmp.eq.s32.totalorder %s16, 7
      %p88 = por %p86, %p87
      %p90 = scmp.ne.s32.totalorder %s73, %s89
      %p91 = scmp.eq.s32.totalorder %s16, 0
      %p92 = por %p90, %p91
      %s93 = ssub.s32 %s18, %s32
      %p94 = scmp.eq.s32.totalorder %s93, 0
      %s96 = sadd.s32 %s95, 1
      %s97 = scalar_select %p94, %s95, %s96
      %p100 = pneg %p94
      %p101 = scmp.eq.s32.totalorder %s10, 7
      %p102 = por %p100, %p101
      %p103 = scmp.ne.s32.totalorder %s95, %s98
      %p104 = scmp.eq.s32.totalorder %s10, 0
      %p105 = por %p103, %p104
      %p106 = scmp.ne.s32.totalorder %s95, %s98
      %p107 = scmp.eq.s32.totalorder %s15, 7
      %p108 = por %p106, %p107
      %p109 = scmp.ne.s32.totalorder %s98, %s99
      %p110 = scmp.eq.s32.totalorder %s15, 0
      %p111 = por %p109, %p110
      %p112 = scmp.ne.s32.totalorder %s98, %s99
      %p113 = scmp.eq.s32.totalorder %s16, 7
      %p114 = por %p112, %p113
      %p116 = scmp.ne.s32.totalorder %s99, %s115
      %p117 = scmp.eq.s32.totalorder %s16, 0
      %p118 = por %p116, %p117
      %s119 = ssub.s32 %s17, %s36
      %s120 = ssub.s32 %s18, %s32
      %s121 = sor.u32 %s119, %s120
      %p122 = scmp.eq.s32.totalorder %s121, 0
      %s124 = sadd.s32 %s123, 1
      %s125 = scalar_select %p122, %s123, %s124
      %p128 = pneg %p122
      %p129 = scmp.eq.s32.totalorder %s10, 7
      %p130 = por %p128, %p129
      %p131 = scmp.ne.s32.totalorder %s123, %s126
      %p132 = scmp.eq.s32.totalorder %s10, 0
      %p133 = por %p131, %p132
      %p134 = scmp.ne.s32.totalorder %s123, %s126
      %p135 = scmp.eq.s32.totalorder %s15, 7
      %p136 = por %p134, %p135
      %p137 = scmp.ne.s32.totalorder %s126, %s127
      %p138 = scmp.eq.s32.totalorder %s15, 0
      %p139 = por %p137, %p138
      %p140 = scmp.ne.s32.totalorder %s126, %s127
      %p141 = scmp.eq.s32.totalorder %s16, 7
      %p142 = por %p140, %p141
      %p144 = scmp.ne.s32.totalorder %s127, %s143
      %p145 = scmp.eq.s32.totalorder %s16, 0
      %p146 = por %p144, %p145
      %s147 = ssub.s32 %s17, %s36
      %s148 = ssub.s32 %s18, %s32
      %s149 = sor.u32 %s147, %s148
      %p150 = scmp.eq.s32.totalorder %s149, 0
      %s152 = sadd.s32 %s151, 1
      %s153 = scalar_select %p150, %s151, %s152
      %p156 = pneg %p150
      %p157 = scmp.eq.s32.totalorder %s10, 7
      %p158 = por %p156, %p157
      %p159 = scmp.ne.s32.totalorder %s151, %s154
      %p160 = scmp.eq.s32.totalorder %s10, 0
      %p161 = por %p159, %p160
      %p162 = scmp.ne.s32.totalorder %s151, %s154
      %p163 = scmp.eq.s32.totalorder %s15, 7
      %p164 = por %p162, %p163
      %p165 = scmp.ne.s32.totalorder %s154, %s155
      %p166 = scmp.eq.s32.totalorder %s15, 0
      %p167 = por %p165, %p166
      %p168 = scmp.ne.s32.totalorder %s154, %s155
      %p169 = scmp.eq.s32.totalorder %s16, 7
      %p170 = por %p168, %p169
      %p172 = scmp.ne.s32.totalorder %s155, %s171
      %p173 = scmp.eq.s32.totalorder %s16, 0
      %p174 = por %p172, %p173
      %p175 = scmp.le.s32.totalorder 1, %s10
      %p176 = scmp.lt.s32.totalorder %s10, 9
      %p177 = pnand %p175, %p176
      %p178 = pneg %p177
      // Predicated region
      $region9: #{whisper_encoder_forward.17} parent=5 // pred_check
        _
      $region10: #{whisper_encoder_forward.17} parent=5 // pred_check_branch
        %180 = sbr.rel (%p177) target = $region12
      $region11: #{whisper_encoder_forward.17} parent=5 // pred_region
        %s181 = ssub.s32 %s10, 1
      $region12: #{whisper_encoder_forward.17} parent=5 // pred_fallthru
        _
      %p182 = scmp.lt.s32.totalorder %s10, 8
      // Predicated region
      $region13: #{whisper_encoder_forward.17} parent=5 // pred_check
        %p183 = pneg %p182
      $region14: #{whisper_encoder_forward.17} parent=5 // pred_check_branch
        %185 = sbr.rel (%p183) target = $region16
      $region15: #{whisper_encoder_forward.17} parent=5 // pred_region
        // Predicated region
        $region17: #{whisper_encoder_forward.17} parent=15 // pred_check
          %p186 = pneg %p51
        $region18: #{whisper_encoder_forward.17} parent=15 // pred_check_branch
          %188 = sbr.rel (%p186) target = $region20
        $region19: #{whisper_encoder_forward.17} parent=15 // pred_region
          %s189 = sand.u32 %s41, 1
          %s190 = sand.u32 %s41, 1
          %s191 = smul.addr %s190, 8
          %s192 = scalar_lea.vmem [#allocation3], %s191
          %s193 = smul.u32 2, %s17
          %s194 = smul.addr %s193, 2
          %s195 = sadd.s32 %s19, %s194
          %s196 = smul.addr %s195, 4
          %s197 = scalar_lea.vmem %s0, %s196
          // Predicated region
          $region21: #{whisper_encoder_forward.17} parent=19 // pred_check
            _
          $region22: #{whisper_encoder_forward.17} parent=19 // pred_check_branch
            %199 = sbr.rel (0) target = $region24
          $region23: #{whisper_encoder_forward.17} parent=19 // pred_region
            // Predicated region
            $region25: #{whisper_encoder_forward.17} parent=23 // pred_check
              _
            $region26: #{whisper_encoder_forward.17} parent=23 // pred_check_branch
              %201 = sbr.rel target = $region28
            $region27: #{whisper_encoder_forward.17} parent=23 // pred_region
              // Predicated region
              $region40: #{whisper_encoder_forward.17} parent=27 // pred_check
                _
              $region41: #{whisper_encoder_forward.17} parent=27 // pred_check_branch
                %218 = sbr.rel (0) target = $region43
              $region42: #{whisper_encoder_forward.17} parent=27 // pred_region
                loop: start=0, step=1, limit=1
                $region44: #{whisper_encoder_forward.17} parent=42 // loop_pre_header
                  _
                $region45: #{whisper_encoder_forward.17} parent=42 // loop_header
                  %s220 = sphi 0, %s224
                  %p221 = scmp.ge.s32.totalorder %s220, 1
                  %s225 = sphi %s197, %s197
                  %s226 = sphi %s192, %s192
                $region46: #{whisper_encoder_forward.17} parent=42 // loop_header_branch
                  %223 = sbr.rel (%p221) target = $region50
                $region47: #{whisper_encoder_forward.17} parent=42 // loop_body
                  _
                $region48: #{whisper_encoder_forward.17} parent=42 // loop_footer
                  %s224 = sadd.s32 1, %s220
                $region49: #{whisper_encoder_forward.17} parent=42 // loop_footer_branch
                  %219 = sbr.rel target = $region45
                $region50: #{whisper_encoder_forward.17} parent=42 // loop_exit
                  _
                loop: start=0, step=1, limit=1
                $region51: #{whisper_encoder_forward.17} parent=42 // loop_pre_header
                  _
                $region52: #{whisper_encoder_forward.17} parent=42 // loop_header
                  %s229 = sphi 0, %s233
                  %p230 = scmp.ge.s32.totalorder %s229, 1
                  %s234 = sphi %s197, %s197
                  %s235 = sphi %s192, %s192
                $region53: #{whisper_encoder_forward.17} parent=42 // loop_header_branch
                  %232 = sbr.rel (%p230) target = $region57
                $region54: #{whisper_encoder_forward.17} parent=42 // loop_body
                  %v236 = vld [vmem:[%s234] sm:$0xf]
                  %237 = vst [vmem:[%s235] sm:$0xf] %v236
                  %v238 = vld [vmem:[%s234 + $0x8] sm:$0xf]
                  %239 = vst [vmem:[%s235 + $0x4] sm:$0xf] %v238
                $region55: #{whisper_encoder_forward.17} parent=42 // loop_footer
                  %s233 = sadd.s32 1, %s229
                $region56: #{whisper_encoder_forward.17} parent=42 // loop_footer_branch
                  %228 = sbr.rel target = $region52
                $region57: #{whisper_encoder_forward.17} parent=42 // loop_exit
                  _
              $region43: #{whisper_encoder_forward.17} parent=27 // pred_fallthru
                _
            $region28: #{whisper_encoder_forward.17} parent=23 // pred_fallthru
              _
            // Predicated region
            $region29: #{whisper_encoder_forward.17} parent=23 // pred_check
              _
            $region30: #{whisper_encoder_forward.17} parent=23 // pred_check_branch
              %203 = sbr.rel (0) target = $region32
            $region31: #{whisper_encoder_forward.17} parent=23 // pred_region
              loop: start=0, step=1, limit=1
              $region33: #{whisper_encoder_forward.17} parent=31 // loop_pre_header
                _
              $region34: #{whisper_encoder_forward.17} parent=31 // loop_header
                %s206 = sphi 0, %s210
                %p207 = scmp.ge.s32.totalorder %s206, 1
                %s211 = sphi %s197, %s197
                %s212 = sphi %s192, %s192
              $region35: #{whisper_encoder_forward.17} parent=31 // loop_header_branch
                %209 = sbr.rel (%p207) target = $region39
              $region36: #{whisper_encoder_forward.17} parent=31 // loop_body
                %v213 = vld [vmem:[%s211] sm:$0xf]
                %214 = vst [vmem:[%s212] sm:$0xf] %v213
                %v215 = vld [vmem:[%s211 + $0x8] sm:$0xf]
                %216 = vst [vmem:[%s212 + $0x4] sm:$0xf] %v215
              $region37: #{whisper_encoder_forward.17} parent=31 // loop_footer
                %s210 = sadd.s32 1, %s206
              $region38: #{whisper_encoder_forward.17} parent=31 // loop_footer_branch
                %205 = sbr.rel target = $region34
              $region39: #{whisper_encoder_forward.17} parent=31 // loop_exit
                _
            $region32: #{whisper_encoder_forward.17} parent=23 // pred_fallthru
              _
          $region24: #{whisper_encoder_forward.17} parent=19 // pred_fallthru
            _
          %240 = vnop
        $region20: #{whisper_encoder_forward.17} parent=15 // pred_fallthru
          _
        // Predicated region
        $region58: #{whisper_encoder_forward.17} parent=15 // pred_check
          %p241 = pneg %p79
        $region59: #{whisper_encoder_forward.17} parent=15 // pred_check_branch
          %243 = sbr.rel (%p241) target = $region61
        $region60: #{whisper_encoder_forward.17} parent=15 // pred_region
          %s244 = sand.u32 %s69, 1
          %s245 = sand.u32 %s69, 1
          %s246 = smul.addr %s245, 64
          %s247 = scalar_lea.vmem [#allocation4], %s246
          %s248 = smul.u32 16, %s19
          %s249 = smul.addr %s248, 2
          %s250 = sadd.s32 %s18, %s249
          %s251 = smul.addr %s250, 4
          %s252 = scalar_lea.vmem %s1, %s251
          // Predicated region
          $region62: #{whisper_encoder_forward.17} parent=60 // pred_check
            _
          $region63: #{whisper_encoder_forward.17} parent=60 // pred_check_branch
            %254 = sbr.rel (0) target = $region65
          $region64: #{whisper_encoder_forward.17} parent=60 // pred_region
            // Predicated region
            $region66: #{whisper_encoder_forward.17} parent=64 // pred_check
              _
            $region67: #{whisper_encoder_forward.17} parent=64 // pred_check_branch
              %256 = sbr.rel target = $region69
            $region68: #{whisper_encoder_forward.17} parent=64 // pred_region
              // Predicated region
              $region81: #{whisper_encoder_forward.17} parent=68 // pred_check
                _
              $region82: #{whisper_encoder_forward.17} parent=68 // pred_check_branch
                %301 = sbr.rel (0) target = $region84
              $region83: #{whisper_encoder_forward.17} parent=68 // pred_region
                loop: start=0, step=1, limit=1
                $region85: #{whisper_encoder_forward.17} parent=83 // loop_pre_header
                  _
                $region86: #{whisper_encoder_forward.17} parent=83 // loop_header
                  %s303 = sphi 0, %s307
                  %p304 = scmp.ge.s32.totalorder %s303, 1
                  %s308 = sphi %s252, %s252
                  %s309 = sphi %s247, %s247
                $region87: #{whisper_encoder_forward.17} parent=83 // loop_header_branch
                  %306 = sbr.rel (%p304) target = $region91
                $region88: #{whisper_encoder_forward.17} parent=83 // loop_body
                  _
                $region89: #{whisper_encoder_forward.17} parent=83 // loop_footer
                  %s307 = sadd.s32 1, %s303
                $region90: #{whisper_encoder_forward.17} parent=83 // loop_footer_branch
                  %302 = sbr.rel target = $region86
                $region91: #{whisper_encoder_forward.17} parent=83 // loop_exit
                  _
                loop: start=0, step=1, limit=1
                $region92: #{whisper_encoder_forward.17} parent=83 // loop_pre_header
                  _
                $region93: #{whisper_encoder_forward.17} parent=83 // loop_header
                  %s312 = sphi 0, %s316
                  %p313 = scmp.ge.s32.totalorder %s312, 1
                  %s317 = sphi %s252, %s252
                  %s318 = sphi %s247, %s247
                $region94: #{whisper_encoder_forward.17} parent=83 // loop_header_branch
                  %315 = sbr.rel (%p313) target = $region98
                $region95: #{whisper_encoder_forward.17} parent=83 // loop_body
                  %v319 = vld [vmem:[%s317] sm:$0xf]
                  %320 = vst [vmem:[%s318] sm:$0xf] %v319
                  %v321 = vld [vmem:[%s317 + $0x8] sm:$0xf]
                  %322 = vst [vmem:[%s318 + $0x4] sm:$0xf] %v321
                  %v323 = vld [vmem:[%s317 + $0x10] sm:$0xf]
                  %324 = vst [vmem:[%s318 + $0x8] sm:$0xf] %v323
                  %v325 = vld [vmem:[%s317 + $0x18] sm:$0xf]
                  %326 = vst [vmem:[%s318 + $0xc] sm:$0xf] %v325
                  %v327 = vld [vmem:[%s317 + $0x20] sm:$0xf]
                  %328 = vst [vmem:[%s318 + $0x10] sm:$0xf] %v327
                  %v329 = vld [vmem:[%s317 + $0x28] sm:$0xf]
                  %330 = vst [vmem:[%s318 + $0x14] sm:$0xf] %v329
                  %v331 = vld [vmem:[%s317 + $0x30] sm:$0xf]
                  %332 = vst [vmem:[%s318 + $0x18] sm:$0xf] %v331
                  %v333 = vld [vmem:[%s317 + $0x38] sm:$0xf]
                  %334 = vst [vmem:[%s318 + $0x1c] sm:$0xf] %v333
                  %v335 = vld [vmem:[%s317 + $0x40] sm:$0xf]
                  %336 = vst [vmem:[%s318 + $0x20] sm:$0xf] %v335
                  %v337 = vld [vmem:[%s317 + $0x48] sm:$0xf]
                  %338 = vst [vmem:[%s318 + $0x24] sm:$0xf] %v337
                  %v339 = vld [vmem:[%s317 + $0x50] sm:$0xf]
                  %340 = vst [vmem:[%s318 + $0x28] sm:$0xf] %v339
                  %v341 = vld [vmem:[%s317 + $0x58] sm:$0xf]
                  %342 = vst [vmem:[%s318 + $0x2c] sm:$0xf] %v341
                  %v343 = vld [vmem:[%s317 + $0x60] sm:$0xf]
                  %344 = vst [vmem:[%s318 + $0x30] sm:$0xf] %v343
                  %v345 = vld [vmem:[%s317 + $0x68] sm:$0xf]
                  %346 = vst [vmem:[%s318 + $0x34] sm:$0xf] %v345
                  %v347 = vld [vmem:[%s317 + $0x70] sm:$0xf]
                  %348 = vst [vmem:[%s318 + $0x38] sm:$0xf] %v347
                  %v349 = vld [vmem:[%s317 + $0x78] sm:$0xf]
                  %350 = vst [vmem:[%s318 + $0x3c] sm:$0xf] %v349
                $region96: #{whisper_encoder_forward.17} parent=83 // loop_footer
                  %s316 = sadd.s32 1, %s312
                $region97: #{whisper_encoder_forward.17} parent=83 // loop_footer_branch
                  %311 = sbr.rel target = $region93
                $region98: #{whisper_encoder_forward.17} parent=83 // loop_exit
                  _
              $region84: #{whisper_encoder_forward.17} parent=68 // pred_fallthru
                _
            $region69: #{whisper_encoder_forward.17} parent=64 // pred_fallthru
              _
            // Predicated region
            $region70: #{whisper_encoder_forward.17} parent=64 // pred_check
              _
            $region71: #{whisper_encoder_forward.17} parent=64 // pred_check_branch
              %258 = sbr.rel (0) target = $region73
            $region72: #{whisper_encoder_forward.17} parent=64 // pred_region
              loop: start=0, step=1, limit=1
              $region74: #{whisper_encoder_forward.17} parent=72 // loop_pre_header
                _
              $region75: #{whisper_encoder_forward.17} parent=72 // loop_header
                %s261 = sphi 0, %s265
                %p262 = scmp.ge.s32.totalorder %s261, 1
                %s266 = sphi %s252, %s252
                %s267 = sphi %s247, %s247
              $region76: #{whisper_encoder_forward.17} parent=72 // loop_header_branch
                %264 = sbr.rel (%p262) target = $region80
              $region77: #{whisper_encoder_forward.17} parent=72 // loop_body
                %v268 = vld [vmem:[%s266] sm:$0xf]
                %269 = vst [vmem:[%s267] sm:$0xf] %v268
                %v270 = vld [vmem:[%s266 + $0x8] sm:$0xf]
                %271 = vst [vmem:[%s267 + $0x4] sm:$0xf] %v270
                %v272 = vld [vmem:[%s266 + $0x10] sm:$0xf]
                %273 = vst [vmem:[%s267 + $0x8] sm:$0xf] %v272
                %v274 = vld [vmem:[%s266 + $0x18] sm:$0xf]
                %275 = vst [vmem:[%s267 + $0xc] sm:$0xf] %v274
                %v276 = vld [vmem:[%s266 + $0x20] sm:$0xf]
                %277 = vst [vmem:[%s267 + $0x10] sm:$0xf] %v276
                %v278 = vld [vmem:[%s266 + $0x28] sm:$0xf]
                %279 = vst [vmem:[%s267 + $0x14] sm:$0xf] %v278
                %v280 = vld [vmem:[%s266 + $0x30] sm:$0xf]
                %281 = vst [vmem:[%s267 + $0x18] sm:$0xf] %v280
                %v282 = vld [vmem:[%s266 + $0x38] sm:$0xf]
                %283 = vst [vmem:[%s267 + $0x1c] sm:$0xf] %v282
                %v284 = vld [vmem:[%s266 + $0x40] sm:$0xf]
                %285 = vst [vmem:[%s267 + $0x20] sm:$0xf] %v284
                %v286 = vld [vmem:[%s266 + $0x48] sm:$0xf]
                %287 = vst [vmem:[%s267 + $0x24] sm:$0xf] %v286
                %v288 = vld [vmem:[%s266 + $0x50] sm:$0xf]
                %289 = vst [vmem:[%s267 + $0x28] sm:$0xf] %v288
                %v290 = vld [vmem:[%s266 + $0x58] sm:$0xf]
                %291 = vst [vmem:[%s267 + $0x2c] sm:$0xf] %v290
                %v292 = vld [vmem:[%s266 + $0x60] sm:$0xf]
                %293 = vst [vmem:[%s267 + $0x30] sm:$0xf] %v292
                %v294 = vld [vmem:[%s266 + $0x68] sm:$0xf]
                %295 = vst [vmem:[%s267 + $0x34] sm:$0xf] %v294
                %v296 = vld [vmem:[%s266 + $0x70] sm:$0xf]
                %297 = vst [vmem:[%s267 + $0x38] sm:$0xf] %v296
                %v298 = vld [vmem:[%s266 + $0x78] sm:$0xf]
                %299 = vst [vmem:[%s267 + $0x3c] sm:$0xf] %v298
              $region78: #{whisper_encoder_forward.17} parent=72 // loop_footer
                %s265 = sadd.s32 1, %s261
              $region79: #{whisper_encoder_forward.17} parent=72 // loop_footer_branch
                %260 = sbr.rel target = $region75
              $region80: #{whisper_encoder_forward.17} parent=72 // loop_exit
                _
            $region73: #{whisper_encoder_forward.17} parent=64 // pred_fallthru
              _
          $region65: #{whisper_encoder_forward.17} parent=60 // pred_fallthru
            _
          %351 = vnop
        $region61: #{whisper_encoder_forward.17} parent=15 // pred_fallthru
          _
        // Predicated region
        $region99: #{whisper_encoder_forward.17} parent=15 // pred_check
          %p352 = pneg %p105
        $region100: #{whisper_encoder_forward.17} parent=15 // pred_check_branch
          %354 = sbr.rel (%p352) target = $region102
        $region101: #{whisper_encoder_forward.17} parent=15 // pred_region
          %p355 = scmp.lt.s32.totalorder %s18, 1
          %s356 = scalar_select %p355, %s18, 1
          %s357 = scalar_lea.vmem %s2, %s356
        $region102: #{whisper_encoder_forward.17} parent=15 // pred_fallthru
          _
        // Predicated region
        $region103: #{whisper_encoder_forward.17} parent=15 // pred_check
          %p358 = pneg %p133
        $region104: #{whisper_encoder_forward.17} parent=15 // pred_check_branch
          %360 = sbr.rel (%p358) target = $region106
        $region105: #{whisper_encoder_forward.17} parent=15 // pred_region
          %s361 = sand.u32 %s123, 1
          %s362 = sand.u32 %s123, 1
          %s363 = smul.addr %s362, 8
          %s364 = scalar_lea.vmem [#allocation5], %s363
          %s365 = smul.u32 2, %s17
          %s366 = smul.addr %s365, 2
          %s367 = sadd.s32 %s18, %s366
          %s368 = smul.addr %s367, 4
          %s369 = scalar_lea.vmem %s3, %s368
          // Predicated region
          $region107: #{whisper_encoder_forward.17} parent=105 // pred_check
            _
          $region108: #{whisper_encoder_forward.17} parent=105 // pred_check_branch
            %371 = sbr.rel (0) target = $region110
          $region109: #{whisper_encoder_forward.17} parent=105 // pred_region
            // Predicated region
            $region111: #{whisper_encoder_forward.17} parent=109 // pred_check
              _
            $region112: #{whisper_encoder_forward.17} parent=109 // pred_check_branch
              %373 = sbr.rel target = $region114
            $region113: #{whisper_encoder_forward.17} parent=109 // pred_region
              // Predicated region
              $region126: #{whisper_encoder_forward.17} parent=113 // pred_check
                _
              $region127: #{whisper_encoder_forward.17} parent=113 // pred_check_branch
                %390 = sbr.rel (0) target = $region129
              $region128: #{whisper_encoder_forward.17} parent=113 // pred_region
                loop: start=0, step=1, limit=1
                $region130: #{whisper_encoder_forward.17} parent=128 // loop_pre_header
                  _
                $region131: #{whisper_encoder_forward.17} parent=128 // loop_header
                  %s392 = sphi 0, %s396
                  %p393 = scmp.ge.s32.totalorder %s392, 1
                  %s397 = sphi %s369, %s369
                  %s398 = sphi %s364, %s364
                $region132: #{whisper_encoder_forward.17} parent=128 // loop_header_branch
                  %395 = sbr.rel (%p393) target = $region136
                $region133: #{whisper_encoder_forward.17} parent=128 // loop_body
                  _
                $region134: #{whisper_encoder_forward.17} parent=128 // loop_footer
                  %s396 = sadd.s32 1, %s392
                $region135: #{whisper_encoder_forward.17} parent=128 // loop_footer_branch
                  %391 = sbr.rel target = $region131
                $region136: #{whisper_encoder_forward.17} parent=128 // loop_exit
                  _
                loop: start=0, step=1, limit=1
                $region137: #{whisper_encoder_forward.17} parent=128 // loop_pre_header
                  _
                $region138: #{whisper_encoder_forward.17} parent=128 // loop_header
                  %s401 = sphi 0, %s405
                  %p402 = scmp.ge.s32.totalorder %s401, 1
                  %s406 = sphi %s369, %s369
                  %s407 = sphi %s364, %s364
                $region139: #{whisper_encoder_forward.17} parent=128 // loop_header_branch
                  %404 = sbr.rel (%p402) target = $region143
                $region140: #{whisper_encoder_forward.17} parent=128 // loop_body
                  %v408 = vld [vmem:[%s406] sm:$0xf]
                  %409 = vst [vmem:[%s407] sm:$0xf] %v408
                  %v410 = vld [vmem:[%s406 + $0x8] sm:$0xf]
                  %411 = vst [vmem:[%s407 + $0x4] sm:$0xf] %v410
                $region141: #{whisper_encoder_forward.17} parent=128 // loop_footer
                  %s405 = sadd.s32 1, %s401
                $region142: #{whisper_encoder_forward.17} parent=128 // loop_footer_branch
                  %400 = sbr.rel target = $region138
                $region143: #{whisper_encoder_forward.17} parent=128 // loop_exit
                  _
              $region129: #{whisper_encoder_forward.17} parent=113 // pred_fallthru
                _
            $region114: #{whisper_encoder_forward.17} parent=109 // pred_fallthru
              _
            // Predicated region
            $region115: #{whisper_encoder_forward.17} parent=109 // pred_check
              _
            $region116: #{whisper_encoder_forward.17} parent=109 // pred_check_branch
              %375 = sbr.rel (0) target = $region118
            $region117: #{whisper_encoder_forward.17} parent=109 // pred_region
              loop: start=0, step=1, limit=1
              $region119: #{whisper_encoder_forward.17} parent=117 // loop_pre_header
                _
              $region120: #{whisper_encoder_forward.17} parent=117 // loop_header
                %s378 = sphi 0, %s382
                %p379 = scmp.ge.s32.totalorder %s378, 1
                %s383 = sphi %s369, %s369
                %s384 = sphi %s364, %s364
              $region121: #{whisper_encoder_forward.17} parent=117 // loop_header_branch
                %381 = sbr.rel (%p379) target = $region125
              $region122: #{whisper_encoder_forward.17} parent=117 // loop_body
                %v385 = vld [vmem:[%s383] sm:$0xf]
                %386 = vst [vmem:[%s384] sm:$0xf] %v385
                %v387 = vld [vmem:[%s383 + $0x8] sm:$0xf]
                %388 = vst [vmem:[%s384 + $0x4] sm:$0xf] %v387
              $region123: #{whisper_encoder_forward.17} parent=117 // loop_footer
                %s382 = sadd.s32 1, %s378
              $region124: #{whisper_encoder_forward.17} parent=117 // loop_footer_branch
                %377 = sbr.rel target = $region120
              $region125: #{whisper_encoder_forward.17} parent=117 // loop_exit
                _
            $region118: #{whisper_encoder_forward.17} parent=109 // pred_fallthru
              _
          $region110: #{whisper_encoder_forward.17} parent=105 // pred_fallthru
            _
          %412 = vnop
        $region106: #{whisper_encoder_forward.17} parent=15 // pred_fallthru
          _
      $region16: #{whisper_encoder_forward.17} parent=5 // pred_fallthru
        _
      %p413 = scmp.le.s32.totalorder 1, %s10
      %p414 = scmp.lt.s32.totalorder %s10, 9
      %p415 = pnand %p413, %p414
      %p416 = pneg %p415
      // Predicated region
      $region144: #{whisper_encoder_forward.17} parent=5 // pred_check
        _
      $region145: #{whisper_encoder_forward.17} parent=5 // pred_check_branch
        %418 = sbr.rel (%p415) target = $region147
      $region146: #{whisper_encoder_forward.17} parent=5 // pred_region
        %s419 = ssub.s32 %s10, 1
        %s420 = sand.u32 %s44, 1
        %s421 = sand.u32 %s44, 1
        %s422 = smul.addr %s421, 8
        %s423 = scalar_lea.vmem [#allocation3], %s422
        // Predicated region
        $region148: #{whisper_encoder_forward.17} parent=146 // pred_check
          %p424 = pneg %p57
        $region149: #{whisper_encoder_forward.17} parent=146 // pred_check_branch
          %426 = sbr.rel (%p424) target = $region151
        $region150: #{whisper_encoder_forward.17} parent=146 // pred_region
          _
        $region151: #{whisper_encoder_forward.17} parent=146 // pred_fallthru
          _
        %s427 = sand.u32 %s72, 1
        %s428 = sand.u32 %s72, 1
        %s429 = smul.addr %s428, 64
        %s430 = scalar_lea.vmem [#allocation4], %s429
        // Predicated region
        $region152: #{whisper_encoder_forward.17} parent=146 // pred_check
          %p431 = pneg %p85
        $region153: #{whisper_encoder_forward.17} parent=146 // pred_check_branch
          %433 = sbr.rel (%p431) target = $region155
        $region154: #{whisper_encoder_forward.17} parent=146 // pred_region
          _
        $region155: #{whisper_encoder_forward.17} parent=146 // pred_fallthru
          _
        %s434 = sand.u32 %s126, 1
        %s435 = sand.u32 %s126, 1
        %s436 = smul.addr %s435, 8
        %s437 = scalar_lea.vmem [#allocation5], %s436
        // Predicated region
        $region156: #{whisper_encoder_forward.17} parent=146 // pred_check
          %p438 = pneg %p139
        $region157: #{whisper_encoder_forward.17} parent=146 // pred_check_branch
          %440 = sbr.rel (%p438) target = $region159
        $region158: #{whisper_encoder_forward.17} parent=146 // pred_region
          _
        $region159: #{whisper_encoder_forward.17} parent=146 // pred_fallthru
          _
        %s441 = sand.u32 %s44, 1
        %s442 = sand.u32 %s44, 1
        %s443 = smul.addr %s442, 8
        %s444 = scalar_lea.vmem [#allocation3], %s443
        %p445 = pneg %p57
        %p446 = pneg %p54
        %s447 = sand.u32 %s72, 1
        %s448 = sand.u32 %s72, 1
        %s449 = smul.addr %s448, 64
        %s450 = scalar_lea.vmem [#allocation4], %s449
        %p451 = pneg %p85
        %p452 = pneg %p82
        %p453 = scmp.lt.s32.totalorder %s21, 1
        %s454 = scalar_select %p453, %s21, 1
        %s455 = scalar_lea.vmem %s2, %s454
        %p456 = pneg %p111
        %p457 = pneg %p108
        %s458 = sand.u32 %s126, 1
        %s459 = sand.u32 %s126, 1
        %s460 = smul.addr %s459, 8
        %s461 = scalar_lea.vmem [#allocation5], %s460
        %p462 = pneg %p139
        %p463 = pneg %p136
        %p464 = pneg %p167
        %p465 = pneg %p164
        %s466 = sand.u32 %s154, 1
        %s467 = sand.u32 %s154, 1
        %s468 = smul.addr %s467, 8
        %s469 = scalar_lea.vmem [#allocation6], %s468
        %s470 = smul.u32 2, %s20
        %s471 = smul.u32 16, %s22
        %p472 = scmp.lt.s32.totalorder %s21, 1
        %s473 = scalar_select %p472, %s21, 1
        %s474 = scalar_lea.vmem %s2, %s473
        %s475 = smul.u32 2, %s20
        %s476 = smul.u32 2, %s20
        %p478 = scmp.eq.s32.totalorder %s22, 0
        // Predicated region
        $region160: #{whisper_encoder_forward.17} parent=146 // pred_check
          %p479 = pneg %p478
        $region161: #{whisper_encoder_forward.17} parent=146 // pred_check_branch
          %481 = sbr.rel (%p479) target = $region163
        $region162: #{whisper_encoder_forward.17} parent=146 // pred_region
          %482 = vst [vmem:[#allocation2] sm:$0xff] 0.0
          %483 = vst [vmem:[#allocation2 + $0x8] sm:$0xff] 0.0
        $region163: #{whisper_encoder_forward.17} parent=146 // pred_fallthru
          _
        %v484 = vld [vmem:[#allocation2] sm:$0xff]
        %v485 = vld [vmem:[#allocation2 + $0x8] sm:$0xff]
        %v486 = vld [vmem:[%s423] sm:$0xf]
        %v487 = vld [vmem:[%s423 + $0x4] sm:$0xf]
        %v488 = vld [vmem:[%s430] sm:$0xf]
        %v489 = vld [vmem:[%s430 + $0x4] sm:$0xf]
        %v490 = vld [vmem:[%s430 + $0x8] sm:$0xf]
        %v491 = vld [vmem:[%s430 + $0xc] sm:$0xf]
        %v492 = vld [vmem:[%s430 + $0x10] sm:$0xf]
        %v493 = vld [vmem:[%s430 + $0x14] sm:$0xf]
        %v494 = vld [vmem:[%s430 + $0x18] sm:$0xf]
        %v495 = vld [vmem:[%s430 + $0x1c] sm:$0xf]
        %v496 = vld [vmem:[%s430 + $0x20] sm:$0xf]
        %v497 = vld [vmem:[%s430 + $0x24] sm:$0xf]
        %v498 = vld [vmem:[%s430 + $0x28] sm:$0xf]
        %v499 = vld [vmem:[%s430 + $0x2c] sm:$0xf]
        %v500 = vld [vmem:[%s430 + $0x30] sm:$0xf]
        %v501 = vld [vmem:[%s430 + $0x34] sm:$0xf]
        %v502 = vld [vmem:[%s430 + $0x38] sm:$0xf]
        %v503 = vld [vmem:[%s430 + $0x3c] sm:$0xf]
        %v506 = vunpack.c.l.b16 %v486
        %v507 = vunpack.c.l.b16 %v487
        %v508 = vpack.c.b16 %v507, %v506
        %v526 = vunpack.c.l.b16 %v488
        %v527 = vunpack.c.l.b16 %v489
        %v528 = vunpack.c.l.b16 %v490
        %v529 = vunpack.c.l.b16 %v491
        %v530 = vunpack.c.l.b16 %v492
        %v531 = vunpack.c.l.b16 %v493
        %v532 = vunpack.c.l.b16 %v494
        %v533 = vunpack.c.l.b16 %v495
        %v534 = vunpack.c.l.b16 %v496
        %v535 = vunpack.c.l.b16 %v497
        %v536 = vunpack.c.l.b16 %v498
        %v537 = vunpack.c.l.b16 %v499
        %v538 = vunpack.c.l.b16 %v500
        %v539 = vunpack.c.l.b16 %v501
        %v540 = vunpack.c.l.b16 %v502
        %v541 = vunpack.c.l.b16 %v503
        %v542 = vpack.c.b16 %v527, %v526
        %v543 = vpack.c.b16 %v529, %v528
        %v544 = vpack.c.b16 %v531, %v530
        %v545 = vpack.c.b16 %v533, %v532
        %v546 = vpack.c.b16 %v535, %v534
        %v547 = vpack.c.b16 %v537, %v536
        %v548 = vpack.c.b16 %v539, %v538
        %v549 = vpack.c.b16 %v541, %v540
        %558 = vmatprep.subr.bf16.mxu0 0
        %559 = vmatpush1.bf16.msra.mxu0 %v542
        %560 = vmatprep.subr.bf16.mxu0 0
        %561 = vmatpush1.bf16.msra.mxu0 %v543
        %562 = vmatprep.subr.bf16.mxu0 0
        %563 = vmatpush1.bf16.msra.mxu0 %v544
        %564 = vmatprep.subr.bf16.mxu0 0
        %565 = vmatpush1.bf16.msra.mxu0 %v545
        %566 = vmatprep.subr.bf16.mxu0 0
        %567 = vmatpush1.bf16.msra.mxu0 %v546
        %568 = vmatprep.subr.bf16.mxu0 0
        %569 = vmatpush1.bf16.msra.mxu0 %v547
        %570 = vmatprep.subr.bf16.mxu0 0
        %571 = vmatpush1.bf16.msra.mxu0 %v548
        %572 = vmatprep.subr.bf16.mxu0 0
        %573 = vmatpush1.bf16.msra.mxu0 %v549
        %574 = vmatprep.subr.bf16.mxu0 0
        %575 = vmatpush1.bf16.msra.mxu0 0
        %576 = vmatprep.subr.bf16.mxu0 0
        %577 = vmatpush1.bf16.msra.mxu0 0
        %578 = vmatprep.subr.bf16.mxu0 0
        %579 = vmatpush1.bf16.msra.mxu0 0
        %580 = vmatprep.subr.bf16.mxu0 0
        %581 = vmatpush1.bf16.msra.mxu0 0
        %582 = vmatprep.subr.bf16.mxu0 0
        %583 = vmatpush1.bf16.msra.mxu0 0
        %584 = vmatprep.subr.bf16.mxu0 0
        %585 = vmatpush1.bf16.msra.mxu0 0
        %586 = vmatprep.subr.bf16.mxu0 0
        %587 = vmatpush1.bf16.msra.mxu0 0
        %588 = vmatprep.subr.bf16.mxu0 0
        %589 = vmatpush1.bf16.msra.mxu0 0
        %590 = vmatprep.mubr.bf16.mxu0 0
        %591 = vmatmul.mubr.bf16.gmra.mrb[0].mxu0 %v508
        %v592 = vpop.f32.mrb[0].mxu0
        %v593 = vadd.f32 0.0, %v592
        %v594 = vpop.f32.mrb[0].mxu0
        %v595 = vpop.f32.mrb[0].mxu0
        %v596 = vadd.f32 0.0, %v595
        %v597 = vpop.f32.mrb[0].mxu0
        %598 = vdwg.mxu0
        %v599 = vadd.f32 %v484, %v593
        %v600 = vadd.f32 %v485, %v596
        %601 = vst [vmem:[#allocation2] sm:$0xff] %v599
        %602 = vst [vmem:[#allocation2 + $0x8] sm:$0xff] %v600
        %p603 = scmp.eq.s32.totalorder %s22, 1
        // Predicated region
        $region164: #{whisper_encoder_forward.17} parent=146 // pred_check
          %p604 = pneg %p603
        $region165: #{whisper_encoder_forward.17} parent=146 // pred_check_branch
          %606 = sbr.rel (%p604) target = $region167
        $region166: #{whisper_encoder_forward.17} parent=146 // pred_region
          %v607 = vld [vmem:[#allocation2] sm:$0xff]
          %v608 = vld [vmem:[#allocation2 + $0x8] sm:$0xff]
          %v609 = vld [vmem:[%s474] sm:$0x1]
          %v611 = vlaneseq
          %v612 = vshrl.u32 %v611, 7
          %v613 = vsub.s32 0, %v612
          %v614 = vrot.slane %v609, %v613
          %v616 = vadd.f32 %v607, %v614
          %v617 = vadd.f32 %v608, %v614
          %v618 = vld [vmem:[%s437] sm:$0xf]
          %v619 = vld [vmem:[%s437 + $0x4] sm:$0xf]
          %v620 = vunpack.c.l.bf16 %v618
          %v621 = vunpack.c.l.bf16 %v619
          %v622 = vadd.f32 %v616, %v620
          %v623 = vadd.f32 %v617, %v621
          %v624 = vpack.c.bf16 %v623, %v622
          %v626 = vunpack.c.l.b16 %v624
          %v627 = vunpack.c.h.b16 %v624
          %v628 = vpack.c.b16 %v626, %v626
          %v629 = vpack.c.b16 %v627, %v627
          %632 = vst [vmem:[%s469] sm:$0xf] %v628
          %633 = vst [vmem:[%s469 + $0x4] sm:$0xf] %v629
        $region167: #{whisper_encoder_forward.17} parent=146 // pred_fallthru
          _
        %s634 = sand.u32 %s154, 1
        %s635 = sand.u32 %s154, 1
        %s636 = smul.addr %s635, 8
        %s637 = scalar_lea.vmem [#allocation6], %s636
        // Predicated region
        $region168: #{whisper_encoder_forward.17} parent=146 // pred_check
          %p638 = pneg %p164
        $region169: #{whisper_encoder_forward.17} parent=146 // pred_check_branch
          %640 = sbr.rel (%p638) target = $region171
        $region170: #{whisper_encoder_forward.17} parent=146 // pred_region
          %s641 = smul.u32 2, %s20
          %s642 = smul.addr %s641, 2
          %s643 = sadd.s32 %s21, %s642
          %s644 = smul.addr %s643, 4
          %s645 = scalar_lea.vmem %s4, %s644
          // Predicated region
          $region172: #{whisper_encoder_forward.17} parent=170 // pred_check
            _
          $region173: #{whisper_encoder_forward.17} parent=170 // pred_check_branch
            %647 = sbr.rel (0) target = $region175
          $region174: #{whisper_encoder_forward.17} parent=170 // pred_region
            // Predicated region
            $region176: #{whisper_encoder_forward.17} parent=174 // pred_check
              _
            $region177: #{whisper_encoder_forward.17} parent=174 // pred_check_branch
              %649 = sbr.rel target = $region179
            $region178: #{whisper_encoder_forward.17} parent=174 // pred_region
              // Predicated region
              $region191: #{whisper_encoder_forward.17} parent=178 // pred_check
                _
              $region192: #{whisper_encoder_forward.17} parent=178 // pred_check_branch
                %666 = sbr.rel (0) target = $region194
              $region193: #{whisper_encoder_forward.17} parent=178 // pred_region
                loop: start=0, step=1, limit=1
                $region195: #{whisper_encoder_forward.17} parent=193 // loop_pre_header
                  _
                $region196: #{whisper_encoder_forward.17} parent=193 // loop_header
                  %s668 = sphi 0, %s672
                  %p669 = scmp.ge.s32.totalorder %s668, 1
                  %s673 = sphi %s637, %s637
                  %s674 = sphi %s645, %s645
                $region197: #{whisper_encoder_forward.17} parent=193 // loop_header_branch
                  %671 = sbr.rel (%p669) target = $region201
                $region198: #{whisper_encoder_forward.17} parent=193 // loop_body
                  _
                $region199: #{whisper_encoder_forward.17} parent=193 // loop_footer
                  %s672 = sadd.s32 1, %s668
                $region200: #{whisper_encoder_forward.17} parent=193 // loop_footer_branch
                  %667 = sbr.rel target = $region196
                $region201: #{whisper_encoder_forward.17} parent=193 // loop_exit
                  _
                loop: start=0, step=1, limit=1
                $region202: #{whisper_encoder_forward.17} parent=193 // loop_pre_header
                  _
                $region203: #{whisper_encoder_forward.17} parent=193 // loop_header
                  %s677 = sphi 0, %s681
                  %p678 = scmp.ge.s32.totalorder %s677, 1
                  %s682 = sphi %s637, %s637
                  %s683 = sphi %s645, %s645
                $region204: #{whisper_encoder_forward.17} parent=193 // loop_header_branch
                  %680 = sbr.rel (%p678) target = $region208
                $region205: #{whisper_encoder_forward.17} parent=193 // loop_body
                  %v684 = vld [vmem:[%s682] sm:$0xf]
                  %685 = vst [vmem:[%s683] sm:$0xf] %v684
                  %v686 = vld [vmem:[%s682 + $0x4] sm:$0xf]
                  %687 = vst [vmem:[%s683 + $0x8] sm:$0xf] %v686
                $region206: #{whisper_encoder_forward.17} parent=193 // loop_footer
                  %s681 = sadd.s32 1, %s677
                $region207: #{whisper_encoder_forward.17} parent=193 // loop_footer_branch
                  %676 = sbr.rel target = $region203
                $region208: #{whisper_encoder_forward.17} parent=193 // loop_exit
                  _
              $region194: #{whisper_encoder_forward.17} parent=178 // pred_fallthru
                _
            $region179: #{whisper_encoder_forward.17} parent=174 // pred_fallthru
              _
            // Predicated region
            $region180: #{whisper_encoder_forward.17} parent=174 // pred_check
              _
            $region181: #{whisper_encoder_forward.17} parent=174 // pred_check_branch
              %651 = sbr.rel (0) target = $region183
            $region182: #{whisper_encoder_forward.17} parent=174 // pred_region
              loop: start=0, step=1, limit=1
              $region184: #{whisper_encoder_forward.17} parent=182 // loop_pre_header
                _
              $region185: #{whisper_encoder_forward.17} parent=182 // loop_header
                %s654 = sphi 0, %s658
                %p655 = scmp.ge.s32.totalorder %s654, 1
                %s659 = sphi %s637, %s637
                %s660 = sphi %s645, %s645
              $region186: #{whisper_encoder_forward.17} parent=182 // loop_header_branch
                %657 = sbr.rel (%p655) target = $region190
              $region187: #{whisper_encoder_forward.17} parent=182 // loop_body
                %v661 = vld [vmem:[%s659] sm:$0xf]
                %662 = vst [vmem:[%s660] sm:$0xf] %v661
                %v663 = vld [vmem:[%s659 + $0x4] sm:$0xf]
                %664 = vst [vmem:[%s660 + $0x8] sm:$0xf] %v663
              $region188: #{whisper_encoder_forward.17} parent=182 // loop_footer
                %s658 = sadd.s32 1, %s654
              $region189: #{whisper_encoder_forward.17} parent=182 // loop_footer_branch
                %653 = sbr.rel target = $region185
              $region190: #{whisper_encoder_forward.17} parent=182 // loop_exit
                _
            $region183: #{whisper_encoder_forward.17} parent=174 // pred_fallthru
              _
          $region175: #{whisper_encoder_forward.17} parent=170 // pred_fallthru
            _
          %688 = vnop
        $region171: #{whisper_encoder_forward.17} parent=146 // pred_fallthru
          _
      $region147: #{whisper_encoder_forward.17} parent=5 // pred_fallthru
        _
      %p689 = scmp.le.s32.totalorder 2, %s10
      // Predicated region
      $region209: #{whisper_encoder_forward.17} parent=5 // pred_check
        %p690 = pneg %p689
      $region210: #{whisper_encoder_forward.17} parent=5 // pred_check_branch
        %692 = sbr.rel (%p690) target = $region212
      $region211: #{whisper_encoder_forward.17} parent=5 // pred_region
        %s693 = ssub.s32 %s10, 2
        // Predicated region
        $region213: #{whisper_encoder_forward.17} parent=211 // pred_check
          %p694 = pneg %p170
        $region214: #{whisper_encoder_forward.17} parent=211 // pred_check_branch
          %696 = sbr.rel (%p694) target = $region216
        $region215: #{whisper_encoder_forward.17} parent=211 // pred_region
          %s697 = sand.u32 %s155, 1
          %s698 = sand.u32 %s155, 1
          %s699 = smul.addr %s698, 8
          %s700 = scalar_lea.vmem [#allocation6], %s699
        $region216: #{whisper_encoder_forward.17} parent=211 // pred_fallthru
          _
      $region212: #{whisper_encoder_forward.17} parent=5 // pred_fallthru
        _
    $region6: #{whisper_encoder_forward.17} parent=1 // loop_footer
      %s14 = sadd.s32 1, %s10
    $region7: #{whisper_encoder_forward.17} parent=1 // loop_footer_branch
      %9 = sbr.rel target = $region3
    $region8: #{whisper_encoder_forward.17} parent=1 // loop_exit
      _

// kernel: whisper_encoder_forward.18
$region0: #{whisper_encoder_forward.18}
  #allocation0 [shape = 'u32[]', space=smem, size = 0x4, offset = 0x4, fixed_abs, tag = 'smem constant byte address 0x4 - core index']
  #allocation1 [shape = 'u32[144,128]{1,0:T(1,128)}', space=vmem, size = 0x12000, scoped, tag = 'internal scratch']
  %s0 = inlined_call_operand.vmem [shape: bf16[32,256], index: 0, kind: input, shape index: {}]
  %s1 = inlined_call_operand.vmem [shape: bf16[256,512], index: 1, kind: input, shape index: {}]
  %s2 = inlined_call_operand.vmem [shape: f32[1,512], index: 2, kind: input, shape index: {}]
  %s3 = inlined_call_operand.vmem [shape: f32[1,256], index: 3, kind: input, shape index: {}]
  %s4 = inlined_call_operand.vmem [shape: f32[1,256], index: 4, kind: input, shape index: {}]
  %s5 = inlined_call_operand.vmem [shape: bf16[32,512], index: 5, kind: output, shape index: {}]
  %s6 = sld [smem:[#allocation0]]
  $region131: #{whisper_encoder_forward.18} parent=0
    _
  %s8 = ssub.s32 1, %s6
  %s9 = scalar_select 0, %s8, %s6
  $region1: #{whisper_encoder_forward.18} parent=0
    #allocation2 [shape = 'u8[131072]{0}', space=vmem, size = 0x20000, scoped, tag = 'input window, operand 1']
    #allocation3 [shape = 'u8[8192]{0}', space=vmem, size = 0x2000, scoped, tag = 'output window, operand 0']
    loop: start=0, step=1, limit=10
    $region2: #{whisper_encoder_forward.18} parent=1 // loop_pre_header
      _
    $region3: #{whisper_encoder_forward.18} parent=1 // loop_header
      %s11 = sphi 0, %s15
      %p12 = scmp.ge.s32.totalorder %s11, 10
      %s18 = sphi 0, %s30
      %s19 = sphi 0, %s26
      %s20 = sphi 0, %s18
      %s21 = sphi 0, %s19
      %s22 = sphi 0, %s20
      %s23 = sphi 0, %s21
      %s33 = sphi 0, %s35
      %s36 = sphi 0, %s33
      %s37 = sphi 0, %s36
      %s53 = sphi 0, %s37
      %s59 = sphi 0, %s61
      %s62 = sphi 0, %s59
      %s63 = sphi 0, %s62
      %s79 = sphi 0, %s63
      %s85 = sphi 0, %s87
      %s88 = sphi 0, %s85
      %s89 = sphi 0, %s88
      %s105 = sphi 0, %s89
      %s109 = sphi 0, %s109
      %s111 = sphi 0, %s109
      %s112 = sphi 0, %s111
      %s126 = sphi 0, %s112
      %s130 = sphi 0, %s130
      %s132 = sphi 0, %s130
      %s133 = sphi 0, %s132
      %s147 = sphi 0, %s133
      %s155 = sphi 0, %s157
      %s158 = sphi 0, %s155
      %s159 = sphi 0, %s158
      %s175 = sphi 0, %s159
    $region4: #{whisper_encoder_forward.18} parent=1 // loop_header_branch
      %14 = sbr.rel (%p12) target = $region8
    $region5: #{whisper_encoder_forward.18} parent=1 // loop_body
      %s16 = ssub.s32 %s11, 1
      %s17 = ssub.s32 %s11, 2
      %s24 = sadd.s32 1, %s19
      %p25 = scmp.ge.s32.totalorder %s24, 4
      %s26 = scalar_select %p25, 0, %s24
      %s27 = sadd.s32 1, %s18
      %s28 = scalar_select %p25, %s27, %s18
      %p29 = scmp.ge.s32.totalorder %s28, 2
      %s30 = scalar_select %p29, 0, %s28
      %s31 = ssub.s32 %s18, %s30
      %p32 = scmp.eq.s32.totalorder %s31, 0
      %s34 = sadd.s32 %s33, 1
      %s35 = scalar_select %p32, %s33, %s34
      %p38 = pneg %p32
      %p39 = scmp.eq.s32.totalorder %s11, 7
      %p40 = por %p38, %p39
      %p41 = scmp.ne.s32.totalorder %s33, %s36
      %p42 = scmp.eq.s32.totalorder %s11, 0
      %p43 = por %p41, %p42
      %p44 = scmp.ne.s32.totalorder %s33, %s36
      %p45 = scmp.eq.s32.totalorder %s16, 7
      %p46 = por %p44, %p45
      %p47 = scmp.ne.s32.totalorder %s36, %s37
      %p48 = scmp.eq.s32.totalorder %s16, 0
      %p49 = por %p47, %p48
      %p50 = scmp.ne.s32.totalorder %s36, %s37
      %p51 = scmp.eq.s32.totalorder %s17, 7
      %p52 = por %p50, %p51
      %p54 = scmp.ne.s32.totalorder %s37, %s53
      %p55 = scmp.eq.s32.totalorder %s17, 0
      %p56 = por %p54, %p55
      %s57 = ssub.s32 %s19, %s26
      %p58 = scmp.eq.s32.totalorder %s57, 0
      %s60 = sadd.s32 %s59, 1
      %s61 = scalar_select %p58, %s59, %s60
      %p64 = pneg %p58
      %p65 = scmp.eq.s32.totalorder %s11, 7
      %p66 = por %p64, %p65
      %p67 = scmp.ne.s32.totalorder %s59, %s62
      %p68 = scmp.eq.s32.totalorder %s11, 0
      %p69 = por %p67, %p68
      %p70 = scmp.ne.s32.totalorder %s59, %s62
      %p71 = scmp.eq.s32.totalorder %s16, 7
      %p72 = por %p70, %p71
      %p73 = scmp.ne.s32.totalorder %s62, %s63
      %p74 = scmp.eq.s32.totalorder %s16, 0
      %p75 = por %p73, %p74
      %p76 = scmp.ne.s32.totalorder %s62, %s63
      %p77 = scmp.eq.s32.totalorder %s17, 7
      %p78 = por %p76, %p77
      %p80 = scmp.ne.s32.totalorder %s63, %s79
      %p81 = scmp.eq.s32.totalorder %s17, 0
      %p82 = por %p80, %p81
      %s83 = ssub.s32 %s19, %s26
      %p84 = scmp.eq.s32.totalorder %s83, 0
      %s86 = sadd.s32 %s85, 1
      %s87 = scalar_select %p84, %s85, %s86
      %p90 = pneg %p84
      %p91 = scmp.eq.s32.totalorder %s11, 7
      %p92 = por %p90, %p91
      %p93 = scmp.ne.s32.totalorder %s85, %s88
      %p94 = scmp.eq.s32.totalorder %s11, 0
      %p95 = por %p93, %p94
      %p96 = scmp.ne.s32.totalorder %s85, %s88
      %p97 = scmp.eq.s32.totalorder %s16, 7
      %p98 = por %p96, %p97
      %p99 = scmp.ne.s32.totalorder %s88, %s89
      %p100 = scmp.eq.s32.totalorder %s16, 0
      %p101 = por %p99, %p100
      %p102 = scmp.ne.s32.totalorder %s88, %s89
      %p103 = scmp.eq.s32.totalorder %s17, 7
      %p104 = por %p102, %p103
      %p106 = scmp.ne.s32.totalorder %s89, %s105
      %p107 = scmp.eq.s32.totalorder %s17, 0
      %p108 = por %p106, %p107
      %s110 = sadd.s32 %s109, 1
      %p113 = scmp.eq.s32.totalorder %s11, 7
      %p114 = scmp.ne.s32.totalorder %s109, %s111
      %p115 = scmp.eq.s32.totalorder %s11, 0
      %p116 = por %p114, %p115
      %p117 = scmp.ne.s32.totalorder %s109, %s111
      %p118 = scmp.eq.s32.totalorder %s16, 7
      %p119 = por %p117, %p118
      %p120 = scmp.ne.s32.totalorder %s111, %s112
      %p121 = scmp.eq.s32.totalorder %s16, 0
      %p122 = por %p120, %p121
      %p123 = scmp.ne.s32.totalorder %s111, %s112
      %p124 = scmp.eq.s32.totalorder %s17, 7
      %p125 = por %p123, %p124
      %p127 = scmp.ne.s32.totalorder %s112, %s126
      %p128 = scmp.eq.s32.totalorder %s17, 0
      %p129 = por %p127, %p128
      %s131 = sadd.s32 %s130, 1
      %p134 = scmp.eq.s32.totalorder %s11, 7
      %p135 = scmp.ne.s32.totalorder %s130, %s132
      %p136 = scmp.eq.s32.totalorder %s11, 0
      %p137 = por %p135, %p136
      %p138 = scmp.ne.s32.totalorder %s130, %s132
      %p139 = scmp.eq.s32.totalorder %s16, 7
      %p140 = por %p138, %p139
      %p141 = scmp.ne.s32.totalorder %s132, %s133
      %p142 = scmp.eq.s32.totalorder %s16, 0
      %p143 = por %p141, %p142
      %p144 = scmp.ne.s32.totalorder %s132, %s133
      %p145 = scmp.eq.s32.totalorder %s17, 7
      %p146 = por %p144, %p145
      %p148 = scmp.ne.s32.totalorder %s133, %s147
      %p149 = scmp.eq.s32.totalorder %s17, 0
      %p150 = por %p148, %p149
      %s151 = ssub.s32 %s18, %s30
      %s152 = ssub.s32 %s19, %s26
      %s153 = sor.u32 %s151, %s152
      %p154 = scmp.eq.s32.totalorder %s153, 0
      %s156 = sadd.s32 %s155, 1
      %s157 = scalar_select %p154, %s155, %s156
      %p160 = pneg %p154
      %p161 = scmp.eq.s32.totalorder %s11, 7
      %p162 = por %p160, %p161
      %p163 = scmp.ne.s32.totalorder %s155, %s158
      %p164 = scmp.eq.s32.totalorder %s11, 0
      %p165 = por %p163, %p164
      %p166 = scmp.ne.s32.totalorder %s155, %s158
      %p167 = scmp.eq.s32.totalorder %s16, 7
      %p168 = por %p166, %p167
      %p169 = scmp.ne.s32.totalorder %s158, %s159
      %p170 = scmp.eq.s32.totalorder %s16, 0
      %p171 = por %p169, %p170
      %p172 = scmp.ne.s32.totalorder %s158, %s159
      %p173 = scmp.eq.s32.totalorder %s17, 7
      %p174 = por %p172, %p173
      %p176 = scmp.ne.s32.totalorder %s159, %s175
      %p177 = scmp.eq.s32.totalorder %s17, 0
      %p178 = por %p176, %p177
      %p179 = scmp.le.s32.totalorder 1, %s11
      %p180 = scmp.lt.s32.totalorder %s11, 9
      %p181 = pnand %p179, %p180
      %p182 = pneg %p181
      // Predicated region
      $region9: #{whisper_encoder_forward.18} parent=5 // pred_check
        _
      $region10: #{whisper_encoder_forward.18} parent=5 // pred_check_branch
        %184 = sbr.rel (%p181) target = $region12
      $region11: #{whisper_encoder_forward.18} parent=5 // pred_region
        %s185 = ssub.s32 %s11, 1
        // Predicated region
        $region13: #{whisper_encoder_forward.18} parent=11 // pred_check
          %p186 = pneg %p122
        $region14: #{whisper_encoder_forward.18} parent=11 // pred_check_branch
          %188 = sbr.rel (%p186) target = $region16
        $region15: #{whisper_encoder_forward.18} parent=11 // pred_region
          _
        $region16: #{whisper_encoder_forward.18} parent=11 // pred_fallthru
          _
        // Predicated region
        $region17: #{whisper_encoder_forward.18} parent=11 // pred_check
          %p189 = pneg %p143
        $region18: #{whisper_encoder_forward.18} parent=11 // pred_check_branch
          %191 = sbr.rel (%p189) target = $region20
        $region19: #{whisper_encoder_forward.18} parent=11 // pred_region
          _
        $region20: #{whisper_encoder_forward.18} parent=11 // pred_fallthru
          _
      $region12: #{whisper_encoder_forward.18} parent=5 // pred_fallthru
        _
      %p192 = scmp.lt.s32.totalorder %s11, 8
      // Predicated region
      $region21: #{whisper_encoder_forward.18} parent=5 // pred_check
        %p193 = pneg %p192
      $region22: #{whisper_encoder_forward.18} parent=5 // pred_check_branch
        %195 = sbr.rel (%p193) target = $region24
      $region23: #{whisper_encoder_forward.18} parent=5 // pred_region
        // Predicated region
        $region25: #{whisper_encoder_forward.18} parent=23 // pred_check
          %p196 = pneg %p43
        $region26: #{whisper_encoder_forward.18} parent=23 // pred_check_branch
          %198 = sbr.rel (%p196) target = $region28
        $region27: #{whisper_encoder_forward.18} parent=23 // pred_region
          %s199 = smul.u32 2, %s18
          %p200 = scmp.lt.s32.totalorder %s199, 3
          %s201 = scalar_select %p200, %s199, 3
          %s202 = smul.addr %s201, 2
          %s203 = smul.addr %s202, 4
          %s204 = scalar_lea.vmem %s0, %s203
          %s205 = smul.u32 2, %s18
        $region28: #{whisper_encoder_forward.18} parent=23 // pred_fallthru
          _
        // Predicated region
        $region29: #{whisper_encoder_forward.18} parent=23 // pred_check
          %p206 = pneg %p69
        $region30: #{whisper_encoder_forward.18} parent=23 // pred_check_branch
          %208 = sbr.rel (%p206) target = $region32
        $region31: #{whisper_encoder_forward.18} parent=23 // pred_region
          %s209 = sand.u32 %s59, 1
          %s210 = sand.u32 %s59, 1
          %s211 = smul.addr %s210, 128
          %s212 = scalar_lea.vmem [#allocation2], %s211
          %s213 = smul.addr %s19, 4
          %s214 = scalar_lea.vmem %s1, %s213
          // Predicated region
          $region33: #{whisper_encoder_forward.18} parent=31 // pred_check
            _
          $region34: #{whisper_encoder_forward.18} parent=31 // pred_check_branch
            %216 = sbr.rel (0) target = $region36
          $region35: #{whisper_encoder_forward.18} parent=31 // pred_region
            // Predicated region
            $region37: #{whisper_encoder_forward.18} parent=35 // pred_check
              _
            $region38: #{whisper_encoder_forward.18} parent=35 // pred_check_branch
              %218 = sbr.rel target = $region40
            $region39: #{whisper_encoder_forward.18} parent=35 // pred_region
              // Predicated region
              $region52: #{whisper_encoder_forward.18} parent=39 // pred_check
                _
              $region53: #{whisper_encoder_forward.18} parent=39 // pred_check_branch
                %295 = sbr.rel (0) target = $region55
              $region54: #{whisper_encoder_forward.18} parent=39 // pred_region
                loop: start=0, step=1, limit=1
                $region56: #{whisper_encoder_forward.18} parent=54 // loop_pre_header
                  _
                $region57: #{whisper_encoder_forward.18} parent=54 // loop_header
                  %s297 = sphi 0, %s301
                  %p298 = scmp.ge.s32.totalorder %s297, 1
                  %s302 = sphi %s214, %s214
                  %s303 = sphi %s212, %s212
                $region58: #{whisper_encoder_forward.18} parent=54 // loop_header_branch
                  %300 = sbr.rel (%p298) target = $region62
                $region59: #{whisper_encoder_forward.18} parent=54 // loop_body
                  _
                $region60: #{whisper_encoder_forward.18} parent=54 // loop_footer
                  %s301 = sadd.s32 1, %s297
                $region61: #{whisper_encoder_forward.18} parent=54 // loop_footer_branch
                  %296 = sbr.rel target = $region57
                $region62: #{whisper_encoder_forward.18} parent=54 // loop_exit
                  _
                loop: start=0, step=1, limit=1
                $region63: #{whisper_encoder_forward.18} parent=54 // loop_pre_header
                  _
                $region64: #{whisper_encoder_forward.18} parent=54 // loop_header
                  %s306 = sphi 0, %s310
                  %p307 = scmp.ge.s32.totalorder %s306, 1
                  %s311 = sphi %s214, %s214
                  %s312 = sphi %s212, %s212
                $region65: #{whisper_encoder_forward.18} parent=54 // loop_header_branch
                  %309 = sbr.rel (%p307) target = $region69
                $region66: #{whisper_encoder_forward.18} parent=54 // loop_body
                  %v313 = vld [vmem:[%s311] sm:$0xf]
                  %314 = vst [vmem:[%s312] sm:$0xf] %v313
                  %v315 = vld [vmem:[%s311 + $0x10] sm:$0xf]
                  %316 = vst [vmem:[%s312 + $0x4] sm:$0xf] %v315
                  %v317 = vld [vmem:[%s311 + $0x20] sm:$0xf]
                  %318 = vst [vmem:[%s312 + $0x8] sm:$0xf] %v317
                  %v319 = vld [vmem:[%s311 + $0x30] sm:$0xf]
                  %320 = vst [vmem:[%s312 + $0xc] sm:$0xf] %v319
                  %v321 = vld [vmem:[%s311 + $0x40] sm:$0xf]
                  %322 = vst [vmem:[%s312 + $0x10] sm:$0xf] %v321
                  %v323 = vld [vmem:[%s311 + $0x50] sm:$0xf]
                  %324 = vst [vmem:[%s312 + $0x14] sm:$0xf] %v323
                  %v325 = vld [vmem:[%s311 + $0x60] sm:$0xf]
                  %326 = vst [vmem:[%s312 + $0x18] sm:$0xf] %v325
                  %v327 = vld [vmem:[%s311 + $0x70] sm:$0xf]
                  %328 = vst [vmem:[%s312 + $0x1c] sm:$0xf] %v327
                  %v329 = vld [vmem:[%s311 + $0x80] sm:$0xf]
                  %330 = vst [vmem:[%s312 + $0x20] sm:$0xf] %v329
                  %v331 = vld [vmem:[%s311 + $0x90] sm:$0xf]
                  %332 = vst [vmem:[%s312 + $0x24] sm:$0xf] %v331
                  %v333 = vld [vmem:[%s311 + $0xa0] sm:$0xf]
                  %334 = vst [vmem:[%s312 + $0x28] sm:$0xf] %v333
                  %v335 = vld [vmem:[%s311 + $0xb0] sm:$0xf]
                  %336 = vst [vmem:[%s312 + $0x2c] sm:$0xf] %v335
                  %v337 = vld [vmem:[%s311 + $0xc0] sm:$0xf]
                  %338 = vst [vmem:[%s312 + $0x30] sm:$0xf] %v337
                  %v339 = vld [vmem:[%s311 + $0xd0] sm:$0xf]
                  %340 = vst [vmem:[%s312 + $0x34] sm:$0xf] %v339
                  %v341 = vld [vmem:[%s311 + $0xe0] sm:$0xf]
                  %342 = vst [vmem:[%s312 + $0x38] sm:$0xf] %v341
                  %v343 = vld [vmem:[%s311 + $0xf0] sm:$0xf]
                  %344 = vst [vmem:[%s312 + $0x3c] sm:$0xf] %v343
                  %v345 = vld [vmem:[%s311 + $0x100] sm:$0xf]
                  %346 = vst [vmem:[%s312 + $0x40] sm:$0xf] %v345
                  %v347 = vld [vmem:[%s311 + $0x110] sm:$0xf]
                  %348 = vst [vmem:[%s312 + $0x44] sm:$0xf] %v347
                  %v349 = vld [vmem:[%s311 + $0x120] sm:$0xf]
                  %350 = vst [vmem:[%s312 + $0x48] sm:$0xf] %v349
                  %v351 = vld [vmem:[%s311 + $0x130] sm:$0xf]
                  %352 = vst [vmem:[%s312 + $0x4c] sm:$0xf] %v351
                  %v353 = vld [vmem:[%s311 + $0x140] sm:$0xf]
                  %354 = vst [vmem:[%s312 + $0x50] sm:$0xf] %v353
                  %v355 = vld [vmem:[%s311 + $0x150] sm:$0xf]
                  %356 = vst [vmem:[%s312 + $0x54] sm:$0xf] %v355
                  %v357 = vld [vmem:[%s311 + $0x160] sm:$0xf]
                  %358 = vst [vmem:[%s312 + $0x58] sm:$0xf] %v357
                  %v359 = vld [vmem:[%s311 + $0x170] sm:$0xf]
                  %360 = vst [vmem:[%s312 + $0x5c] sm:$0xf] %v359
                  %v361 = vld [vmem:[%s311 + $0x180] sm:$0xf]
                  %362 = vst [vmem:[%s312 + $0x60] sm:$0xf] %v361
                  %v363 = vld [vmem:[%s311 + $0x190] sm:$0xf]
                  %364 = vst [vmem:[%s312 + $0x64] sm:$0xf] %v363
                  %v365 = vld [vmem:[%s311 + $0x1a0] sm:$0xf]
                  %366 = vst [vmem:[%s312 + $0x68] sm:$0xf] %v365
                  %v367 = vld [vmem:[%s311 + $0x1b0] sm:$0xf]
                  %368 = vst [vmem:[%s312 + $0x6c] sm:$0xf] %v367
                  %v369 = vld [vmem:[%s311 + $0x1c0] sm:$0xf]
                  %370 = vst [vmem:[%s312 + $0x70] sm:$0xf] %v369
                  %v371 = vld [vmem:[%s311 + $0x1d0] sm:$0xf]
                  %372 = vst [vmem:[%s312 + $0x74] sm:$0xf] %v371
                  %v373 = vld [vmem:[%s311 + $0x1e0] sm:$0xf]
                  %374 = vst [vmem:[%s312 + $0x78] sm:$0xf] %v373
                  %v375 = vld [vmem:[%s311 + $0x1f0] sm:$0xf]
                  %376 = vst [vmem:[%s312 + $0x7c] sm:$0xf] %v375
                $region67: #{whisper_encoder_forward.18} parent=54 // loop_footer
                  %s310 = sadd.s32 1, %s306
                $region68: #{whisper_encoder_forward.18} parent=54 // loop_footer_branch
                  %305 = sbr.rel target = $region64
                $region69: #{whisper_encoder_forward.18} parent=54 // loop_exit
                  _
              $region55: #{whisper_encoder_forward.18} parent=39 // pred_fallthru
                _
            $region40: #{whisper_encoder_forward.18} parent=35 // pred_fallthru
              _
            // Predicated region
            $region41: #{whisper_encoder_forward.18} parent=35 // pred_check
              _
            $region42: #{whisper_encoder_forward.18} parent=35 // pred_check_branch
              %220 = sbr.rel (0) target = $region44
            $region43: #{whisper_encoder_forward.18} parent=35 // pred_region
              loop: start=0, step=1, limit=1
              $region45: #{whisper_encoder_forward.18} parent=43 // loop_pre_header
                _
              $region46: #{whisper_encoder_forward.18} parent=43 // loop_header
                %s223 = sphi 0, %s227
                %p224 = scmp.ge.s32.totalorder %s223, 1
                %s228 = sphi %s214, %s214
                %s229 = sphi %s212, %s212
              $region47: #{whisper_encoder_forward.18} parent=43 // loop_header_branch
                %226 = sbr.rel (%p224) target = $region51
              $region48: #{whisper_encoder_forward.18} parent=43 // loop_body
                %v230 = vld [vmem:[%s228] sm:$0xf]
                %231 = vst [vmem:[%s229] sm:$0xf] %v230
                %v232 = vld [vmem:[%s228 + $0x10] sm:$0xf]
                %233 = vst [vmem:[%s229 + $0x4] sm:$0xf] %v232
                %v234 = vld [vmem:[%s228 + $0x20] sm:$0xf]
                %235 = vst [vmem:[%s229 + $0x8] sm:$0xf] %v234
                %v236 = vld [vmem:[%s228 + $0x30] sm:$0xf]
                %237 = vst [vmem:[%s229 + $0xc] sm:$0xf] %v236
                %v238 = vld [vmem:[%s228 + $0x40] sm:$0xf]
                %239 = vst [vmem:[%s229 + $0x10] sm:$0xf] %v238
                %v240 = vld [vmem:[%s228 + $0x50] sm:$0xf]
                %241 = vst [vmem:[%s229 + $0x14] sm:$0xf] %v240
                %v242 = vld [vmem:[%s228 + $0x60] sm:$0xf]
                %243 = vst [vmem:[%s229 + $0x18] sm:$0xf] %v242
                %v244 = vld [vmem:[%s228 + $0x70] sm:$0xf]
                %245 = vst [vmem:[%s229 + $0x1c] sm:$0xf] %v244
                %v246 = vld [vmem:[%s228 + $0x80] sm:$0xf]
                %247 = vst [vmem:[%s229 + $0x20] sm:$0xf] %v246
                %v248 = vld [vmem:[%s228 + $0x90] sm:$0xf]
                %249 = vst [vmem:[%s229 + $0x24] sm:$0xf] %v248
                %v250 = vld [vmem:[%s228 + $0xa0] sm:$0xf]
                %251 = vst [vmem:[%s229 + $0x28] sm:$0xf] %v250
                %v252 = vld [vmem:[%s228 + $0xb0] sm:$0xf]
                %253 = vst [vmem:[%s229 + $0x2c] sm:$0xf] %v252
                %v254 = vld [vmem:[%s228 + $0xc0] sm:$0xf]
                %255 = vst [vmem:[%s229 + $0x30] sm:$0xf] %v254
                %v256 = vld [vmem:[%s228 + $0xd0] sm:$0xf]
                %257 = vst [vmem:[%s229 + $0x34] sm:$0xf] %v256
                %v258 = vld [vmem:[%s228 + $0xe0] sm:$0xf]
                %259 = vst [vmem:[%s229 + $0x38] sm:$0xf] %v258
                %v260 = vld [vmem:[%s228 + $0xf0] sm:$0xf]
                %261 = vst [vmem:[%s229 + $0x3c] sm:$0xf] %v260
                %v262 = vld [vmem:[%s228 + $0x100] sm:$0xf]
                %263 = vst [vmem:[%s229 + $0x40] sm:$0xf] %v262
                %v264 = vld [vmem:[%s228 + $0x110] sm:$0xf]
                %265 = vst [vmem:[%s229 + $0x44] sm:$0xf] %v264
                %v266 = vld [vmem:[%s228 + $0x120] sm:$0xf]
                %267 = vst [vmem:[%s229 + $0x48] sm:$0xf] %v266
                %v268 = vld [vmem:[%s228 + $0x130] sm:$0xf]
                %269 = vst [vmem:[%s229 + $0x4c] sm:$0xf] %v268
                %v270 = vld [vmem:[%s228 + $0x140] sm:$0xf]
                %271 = vst [vmem:[%s229 + $0x50] sm:$0xf] %v270
                %v272 = vld [vmem:[%s228 + $0x150] sm:$0xf]
                %273 = vst [vmem:[%s229 + $0x54] sm:$0xf] %v272
                %v274 = vld [vmem:[%s228 + $0x160] sm:$0xf]
                %275 = vst [vmem:[%s229 + $0x58] sm:$0xf] %v274
                %v276 = vld [vmem:[%s228 + $0x170] sm:$0xf]
                %277 = vst [vmem:[%s229 + $0x5c] sm:$0xf] %v276
                %v278 = vld [vmem:[%s228 + $0x180] sm:$0xf]
                %279 = vst [vmem:[%s229 + $0x60] sm:$0xf] %v278
                %v280 = vld [vmem:[%s228 + $0x190] sm:$0xf]
                %281 = vst [vmem:[%s229 + $0x64] sm:$0xf] %v280
                %v282 = vld [vmem:[%s228 + $0x1a0] sm:$0xf]
                %283 = vst [vmem:[%s229 + $0x68] sm:$0xf] %v282
                %v284 = vld [vmem:[%s228 + $0x1b0] sm:$0xf]
                %285 = vst [vmem:[%s229 + $0x6c] sm:$0xf] %v284
                %v286 = vld [vmem:[%s228 + $0x1c0] sm:$0xf]
                %287 = vst [vmem:[%s229 + $0x70] sm:$0xf] %v286
                %v288 = vld [vmem:[%s228 + $0x1d0] sm:$0xf]
                %289 = vst [vmem:[%s229 + $0x74] sm:$0xf] %v288
                %v290 = vld [vmem:[%s228 + $0x1e0] sm:$0xf]
                %291 = vst [vmem:[%s229 + $0x78] sm:$0xf] %v290
                %v292 = vld [vmem:[%s228 + $0x1f0] sm:$0xf]
                %293 = vst [vmem:[%s229 + $0x7c] sm:$0xf] %v292
              $region49: #{whisper_encoder_forward.18} parent=43 // loop_footer
                %s227 = sadd.s32 1, %s223
              $region50: #{whisper_encoder_forward.18} parent=43 // loop_footer_branch
                %222 = sbr.rel target = $region46
              $region51: #{whisper_encoder_forward.18} parent=43 // loop_exit
                _
            $region44: #{whisper_encoder_forward.18} parent=35 // pred_fallthru
              _
          $region36: #{whisper_encoder_forward.18} parent=31 // pred_fallthru
            _
          %377 = vnop
        $region32: #{whisper_encoder_forward.18} parent=23 // pred_fallthru
          _
        // Predicated region
        $region70: #{whisper_encoder_forward.18} parent=23 // pred_check
          %p378 = pneg %p95
        $region71: #{whisper_encoder_forward.18} parent=23 // pred_check_branch
          %380 = sbr.rel (%p378) target = $region73
        $region72: #{whisper_encoder_forward.18} parent=23 // pred_region
          %p381 = scmp.lt.s32.totalorder %s19, 3
          %s382 = scalar_select %p381, %s19, 3
          %s383 = scalar_lea.vmem %s2, %s382
        $region73: #{whisper_encoder_forward.18} parent=23 // pred_fallthru
          _
      $region24: #{whisper_encoder_forward.18} parent=5 // pred_fallthru
        _
      %p384 = scmp.le.s32.totalorder 1, %s11
      %p385 = scmp.lt.s32.totalorder %s11, 9
      %p386 = pnand %p384, %p385
      %p387 = pneg %p386
      // Predicated region
      $region74: #{whisper_encoder_forward.18} parent=5 // pred_check
        _
      $region75: #{whisper_encoder_forward.18} parent=5 // pred_check_branch
        %389 = sbr.rel (%p386) target = $region77
      $region76: #{whisper_encoder_forward.18} parent=5 // pred_region
        %s390 = ssub.s32 %s11, 1
        %s391 = sand.u32 %s62, 1
        %s392 = sand.u32 %s62, 1
        %s393 = smul.addr %s392, 128
        %s394 = scalar_lea.vmem [#allocation2], %s393
        // Predicated region
        $region78: #{whisper_encoder_forward.18} parent=76 // pred_check
          %p395 = pneg %p75
        $region79: #{whisper_encoder_forward.18} parent=76 // pred_check_branch
          %397 = sbr.rel (%p395) target = $region81
        $region80: #{whisper_encoder_forward.18} parent=76 // pred_region
          _
        $region81: #{whisper_encoder_forward.18} parent=76 // pred_fallthru
          _
        %s398 = smul.u32 2, %s20
        %p399 = scmp.lt.s32.totalorder %s398, 3
        %s400 = scalar_select %p399, %s398, 3
        %s401 = smul.addr %s400, 2
        %s402 = smul.addr %s401, 4
        %s403 = scalar_lea.vmem %s0, %s402
        %p404 = pneg %p49
        %p405 = pneg %p46
        %s406 = sand.u32 %s62, 1
        %s407 = sand.u32 %s62, 1
        %s408 = smul.addr %s407, 128
        %s409 = scalar_lea.vmem [#allocation2], %s408
        %p410 = pneg %p75
        %p411 = pneg %p72
        %p412 = scmp.lt.s32.totalorder %s21, 3
        %s413 = scalar_select %p412, %s21, 3
        %s414 = scalar_lea.vmem %s2, %s413
        %p415 = pneg %p101
        %p416 = pneg %p98
        %p417 = pneg %p122
        %p418 = pneg %p119
        %p419 = pneg %p143
        %p420 = pneg %p140
        %p421 = pneg %p171
        %p422 = pneg %p168
        %s423 = sand.u32 %s158, 1
        %s424 = sand.u32 %s158, 1
        %s425 = smul.addr %s424, 8
        %s426 = scalar_lea.vmem [#allocation3], %s425
        %s427 = smul.u32 2, %s20
        %p428 = scmp.lt.s32.totalorder %s427, 3
        %s429 = scalar_select %p428, %s427, 3
        %s430 = smul.addr %s429, 2
        %s431 = smul.addr %s430, 4
        %s432 = scalar_lea.vmem %s0, %s431
        %s433 = smul.u32 2, %s20
        %p434 = scmp.lt.s32.totalorder %s21, 3
        %s435 = scalar_select %p434, %s21, 3
        %s436 = scalar_lea.vmem %s2, %s435
        %s437 = smul.u32 2, %s20
        %v439 = vld [vmem:[%s432] sm:$0xff]
        %v440 = vld [vmem:[%s432 + $0x8] sm:$0xff]
        %v441 = vunpack.c.l.bf16 %v439
        %v442 = vunpack.c.h.bf16 %v439
        %v443 = vunpack.c.l.bf16 %v440
        %v444 = vunpack.c.h.bf16 %v440
        %v445 = vadd.f32 %v441, %v442
        %446 = vadd.xlane.f32.xlu0 %v445
        %v447 = vpop.xlane.xlu0 %446
        %v448 = vadd.f32 %v443, %v444
        %449 = vadd.xlane.f32.xlu0 %v448
        %v450 = vpop.xlane.xlu0 %449
        %v451 = vrcp.pop 256.0
        %v452 = vmul.f32 %v447, %v451
        %v453 = vmul.f32 %v450, %v451
        %v454 = vsub.f32 %v441, %v452
        %v455 = vsub.f32 %v442, %v452
        %v456 = vsub.f32 %v443, %v453
        %v457 = vsub.f32 %v444, %v453
        %v458 = vmul.f32 %v454, %v454
        %v459 = vmul.f32 %v455, %v455
        %v460 = vmul.f32 %v456, %v456
        %v461 = vmul.f32 %v457, %v457
        %v462 = vadd.f32 %v458, %v459
        %463 = vadd.xlane.f32.xlu0 %v462
        %v464 = vpop.xlane.xlu0 %463
        %v465 = vadd.f32 %v460, %v461
        %466 = vadd.xlane.f32.xlu0 %v465
        %v467 = vpop.xlane.xlu0 %466
        %v468 = vmul.f32 %v464, %v451
        %v469 = vmul.f32 %v467, %v451
        %v470 = vadd.f32 %v468, 1e-05
        %v471 = vadd.f32 %v469, 1e-05
        %v472 = vrsqrt.pop %v470
        %v473 = vrsqrt.pop %v471
        %v474 = vmul.f32 %v454, %v472
        %v475 = vmul.f32 %v455, %v472
        %v476 = vmul.f32 %v456, %v473
        %v477 = vmul.f32 %v457, %v473
        %v478 = vld [vmem:[%s3] sm:$0x3]
        %v480 = vlaneseq
        %v481 = vshrl.u32 %v480, 7
        %v482 = vsub.s32 0, %v481
        %v483 = vrot.slane %v478, %v482
        %v484 = vlaneseq
        %v485 = vshrl.u32 %v484, 7
        %v486 = vsub.s32 1, %v485
        %v487 = vrot.slane %v478, %v486
        %v490 = vmul.f32 %v474, %v483
        %v491 = vmul.f32 %v475, %v487
        %v492 = vmul.f32 %v476, %v483
        %v493 = vmul.f32 %v477, %v487
        %v494 = vld [vmem:[%s4] sm:$0x3]
        %v496 = vlaneseq
        %v497 = vshrl.u32 %v496, 7
        %v498 = vsub.s32 0, %v497
        %v499 = vrot.slane %v494, %v498
        %v500 = vlaneseq
        %v501 = vshrl.u32 %v500, 7
        %v502 = vsub.s32 1, %v501
        %v503 = vrot.slane %v494, %v502
        %v506 = vadd.f32 %v490, %v499
        %v507 = vadd.f32 %v491, %v503
        %v508 = vadd.f32 %v492, %v499
        %v509 = vadd.f32 %v493, %v503
        %v510 = vpack.c.bf16 %v508, %v506
        %v511 = vpack.c.bf16 %v509, %v507
        %v512 = vld [vmem:[%s394] sm:$0xf]
        %v513 = vld [vmem:[%s394 + $0x4] sm:$0xf]
        %v514 = vld [vmem:[%s394 + $0x8] sm:$0xf]
        %v515 = vld [vmem:[%s394 + $0xc] sm:$0xf]
        %v516 = vld [vmem:[%s394 + $0x10] sm:$0xf]
        %v517 = vld [vmem:[%s394 + $0x14] sm:$0xf]
        %v518 = vld [vmem:[%s394 + $0x18] sm:$0xf]
        %v519 = vld [vmem:[%s394 + $0x1c] sm:$0xf]
        %v520 = vld [vmem:[%s394 + $0x20] sm:$0xf]
        %v521 = vld [vmem:[%s394 + $0x24] sm:$0xf]
        %v522 = vld [vmem:[%s394 + $0x28] sm:$0xf]
        %v523 = vld [vmem:[%s394 + $0x2c] sm:$0xf]
        %v524 = vld [vmem:[%s394 + $0x30] sm:$0xf]
        %v525 = vld [vmem:[%s394 + $0x34] sm:$0xf]
        %v526 = vld [vmem:[%s394 + $0x38] sm:$0xf]
        %v527 = vld [vmem:[%s394 + $0x3c] sm:$0xf]
        %v528 = vld [vmem:[%s394 + $0x40] sm:$0xf]
        %v529 = vld [vmem:[%s394 + $0x44] sm:$0xf]
        %v530 = vld [vmem:[%s394 + $0x48] sm:$0xf]
        %v531 = vld [vmem:[%s394 + $0x4c] sm:$0xf]
        %v532 = vld [vmem:[%s394 + $0x50] sm:$0xf]
        %v533 = vld [vmem:[%s394 + $0x54] sm:$0xf]
        %v534 = vld [vmem:[%s394 + $0x58] sm:$0xf]
        %v535 = vld [vmem:[%s394 + $0x5c] sm:$0xf]
        %v536 = vld [vmem:[%s394 + $0x60] sm:$0xf]
        %v537 = vld [vmem:[%s394 + $0x64] sm:$0xf]
        %v538 = vld [vmem:[%s394 + $0x68] sm:$0xf]
        %v539 = vld [vmem:[%s394 + $0x6c] sm:$0xf]
        %v540 = vld [vmem:[%s394 + $0x70] sm:$0xf]
        %v541 = vld [vmem:[%s394 + $0x74] sm:$0xf]
        %v542 = vld [vmem:[%s394 + $0x78] sm:$0xf]
        %v543 = vld [vmem:[%s394 + $0x7c] sm:$0xf]
        %v544 = vld [vmem:[%s436] sm:$0x1]
        %v546 = vlaneseq
        %v547 = vshrl.u32 %v546, 7
        %v548 = vsub.s32 0, %v547
        %v549 = vrot.slane %v544, %v548
        %v583 = vunpack.c.l.b16 %v512
        %v584 = vunpack.c.l.b16 %v513
        %v585 = vunpack.c.l.b16 %v514
        %v586 = vunpack.c.l.b16 %v515
        %v587 = vunpack.c.l.b16 %v516
        %v588 = vunpack.c.l.b16 %v517
        %v589 = vunpack.c.l.b16 %v518
        %v590 = vunpack.c.l.b16 %v519
        %v591 = vunpack.c.l.b16 %v520
        %v592 = vunpack.c.l.b16 %v521
        %v593 = vunpack.c.l.b16 %v522
        %v594 = vunpack.c.l.b16 %v523
        %v595 = vunpack.c.l.b16 %v524
        %v596 = vunpack.c.l.b16 %v525
        %v597 = vunpack.c.l.b16 %v526
        %v598 = vunpack.c.l.b16 %v527
        %v599 = vunpack.c.l.b16 %v528
        %v600 = vunpack.c.l.b16 %v529
        %v601 = vunpack.c.l.b16 %v530
        %v602 = vunpack.c.l.b16 %v531
        %v603 = vunpack.c.l.b16 %v532
        %v604 = vunpack.c.l.b16 %v533
        %v605 = vunpack.c.l.b16 %v534
        %v606 = vunpack.c.l.b16 %v535
        %v607 = vunpack.c.l.b16 %v536
        %v608 = vunpack.c.l.b16 %v537
        %v609 = vunpack.c.l.b16 %v538
        %v610 = vunpack.c.l.b16 %v539
        %v611 = vunpack.c.l.b16 %v540
        %v612 = vunpack.c.l.b16 %v541
        %v613 = vunpack.c.l.b16 %v542
        %v614 = vunpack.c.l.b16 %v543
        %v615 = vpack.c.b16 %v584, %v583
        %v616 = vpack.c.b16 %v586, %v585
        %v617 = vpack.c.b16 %v588, %v587
        %v618 = vpack.c.b16 %v590, %v589
        %v619 = vpack.c.b16 %v592, %v591
        %v620 = vpack.c.b16 %v594, %v593
        %v621 = vpack.c.b16 %v596, %v595
        %v622 = vpack.c.b16 %v598, %v597
        %v623 = vpack.c.b16 %v600, %v599
        %v624 = vpack.c.b16 %v602, %v601
        %v625 = vpack.c.b16 %v604, %v603
        %v626 = vpack.c.b16 %v606, %v605
        %v627 = vpack.c.b16 %v608, %v607
        %v628 = vpack.c.b16 %v610, %v609
        %v629 = vpack.c.b16 %v612, %v611
        %v630 = vpack.c.b16 %v614, %v613
        %647 = vmatprep.subr.bf16.mxu0 0
        %648 = vmatpush1.bf16.msra.mxu0 %v615
        %649 = vmatprep.subr.bf16.mxu0 0
        %650 = vmatpush1.bf16.msra.mxu0 %v616
        %651 = vmatprep.subr.bf16.mxu0 0
        %652 = vmatpush1.bf16.msra.mxu0 %v617
        %653 = vmatprep.subr.bf16.mxu0 0
        %654 = vmatpush1.bf16.msra.mxu0 %v618
        %655 = vmatprep.subr.bf16.mxu0 0
        %656 = vmatpush1.bf16.msra.mxu0 %v619
        %657 = vmatprep.subr.bf16.mxu0 0
        %658 = vmatpush1.bf16.msra.mxu0 %v620
        %659 = vmatprep.subr.bf16.mxu0 0
        %660 = vmatpush1.bf16.msra.mxu0 %v621
        %661 = vmatprep.subr.bf16.mxu0 0
        %662 = vmatpush1.bf16.msra.mxu0 %v622
        %663 = vmatprep.subr.bf16.mxu0 0
        %664 = vmatpush1.bf16.msra.mxu0 %v623
        %665 = vmatprep.subr.bf16.mxu0 0
        %666 = vmatpush1.bf16.msra.mxu0 %v624
        %667 = vmatprep.subr.bf16.mxu0 0
        %668 = vmatpush1.bf16.msra.mxu0 %v625
        %669 = vmatprep.subr.bf16.mxu0 0
        %670 = vmatpush1.bf16.msra.mxu0 %v626
        %671 = vmatprep.subr.bf16.mxu0 0
        %672 = vmatpush1.bf16.msra.mxu0 %v627
        %673 = vmatprep.subr.bf16.mxu0 0
        %674 = vmatpush1.bf16.msra.mxu0 %v628
        %675 = vmatprep.subr.bf16.mxu0 0
        %676 = vmatpush1.bf16.msra.mxu0 %v629
        %677 = vmatprep.subr.bf16.mxu0 0
        %678 = vmatpush1.bf16.msra.mxu0 %v630
        %679 = vmatprep.mubr.bf16.mxu0 %v511
        %680 = vmatmul.mubr.bf16.gmra.mrb[0].mxu0 %v510
        %v681 = vpop.f32.mrb[0].mxu0
        %v682 = vadd.f32 %v549, %v681
        %v683 = vpop.f32.mrb[0].mxu0
        %v684 = vpop.f32.mrb[0].mxu0
        %v685 = vadd.f32 %v549, %v684
        %v686 = vpop.f32.mrb[0].mxu0
        %687 = vdwg.mxu0
        %v688 = vmul.f32 %v682, 0.5
        %v689 = vmul.f32 %v685, 0.5
        %v690 = vmul.f32 %v682, 0.044715
        %v691 = vmul.f32 %v685, 0.044715
        %v692 = vmul.f32 %v690, %v682
        %v693 = vmul.f32 %v691, %v685
        %v694 = vmul.f32 %v692, %v682
        %v695 = vmul.f32 %v693, %v685
        %v696 = vadd.f32 %v682, %v694
        %v697 = vadd.f32 %v685, %v695
        %v698 = vmul.f32 %v696, 0.7978846
        %v699 = vmul.f32 %v697, 0.7978846
        %v700 = vtanh.pop %v698
        %v701 = vtanh.pop %v699
        %v702 = vadd.f32 %v700, 1.0
        %v703 = vadd.f32 %v701, 1.0
        %v704 = vmul.f32 %v688, %v702
        %v705 = vmul.f32 %v689, %v703
        %v706 = vpack.c.bf16 %v705, %v704
        %v708 = vunpack.c.l.b16 %v706
        %v709 = vunpack.c.h.b16 %v706
        %v710 = vpack.c.b16 %v708, %v708
        %v711 = vpack.c.b16 %v709, %v709
        %714 = vst [vmem:[%s426] sm:$0xf] %v710
        %715 = vst [vmem:[%s426 + $0x4] sm:$0xf] %v711
        %s716 = sand.u32 %s158, 1
        %s717 = sand.u32 %s158, 1
        %s718 = smul.addr %s717, 8
        %s719 = scalar_lea.vmem [#allocation3], %s718
        // Predicated region
        $region82: #{whisper_encoder_forward.18} parent=76 // pred_check
          %p720 = pneg %p168
        $region83: #{whisper_encoder_forward.18} parent=76 // pred_check_branch
          %722 = sbr.rel (%p720) target = $region85
        $region84: #{whisper_encoder_forward.18} parent=76 // pred_region
          %s723 = smul.u32 2, %s20
          %s724 = smul.addr %s723, 4
          %s725 = sadd.s32 %s21, %s724
          %s726 = smul.addr %s725, 4
          %s727 = scalar_lea.vmem %s5, %s726
          // Predicated region
          $region86: #{whisper_encoder_forward.18} parent=84 // pred_check
            _
          $region87: #{whisper_encoder_forward.18} parent=84 // pred_check_branch
            %729 = sbr.rel (0) target = $region89
          $region88: #{whisper_encoder_forward.18} parent=84 // pred_region
            // Predicated region
            $region90: #{whisper_encoder_forward.18} parent=88 // pred_check
              _
            $region91: #{whisper_encoder_forward.18} parent=88 // pred_check_branch
              %731 = sbr.rel target = $region93
            $region92: #{whisper_encoder_forward.18} parent=88 // pred_region
              // Predicated region
              $region105: #{whisper_encoder_forward.18} parent=92 // pred_check
                _
              $region106: #{whisper_encoder_forward.18} parent=92 // pred_check_branch
                %748 = sbr.rel (0) target = $region108
              $region107: #{whisper_encoder_forward.18} parent=92 // pred_region
                loop: start=0, step=1, limit=1
                $region109: #{whisper_encoder_forward.18} parent=107 // loop_pre_header
                  _
                $region110: #{whisper_encoder_forward.18} parent=107 // loop_header
                  %s750 = sphi 0, %s754
                  %p751 = scmp.ge.s32.totalorder %s750, 1
                  %s755 = sphi %s719, %s719
                  %s756 = sphi %s727, %s727
                $region111: #{whisper_encoder_forward.18} parent=107 // loop_header_branch
                  %753 = sbr.rel (%p751) target = $region115
                $region112: #{whisper_encoder_forward.18} parent=107 // loop_body
                  _
                $region113: #{whisper_encoder_forward.18} parent=107 // loop_footer
                  %s754 = sadd.s32 1, %s750
                $region114: #{whisper_encoder_forward.18} parent=107 // loop_footer_branch
                  %749 = sbr.rel target = $region110
                $region115: #{whisper_encoder_forward.18} parent=107 // loop_exit
                  _
                loop: start=0, step=1, limit=1
                $region116: #{whisper_encoder_forward.18} parent=107 // loop_pre_header
                  _
                $region117: #{whisper_encoder_forward.18} parent=107 // loop_header
                  %s759 = sphi 0, %s763
                  %p760 = scmp.ge.s32.totalorder %s759, 1
                  %s764 = sphi %s719, %s719
                  %s765 = sphi %s727, %s727
                $region118: #{whisper_encoder_forward.18} parent=107 // loop_header_branch
                  %762 = sbr.rel (%p760) target = $region122
                $region119: #{whisper_encoder_forward.18} parent=107 // loop_body
                  %v766 = vld [vmem:[%s764] sm:$0xf]
                  %767 = vst [vmem:[%s765] sm:$0xf] %v766
                  %v768 = vld [vmem:[%s764 + $0x4] sm:$0xf]
                  %769 = vst [vmem:[%s765 + $0x10] sm:$0xf] %v768
                $region120: #{whisper_encoder_forward.18} parent=107 // loop_footer
                  %s763 = sadd.s32 1, %s759
                $region121: #{whisper_encoder_forward.18} parent=107 // loop_footer_branch
                  %758 = sbr.rel target = $region117
                $region122: #{whisper_encoder_forward.18} parent=107 // loop_exit
                  _
              $region108: #{whisper_encoder_forward.18} parent=92 // pred_fallthru
                _
            $region93: #{whisper_encoder_forward.18} parent=88 // pred_fallthru
              _
            // Predicated region
            $region94: #{whisper_encoder_forward.18} parent=88 // pred_check
              _
            $region95: #{whisper_encoder_forward.18} parent=88 // pred_check_branch
              %733 = sbr.rel (0) target = $region97
            $region96: #{whisper_encoder_forward.18} parent=88 // pred_region
              loop: start=0, step=1, limit=1
              $region98: #{whisper_encoder_forward.18} parent=96 // loop_pre_header
                _
              $region99: #{whisper_encoder_forward.18} parent=96 // loop_header
                %s736 = sphi 0, %s740
                %p737 = scmp.ge.s32.totalorder %s736, 1
                %s741 = sphi %s719, %s719
                %s742 = sphi %s727, %s727
              $region100: #{whisper_encoder_forward.18} parent=96 // loop_header_branch
                %739 = sbr.rel (%p737) target = $region104
              $region101: #{whisper_encoder_forward.18} parent=96 // loop_body
                %v743 = vld [vmem:[%s741] sm:$0xf]
                %744 = vst [vmem:[%s742] sm:$0xf] %v743
                %v745 = vld [vmem:[%s741 + $0x4] sm:$0xf]
                %746 = vst [vmem:[%s742 + $0x10] sm:$0xf] %v745
              $region102: #{whisper_encoder_forward.18} parent=96 // loop_footer
                %s740 = sadd.s32 1, %s736
              $region103: #{whisper_encoder_forward.18} parent=96 // loop_footer_branch
                %735 = sbr.rel target = $region99
              $region104: #{whisper_encoder_forward.18} parent=96 // loop_exit
                _
            $region97: #{whisper_encoder_forward.18} parent=88 // pred_fallthru
              _
          $region89: #{whisper_encoder_forward.18} parent=84 // pred_fallthru
            _
          %770 = vnop
        $region85: #{whisper_encoder_forward.18} parent=76 // pred_fallthru
          _
      $region77: #{whisper_encoder_forward.18} parent=5 // pred_fallthru
        _
      %p771 = scmp.le.s32.totalorder 2, %s11
      // Predicated region
      $region123: #{whisper_encoder_forward.18} parent=5 // pred_check
        %p772 = pneg %p771
      $region124: #{whisper_encoder_forward.18} parent=5 // pred_check_branch
        %774 = sbr.rel (%p772) target = $region126
      $region125: #{whisper_encoder_forward.18} parent=5 // pred_region
        %s775 = ssub.s32 %s11, 2
        // Predicated region
        $region127: #{whisper_encoder_forward.18} parent=125 // pred_check
          %p776 = pneg %p174
        $region128: #{whisper_encoder_forward.18} parent=125 // pred_check_branch
          %778 = sbr.rel (%p776) target = $region130
        $region129: #{whisper_encoder_forward.18} parent=125 // pred_region
          %s779 = sand.u32 %s159, 1
          %s780 = sand.u32 %s159, 1
          %s781 = smul.addr %s780, 8
          %s782 = scalar_lea.vmem [#allocation3], %s781
        $region130: #{whisper_encoder_forward.18} parent=125 // pred_fallthru
          _
      $region126: #{whisper_encoder_forward.18} parent=5 // pred_fallthru
        _
    $region6: #{whisper_encoder_forward.18} parent=1 // loop_footer
      %s15 = sadd.s32 1, %s11
    $region7: #{whisper_encoder_forward.18} parent=1 // loop_footer_branch
      %10 = sbr.rel target = $region3
    $region8: #{whisper_encoder_forward.18} parent=1 // loop_exit
      _

// kernel: whisper_encoder_forward.25
$region0: #{whisper_encoder_forward.25}
  #allocation0 [shape = 'u32[]', space=smem, size = 0x4, offset = 0x4, fixed_abs, tag = 'smem constant byte address 0x4 - core index']
  #allocation1 [shape = 'u32[144,128]{1,0:T(1,128)}', space=vmem, size = 0x12000, scoped, tag = 'internal scratch']
  %s0 = inlined_call_operand.vmem [shape: bf16[32,256], index: 0, kind: input, shape index: {}]
  %s1 = inlined_call_operand.vmem [shape: f32[1,256], index: 1, kind: input, shape index: {}]
  %s2 = inlined_call_operand.vmem [shape: f32[1,256], index: 2, kind: input, shape index: {}]
  %s3 = inlined_call_operand.vmem [shape: f32[32,256], index: 3, kind: output, shape index: {}]
  %s4 = sld [smem:[#allocation0]]
  $region45: #{whisper_encoder_forward.25} parent=0
    _
  %s6 = ssub.s32 1, %s4
  %s7 = scalar_select 0, %s6, %s4
  loop: start=0, step=1, limit=4
  $region2: #{whisper_encoder_forward.25} parent=0 // loop_pre_header
    _
  $region3: #{whisper_encoder_forward.25} parent=0 // loop_header
    %s9 = sphi 0, %s13
    %p10 = scmp.ge.s32.totalorder %s9, 4
    %s19 = sphi 0, %s21
    %s22 = sphi 0, %s19
    %s23 = sphi 0, %s22
    %s39 = sphi 0, %s23
    %s43 = sphi 0, %s43
    %s45 = sphi 0, %s43
    %s46 = sphi 0, %s45
    %s60 = sphi 0, %s46
    %s64 = sphi 0, %s64
    %s66 = sphi 0, %s64
    %s67 = sphi 0, %s66
    %s81 = sphi 0, %s67
    %s87 = sphi 0, %s89
    %s90 = sphi 0, %s87
    %s91 = sphi 0, %s90
    %s107 = sphi 0, %s91
  $region4: #{whisper_encoder_forward.25} parent=0 // loop_header_branch
    %12 = sbr.rel (%p10) target = $region8
  $region5: #{whisper_encoder_forward.25} parent=0 // loop_body
    %s14 = ssub.s32 %s9, 1
    %s15 = ssub.s32 %s9, 2
    %s16 = sadd.s32 %s9, 1
    %s17 = ssub.s32 %s9, %s16
    %p18 = scmp.eq.s32.totalorder %s17, 0
    %s20 = sadd.s32 %s19, 1
    %s21 = scalar_select %p18, %s19, %s20
    %p24 = pneg %p18
    %p25 = scmp.eq.s32.totalorder %s9, 1
    %p26 = por %p24, %p25
    %p27 = scmp.ne.s32.totalorder %s19, %s22
    %p28 = scmp.eq.s32.totalorder %s9, 0
    %p29 = por %p27, %p28
    %p30 = scmp.ne.s32.totalorder %s19, %s22
    %p31 = scmp.eq.s32.totalorder %s14, 1
    %p32 = por %p30, %p31
    %p33 = scmp.ne.s32.totalorder %s22, %s23
    %p34 = scmp.eq.s32.totalorder %s14, 0
    %p35 = por %p33, %p34
    %p36 = scmp.ne.s32.totalorder %s22, %s23
    %p37 = scmp.eq.s32.totalorder %s15, 1
    %p38 = por %p36, %p37
    %p40 = scmp.ne.s32.totalorder %s23, %s39
    %p41 = scmp.eq.s32.totalorder %s15, 0
    %p42 = por %p40, %p41
    %s44 = sadd.s32 %s43, 1
    %p47 = scmp.eq.s32.totalorder %s9, 1
    %p48 = scmp.ne.s32.totalorder %s43, %s45
    %p49 = scmp.eq.s32.totalorder %s9, 0
    %p50 = por %p48, %p49
    %p51 = scmp.ne.s32.totalorder %s43, %s45
    %p52 = scmp.eq.s32.totalorder %s14, 1
    %p53 = por %p51, %p52
    %p54 = scmp.ne.s32.totalorder %s45, %s46
    %p55 = scmp.eq.s32.totalorder %s14, 0
    %p56 = por %p54, %p55
    %p57 = scmp.ne.s32.totalorder %s45, %s46
    %p58 = scmp.eq.s32.totalorder %s15, 1
    %p59 = por %p57, %p58
    %p61 = scmp.ne.s32.totalorder %s46, %s60
    %p62 = scmp.eq.s32.totalorder %s15, 0
    %p63 = por %p61, %p62
    %s65 = sadd.s32 %s64, 1
    %p68 = scmp.eq.s32.totalorder %s9, 1
    %p69 = scmp.ne.s32.totalorder %s64, %s66
    %p70 = scmp.eq.s32.totalorder %s9, 0
    %p71 = por %p69, %p70
    %p72 = scmp.ne.s32.totalorder %s64, %s66
    %p73 = scmp.eq.s32.totalorder %s14, 1
    %p74 = por %p72, %p73
    %p75 = scmp.ne.s32.totalorder %s66, %s67
    %p76 = scmp.eq.s32.totalorder %s14, 0
    %p77 = por %p75, %p76
    %p78 = scmp.ne.s32.totalorder %s66, %s67
    %p79 = scmp.eq.s32.totalorder %s15, 1
    %p80 = por %p78, %p79
    %p82 = scmp.ne.s32.totalorder %s67, %s81
    %p83 = scmp.eq.s32.totalorder %s15, 0
    %p84 = por %p82, %p83
    %s85 = ssub.s32 %s9, %s16
    %p86 = scmp.eq.s32.totalorder %s85, 0
    %s88 = sadd.s32 %s87, 1
    %s89 = scalar_select %p86, %s87, %s88
    %p92 = pneg %p86
    %p93 = scmp.eq.s32.totalorder %s9, 1
    %p94 = por %p92, %p93
    %p95 = scmp.ne.s32.totalorder %s87, %s90
    %p96 = scmp.eq.s32.totalorder %s9, 0
    %p97 = por %p95, %p96
    %p98 = scmp.ne.s32.totalorder %s87, %s90
    %p99 = scmp.eq.s32.totalorder %s14, 1
    %p100 = por %p98, %p99
    %p101 = scmp.ne.s32.totalorder %s90, %s91
    %p102 = scmp.eq.s32.totalorder %s14, 0
    %p103 = por %p101, %p102
    %p104 = scmp.ne.s32.totalorder %s90, %s91
    %p105 = scmp.eq.s32.totalorder %s15, 1
    %p106 = por %p104, %p105
    %p108 = scmp.ne.s32.totalorder %s91, %s107
    %p109 = scmp.eq.s32.totalorder %s15, 0
    %p110 = por %p108, %p109
    %p111 = scmp.le.s32.totalorder 1, %s9
    %p112 = scmp.lt.s32.totalorder %s9, 3
    %p113 = pnand %p111, %p112
    %p114 = pneg %p113
    // Predicated region
    $region9: #{whisper_encoder_forward.25} parent=5 // pred_check
      _
    $region10: #{whisper_encoder_forward.25} parent=5 // pred_check_branch
      %116 = sbr.rel (%p113) target = $region12
    $region11: #{whisper_encoder_forward.25} parent=5 // pred_region
      %s117 = ssub.s32 %s9, 1
      // Predicated region
      $region13: #{whisper_encoder_forward.25} parent=11 // pred_check
        %p118 = pneg %p56
      $region14: #{whisper_encoder_forward.25} parent=11 // pred_check_branch
        %120 = sbr.rel (%p118) target = $region16
      $region15: #{whisper_encoder_forward.25} parent=11 // pred_region
        _
      $region16: #{whisper_encoder_forward.25} parent=11 // pred_fallthru
        _
      // Predicated region
      $region17: #{whisper_encoder_forward.25} parent=11 // pred_check
        %p121 = pneg %p77
      $region18: #{whisper_encoder_forward.25} parent=11 // pred_check_branch
        %123 = sbr.rel (%p121) target = $region20
      $region19: #{whisper_encoder_forward.25} parent=11 // pred_region
        _
      $region20: #{whisper_encoder_forward.25} parent=11 // pred_fallthru
        _
    $region12: #{whisper_encoder_forward.25} parent=5 // pred_fallthru
      _
    %p124 = scmp.lt.s32.totalorder %s9, 2
    // Predicated region
    $region21: #{whisper_encoder_forward.25} parent=5 // pred_check
      %p125 = pneg %p124
    $region22: #{whisper_encoder_forward.25} parent=5 // pred_check_branch
      %127 = sbr.rel (%p125) target = $region24
    $region23: #{whisper_encoder_forward.25} parent=5 // pred_region
      // Predicated region
      $region25: #{whisper_encoder_forward.25} parent=23 // pred_check
        %p128 = pneg %p29
      $region26: #{whisper_encoder_forward.25} parent=23 // pred_check_branch
        %130 = sbr.rel (%p128) target = $region28
      $region27: #{whisper_encoder_forward.25} parent=23 // pred_region
        %s131 = smul.u32 2, %s9
        %p132 = scmp.lt.s32.totalorder %s131, 3
        %s133 = scalar_select %p132, %s131, 3
        %s134 = smul.addr %s133, 2
        %s135 = smul.addr %s134, 4
        %s136 = scalar_lea.vmem %s0, %s135
        %s137 = smul.u32 2, %s9
      $region28: #{whisper_encoder_forward.25} parent=23 // pred_fallthru
        _
    $region24: #{whisper_encoder_forward.25} parent=5 // pred_fallthru
      _
    %p138 = scmp.le.s32.totalorder 1, %s9
    %p139 = scmp.lt.s32.totalorder %s9, 3
    %p140 = pnand %p138, %p139
    %p141 = pneg %p140
    // Predicated region
    $region29: #{whisper_encoder_forward.25} parent=5 // pred_check
      _
    $region30: #{whisper_encoder_forward.25} parent=5 // pred_check_branch
      %143 = sbr.rel (%p140) target = $region32
    $region31: #{whisper_encoder_forward.25} parent=5 // pred_region
      %s144 = ssub.s32 %s9, 1
      %s145 = smul.u32 2, %s14
      %p146 = scmp.lt.s32.totalorder %s145, 3
      %s147 = scalar_select %p146, %s145, 3
      %s148 = smul.addr %s147, 2
      %s149 = smul.addr %s148, 4
      %s150 = scalar_lea.vmem %s0, %s149
      %p151 = pneg %p35
      %p152 = pneg %p32
      %p153 = pneg %p56
      %p154 = pneg %p53
      %p155 = pneg %p77
      %p156 = pneg %p74
      %p157 = pneg %p103
      %p158 = pneg %p100
      %s159 = smul.u32 2, %s14
      %p160 = scmp.lt.s32.totalorder %s159, 3
      %s161 = scalar_select %p160, %s159, 3
      %s162 = smul.addr %s161, 2
      %s163 = smul.addr %s162, 8
      %s164 = scalar_lea.vmem %s3, %s163
      %s165 = smul.u32 2, %s14
      %p166 = scmp.lt.s32.totalorder %s165, 3
      %s167 = scalar_select %p166, %s165, 3
      %s168 = smul.addr %s167, 2
      %s169 = smul.addr %s168, 4
      %s170 = scalar_lea.vmem %s0, %s169
      %s171 = smul.u32 2, %s14
      %s172 = smul.u32 2, %s14
      %p173 = scmp.lt.s32.totalorder %s172, 3
      %s174 = scalar_select %p173, %s172, 3
      %s175 = smul.addr %s174, 2
      %s176 = smul.addr %s175, 8
      %s177 = scalar_lea.vmem %s3, %s176
      %s178 = smul.u32 2, %s14
      %v179 = vld [vmem:[%s170] sm:$0xff]
      %v180 = vld [vmem:[%s170 + $0x8] sm:$0xff]
      %v181 = vunpack.c.l.bf16 %v179
      %v182 = vunpack.c.h.bf16 %v179
      %v183 = vunpack.c.l.bf16 %v180
      %v184 = vunpack.c.h.bf16 %v180
      %v185 = vadd.f32 %v181, %v182
      %186 = vadd.xlane.f32.xlu0 %v185
      %v187 = vpop.xlane.xlu0 %186
      %v188 = vadd.f32 %v183, %v184
      %189 = vadd.xlane.f32.xlu0 %v188
      %v190 = vpop.xlane.xlu0 %189
      %v191 = vrcp.pop 256.0
      %v192 = vmul.f32 %v187, %v191
      %v193 = vmul.f32 %v190, %v191
      %v194 = vsub.f32 %v181, %v192
      %v195 = vsub.f32 %v182, %v192
      %v196 = vsub.f32 %v183, %v193
      %v197 = vsub.f32 %v184, %v193
      %v198 = vmul.f32 %v194, %v194
      %v199 = vmul.f32 %v195, %v195
      %v200 = vmul.f32 %v196, %v196
      %v201 = vmul.f32 %v197, %v197
      %v202 = vadd.f32 %v198, %v199
      %203 = vadd.xlane.f32.xlu0 %v202
      %v204 = vpop.xlane.xlu0 %203
      %v205 = vadd.f32 %v200, %v201
      %206 = vadd.xlane.f32.xlu0 %v205
      %v207 = vpop.xlane.xlu0 %206
      %v208 = vmul.f32 %v204, %v191
      %v209 = vmul.f32 %v207, %v191
      %v210 = vadd.f32 %v208, 1e-05
      %v211 = vadd.f32 %v209, 1e-05
      %v212 = vrsqrt.pop %v210
      %v213 = vrsqrt.pop %v211
      %v214 = vmul.f32 %v194, %v212
      %v215 = vmul.f32 %v195, %v212
      %v216 = vmul.f32 %v196, %v213
      %v217 = vmul.f32 %v197, %v213
      %v218 = vld [vmem:[%s1] sm:$0x3]
      %v220 = vlaneseq
      %v221 = vshrl.u32 %v220, 7
      %v222 = vsub.s32 0, %v221
      %v223 = vrot.slane %v218, %v222
      %v224 = vlaneseq
      %v225 = vshrl.u32 %v224, 7
      %v226 = vsub.s32 1, %v225
      %v227 = vrot.slane %v218, %v226
      %v230 = vmul.f32 %v214, %v223
      %v231 = vmul.f32 %v215, %v227
      %v232 = vmul.f32 %v216, %v223
      %v233 = vmul.f32 %v217, %v227
      %v234 = vld [vmem:[%s2] sm:$0x3]
      %v236 = vlaneseq
      %v237 = vshrl.u32 %v236, 7
      %v238 = vsub.s32 0, %v237
      %v239 = vrot.slane %v234, %v238
      %v240 = vlaneseq
      %v241 = vshrl.u32 %v240, 7
      %v242 = vsub.s32 1, %v241
      %v243 = vrot.slane %v234, %v242
      %v246 = vadd.f32 %v230, %v239
      %v247 = vadd.f32 %v231, %v243
      %v248 = vadd.f32 %v232, %v239
      %v249 = vadd.f32 %v233, %v243
      %250 = vst [vmem:[%s177] sm:$0xff] %v246
      %251 = vst [vmem:[%s177 + $0x8] sm:$0xff] %v247
      %252 = vst [vmem:[%s177 + $0x10] sm:$0xff] %v248
      %253 = vst [vmem:[%s177 + $0x18] sm:$0xff] %v249
      %s254 = smul.u32 2, %s14
      %p255 = scmp.lt.s32.totalorder %s254, 3
      %s256 = scalar_select %p255, %s254, 3
      %s257 = smul.addr %s256, 2
      %s258 = smul.addr %s257, 8
      %s259 = scalar_lea.vmem %s3, %s258
      // Predicated region
      $region33: #{whisper_encoder_forward.25} parent=31 // pred_check
        %p260 = pneg %p100
      $region34: #{whisper_encoder_forward.25} parent=31 // pred_check_branch
        %262 = sbr.rel (%p260) target = $region36
      $region35: #{whisper_encoder_forward.25} parent=31 // pred_region
        %s263 = smul.u32 2, %s14
      $region36: #{whisper_encoder_forward.25} parent=31 // pred_fallthru
        _
    $region32: #{whisper_encoder_forward.25} parent=5 // pred_fallthru
      _
    %p264 = scmp.le.s32.totalorder 2, %s9
    // Predicated region
    $region37: #{whisper_encoder_forward.25} parent=5 // pred_check
      %p265 = pneg %p264
    $region38: #{whisper_encoder_forward.25} parent=5 // pred_check_branch
      %267 = sbr.rel (%p265) target = $region40
    $region39: #{whisper_encoder_forward.25} parent=5 // pred_region
      %s268 = ssub.s32 %s9, 2
      // Predicated region
      $region41: #{whisper_encoder_forward.25} parent=39 // pred_check
        %p269 = pneg %p106
      $region42: #{whisper_encoder_forward.25} parent=39 // pred_check_branch
        %271 = sbr.rel (%p269) target = $region44
      $region43: #{whisper_encoder_forward.25} parent=39 // pred_region
        %s272 = smul.u32 2, %s15
        %p273 = scmp.lt.s32.totalorder %s272, 3
        %s274 = scalar_select %p273, %s272, 3
        %s275 = smul.addr %s274, 2
        %s276 = smul.addr %s275, 8
        %s277 = scalar_lea.vmem %s3, %s276
      $region44: #{whisper_encoder_forward.25} parent=39 // pred_fallthru
        _
    $region40: #{whisper_encoder_forward.25} parent=5 // pred_fallthru
      _
  $region6: #{whisper_encoder_forward.25} parent=0 // loop_footer
    %s13 = sadd.s32 1, %s9
  $region7: #{whisper_encoder_forward.25} parent=0 // loop_footer_branch
    %8 = sbr.rel target = $region3
  $region8: #{whisper_encoder_forward.25} parent=0 // loop_exit
    _

// kernel: whisper_encoder_forward.19
$region0: #{whisper_encoder_forward.19}
  #allocation0 [shape = 'u32[]', space=smem, size = 0x4, offset = 0x4, fixed_abs, tag = 'smem constant byte address 0x4 - core index']
  #allocation1 [shape = 'u32[144,128]{1,0:T(1,128)}', space=vmem, size = 0x12000, scoped, tag = 'internal scratch']
  #allocation2 [shape = 'f32[16,128]{1,0:T(8,128)}', space=vmem, size = 0x2000, scoped, tag = 'scratch operand']
  %s0 = inlined_call_operand.vmem [shape: bf16[32,512], index: 0, kind: input, shape index: {}]
  %s1 = inlined_call_operand.vmem [shape: bf16[512,256], index: 1, kind: input, shape index: {}]
  %s2 = inlined_call_operand.vmem [shape: f32[1,256], index: 2, kind: input, shape index: {}]
  %s3 = inlined_call_operand.vmem [shape: bf16[32,256], index: 3, kind: input, shape index: {}]
  %s4 = inlined_call_operand.vmem [shape: bf16[32,256], index: 4, kind: output, shape index: {}]
  %s5 = sld [smem:[#allocation0]]
  $region217: #{whisper_encoder_forward.19} parent=0
    _
  %s7 = ssub.s32 1, %s5
  %s8 = scalar_select 0, %s7, %s5
  $region1: #{whisper_encoder_forward.19} parent=0
    #allocation3 [shape = 'u8[8192]{0}', space=vmem, size = 0x2000, scoped, tag = 'input window, operand 0']
    #allocation4 [shape = 'u8[65536]{0}', space=vmem, size = 0x10000, scoped, tag = 'input window, operand 1']
    #allocation5 [shape = 'u8[8192]{0}', space=vmem, size = 0x2000, scoped, tag = 'input window, operand 3']
    #allocation6 [shape = 'u8[8192]{0}', space=vmem, size = 0x2000, scoped, tag = 'output window, operand 0']
    loop: start=0, step=1, limit=18
    $region2: #{whisper_encoder_forward.19} parent=1 // loop_pre_header
      _
    $region3: #{whisper_encoder_forward.19} parent=1 // loop_header
      %s10 = sphi 0, %s14
      %p11 = scmp.ge.s32.totalorder %s10, 18
      %s17 = sphi 0, %s36
      %s18 = sphi 0, %s32
      %s19 = sphi 0, %s28
      %s20 = sphi 0, %s17
      %s21 = sphi 0, %s18
      %s22 = sphi 0, %s19
      %s23 = sphi 0, %s20
      %s24 = sphi 0, %s21
      %s25 = sphi 0, %s22
      %s41 = sphi 0, %s43
      %s44 = sphi 0, %s41
      %s45 = sphi 0, %s44
      %s61 = sphi 0, %s45
      %s69 = sphi 0, %s71
      %s72 = sphi 0, %s69
      %s73 = sphi 0, %s72
      %s89 = sphi 0, %s73
      %s95 = sphi 0, %s97
      %s98 = sphi 0, %s95
      %s99 = sphi 0, %s98
      %s115 = sphi 0, %s99
      %s123 = sphi 0, %s125
      %s126 = sphi 0, %s123
      %s127 = sphi 0, %s126
      %s143 = sphi 0, %s127
      %s151 = sphi 0, %s153
      %s154 = sphi 0, %s151
      %s155 = sphi 0, %s154
      %s171 = sphi 0, %s155
    $region4: #{whisper_encoder_forward.19} parent=1 // loop_header_branch
      %13 = sbr.rel (%p11) target = $region8
    $region5: #{whisper_encoder_forward.19} parent=1 // loop_body
      %s15 = ssub.s32 %s10, 1
      %s16 = ssub.s32 %s10, 2
      %s26 = sadd.s32 1, %s19
      %p27 = scmp.ge.s32.totalorder %s26, 4
      %s28 = scalar_select %p27, 0, %s26
      %s29 = sadd.s32 1, %s18
      %s30 = scalar_select %p27, %s29, %s18
      %p31 = scmp.ge.s32.totalorder %s30, 2
      %s32 = scalar_select %p31, 0, %s30
      %s33 = sadd.s32 1, %s17
      %s34 = scalar_select %p31, %s33, %s17
      %p35 = scmp.ge.s32.totalorder %s34, 2
      %s36 = scalar_select %p35, 0, %s34
      %s37 = ssub.s32 %s17, %s36
      %s38 = ssub.s32 %s19, %s28
      %s39 = sor.u32 %s37, %s38
      %p40 = scmp.eq.s32.totalorder %s39, 0
      %s42 = sadd.s32 %s41, 1
      %s43 = scalar_select %p40, %s41, %s42
      %p46 = pneg %p40
      %p47 = scmp.eq.s32.totalorder %s10, 15
      %p48 = por %p46, %p47
      %p49 = scmp.ne.s32.totalorder %s41, %s44
      %p50 = scmp.eq.s32.totalorder %s10, 0
      %p51 = por %p49, %p50
      %p52 = scmp.ne.s32.totalorder %s41, %s44
      %p53 = scmp.eq.s32.totalorder %s15, 15
      %p54 = por %p52, %p53
      %p55 = scmp.ne.s32.totalorder %s44, %s45
      %p56 = scmp.eq.s32.totalorder %s15, 0
      %p57 = por %p55, %p56
      %p58 = scmp.ne.s32.totalorder %s44, %s45
      %p59 = scmp.eq.s32.totalorder %s16, 15
      %p60 = por %p58, %p59
      %p62 = scmp.ne.s32.totalorder %s45, %s61
      %p63 = scmp.eq.s32.totalorder %s16, 0
      %p64 = por %p62, %p63
      %s65 = ssub.s32 %s19, %s28
      %s66 = ssub.s32 %s18, %s32
      %s67 = sor.u32 %s65, %s66
      %p68 = scmp.eq.s32.totalorder %s67, 0
      %s70 = sadd.s32 %s69, 1
      %s71 = scalar_select %p68, %s69, %s70
      %p74 = pneg %p68
      %p75 = scmp.eq.s32.totalorder %s10, 15
      %p76 = por %p74, %p75
      %p77 = scmp.ne.s32.totalorder %s69, %s72
      %p78 = scmp.eq.s32.totalorder %s10, 0
      %p79 = por %p77, %p78
      %p80 = scmp.ne.s32.totalorder %s69, %s72
      %p81 = scmp.eq.s32.totalorder %s15, 15
      %p82 = por %p80, %p81
      %p83 = scmp.ne.s32.totalorder %s72, %s73
      %p84 = scmp.eq.s32.totalorder %s15, 0
      %p85 = por %p83, %p84
      %p86 = scmp.ne.s32.totalorder %s72, %s73
      %p87 = scmp.eq.s32.totalorder %s16, 15
      %p88 = por %p86, %p87
      %p90 = scmp.ne.s32.totalorder %s73, %s89
      %p91 = scmp.eq.s32.totalorder %s16, 0
      %p92 = por %p90, %p91
      %s93 = ssub.s32 %s18, %s32
      %p94 = scmp.eq.s32.totalorder %s93, 0
      %s96 = sadd.s32 %s95, 1
      %s97 = scalar_select %p94, %s95, %s96
      %p100 = pneg %p94
      %p101 = scmp.eq.s32.totalorder %s10, 15
      %p102 = por %p100, %p101
      %p103 = scmp.ne.s32.totalorder %s95, %s98
      %p104 = scmp.eq.s32.totalorder %s10, 0
      %p105 = por %p103, %p104
      %p106 = scmp.ne.s32.totalorder %s95, %s98
      %p107 = scmp.eq.s32.totalorder %s15, 15
      %p108 = por %p106, %p107
      %p109 = scmp.ne.s32.totalorder %s98, %s99
      %p110 = scmp.eq.s32.totalorder %s15, 0
      %p111 = por %p109, %p110
      %p112 = scmp.ne.s32.totalorder %s98, %s99
      %p113 = scmp.eq.s32.totalorder %s16, 15
      %p114 = por %p112, %p113
      %p116 = scmp.ne.s32.totalorder %s99, %s115
      %p117 = scmp.eq.s32.totalorder %s16, 0
      %p118 = por %p116, %p117
      %s119 = ssub.s32 %s17, %s36
      %s120 = ssub.s32 %s18, %s32
      %s121 = sor.u32 %s119, %s120
      %p122 = scmp.eq.s32.totalorder %s121, 0
      %s124 = sadd.s32 %s123, 1
      %s125 = scalar_select %p122, %s123, %s124
      %p128 = pneg %p122
      %p129 = scmp.eq.s32.totalorder %s10, 15
      %p130 = por %p128, %p129
      %p131 = scmp.ne.s32.totalorder %s123, %s126
      %p132 = scmp.eq.s32.totalorder %s10, 0
      %p133 = por %p131, %p132
      %p134 = scmp.ne.s32.totalorder %s123, %s126
      %p135 = scmp.eq.s32.totalorder %s15, 15
      %p136 = por %p134, %p135
      %p137 = scmp.ne.s32.totalorder %s126, %s127
      %p138 = scmp.eq.s32.totalorder %s15, 0
      %p139 = por %p137, %p138
      %p140 = scmp.ne.s32.totalorder %s126, %s127
      %p141 = scmp.eq.s32.totalorder %s16, 15
      %p142 = por %p140, %p141
      %p144 = scmp.ne.s32.totalorder %s127, %s143
      %p145 = scmp.eq.s32.totalorder %s16, 0
      %p146 = por %p144, %p145
      %s147 = ssub.s32 %s17, %s36
      %s148 = ssub.s32 %s18, %s32
      %s149 = sor.u32 %s147, %s148
      %p150 = scmp.eq.s32.totalorder %s149, 0
      %s152 = sadd.s32 %s151, 1
      %s153 = scalar_select %p150, %s151, %s152
      %p156 = pneg %p150
      %p157 = scmp.eq.s32.totalorder %s10, 15
      %p158 = por %p156, %p157
      %p159 = scmp.ne.s32.totalorder %s151, %s154
      %p160 = scmp.eq.s32.totalorder %s10, 0
      %p161 = por %p159, %p160
      %p162 = scmp.ne.s32.totalorder %s151, %s154
      %p163 = scmp.eq.s32.totalorder %s15, 15
      %p164 = por %p162, %p163
      %p165 = scmp.ne.s32.totalorder %s154, %s155
      %p166 = scmp.eq.s32.totalorder %s15, 0
      %p167 = por %p165, %p166
      %p168 = scmp.ne.s32.totalorder %s154, %s155
      %p169 = scmp.eq.s32.totalorder %s16, 15
      %p170 = por %p168, %p169
      %p172 = scmp.ne.s32.totalorder %s155, %s171
      %p173 = scmp.eq.s32.totalorder %s16, 0
      %p174 = por %p172, %p173
      %p175 = scmp.le.s32.totalorder 1, %s10
      %p176 = scmp.lt.s32.totalorder %s10, 17
      %p177 = pnand %p175, %p176
      %p178 = pneg %p177
      // Predicated region
      $region9: #{whisper_encoder_forward.19} parent=5 // pred_check
        _
      $region10: #{whisper_encoder_forward.19} parent=5 // pred_check_branch
        %180 = sbr.rel (%p177) target = $region12
      $region11: #{whisper_encoder_forward.19} parent=5 // pred_region
        %s181 = ssub.s32 %s10, 1
      $region12: #{whisper_encoder_forward.19} parent=5 // pred_fallthru
        _
      %p182 = scmp.lt.s32.totalorder %s10, 16
      // Predicated region
      $region13: #{whisper_encoder_forward.19} parent=5 // pred_check
        %p183 = pneg %p182
      $region14: #{whisper_encoder_forward.19} parent=5 // pred_check_branch
        %185 = sbr.rel (%p183) target = $region16
      $region15: #{whisper_encoder_forward.19} parent=5 // pred_region
        // Predicated region
        $region17: #{whisper_encoder_forward.19} parent=15 // pred_check
          %p186 = pneg %p51
        $region18: #{whisper_encoder_forward.19} parent=15 // pred_check_branch
          %188 = sbr.rel (%p186) target = $region20
        $region19: #{whisper_encoder_forward.19} parent=15 // pred_region
          %s189 = sand.u32 %s41, 1
          %s190 = sand.u32 %s41, 1
          %s191 = smul.addr %s190, 8
          %s192 = scalar_lea.vmem [#allocation3], %s191
          %s193 = smul.u32 2, %s17
          %s194 = smul.addr %s193, 4
          %s195 = sadd.s32 %s19, %s194
          %s196 = smul.addr %s195, 4
          %s197 = scalar_lea.vmem %s0, %s196
          // Predicated region
          $region21: #{whisper_encoder_forward.19} parent=19 // pred_check
            _
          $region22: #{whisper_encoder_forward.19} parent=19 // pred_check_branch
            %199 = sbr.rel (0) target = $region24
          $region23: #{whisper_encoder_forward.19} parent=19 // pred_region
            // Predicated region
            $region25: #{whisper_encoder_forward.19} parent=23 // pred_check
              _
            $region26: #{whisper_encoder_forward.19} parent=23 // pred_check_branch
              %201 = sbr.rel target = $region28
            $region27: #{whisper_encoder_forward.19} parent=23 // pred_region
              // Predicated region
              $region40: #{whisper_encoder_forward.19} parent=27 // pred_check
                _
              $region41: #{whisper_encoder_forward.19} parent=27 // pred_check_branch
                %218 = sbr.rel (0) target = $region43
              $region42: #{whisper_encoder_forward.19} parent=27 // pred_region
                loop: start=0, step=1, limit=1
                $region44: #{whisper_encoder_forward.19} parent=42 // loop_pre_header
                  _
                $region45: #{whisper_encoder_forward.19} parent=42 // loop_header
                  %s220 = sphi 0, %s224
                  %p221 = scmp.ge.s32.totalorder %s220, 1
                  %s225 = sphi %s197, %s197
                  %s226 = sphi %s192, %s192
                $region46: #{whisper_encoder_forward.19} parent=42 // loop_header_branch
                  %223 = sbr.rel (%p221) target = $region50
                $region47: #{whisper_encoder_forward.19} parent=42 // loop_body
                  _
                $region48: #{whisper_encoder_forward.19} parent=42 // loop_footer
                  %s224 = sadd.s32 1, %s220
                $region49: #{whisper_encoder_forward.19} parent=42 // loop_footer_branch
                  %219 = sbr.rel target = $region45
                $region50: #{whisper_encoder_forward.19} parent=42 // loop_exit
                  _
                loop: start=0, step=1, limit=1
                $region51: #{whisper_encoder_forward.19} parent=42 // loop_pre_header
                  _
                $region52: #{whisper_encoder_forward.19} parent=42 // loop_header
                  %s229 = sphi 0, %s233
                  %p230 = scmp.ge.s32.totalorder %s229, 1
                  %s234 = sphi %s197, %s197
                  %s235 = sphi %s192, %s192
                $region53: #{whisper_encoder_forward.19} parent=42 // loop_header_branch
                  %232 = sbr.rel (%p230) target = $region57
                $region54: #{whisper_encoder_forward.19} parent=42 // loop_body
                  %v236 = vld [vmem:[%s234] sm:$0xf]
                  %237 = vst [vmem:[%s235] sm:$0xf] %v236
                  %v238 = vld [vmem:[%s234 + $0x10] sm:$0xf]
                  %239 = vst [vmem:[%s235 + $0x4] sm:$0xf] %v238
                $region55: #{whisper_encoder_forward.19} parent=42 // loop_footer
                  %s233 = sadd.s32 1, %s229
                $region56: #{whisper_encoder_forward.19} parent=42 // loop_footer_branch
                  %228 = sbr.rel target = $region52
                $region57: #{whisper_encoder_forward.19} parent=42 // loop_exit
                  _
              $region43: #{whisper_encoder_forward.19} parent=27 // pred_fallthru
                _
            $region28: #{whisper_encoder_forward.19} parent=23 // pred_fallthru
              _
            // Predicated region
            $region29: #{whisper_encoder_forward.19} parent=23 // pred_check
              _
            $region30: #{whisper_encoder_forward.19} parent=23 // pred_check_branch
              %203 = sbr.rel (0) target = $region32
            $region31: #{whisper_encoder_forward.19} parent=23 // pred_region
              loop: start=0, step=1, limit=1
              $region33: #{whisper_encoder_forward.19} parent=31 // loop_pre_header
                _
              $region34: #{whisper_encoder_forward.19} parent=31 // loop_header
                %s206 = sphi 0, %s210
                %p207 = scmp.ge.s32.totalorder %s206, 1
                %s211 = sphi %s197, %s197
                %s212 = sphi %s192, %s192
              $region35: #{whisper_encoder_forward.19} parent=31 // loop_header_branch
                %209 = sbr.rel (%p207) target = $region39
              $region36: #{whisper_encoder_forward.19} parent=31 // loop_body
                %v213 = vld [vmem:[%s211] sm:$0xf]
                %214 = vst [vmem:[%s212] sm:$0xf] %v213
                %v215 = vld [vmem:[%s211 + $0x10] sm:$0xf]
                %216 = vst [vmem:[%s212 + $0x4] sm:$0xf] %v215
              $region37: #{whisper_encoder_forward.19} parent=31 // loop_footer
                %s210 = sadd.s32 1, %s206
              $region38: #{whisper_encoder_forward.19} parent=31 // loop_footer_branch
                %205 = sbr.rel target = $region34
              $region39: #{whisper_encoder_forward.19} parent=31 // loop_exit
                _
            $region32: #{whisper_encoder_forward.19} parent=23 // pred_fallthru
              _
          $region24: #{whisper_encoder_forward.19} parent=19 // pred_fallthru
            _
          %240 = vnop
        $region20: #{whisper_encoder_forward.19} parent=15 // pred_fallthru
          _
        // Predicated region
        $region58: #{whisper_encoder_forward.19} parent=15 // pred_check
          %p241 = pneg %p79
        $region59: #{whisper_encoder_forward.19} parent=15 // pred_check_branch
          %243 = sbr.rel (%p241) target = $region61
        $region60: #{whisper_encoder_forward.19} parent=15 // pred_region
          %s244 = sand.u32 %s69, 1
          %s245 = sand.u32 %s69, 1
          %s246 = smul.addr %s245, 64
          %s247 = scalar_lea.vmem [#allocation4], %s246
          %s248 = smul.u32 16, %s19
          %s249 = smul.addr %s248, 2
          %s250 = sadd.s32 %s18, %s249
          %s251 = smul.addr %s250, 4
          %s252 = scalar_lea.vmem %s1, %s251
          // Predicated region
          $region62: #{whisper_encoder_forward.19} parent=60 // pred_check
            _
          $region63: #{whisper_encoder_forward.19} parent=60 // pred_check_branch
            %254 = sbr.rel (0) target = $region65
          $region64: #{whisper_encoder_forward.19} parent=60 // pred_region
            // Predicated region
            $region66: #{whisper_encoder_forward.19} parent=64 // pred_check
              _
            $region67: #{whisper_encoder_forward.19} parent=64 // pred_check_branch
              %256 = sbr.rel target = $region69
            $region68: #{whisper_encoder_forward.19} parent=64 // pred_region
              // Predicated region
              $region81: #{whisper_encoder_forward.19} parent=68 // pred_check
                _
              $region82: #{whisper_encoder_forward.19} parent=68 // pred_check_branch
                %301 = sbr.rel (0) target = $region84
              $region83: #{whisper_encoder_forward.19} parent=68 // pred_region
                loop: start=0, step=1, limit=1
                $region85: #{whisper_encoder_forward.19} parent=83 // loop_pre_header
                  _
                $region86: #{whisper_encoder_forward.19} parent=83 // loop_header
                  %s303 = sphi 0, %s307
                  %p304 = scmp.ge.s32.totalorder %s303, 1
                  %s308 = sphi %s252, %s252
                  %s309 = sphi %s247, %s247
                $region87: #{whisper_encoder_forward.19} parent=83 // loop_header_branch
                  %306 = sbr.rel (%p304) target = $region91
                $region88: #{whisper_encoder_forward.19} parent=83 // loop_body
                  _
                $region89: #{whisper_encoder_forward.19} parent=83 // loop_footer
                  %s307 = sadd.s32 1, %s303
                $region90: #{whisper_encoder_forward.19} parent=83 // loop_footer_branch
                  %302 = sbr.rel target = $region86
                $region91: #{whisper_encoder_forward.19} parent=83 // loop_exit
                  _
                loop: start=0, step=1, limit=1
                $region92: #{whisper_encoder_forward.19} parent=83 // loop_pre_header
                  _
                $region93: #{whisper_encoder_forward.19} parent=83 // loop_header
                  %s312 = sphi 0, %s316
                  %p313 = scmp.ge.s32.totalorder %s312, 1
                  %s317 = sphi %s252, %s252
                  %s318 = sphi %s247, %s247
                $region94: #{whisper_encoder_forward.19} parent=83 // loop_header_branch
                  %315 = sbr.rel (%p313) target = $region98
                $region95: #{whisper_encoder_forward.19} parent=83 // loop_body
                  %v319 = vld [vmem:[%s317] sm:$0xf]
                  %320 = vst [vmem:[%s318] sm:$0xf] %v319
                  %v321 = vld [vmem:[%s317 + $0x8] sm:$0xf]
                  %322 = vst [vmem:[%s318 + $0x4] sm:$0xf] %v321
                  %v323 = vld [vmem:[%s317 + $0x10] sm:$0xf]
                  %324 = vst [vmem:[%s318 + $0x8] sm:$0xf] %v323
                  %v325 = vld [vmem:[%s317 + $0x18] sm:$0xf]
                  %326 = vst [vmem:[%s318 + $0xc] sm:$0xf] %v325
                  %v327 = vld [vmem:[%s317 + $0x20] sm:$0xf]
                  %328 = vst [vmem:[%s318 + $0x10] sm:$0xf] %v327
                  %v329 = vld [vmem:[%s317 + $0x28] sm:$0xf]
                  %330 = vst [vmem:[%s318 + $0x14] sm:$0xf] %v329
                  %v331 = vld [vmem:[%s317 + $0x30] sm:$0xf]
                  %332 = vst [vmem:[%s318 + $0x18] sm:$0xf] %v331
                  %v333 = vld [vmem:[%s317 + $0x38] sm:$0xf]
                  %334 = vst [vmem:[%s318 + $0x1c] sm:$0xf] %v333
                  %v335 = vld [vmem:[%s317 + $0x40] sm:$0xf]
                  %336 = vst [vmem:[%s318 + $0x20] sm:$0xf] %v335
                  %v337 = vld [vmem:[%s317 + $0x48] sm:$0xf]
                  %338 = vst [vmem:[%s318 + $0x24] sm:$0xf] %v337
                  %v339 = vld [vmem:[%s317 + $0x50] sm:$0xf]
                  %340 = vst [vmem:[%s318 + $0x28] sm:$0xf] %v339
                  %v341 = vld [vmem:[%s317 + $0x58] sm:$0xf]
                  %342 = vst [vmem:[%s318 + $0x2c] sm:$0xf] %v341
                  %v343 = vld [vmem:[%s317 + $0x60] sm:$0xf]
                  %344 = vst [vmem:[%s318 + $0x30] sm:$0xf] %v343
                  %v345 = vld [vmem:[%s317 + $0x68] sm:$0xf]
                  %346 = vst [vmem:[%s318 + $0x34] sm:$0xf] %v345
                  %v347 = vld [vmem:[%s317 + $0x70] sm:$0xf]
                  %348 = vst [vmem:[%s318 + $0x38] sm:$0xf] %v347
                  %v349 = vld [vmem:[%s317 + $0x78] sm:$0xf]
                  %350 = vst [vmem:[%s318 + $0x3c] sm:$0xf] %v349
                $region96: #{whisper_encoder_forward.19} parent=83 // loop_footer
                  %s316 = sadd.s32 1, %s312
                $region97: #{whisper_encoder_forward.19} parent=83 // loop_footer_branch
                  %311 = sbr.rel target = $region93
                $region98: #{whisper_encoder_forward.19} parent=83 // loop_exit
                  _
              $region84: #{whisper_encoder_forward.19} parent=68 // pred_fallthru
                _
            $region69: #{whisper_encoder_forward.19} parent=64 // pred_fallthru
              _
            // Predicated region
            $region70: #{whisper_encoder_forward.19} parent=64 // pred_check
              _
            $region71: #{whisper_encoder_forward.19} parent=64 // pred_check_branch
              %258 = sbr.rel (0) target = $region73
            $region72: #{whisper_encoder_forward.19} parent=64 // pred_region
              loop: start=0, step=1, limit=1
              $region74: #{whisper_encoder_forward.19} parent=72 // loop_pre_header
                _
              $region75: #{whisper_encoder_forward.19} parent=72 // loop_header
                %s261 = sphi 0, %s265
                %p262 = scmp.ge.s32.totalorder %s261, 1
                %s266 = sphi %s252, %s252
                %s267 = sphi %s247, %s247
              $region76: #{whisper_encoder_forward.19} parent=72 // loop_header_branch
                %264 = sbr.rel (%p262) target = $region80
              $region77: #{whisper_encoder_forward.19} parent=72 // loop_body
                %v268 = vld [vmem:[%s266] sm:$0xf]
                %269 = vst [vmem:[%s267] sm:$0xf] %v268
                %v270 = vld [vmem:[%s266 + $0x8] sm:$0xf]
                %271 = vst [vmem:[%s267 + $0x4] sm:$0xf] %v270
                %v272 = vld [vmem:[%s266 + $0x10] sm:$0xf]
                %273 = vst [vmem:[%s267 + $0x8] sm:$0xf] %v272
                %v274 = vld [vmem:[%s266 + $0x18] sm:$0xf]
                %275 = vst [vmem:[%s267 + $0xc] sm:$0xf] %v274
                %v276 = vld [vmem:[%s266 + $0x20] sm:$0xf]
                %277 = vst [vmem:[%s267 + $0x10] sm:$0xf] %v276
                %v278 = vld [vmem:[%s266 + $0x28] sm:$0xf]
                %279 = vst [vmem:[%s267 + $0x14] sm:$0xf] %v278
                %v280 = vld [vmem:[%s266 + $0x30] sm:$0xf]
                %281 = vst [vmem:[%s267 + $0x18] sm:$0xf] %v280
                %v282 = vld [vmem:[%s266 + $0x38] sm:$0xf]
                %283 = vst [vmem:[%s267 + $0x1c] sm:$0xf] %v282
                %v284 = vld [vmem:[%s266 + $0x40] sm:$0xf]
                %285 = vst [vmem:[%s267 + $0x20] sm:$0xf] %v284
                %v286 = vld [vmem:[%s266 + $0x48] sm:$0xf]
                %287 = vst [vmem:[%s267 + $0x24] sm:$0xf] %v286
                %v288 = vld [vmem:[%s266 + $0x50] sm:$0xf]
                %289 = vst [vmem:[%s267 + $0x28] sm:$0xf] %v288
                %v290 = vld [vmem:[%s266 + $0x58] sm:$0xf]
                %291 = vst [vmem:[%s267 + $0x2c] sm:$0xf] %v290
                %v292 = vld [vmem:[%s266 + $0x60] sm:$0xf]
                %293 = vst [vmem:[%s267 + $0x30] sm:$0xf] %v292
                %v294 = vld [vmem:[%s266 + $0x68] sm:$0xf]
                %295 = vst [vmem:[%s267 + $0x34] sm:$0xf] %v294
                %v296 = vld [vmem:[%s266 + $0x70] sm:$0xf]
                %297 = vst [vmem:[%s267 + $0x38] sm:$0xf] %v296
                %v298 = vld [vmem:[%s266 + $0x78] sm:$0xf]
                %299 = vst [vmem:[%s267 + $0x3c] sm:$0xf] %v298
              $region78: #{whisper_encoder_forward.19} parent=72 // loop_footer
                %s265 = sadd.s32 1, %s261
              $region79: #{whisper_encoder_forward.19} parent=72 // loop_footer_branch
                %260 = sbr.rel target = $region75
              $region80: #{whisper_encoder_forward.19} parent=72 // loop_exit
                _
            $region73: #{whisper_encoder_forward.19} parent=64 // pred_fallthru
              _
          $region65: #{whisper_encoder_forward.19} parent=60 // pred_fallthru
            _
          %351 = vnop
        $region61: #{whisper_encoder_forward.19} parent=15 // pred_fallthru
          _
        // Predicated region
        $region99: #{whisper_encoder_forward.19} parent=15 // pred_check
          %p352 = pneg %p105
        $region100: #{whisper_encoder_forward.19} parent=15 // pred_check_branch
          %354 = sbr.rel (%p352) target = $region102
        $region101: #{whisper_encoder_forward.19} parent=15 // pred_region
          %p355 = scmp.lt.s32.totalorder %s18, 1
          %s356 = scalar_select %p355, %s18, 1
          %s357 = scalar_lea.vmem %s2, %s356
        $region102: #{whisper_encoder_forward.19} parent=15 // pred_fallthru
          _
        // Predicated region
        $region103: #{whisper_encoder_forward.19} parent=15 // pred_check
          %p358 = pneg %p133
        $region104: #{whisper_encoder_forward.19} parent=15 // pred_check_branch
          %360 = sbr.rel (%p358) target = $region106
        $region105: #{whisper_encoder_forward.19} parent=15 // pred_region
          %s361 = sand.u32 %s123, 1
          %s362 = sand.u32 %s123, 1
          %s363 = smul.addr %s362, 8
          %s364 = scalar_lea.vmem [#allocation5], %s363
          %s365 = smul.u32 2, %s17
          %s366 = smul.addr %s365, 2
          %s367 = sadd.s32 %s18, %s366
          %s368 = smul.addr %s367, 4
          %s369 = scalar_lea.vmem %s3, %s368
          // Predicated region
          $region107: #{whisper_encoder_forward.19} parent=105 // pred_check
            _
          $region108: #{whisper_encoder_forward.19} parent=105 // pred_check_branch
            %371 = sbr.rel (0) target = $region110
          $region109: #{whisper_encoder_forward.19} parent=105 // pred_region
            // Predicated region
            $region111: #{whisper_encoder_forward.19} parent=109 // pred_check
              _
            $region112: #{whisper_encoder_forward.19} parent=109 // pred_check_branch
              %373 = sbr.rel target = $region114
            $region113: #{whisper_encoder_forward.19} parent=109 // pred_region
              // Predicated region
              $region126: #{whisper_encoder_forward.19} parent=113 // pred_check
                _
              $region127: #{whisper_encoder_forward.19} parent=113 // pred_check_branch
                %390 = sbr.rel (0) target = $region129
              $region128: #{whisper_encoder_forward.19} parent=113 // pred_region
                loop: start=0, step=1, limit=1
                $region130: #{whisper_encoder_forward.19} parent=128 // loop_pre_header
                  _
                $region131: #{whisper_encoder_forward.19} parent=128 // loop_header
                  %s392 = sphi 0, %s396
                  %p393 = scmp.ge.s32.totalorder %s392, 1
                  %s397 = sphi %s369, %s369
                  %s398 = sphi %s364, %s364
                $region132: #{whisper_encoder_forward.19} parent=128 // loop_header_branch
                  %395 = sbr.rel (%p393) target = $region136
                $region133: #{whisper_encoder_forward.19} parent=128 // loop_body
                  _
                $region134: #{whisper_encoder_forward.19} parent=128 // loop_footer
                  %s396 = sadd.s32 1, %s392
                $region135: #{whisper_encoder_forward.19} parent=128 // loop_footer_branch
                  %391 = sbr.rel target = $region131
                $region136: #{whisper_encoder_forward.19} parent=128 // loop_exit
                  _
                loop: start=0, step=1, limit=1
                $region137: #{whisper_encoder_forward.19} parent=128 // loop_pre_header
                  _
                $region138: #{whisper_encoder_forward.19} parent=128 // loop_header
                  %s401 = sphi 0, %s405
                  %p402 = scmp.ge.s32.totalorder %s401, 1
                  %s406 = sphi %s369, %s369
                  %s407 = sphi %s364, %s364
                $region139: #{whisper_encoder_forward.19} parent=128 // loop_header_branch
                  %404 = sbr.rel (%p402) target = $region143
                $region140: #{whisper_encoder_forward.19} parent=128 // loop_body
                  %v408 = vld [vmem:[%s406] sm:$0xf]
                  %409 = vst [vmem:[%s407] sm:$0xf] %v408
                  %v410 = vld [vmem:[%s406 + $0x8] sm:$0xf]
                  %411 = vst [vmem:[%s407 + $0x4] sm:$0xf] %v410
                $region141: #{whisper_encoder_forward.19} parent=128 // loop_footer
                  %s405 = sadd.s32 1, %s401
                $region142: #{whisper_encoder_forward.19} parent=128 // loop_footer_branch
                  %400 = sbr.rel target = $region138
                $region143: #{whisper_encoder_forward.19} parent=128 // loop_exit
                  _
              $region129: #{whisper_encoder_forward.19} parent=113 // pred_fallthru
                _
            $region114: #{whisper_encoder_forward.19} parent=109 // pred_fallthru
              _
            // Predicated region
            $region115: #{whisper_encoder_forward.19} parent=109 // pred_check
              _
            $region116: #{whisper_encoder_forward.19} parent=109 // pred_check_branch
              %375 = sbr.rel (0) target = $region118
            $region117: #{whisper_encoder_forward.19} parent=109 // pred_region
              loop: start=0, step=1, limit=1
              $region119: #{whisper_encoder_forward.19} parent=117 // loop_pre_header
                _
              $region120: #{whisper_encoder_forward.19} parent=117 // loop_header
                %s378 = sphi 0, %s382
                %p379 = scmp.ge.s32.totalorder %s378, 1
                %s383 = sphi %s369, %s369
                %s384 = sphi %s364, %s364
              $region121: #{whisper_encoder_forward.19} parent=117 // loop_header_branch
                %381 = sbr.rel (%p379) target = $region125
              $region122: #{whisper_encoder_forward.19} parent=117 // loop_body
                %v385 = vld [vmem:[%s383] sm:$0xf]
                %386 = vst [vmem:[%s384] sm:$0xf] %v385
                %v387 = vld [vmem:[%s383 + $0x8] sm:$0xf]
                %388 = vst [vmem:[%s384 + $0x4] sm:$0xf] %v387
              $region123: #{whisper_encoder_forward.19} parent=117 // loop_footer
                %s382 = sadd.s32 1, %s378
              $region124: #{whisper_encoder_forward.19} parent=117 // loop_footer_branch
                %377 = sbr.rel target = $region120
              $region125: #{whisper_encoder_forward.19} parent=117 // loop_exit
                _
            $region118: #{whisper_encoder_forward.19} parent=109 // pred_fallthru
              _
          $region110: #{whisper_encoder_forward.19} parent=105 // pred_fallthru
            _
          %412 = vnop
        $region106: #{whisper_encoder_forward.19} parent=15 // pred_fallthru
          _
      $region16: #{whisper_encoder_forward.19} parent=5 // pred_fallthru
        _
      %p413 = scmp.le.s32.totalorder 1, %s10
      %p414 = scmp.lt.s32.totalorder %s10, 17
      %p415 = pnand %p413, %p414
      %p416 = pneg %p415
      // Predicated region
      $region144: #{whisper_encoder_forward.19} parent=5 // pred_check
        _
      $region145: #{whisper_encoder_forward.19} parent=5 // pred_check_branch
        %418 = sbr.rel (%p415) target = $region147
      $region146: #{whisper_encoder_forward.19} parent=5 // pred_region
        %s419 = ssub.s32 %s10, 1
        %s420 = sand.u32 %s44, 1
        %s421 = sand.u32 %s44, 1
        %s422 = smul.addr %s421, 8
        %s423 = scalar_lea.vmem [#allocation3], %s422
        // Predicated region
        $region148: #{whisper_encoder_forward.19} parent=146 // pred_check
          %p424 = pneg %p57
        $region149: #{whisper_encoder_forward.19} parent=146 // pred_check_branch
          %426 = sbr.rel (%p424) target = $region151
        $region150: #{whisper_encoder_forward.19} parent=146 // pred_region
          _
        $region151: #{whisper_encoder_forward.19} parent=146 // pred_fallthru
          _
        %s427 = sand.u32 %s72, 1
        %s428 = sand.u32 %s72, 1
        %s429 = smul.addr %s428, 64
        %s430 = scalar_lea.vmem [#allocation4], %s429
        // Predicated region
        $region152: #{whisper_encoder_forward.19} parent=146 // pred_check
          %p431 = pneg %p85
        $region153: #{whisper_encoder_forward.19} parent=146 // pred_check_branch
          %433 = sbr.rel (%p431) target = $region155
        $region154: #{whisper_encoder_forward.19} parent=146 // pred_region
          _
        $region155: #{whisper_encoder_forward.19} parent=146 // pred_fallthru
          _
        %s434 = sand.u32 %s126, 1
        %s435 = sand.u32 %s126, 1
        %s436 = smul.addr %s435, 8
        %s437 = scalar_lea.vmem [#allocation5], %s436
        // Predicated region
        $region156: #{whisper_encoder_forward.19} parent=146 // pred_check
          %p438 = pneg %p139
        $region157: #{whisper_encoder_forward.19} parent=146 // pred_check_branch
          %440 = sbr.rel (%p438) target = $region159
        $region158: #{whisper_encoder_forward.19} parent=146 // pred_region
          _
        $region159: #{whisper_encoder_forward.19} parent=146 // pred_fallthru
          _
        %s441 = sand.u32 %s44, 1
        %s442 = sand.u32 %s44, 1
        %s443 = smul.addr %s442, 8
        %s444 = scalar_lea.vmem [#allocation3], %s443
        %p445 = pneg %p57
        %p446 = pneg %p54
        %s447 = sand.u32 %s72, 1
        %s448 = sand.u32 %s72, 1
        %s449 = smul.addr %s448, 64
        %s450 = scalar_lea.vmem [#allocation4], %s449
        %p451 = pneg %p85
        %p452 = pneg %p82
        %p453 = scmp.lt.s32.totalorder %s21, 1
        %s454 = scalar_select %p453, %s21, 1
        %s455 = scalar_lea.vmem %s2, %s454
        %p456 = pneg %p111
        %p457 = pneg %p108
        %s458 = sand.u32 %s126, 1
        %s459 = sand.u32 %s126, 1
        %s460 = smul.addr %s459, 8
        %s461 = scalar_lea.vmem [#allocation5], %s460
        %p462 = pneg %p139
        %p463 = pneg %p136
        %p464 = pneg %p167
        %p465 = pneg %p164
        %s466 = sand.u32 %s154, 1
        %s467 = sand.u32 %s154, 1
        %s468 = smul.addr %s467, 8
        %s469 = scalar_lea.vmem [#allocation6], %s468
        %s470 = smul.u32 2, %s20
        %s471 = smul.u32 16, %s22
        %p472 = scmp.lt.s32.totalorder %s21, 1
        %s473 = scalar_select %p472, %s21, 1
        %s474 = scalar_lea.vmem %s2, %s473
        %s475 = smul.u32 2, %s20
        %s476 = smul.u32 2, %s20
        %p478 = scmp.eq.s32.totalorder %s22, 0
        // Predicated region
        $region160: #{whisper_encoder_forward.19} parent=146 // pred_check
          %p479 = pneg %p478
        $region161: #{whisper_encoder_forward.19} parent=146 // pred_check_branch
          %481 = sbr.rel (%p479) target = $region163
        $region162: #{whisper_encoder_forward.19} parent=146 // pred_region
          %482 = vst [vmem:[#allocation2] sm:$0xff] 0.0
          %483 = vst [vmem:[#allocation2 + $0x8] sm:$0xff] 0.0
        $region163: #{whisper_encoder_forward.19} parent=146 // pred_fallthru
          _
        %v484 = vld [vmem:[#allocation2] sm:$0xff]
        %v485 = vld [vmem:[#allocation2 + $0x8] sm:$0xff]
        %v486 = vld [vmem:[%s423] sm:$0xf]
        %v487 = vld [vmem:[%s423 + $0x4] sm:$0xf]
        %v488 = vld [vmem:[%s430] sm:$0xf]
        %v489 = vld [vmem:[%s430 + $0x4] sm:$0xf]
        %v490 = vld [vmem:[%s430 + $0x8] sm:$0xf]
        %v491 = vld [vmem:[%s430 + $0xc] sm:$0xf]
        %v492 = vld [vmem:[%s430 + $0x10] sm:$0xf]
        %v493 = vld [vmem:[%s430 + $0x14] sm:$0xf]
        %v494 = vld [vmem:[%s430 + $0x18] sm:$0xf]
        %v495 = vld [vmem:[%s430 + $0x1c] sm:$0xf]
        %v496 = vld [vmem:[%s430 + $0x20] sm:$0xf]
        %v497 = vld [vmem:[%s430 + $0x24] sm:$0xf]
        %v498 = vld [vmem:[%s430 + $0x28] sm:$0xf]
        %v499 = vld [vmem:[%s430 + $0x2c] sm:$0xf]
        %v500 = vld [vmem:[%s430 + $0x30] sm:$0xf]
        %v501 = vld [vmem:[%s430 + $0x34] sm:$0xf]
        %v502 = vld [vmem:[%s430 + $0x38] sm:$0xf]
        %v503 = vld [vmem:[%s430 + $0x3c] sm:$0xf]
        %v506 = vunpack.c.l.b16 %v486
        %v507 = vunpack.c.l.b16 %v487
        %v508 = vpack.c.b16 %v507, %v506
        %v526 = vunpack.c.l.b16 %v488
        %v527 = vunpack.c.l.b16 %v489
        %v528 = vunpack.c.l.b16 %v490
        %v529 = vunpack.c.l.b16 %v491
        %v530 = vunpack.c.l.b16 %v492
        %v531 = vunpack.c.l.b16 %v493
        %v532 = vunpack.c.l.b16 %v494
        %v533 = vunpack.c.l.b16 %v495
        %v534 = vunpack.c.l.b16 %v496
        %v535 = vunpack.c.l.b16 %v497
        %v536 = vunpack.c.l.b16 %v498
        %v537 = vunpack.c.l.b16 %v499
        %v538 = vunpack.c.l.b16 %v500
        %v539 = vunpack.c.l.b16 %v501
        %v540 = vunpack.c.l.b16 %v502
        %v541 = vunpack.c.l.b16 %v503
        %v542 = vpack.c.b16 %v527, %v526
        %v543 = vpack.c.b16 %v529, %v528
        %v544 = vpack.c.b16 %v531, %v530
        %v545 = vpack.c.b16 %v533, %v532
        %v546 = vpack.c.b16 %v535, %v534
        %v547 = vpack.c.b16 %v537, %v536
        %v548 = vpack.c.b16 %v539, %v538
        %v549 = vpack.c.b16 %v541, %v540
        %558 = vmatprep.subr.bf16.mxu0 0
        %559 = vmatpush1.bf16.msra.mxu0 %v542
        %560 = vmatprep.subr.bf16.mxu0 0
        %561 = vmatpush1.bf16.msra.mxu0 %v543
        %562 = vmatprep.subr.bf16.mxu0 0
        %563 = vmatpush1.bf16.msra.mxu0 %v544
        %564 = vmatprep.subr.bf16.mxu0 0
        %565 = vmatpush1.bf16.msra.mxu0 %v545
        %566 = vmatprep.subr.bf16.mxu0 0
        %567 = vmatpush1.bf16.msra.mxu0 %v546
        %568 = vmatprep.subr.bf16.mxu0 0
        %569 = vmatpush1.bf16.msra.mxu0 %v547
        %570 = vmatprep.subr.bf16.mxu0 0
        %571 = vmatpush1.bf16.msra.mxu0 %v548
        %572 = vmatprep.subr.bf16.mxu0 0
        %573 = vmatpush1.bf16.msra.mxu0 %v549
        %574 = vmatprep.subr.bf16.mxu0 0
        %575 = vmatpush1.bf16.msra.mxu0 0
        %576 = vmatprep.subr.bf16.mxu0 0
        %577 = vmatpush1.bf16.msra.mxu0 0
        %578 = vmatprep.subr.bf16.mxu0 0
        %579 = vmatpush1.bf16.msra.mxu0 0
        %580 = vmatprep.subr.bf16.mxu0 0
        %581 = vmatpush1.bf16.msra.mxu0 0
        %582 = vmatprep.subr.bf16.mxu0 0
        %583 = vmatpush1.bf16.msra.mxu0 0
        %584 = vmatprep.subr.bf16.mxu0 0
        %585 = vmatpush1.bf16.msra.mxu0 0
        %586 = vmatprep.subr.bf16.mxu0 0
        %587 = vmatpush1.bf16.msra.mxu0 0
        %588 = vmatprep.subr.bf16.mxu0 0
        %589 = vmatpush1.bf16.msra.mxu0 0
        %590 = vmatprep.mubr.bf16.mxu0 0
        %591 = vmatmul.mubr.bf16.gmra.mrb[0].mxu0 %v508
        %v592 = vpop.f32.mrb[0].mxu0
        %v593 = vadd.f32 0.0, %v592
        %v594 = vpop.f32.mrb[0].mxu0
        %v595 = vpop.f32.mrb[0].mxu0
        %v596 = vadd.f32 0.0, %v595
        %v597 = vpop.f32.mrb[0].mxu0
        %598 = vdwg.mxu0
        %v599 = vadd.f32 %v484, %v593
        %v600 = vadd.f32 %v485, %v596
        %601 = vst [vmem:[#allocation2] sm:$0xff] %v599
        %602 = vst [vmem:[#allocation2 + $0x8] sm:$0xff] %v600
        %p603 = scmp.eq.s32.totalorder %s22, 3
        // Predicated region
        $region164: #{whisper_encoder_forward.19} parent=146 // pred_check
          %p604 = pneg %p603
        $region165: #{whisper_encoder_forward.19} parent=146 // pred_check_branch
          %606 = sbr.rel (%p604) target = $region167
        $region166: #{whisper_encoder_forward.19} parent=146 // pred_region
          %v607 = vld [vmem:[#allocation2] sm:$0xff]
          %v608 = vld [vmem:[#allocation2 + $0x8] sm:$0xff]
          %v609 = vld [vmem:[%s474] sm:$0x1]
          %v611 = vlaneseq
          %v612 = vshrl.u32 %v611, 7
          %v613 = vsub.s32 0, %v612
          %v614 = vrot.slane %v609, %v613
          %v616 = vadd.f32 %v607, %v614
          %v617 = vadd.f32 %v608, %v614
          %v618 = vld [vmem:[%s437] sm:$0xf]
          %v619 = vld [vmem:[%s437 + $0x4] sm:$0xf]
          %v620 = vunpack.c.l.bf16 %v618
          %v621 = vunpack.c.l.bf16 %v619
          %v622 = vadd.f32 %v616, %v620
          %v623 = vadd.f32 %v617, %v621
          %v624 = vpack.c.bf16 %v623, %v622
          %v626 = vunpack.c.l.b16 %v624
          %v627 = vunpack.c.h.b16 %v624
          %v628 = vpack.c.b16 %v626, %v626
          %v629 = vpack.c.b16 %v627, %v627
          %632 = vst [vmem:[%s469] sm:$0xf] %v628
          %633 = vst [vmem:[%s469 + $0x4] sm:$0xf] %v629
        $region167: #{whisper_encoder_forward.19} parent=146 // pred_fallthru
          _
        %s634 = sand.u32 %s154, 1
        %s635 = sand.u32 %s154, 1
        %s636 = smul.addr %s635, 8
        %s637 = scalar_lea.vmem [#allocation6], %s636
        // Predicated region
        $region168: #{whisper_encoder_forward.19} parent=146 // pred_check
          %p638 = pneg %p164
        $region169: #{whisper_encoder_forward.19} parent=146 // pred_check_branch
          %640 = sbr.rel (%p638) target = $region171
        $region170: #{whisper_encoder_forward.19} parent=146 // pred_region
          %s641 = smul.u32 2, %s20
          %s642 = smul.addr %s641, 2
          %s643 = sadd.s32 %s21, %s642
          %s644 = smul.addr %s643, 4
          %s645 = scalar_lea.vmem %s4, %s644
          // Predicated region
          $region172: #{whisper_encoder_forward.19} parent=170 // pred_check
            _
          $region173: #{whisper_encoder_forward.19} parent=170 // pred_check_branch
            %647 = sbr.rel (0) target = $region175
          $region174: #{whisper_encoder_forward.19} parent=170 // pred_region
            // Predicated region
            $region176: #{whisper_encoder_forward.19} parent=174 // pred_check
              _
            $region177: #{whisper_encoder_forward.19} parent=174 // pred_check_branch
              %649 = sbr.rel target = $region179
            $region178: #{whisper_encoder_forward.19} parent=174 // pred_region
              // Predicated region
              $region191: #{whisper_encoder_forward.19} parent=178 // pred_check
                _
              $region192: #{whisper_encoder_forward.19} parent=178 // pred_check_branch
                %666 = sbr.rel (0) target = $region194
              $region193: #{whisper_encoder_forward.19} parent=178 // pred_region
                loop: start=0, step=1, limit=1
                $region195: #{whisper_encoder_forward.19} parent=193 // loop_pre_header
                  _
                $region196: #{whisper_encoder_forward.19} parent=193 // loop_header
                  %s668 = sphi 0, %s672
                  %p669 = scmp.ge.s32.totalorder %s668, 1
                  %s673 = sphi %s637, %s637
                  %s674 = sphi %s645, %s645
                $region197: #{whisper_encoder_forward.19} parent=193 // loop_header_branch
                  %671 = sbr.rel (%p669) target = $region201
                $region198: #{whisper_encoder_forward.19} parent=193 // loop_body
                  _
                $region199: #{whisper_encoder_forward.19} parent=193 // loop_footer
                  %s672 = sadd.s32 1, %s668
                $region200: #{whisper_encoder_forward.19} parent=193 // loop_footer_branch
                  %667 = sbr.rel target = $region196
                $region201: #{whisper_encoder_forward.19} parent=193 // loop_exit
                  _
                loop: start=0, step=1, limit=1
                $region202: #{whisper_encoder_forward.19} parent=193 // loop_pre_header
                  _
                $region203: #{whisper_encoder_forward.19} parent=193 // loop_header
                  %s677 = sphi 0, %s681
                  %p678 = scmp.ge.s32.totalorder %s677, 1
                  %s682 = sphi %s637, %s637
                  %s683 = sphi %s645, %s645
                $region204: #{whisper_encoder_forward.19} parent=193 // loop_header_branch
                  %680 = sbr.rel (%p678) target = $region208
                $region205: #{whisper_encoder_forward.19} parent=193 // loop_body
                  %v684 = vld [vmem:[%s682] sm:$0xf]
                  %685 = vst [vmem:[%s683] sm:$0xf] %v684
                  %v686 = vld [vmem:[%s682 + $0x4] sm:$0xf]
                  %687 = vst [vmem:[%s683 + $0x8] sm:$0xf] %v686
                $region206: #{whisper_encoder_forward.19} parent=193 // loop_footer
                  %s681 = sadd.s32 1, %s677
                $region207: #{whisper_encoder_forward.19} parent=193 // loop_footer_branch
                  %676 = sbr.rel target = $region203
                $region208: #{whisper_encoder_forward.19} parent=193 // loop_exit
                  _
              $region194: #{whisper_encoder_forward.19} parent=178 // pred_fallthru
                _
            $region179: #{whisper_encoder_forward.19} parent=174 // pred_fallthru
              _
            // Predicated region
            $region180: #{whisper_encoder_forward.19} parent=174 // pred_check
              _
            $region181: #{whisper_encoder_forward.19} parent=174 // pred_check_branch
              %651 = sbr.rel (0) target = $region183
            $region182: #{whisper_encoder_forward.19} parent=174 // pred_region
              loop: start=0, step=1, limit=1
              $region184: #{whisper_encoder_forward.19} parent=182 // loop_pre_header
                _
              $region185: #{whisper_encoder_forward.19} parent=182 // loop_header
                %s654 = sphi 0, %s658
                %p655 = scmp.ge.s32.totalorder %s654, 1
                %s659 = sphi %s637, %s637
                %s660 = sphi %s645, %s645
              $region186: #{whisper_encoder_forward.19} parent=182 // loop_header_branch
                %657 = sbr.rel (%p655) target = $region190
              $region187: #{whisper_encoder_forward.19} parent=182 // loop_body
                %v661 = vld [vmem:[%s659] sm:$0xf]
                %662 = vst [vmem:[%s660] sm:$0xf] %v661
                %v663 = vld [vmem:[%s659 + $0x4] sm:$0xf]
                %664 = vst [vmem:[%s660 + $0x8] sm:$0xf] %v663
              $region188: #{whisper_encoder_forward.19} parent=182 // loop_footer
                %s658 = sadd.s32 1, %s654
              $region189: #{whisper_encoder_forward.19} parent=182 // loop_footer_branch
                %653 = sbr.rel target = $region185
              $region190: #{whisper_encoder_forward.19} parent=182 // loop_exit
                _
            $region183: #{whisper_encoder_forward.19} parent=174 // pred_fallthru
              _
          $region175: #{whisper_encoder_forward.19} parent=170 // pred_fallthru
            _
          %688 = vnop
        $region171: #{whisper_encoder_forward.19} parent=146 // pred_fallthru
          _
      $region147: #{whisper_encoder_forward.19} parent=5 // pred_fallthru
        _
      %p689 = scmp.le.s32.totalorder 2, %s10
      // Predicated region
      $region209: #{whisper_encoder_forward.19} parent=5 // pred_check
        %p690 = pneg %p689
      $region210: #{whisper_encoder_forward.19} parent=5 // pred_check_branch
        %692 = sbr.rel (%p690) target = $region212
      $region211: #{whisper_encoder_forward.19} parent=5 // pred_region
        %s693 = ssub.s32 %s10, 2
        // Predicated region
        $region213: #{whisper_encoder_forward.19} parent=211 // pred_check
          %p694 = pneg %p170
        $region214: #{whisper_encoder_forward.19} parent=211 // pred_check_branch
          %696 = sbr.rel (%p694) target = $region216
        $region215: #{whisper_encoder_forward.19} parent=211 // pred_region
          %s697 = sand.u32 %s155, 1
          %s698 = sand.u32 %s155, 1
          %s699 = smul.addr %s698, 8
          %s700 = scalar_lea.vmem [#allocation6], %s699
        $region216: #{whisper_encoder_forward.19} parent=211 // pred_fallthru
          _
      $region212: #{whisper_encoder_forward.19} parent=5 // pred_fallthru
        _
    $region6: #{whisper_encoder_forward.19} parent=1 // loop_footer
      %s14 = sadd.s32 1, %s10
    $region7: #{whisper_encoder_forward.19} parent=1 // loop_footer_branch
      %9 = sbr.rel target = $region3
    $region8: #{whisper_encoder_forward.19} parent=1 // loop_exit
      _

</llo_original>
